<compile_context>
chip_gen: v6e
topology: v6e:2x2x1
jax: 0.10.0
libtpu: 0.0.40
codegen_flags: <defaults>
</compile_context>

<pallas_src>
import functools
import numpy as np

import jax
import jax.numpy as jnp
from jax import lax
from jax.experimental import pallas as pl
from jax.experimental.pallas import tpu as pltpu


# Set to jnp.bfloat16 to feed the MXU at native bf16 throughput at scaled-up sizes
# (accumulation stays f32). Kept f32 by default to preserve PyTorch reference numerics.
COMPUTE_DTYPE = jnp.float32
# EUP approximate reciprocal for the softmax denominator (documented ~1e-3 rel. error;
# set False for an exact VALU divide).
USE_APPROX_SOFTMAX_RECIP = True


def _mm(a, b):
    return jnp.dot(a.astype(COMPUTE_DTYPE), b.astype(COMPUTE_DTYPE),
                   preferred_element_type=jnp.float32)


def _softmax_last(s):
    m = jnp.max(s, axis=-1, keepdims=True)
    p = jnp.exp(s - m)
    denom = jnp.sum(p, axis=-1, keepdims=True)
    if USE_APPROX_SOFTMAX_RECIP:
        return p * pl.reciprocal(denom, approx=True)
    return p / denom


def _layernorm(v, gamma, beta):
    mu = jnp.mean(v, axis=-1, keepdims=True)
    c = v - mu
    var = jnp.mean(c * c, axis=-1, keepdims=True)
    return c * lax.rsqrt(var + 1e-6) * gamma + beta


def _transformer_layer(x, ctx_ref, wqkv, bqkv, wo, bo,
                       ln1_g, ln1_b, w1, b1, w2, b2, ln2_g, ln2_b,
                       *, bb, t, n_head, dk, scale):
    """One post-LN encoder layer on a flat (R=bb*t, D) activation; ctx_ref is (R, D) VMEM."""
    d = x.shape[-1]
    # Single wide QKV projection: (R, D) @ (D, 3D) -- full MXU output width.
    qkv = _mm(x, wqkv) + bqkv                                  # (R, 3D), cols = [Q | K | V]
    for bi in range(bb):                                        # attention is per sequence
        r = bi * t
        for h in range(n_head):
            c = h * dk
            q = qkv[r:r + t, c:c + dk]
            k = qkv[r:r + t, d + c:d + c + dk]
            v = qkv[r:r + t, 2 * d + c:2 * d + c + dk]
            s = lax.dot_general(q.astype(COMPUTE_DTYPE), k.astype(COMPUTE_DTYPE),
                                (((1,), (1,)), ((), ())),
                                preferred_element_type=jnp.float32) * scale   # (t, t)
            # Stage per-head context at its static lane offset; full (R, D) is covered
            # each layer, so no stale data survives across layers/grid steps.
            ctx_ref[r:r + t, c:c + dk] = _mm(_softmax_last(s), v)
    # Output projection as ONE full-D contraction instead of H dk-deep matmuls.
    attn = _mm(ctx_ref[...], wo) + bo
    h1 = _layernorm(x + attn, ln1_g, ln1_b)
    ff = jnp.maximum(_mm(h1, w1) + b1, 0.0)
    ff = _mm(ff, w2) + b2
    return _layernorm(h1 + ff, ln2_g, ln2_b)


# ----------------------------------------------------------------------------
# Encoder stack kernel (embed + pos fused into the first layer step)
# ----------------------------------------------------------------------------

def _encoder_stack_kernel(batch_ref, pos_ref, ew_ref, eb_ref,
                          wqkv_ref, bqkv_ref, wo_ref, bo_ref,
                          ln1g_ref, ln1b_ref, w1_ref, b1_ref, w2_ref, b2_ref,
                          ln2g_ref, ln2b_ref,
                          out_ref,
                          x_ref, ctx_ref,
                          *, bb, t, n_head, dk, scale):
    layer = pl.program_id(1)

    @pl.when(layer == 0)
    def _():
        c_in = ew_ref.shape[0]
        e = _mm(batch_ref[...].reshape(bb * t, c_in), ew_ref[...]) + eb_ref[...]
        x_ref[...] = e + pos_ref[...]                 # pos already tiled to (bb*t, D)

    y = _transformer_layer(x_ref[...], ctx_ref,
                           wqkv_ref[0], bqkv_ref[0], wo_ref[0], bo_ref[0],
                           ln1g_ref[0], ln1b_ref[0], w1_ref[0], b1_ref[0],
                           w2_ref[0], b2_ref[0], ln2g_ref[0], ln2b_ref[0],
                           bb=bb, t=t, n_head=n_head, dk=dk, scale=scale)
    x_ref[...] = y

    @pl.when(layer == pl.num_programs(1) - 1)
    def _():
        out_ref[...] = y.reshape(bb, t, y.shape[-1])


# ----------------------------------------------------------------------------
# Decoder stack kernel (pos fused into first layer, coords head fused into last)
# ----------------------------------------------------------------------------

def _decoder_stack_kernel(z_ref, pos_ref, tgt_ref, fcw_ref, fcb_ref,
                          wqkv_ref, bqkv_ref, wo_ref, bo_ref,
                          ln1g_ref, ln1b_ref, w1_ref, b1_ref, w2_ref, b2_ref,
                          ln2g_ref, ln2b_ref,
                          coords_ref, sse_ref,
                          x_ref, ctx_ref,
                          *, bb, t, n_head, dk, scale):
    layer = pl.program_id(1)

    @pl.when(layer == 0)
    def _():
        d = z_ref.shape[-1]
        x_ref[...] = z_ref[...].reshape(bb * t, d) + pos_ref[...]

    y = _transformer_layer(x_ref[...], ctx_ref,
                           wqkv_ref[0], bqkv_ref[0], wo_ref[0], bo_ref[0],
                           ln1g_ref[0], ln1b_ref[0], w1_ref[0], b1_ref[0],
                           w2_ref[0], b2_ref[0], ln2g_ref[0], ln2b_ref[0],
                           bb=bb, t=t, n_head=n_head, dk=dk, scale=scale)
    x_ref[...] = y

    @pl.when(layer == pl.num_programs(1) - 1)
    def _():
        c_out = fcw_ref.shape[1]
        pre = _mm(y, fcw_ref[...]) + fcb_ref[...]
        coords = 1.0 / (1.0 + jnp.exp(-pre))          # sigmoid
        c3 = coords.reshape(bb, t, c_out)
        coords_ref[...] = c3
        diff = c3 - tgt_ref[...]
        s = jnp.sum(diff * diff, axis=2, keepdims=True)
        sse_ref[...] = jnp.sum(s, axis=1, keepdims=True)   # per-batch-element SSE partials


# ----------------------------------------------------------------------------
# Vector quantizer kernel (row-tiled, per-tile counts / SSE partials)
# ----------------------------------------------------------------------------

def _vq_kernel(x_ref, e_ref, q_ref, cnt_ref, sse_ref):
    x = x_ref[...]                                    # (tm, D)
    e = e_ref[...]                                    # (K, D)
    K = e.shape[0]
    x2 = jnp.sum(x * x, axis=-1, keepdims=True)       # (tm, 1)
    e2 = jnp.sum(e * e, axis=-1, keepdims=True).T     # (1, K)
    # Distances stay f32 regardless of COMPUTE_DTYPE so argmin tie-breaks track the f32 ref.
    dist = x2 + e2 - 2.0 * lax.dot_general(x, e, (((1,), (1,)), ((), ())),
                                           preferred_element_type=jnp.float32)
    dmin = jnp.min(dist, axis=-1, keepdims=True)
    iota = lax.broadcasted_iota(jnp.int32, dist.shape, 1)
    # first index achieving the minimum (matches torch.argmin semantics)
    idx = jnp.min(jnp.where(dist <= dmin, iota, K), axis=-1, keepdims=True)
    onehot = (iota == idx).astype(jnp.float32)         # (tm, K) -- never leaves VMEM
    quant = jnp.dot(onehot, e, preferred_element_type=jnp.float32)
    q_ref[...] = quant
    cnt_ref[0] = jnp.sum(onehot, axis=0, keepdims=True)    # (1, K) code-usage counts
    diff = quant - x
    s = jnp.sum(diff * diff, axis=1, keepdims=True)
    sse_ref[0] = jnp.sum(s, axis=0, keepdims=True)         # (1, 1) squared-error partial


# ----------------------------------------------------------------------------
# Wrappers
# ----------------------------------------------------------------------------

def _batch_block(b, t):
    """Batch elements per grid step (amortizes per-step overhead, fills MXU M dim)."""
    if t % 8 != 0:
        return 1
    target = max(1, min(8, 256 // t))          # cap unroll size, aim for >=~128 rows/step
    bb = 1
    for cand in range(1, b + 1):
        if b % cand == 0 and cand <= target:
            bb = cand
    return bb


def _const_spec2(shape):
    return pl.BlockSpec(shape, lambda g, l: (0, 0))


def _layer_spec(shape):
    return pl.BlockSpec((1,) + shape, lambda g, l: (l, 0, 0))


def encoder_stack(batch, pos, enc_w, enc_b, sp, *, n_head):
    B, T, C = batch.shape
    D = enc_w.shape[1]
    L = sp["wqkv"].shape[0]
    Di = sp["w1"].shape[2]
    dk = D // n_head
    assert n_head * dk == D
    Bb = _batch_block(B, T)
    G = B // Bb
    R = Bb * T
    pos_rows = jnp.tile(pos, (Bb, 1))                  # (R, D)

    kernel = functools.partial(_encoder_stack_kernel, bb=Bb, t=T, n_head=n_head,
                               dk=dk, scale=1.0 / float(np.sqrt(dk)))
    return pl.pallas_call(
        kernel,
        out_shape=jax.ShapeDtypeStruct((B, T, D), jnp.float32),
        grid=(G, L),
        in_specs=[
            pl.BlockSpec((Bb, T, C), lambda g, l: (g, 0, 0)),   # raw batch (embed fused)
            _const_spec2((R, D)),                                # pos table tiled to R rows
            _const_spec2((C, D)), _const_spec2((1, D)),          # embed weight / bias
            _layer_spec((D, 3 * D)), _layer_spec((1, 3 * D)),    # wqkv, bqkv
            _layer_spec((D, D)), _layer_spec((1, D)),            # wo, bo
            _layer_spec((1, D)), _layer_spec((1, D)),            # ln1 gamma / beta
            _layer_spec((D, Di)), _layer_spec((1, Di)),          # w1, b1
            _layer_spec((Di, D)), _layer_spec((1, D)),           # w2, b2
            _layer_spec((1, D)), _layer_spec((1, D)),            # ln2 gamma / beta
        ],
        out_specs=pl.BlockSpec((Bb, T, D), lambda g, l: (g, 0, 0)),
        scratch_shapes=[pltpu.VMEM((R, D), jnp.float32),         # activation carried over L
                        pltpu.VMEM((R, D), jnp.float32)],        # per-head context staging
        compiler_params=pltpu.CompilerParams(
            dimension_semantics=("parallel", "arbitrary")),
    )(batch, pos_rows, enc_w, enc_b,
      sp["wqkv"], sp["bqkv"], sp["wo"], sp["bo"],
      sp["ln1_g"], sp["ln1_b"], sp["w1"], sp["b1"], sp["w2"], sp["b2"],
      sp["ln2_g"], sp["ln2_b"])


def decoder_stack(z, pos, target, fc_w, fc_b, sp, *, n_head):
    B, T, D = z.shape
    C = fc_w.shape[1]
    L = sp["wqkv"].shape[0]
    Di = sp["w1"].shape[2]
    dk = D // n_head
    Bb = _batch_block(B, T)
    G = B // Bb
    R = Bb * T
    pos_rows = jnp.tile(pos, (Bb, 1))

    kernel = functools.partial(_decoder_stack_kernel, bb=Bb, t=T, n_head=n_head,
                               dk=dk, scale=1.0 / float(np.sqrt(dk)))
    coords, sse = pl.pallas_call(
        kernel,
        out_shape=(jax.ShapeDtypeStruct((B, T, C), jnp.float32),
                   jax.ShapeDtypeStruct((B, 1, 1), jnp.float32)),
        grid=(G, L),
        in_specs=[
            pl.BlockSpec((Bb, T, D), lambda g, l: (g, 0, 0)),    # quantized input z
            _const_spec2((R, D)),                                 # pos table tiled
            pl.BlockSpec((Bb, T, C), lambda g, l: (g, 0, 0)),     # MSE target (raw batch)
            _const_spec2((D, C)), _const_spec2((1, C)),           # coords head weight / bias
            _layer_spec((D, 3 * D)), _layer_spec((1, 3 * D)),
            _layer_spec((D, D)), _layer_spec((1, D)),
            _layer_spec((1, D)), _layer_spec((1, D)),
            _layer_spec((D, Di)), _layer_spec((1, Di)),
            _layer_spec((Di, D)), _layer_spec((1, D)),
            _layer_spec((1, D)), _layer_spec((1, D)),
        ],
        out_specs=(pl.BlockSpec((Bb, T, C), lambda g, l: (g, 0, 0)),
                   pl.BlockSpec((Bb, 1, 1), lambda g, l: (g, 0, 0))),
        scratch_shapes=[pltpu.VMEM((R, D), jnp.float32),
                        pltpu.VMEM((R, D), jnp.float32)],
        compiler_params=pltpu.CompilerParams(
            dimension_semantics=("parallel", "arbitrary")),
    )(z, pos_rows, target, fc_w, fc_b,
      sp["wqkv"], sp["bqkv"], sp["wo"], sp["bo"],
      sp["ln1_g"], sp["ln1_b"], sp["w1"], sp["b1"], sp["w2"], sp["b2"],
      sp["ln2_g"], sp["ln2_b"])
    return coords, sse


def _row_tile(m):
    for t in (512, 256, 128):
        if m % t == 0:
            return t
    return m


def vector_quantize(x, codebook):
    M, D = x.shape
    K = codebook.shape[0]
    tm = _row_tile(M)
    G = M // tm
    quant, counts, sse = pl.pallas_call(
        _vq_kernel,
        out_shape=(jax.ShapeDtypeStruct((M, D), jnp.float32),
                   jax.ShapeDtypeStruct((G, 1, K), jnp.float32),
                   jax.ShapeDtypeStruct((G, 1, 1), jnp.float32)),
        grid=(G,),
        in_specs=[pl.BlockSpec((tm, D), lambda i: (i, 0)),
                  pl.BlockSpec((K, D), lambda i: (0, 0))],
        out_specs=(pl.BlockSpec((tm, D), lambda i: (i, 0)),
                   pl.BlockSpec((1, 1, K), lambda i: (i, 0, 0)),
                   pl.BlockSpec((1, 1, 1), lambda i: (i, 0, 0))),
        compiler_params=pltpu.CompilerParams(dimension_semantics=("parallel",)),
    )(x, codebook)
    avg_probs = jnp.sum(counts[:, 0, :], axis=0) / float(M)
    e_latent = jnp.sum(sse) / float(M * D)
    return quant, avg_probs, e_latent


# ----------------------------------------------------------------------------
# Model glue (parameters, forward)
# ----------------------------------------------------------------------------

def sinusoid_pos_table(n_tokens, d_model):
    pos = np.arange(n_tokens, dtype=np.float64)[:, None]
    j = np.arange(d_model)[None, :]
    angle = pos / np.power(10000.0, 2.0 * (j // 2) / d_model)
    table = np.zeros((n_tokens, d_model), dtype=np.float64)
    table[:, 0::2] = np.sin(angle[:, 0::2])
    table[:, 1::2] = np.cos(angle[:, 1::2])
    return jnp.asarray(table, dtype=jnp.float32)               # (T, D)


def continuous_transformer_forward(batch, params, *, n_head, commitment_cost):
    B, T, C = batch.shape
    D = params["enc_w"].shape[1]

    # encoder stack (embed Linear(6->D) + pos add fused into its first layer step)
    enc_out = encoder_stack(batch, params["pos"], params["enc_w"], params["enc_b"],
                            params["encoder"], n_head=n_head)

    # vector quantizer: quantized rows, codebook usage, e_latent MSE
    quant, avg_probs, e_latent = vector_quantize(enc_out.reshape(B * T, D),
                                                 params["codebook"])
    vq_loss = (1.0 + commitment_cost) * e_latent       # forward value of q_latent + cc*e_latent
    perplexity = jnp.exp(-jnp.sum(avg_probs * jnp.log(avg_probs + 1e-10)))

    # straight-through: forward value of z is `quantized`
    z = quant.reshape(B, T, D)

    # decoder stack (pos fused into first layer, coords head + sigmoid + SSE into last)
    coords, sse = decoder_stack(z, params["pos"], batch, params["fc_w"], params["fc_b"],
                                params["decoder"], n_head=n_head)
    loss_coords = jnp.sum(sse) / float(B * T * C)
    return coords, loss_coords, vq_loss, perplexity


def init_params(key, d_model, d_inner, n_layer, n_head, n_tokens, codebook_size):
    keys = jax.random.split(key, 8)

    def nrm(k, shape):
        return jax.random.normal(k, shape, jnp.float32) * 0.02

    def make_stack(k):
        ks = jax.random.split(k, 4)
        return {
            # wqkv columns are [Q | K | V], each head-major (dk cols per head).
            "wqkv": nrm(ks[0], (n_layer, d_model, 3 * d_model)),
            "bqkv": jnp.zeros((n_layer, 1, 3 * d_model), jnp.float32),
            # wo rows are head-major, so concat_h(ctx_h) @ wo is the standard output proj.
            "wo": nrm(ks[1], (n_layer, d_model, d_model)),
            "bo": jnp.zeros((n_layer, 1, d_model), jnp.float32),
            "ln1_g": jnp.ones((n_layer, 1, d_model), jnp.float32),
            "ln1_b": jnp.zeros((n_layer, 1, d_model), jnp.float32),
            "w1": nrm(ks[2], (n_layer, d_model, d_inner)),
            "b1": jnp.zeros((n_layer, 1, d_inner), jnp.float32),
            "w2": nrm(ks[3], (n_layer, d_inner, d_model)),
            "b2": jnp.zeros((n_layer, 1, d_model), jnp.float32),
            "ln2_g": jnp.ones((n_layer, 1, d_model), jnp.float32),
            "ln2_b": jnp.zeros((n_layer, 1, d_model), jnp.float32),
        }

    params = {
        "pos": sinusoid_pos_table(n_tokens, d_model),
        "enc_w": nrm(keys[0], (6, d_model)),
        "enc_b": jnp.zeros((1, d_model), jnp.float32),
        "fc_w": nrm(keys[1], (d_model, 6)),
        "fc_b": jnp.zeros((1, 6), jnp.float32),
        "encoder": make_stack(keys[2]),
        "decoder": make_stack(keys[3]),
        "codebook": jax.random.uniform(keys[4], (codebook_size, d_model), jnp.float32,
                                       minval=-1.0 / codebook_size,
                                       maxval=1.0 / codebook_size),
    }
    return params


if __name__ == "__main__":
    B, T = 2, 8                     # batch, n_tokens
    d_model, d_inner = 32, 64
    n_layer, n_head = 2, 4
    codebook_size, commitment_cost = 64, 0.25

    key = jax.random.PRNGKey(0)
    k_param, k_data = jax.random.split(key)
    params = init_params(k_param, d_model, d_inner, n_layer, n_head, T, codebook_size)
    batch = jax.random.uniform(k_data, (B, T, 6), jnp.float32)

    fwd = jax.jit(functools.partial(continuous_transformer_forward,
                                    n_head=n_head, commitment_cost=commitment_cost))
    coords_out, loss_coords, vq_loss, perplexity = fwd(batch, params)
    jax.block_until_ready((coords_out, loss_coords, vq_loss, perplexity))

    assert coords_out.shape == (B, T, 6)
    assert loss_coords.shape == () and vq_loss.shape == () and perplexity.shape == ()
    print("KERNEL_OK")
</pallas_src>

<mosaic_0001>
module attributes {stable_mosaic.version = 11 : i64} {
  func.func @_encoder_stack_kernel(%arg0: i32, %arg1: i32, %arg2: memref<2x8x6xf32, #tpu.memory_space<vmem>>, %arg3: memref<16x32xf32, #tpu.memory_space<vmem>>, %arg4: memref<6x32xf32, #tpu.memory_space<vmem>>, %arg5: memref<1x32xf32, #tpu.memory_space<vmem>>, %arg6: memref<1x32x96xf32, #tpu.memory_space<vmem>>, %arg7: memref<1x1x96xf32, #tpu.memory_space<vmem>>, %arg8: memref<1x32x32xf32, #tpu.memory_space<vmem>>, %arg9: memref<1x1x32xf32, #tpu.memory_space<vmem>>, %arg10: memref<1x1x32xf32, #tpu.memory_space<vmem>>, %arg11: memref<1x1x32xf32, #tpu.memory_space<vmem>>, %arg12: memref<1x32x64xf32, #tpu.memory_space<vmem>>, %arg13: memref<1x1x64xf32, #tpu.memory_space<vmem>>, %arg14: memref<1x64x32xf32, #tpu.memory_space<vmem>>, %arg15: memref<1x1x32xf32, #tpu.memory_space<vmem>>, %arg16: memref<1x1x32xf32, #tpu.memory_space<vmem>>, %arg17: memref<1x1x32xf32, #tpu.memory_space<vmem>>, %arg18: memref<2x8x32xf32, #tpu.memory_space<vmem>>, %arg19: memref<16x32xf32, #tpu.memory_space<vmem>>, %arg20: memref<16x32xf32, #tpu.memory_space<vmem>>) attributes {dimension_semantics = [#tpu.dimension_semantics<parallel>, #tpu.dimension_semantics<arbitrary>], iteration_bounds = array<i64: 1, 2>, scalar_prefetch = 0 : i64, scratch_operands = 2 : i64, tpu.core_type = #tpu.core_type<tc>, window_params = [{transform_indices = @transform_0, window_bounds = array<i64: 2, 8, 6>}, {pipeline_mode = #tpu.pipeline_mode<synchronous>, transform_indices = @transform_1, window_bounds = array<i64: 16, 32>}, {pipeline_mode = #tpu.pipeline_mode<synchronous>, transform_indices = @transform_2, window_bounds = array<i64: 6, 32>}, {pipeline_mode = #tpu.pipeline_mode<synchronous>, transform_indices = @transform_3, window_bounds = array<i64: 1, 32>}, {transform_indices = @transform_4, window_bounds = array<i64: 1, 32, 96>}, {transform_indices = @transform_5, window_bounds = array<i64: 1, 1, 96>}, {transform_indices = @transform_6, window_bounds = array<i64: 1, 32, 32>}, {transform_indices = @transform_7, window_bounds = array<i64: 1, 1, 32>}, {transform_indices = @transform_8, window_bounds = array<i64: 1, 1, 32>}, {transform_indices = @transform_9, window_bounds = array<i64: 1, 1, 32>}, {transform_indices = @transform_10, window_bounds = array<i64: 1, 32, 64>}, {transform_indices = @transform_11, window_bounds = array<i64: 1, 1, 64>}, {transform_indices = @transform_12, window_bounds = array<i64: 1, 64, 32>}, {transform_indices = @transform_13, window_bounds = array<i64: 1, 1, 32>}, {transform_indices = @transform_14, window_bounds = array<i64: 1, 1, 32>}, {transform_indices = @transform_15, window_bounds = array<i64: 1, 1, 32>}, {transform_indices = @transform_16, window_bounds = array<i64: 2, 8, 32>}]} {
    %c0_i32 = arith.constant 0 : i32
    %0 = arith.cmpi eq, %arg1, %c0_i32 : i32
    %1 = arith.extui %0 : i1 to i32
    %c0_i32_0 = arith.constant 0 : i32
    %2 = arith.cmpi ne, %1, %c0_i32_0 : i32
    scf.if %2 {
      %c0_110 = arith.constant 0 : index
      %c0_111 = arith.constant 0 : index
      %c0_112 = arith.constant 0 : index
      %233 = vector.load %arg2[%c0_110, %c0_111, %c0_112] : memref<2x8x6xf32, #tpu.memory_space<vmem>>, vector<2x8x6xf32>
      %234 = vector.shape_cast %233 : vector<2x8x6xf32> to vector<16x6xf32>
      %c0_113 = arith.constant 0 : index
      %c0_114 = arith.constant 0 : index
      %235 = vector.load %arg4[%c0_113, %c0_114] : memref<6x32xf32, #tpu.memory_space<vmem>>, vector<6x32xf32>
      %cst_115 = arith.constant dense<0.000000e+00> : vector<16x32xf32>
      %236 = tpu.matmul %234, %235, %cst_115 {dimension_numbers = #tpu.dot_dimension_numbers<[1], [0], [0], [1], [0, 0, 1, 1], [], []>} : vector<16x6xf32>, vector<6x32xf32>, vector<16x32xf32> -> vector<16x32xf32>
      %c0_116 = arith.constant 0 : index
      %c0_117 = arith.constant 0 : index
      %237 = vector.load %arg5[%c0_116, %c0_117] : memref<1x32xf32, #tpu.memory_space<vmem>>, vector<1x32xf32>
      %238 = vector.broadcast %237 : vector<1x32xf32> to vector<16x32xf32>
      %239 = arith.addf %236, %238 : vector<16x32xf32>
      %c0_118 = arith.constant 0 : index
      %c0_119 = arith.constant 0 : index
      %240 = vector.load %arg3[%c0_118, %c0_119] : memref<16x32xf32, #tpu.memory_space<vmem>>, vector<16x32xf32>
      %241 = arith.addf %239, %240 : vector<16x32xf32>
      %c0_120 = arith.constant 0 : index
      %c0_121 = arith.constant 0 : index
      %242 = vector.load %arg19[%c0_120, %c0_121] : memref<16x32xf32, #tpu.memory_space<vmem>>, vector<16x32xf32>
      tpu.vector_store %arg19[%c0_120, %c0_121], %241 {strides = array<i32>} : memref<16x32xf32, #tpu.memory_space<vmem>>, vector<16x32xf32>,
    } else {
    }
    %c0 = arith.constant 0 : index
    %c0_1 = arith.constant 0 : index
    %3 = vector.load %arg19[%c0, %c0_1] : memref<16x32xf32, #tpu.memory_space<vmem>>, vector<16x32xf32>
    %c0_2 = arith.constant 0 : index
    %c0_3 = arith.constant 0 : index
    %c0_4 = arith.constant 0 : index
    %4 = vector.load %arg6[%c0_2, %c0_3, %c0_4] : memref<1x32x96xf32, #tpu.memory_space<vmem>>, vector<1x32x96xf32>
    %5 = vector.shape_cast %4 : vector<1x32x96xf32> to vector<32x96xf32>
    %c0_5 = arith.constant 0 : index
    %c0_6 = arith.constant 0 : index
    %c0_7 = arith.constant 0 : index
    %6 = vector.load %arg7[%c0_5, %c0_6, %c0_7] : memref<1x1x96xf32, #tpu.memory_space<vmem>>, vector<1x1x96xf32>
    %7 = vector.shape_cast %6 : vector<1x1x96xf32> to vector<1x96xf32>
    %c0_8 = arith.constant 0 : index
    %c0_9 = arith.constant 0 : index
    %c0_10 = arith.constant 0 : index
    %8 = vector.load %arg8[%c0_8, %c0_9, %c0_10] : memref<1x32x32xf32, #tpu.memory_space<vmem>>, vector<1x32x32xf32>
    %9 = vector.shape_cast %8 : vector<1x32x32xf32> to vector<32x32xf32>
    %c0_11 = arith.constant 0 : index
    %c0_12 = arith.constant 0 : index
    %c0_13 = arith.constant 0 : index
    %10 = vector.load %arg9[%c0_11, %c0_12, %c0_13] : memref<1x1x32xf32, #tpu.memory_space<vmem>>, vector<1x1x32xf32>
    %11 = vector.shape_cast %10 : vector<1x1x32xf32> to vector<1x32xf32>
    %c0_14 = arith.constant 0 : index
    %c0_15 = arith.constant 0 : index
    %c0_16 = arith.constant 0 : index
    %12 = vector.load %arg10[%c0_14, %c0_15, %c0_16] : memref<1x1x32xf32, #tpu.memory_space<vmem>>, vector<1x1x32xf32>
    %13 = vector.shape_cast %12 : vector<1x1x32xf32> to vector<1x32xf32>
    %c0_17 = arith.constant 0 : index
    %c0_18 = arith.constant 0 : index
    %c0_19 = arith.constant 0 : index
    %14 = vector.load %arg11[%c0_17, %c0_18, %c0_19] : memref<1x1x32xf32, #tpu.memory_space<vmem>>, vector<1x1x32xf32>
    %15 = vector.shape_cast %14 : vector<1x1x32xf32> to vector<1x32xf32>
    %c0_20 = arith.constant 0 : index
    %c0_21 = arith.constant 0 : index
    %c0_22 = arith.constant 0 : index
    %16 = vector.load %arg12[%c0_20, %c0_21, %c0_22] : memref<1x32x64xf32, #tpu.memory_space<vmem>>, vector<1x32x64xf32>
    %17 = vector.shape_cast %16 : vector<1x32x64xf32> to vector<32x64xf32>
    %c0_23 = arith.constant 0 : index
    %c0_24 = arith.constant 0 : index
    %c0_25 = arith.constant 0 : index
    %18 = vector.load %arg13[%c0_23, %c0_24, %c0_25] : memref<1x1x64xf32, #tpu.memory_space<vmem>>, vector<1x1x64xf32>
    %19 = vector.shape_cast %18 : vector<1x1x64xf32> to vector<1x64xf32>
    %c0_26 = arith.constant 0 : index
    %c0_27 = arith.constant 0 : index
    %c0_28 = arith.constant 0 : index
    %20 = vector.load %arg14[%c0_26, %c0_27, %c0_28] : memref<1x64x32xf32, #tpu.memory_space<vmem>>, vector<1x64x32xf32>
    %21 = vector.shape_cast %20 : vector<1x64x32xf32> to vector<64x32xf32>
    %c0_29 = arith.constant 0 : index
    %c0_30 = arith.constant 0 : index
    %c0_31 = arith.constant 0 : index
    %22 = vector.load %arg15[%c0_29, %c0_30, %c0_31] : memref<1x1x32xf32, #tpu.memory_space<vmem>>, vector<1x1x32xf32>
    %23 = vector.shape_cast %22 : vector<1x1x32xf32> to vector<1x32xf32>
    %c0_32 = arith.constant 0 : index
    %c0_33 = arith.constant 0 : index
    %c0_34 = arith.constant 0 : index
    %24 = vector.load %arg16[%c0_32, %c0_33, %c0_34] : memref<1x1x32xf32, #tpu.memory_space<vmem>>, vector<1x1x32xf32>
    %25 = vector.shape_cast %24 : vector<1x1x32xf32> to vector<1x32xf32>
    %c0_35 = arith.constant 0 : index
    %c0_36 = arith.constant 0 : index
    %c0_37 = arith.constant 0 : index
    %26 = vector.load %arg17[%c0_35, %c0_36, %c0_37] : memref<1x1x32xf32, #tpu.memory_space<vmem>>, vector<1x1x32xf32>
    %27 = vector.shape_cast %26 : vector<1x1x32xf32> to vector<1x32xf32>
    %cst = arith.constant dense<0.000000e+00> : vector<16x96xf32>
    %28 = tpu.matmul %3, %5, %cst {dimension_numbers = #tpu.dot_dimension_numbers<[1], [0], [0], [1], [0, 0, 1, 1], [], []>} : vector<16x32xf32>, vector<32x96xf32>, vector<16x96xf32> -> vector<16x96xf32>
    %29 = vector.broadcast %7 : vector<1x96xf32> to vector<16x96xf32>
    %30 = arith.addf %28, %29 : vector<16x96xf32>
    %31 = vector.extract_strided_slice %30 {offsets = [0, 0], sizes = [8, 8], strides = [1, 1]} : vector<16x96xf32> to vector<8x8xf32>
    %32 = vector.extract_strided_slice %30 {offsets = [0, 32], sizes = [8, 8], strides = [1, 1]} : vector<16x96xf32> to vector<8x8xf32>
    %33 = vector.extract_strided_slice %30 {offsets = [0, 64], sizes = [8, 8], strides = [1, 1]} : vector<16x96xf32> to vector<8x8xf32>
    %cst_38 = arith.constant dense<0.000000e+00> : vector<8x8xf32>
    %34 = tpu.matmul %31, %32, %cst_38 {dimension_numbers = #tpu.dot_dimension_numbers<[1], [1], [0], [0], [0, 0, 1, 0], [], []>} : vector<8x8xf32>, vector<8x8xf32>, vector<8x8xf32> -> vector<8x8xf32>
    %cst_39 = arith.constant 0.353553385 : f32
    %35 = vector.broadcast %cst_39 : f32 to vector<8x8xf32>
    %36 = arith.mulf %34, %35 : vector<8x8xf32>
    %cst_40 = arith.constant dense<0xFF800000> : vector<8xf32>
    %37 = vector.multi_reduction <maximumf>, %36, %cst_40 [1] : vector<8x8xf32> to vector<8xf32>
    %38 = vector.shape_cast %37 : vector<8xf32> to vector<8x1xf32>
    %39 = vector.broadcast %38 : vector<8x1xf32> to vector<8x8xf32>
    %40 = arith.subf %36, %39 : vector<8x8xf32>
    %41 = math.exp %40 : vector<8x8xf32>
    %cst_41 = arith.constant dense<0.000000e+00> : vector<8xf32>
    %42 = vector.multi_reduction <add>, %41, %cst_41 [1] : vector<8x8xf32> to vector<8xf32>
    %43 = vector.shape_cast %42 : vector<8xf32> to vector<8x1xf32>
    %44 = tpu.reciprocal %43 {approx = true} : vector<8x1xf32> -> vector<8x1xf32>
    %45 = vector.broadcast %44 : vector<8x1xf32> to vector<8x8xf32>
    %46 = arith.mulf %41, %45 : vector<8x8xf32>
    %cst_42 = arith.constant dense<0.000000e+00> : vector<8x8xf32>
    %47 = tpu.matmul %46, %33, %cst_42 {dimension_numbers = #tpu.dot_dimension_numbers<[1], [0], [0], [1], [0, 0, 1, 1], [], []>} : vector<8x8xf32>, vector<8x8xf32>, vector<8x8xf32> -> vector<8x8xf32>
    %c0_43 = arith.constant 0 : index
    %c0_44 = arith.constant 0 : index
    %48 = vector.load %arg20[%c0_43, %c0_44] : memref<16x32xf32, #tpu.memory_space<vmem>>, vector<8x8xf32>
    tpu.vector_store %arg20[%c0_43, %c0_44], %47 {strides = array<i32>} : memref<16x32xf32, #tpu.memory_space<vmem>>, vector<8x8xf32>,
    %49 = vector.extract_strided_slice %30 {offsets = [0, 8], sizes = [8, 8], strides = [1, 1]} : vector<16x96xf32> to vector<8x8xf32>
    %50 = vector.extract_strided_slice %30 {offsets = [0, 40], sizes = [8, 8], strides = [1, 1]} : vector<16x96xf32> to vector<8x8xf32>
    %51 = vector.extract_strided_slice %30 {offsets = [0, 72], sizes = [8, 8], strides = [1, 1]} : vector<16x96xf32> to vector<8x8xf32>
    %cst_45 = arith.constant dense<0.000000e+00> : vector<8x8xf32>
    %52 = tpu.matmul %49, %50, %cst_45 {dimension_numbers = #tpu.dot_dimension_numbers<[1], [1], [0], [0], [0, 0, 1, 0], [], []>} : vector<8x8xf32>, vector<8x8xf32>, vector<8x8xf32> -> vector<8x8xf32>
    %cst_46 = arith.constant 0.353553385 : f32
    %53 = vector.broadcast %cst_46 : f32 to vector<8x8xf32>
    %54 = arith.mulf %52, %53 : vector<8x8xf32>
    %cst_47 = arith.constant dense<0xFF800000> : vector<8xf32>
    %55 = vector.multi_reduction <maximumf>, %54, %cst_47 [1] : vector<8x8xf32> to vector<8xf32>
    %56 = vector.shape_cast %55 : vector<8xf32> to vector<8x1xf32>
    %57 = vector.broadcast %56 : vector<8x1xf32> to vector<8x8xf32>
    %58 = arith.subf %54, %57 : vector<8x8xf32>
    %59 = math.exp %58 : vector<8x8xf32>
    %cst_48 = arith.constant dense<0.000000e+00> : vector<8xf32>
    %60 = vector.multi_reduction <add>, %59, %cst_48 [1] : vector<8x8xf32> to vector<8xf32>
    %61 = vector.shape_cast %60 : vector<8xf32> to vector<8x1xf32>
    %62 = tpu.reciprocal %61 {approx = true} : vector<8x1xf32> -> vector<8x1xf32>
    %63 = vector.broadcast %62 : vector<8x1xf32> to vector<8x8xf32>
    %64 = arith.mulf %59, %63 : vector<8x8xf32>
    %cst_49 = arith.constant dense<0.000000e+00> : vector<8x8xf32>
    %65 = tpu.matmul %64, %51, %cst_49 {dimension_numbers = #tpu.dot_dimension_numbers<[1], [0], [0], [1], [0, 0, 1, 1], [], []>} : vector<8x8xf32>, vector<8x8xf32>, vector<8x8xf32> -> vector<8x8xf32>
    %c0_50 = arith.constant 0 : index
    %c8 = arith.constant 8 : index
    %66 = vector.load %arg20[%c0_50, %c8] : memref<16x32xf32, #tpu.memory_space<vmem>>, vector<8x8xf32>
    tpu.vector_store %arg20[%c0_50, %c8], %65 {strides = array<i32>} : memref<16x32xf32, #tpu.memory_space<vmem>>, vector<8x8xf32>,
    %67 = vector.extract_strided_slice %30 {offsets = [0, 16], sizes = [8, 8], strides = [1, 1]} : vector<16x96xf32> to vector<8x8xf32>
    %68 = vector.extract_strided_slice %30 {offsets = [0, 48], sizes = [8, 8], strides = [1, 1]} : vector<16x96xf32> to vector<8x8xf32>
    %69 = vector.extract_strided_slice %30 {offsets = [0, 80], sizes = [8, 8], strides = [1, 1]} : vector<16x96xf32> to vector<8x8xf32>
    %cst_51 = arith.constant dense<0.000000e+00> : vector<8x8xf32>
    %70 = tpu.matmul %67, %68, %cst_51 {dimension_numbers = #tpu.dot_dimension_numbers<[1], [1], [0], [0], [0, 0, 1, 0], [], []>} : vector<8x8xf32>, vector<8x8xf32>, vector<8x8xf32> -> vector<8x8xf32>
    %cst_52 = arith.constant 0.353553385 : f32
    %71 = vector.broadcast %cst_52 : f32 to vector<8x8xf32>
    %72 = arith.mulf %70, %71 : vector<8x8xf32>
    %cst_53 = arith.constant dense<0xFF800000> : vector<8xf32>
    %73 = vector.multi_reduction <maximumf>, %72, %cst_53 [1] : vector<8x8xf32> to vector<8xf32>
    %74 = vector.shape_cast %73 : vector<8xf32> to vector<8x1xf32>
    %75 = vector.broadcast %74 : vector<8x1xf32> to vector<8x8xf32>
    %76 = arith.subf %72, %75 : vector<8x8xf32>
    %77 = math.exp %76 : vector<8x8xf32>
    %cst_54 = arith.constant dense<0.000000e+00> : vector<8xf32>
    %78 = vector.multi_reduction <add>, %77, %cst_54 [1] : vector<8x8xf32> to vector<8xf32>
    %79 = vector.shape_cast %78 : vector<8xf32> to vector<8x1xf32>
    %80 = tpu.reciprocal %79 {approx = true} : vector<8x1xf32> -> vector<8x1xf32>
    %81 = vector.broadcast %80 : vector<8x1xf32> to vector<8x8xf32>
    %82 = arith.mulf %77, %81 : vector<8x8xf32>
    %cst_55 = arith.constant dense<0.000000e+00> : vector<8x8xf32>
    %83 = tpu.matmul %82, %69, %cst_55 {dimension_numbers = #tpu.dot_dimension_numbers<[1], [0], [0], [1], [0, 0, 1, 1], [], []>} : vector<8x8xf32>, vector<8x8xf32>, vector<8x8xf32> -> vector<8x8xf32>
    %c0_56 = arith.constant 0 : index
    %c16 = arith.constant 16 : index
    %84 = vector.load %arg20[%c0_56, %c16] : memref<16x32xf32, #tpu.memory_space<vmem>>, vector<8x8xf32>
    tpu.vector_store %arg20[%c0_56, %c16], %83 {strides = array<i32>} : memref<16x32xf32, #tpu.memory_space<vmem>>, vector<8x8xf32>,
    %85 = vector.extract_strided_slice %30 {offsets = [0, 24], sizes = [8, 8], strides = [1, 1]} : vector<16x96xf32> to vector<8x8xf32>
    %86 = vector.extract_strided_slice %30 {offsets = [0, 56], sizes = [8, 8], strides = [1, 1]} : vector<16x96xf32> to vector<8x8xf32>
    %87 = vector.extract_strided_slice %30 {offsets = [0, 88], sizes = [8, 8], strides = [1, 1]} : vector<16x96xf32> to vector<8x8xf32>
    %cst_57 = arith.constant dense<0.000000e+00> : vector<8x8xf32>
    %88 = tpu.matmul %85, %86, %cst_57 {dimension_numbers = #tpu.dot_dimension_numbers<[1], [1], [0], [0], [0, 0, 1, 0], [], []>} : vector<8x8xf32>, vector<8x8xf32>, vector<8x8xf32> -> vector<8x8xf32>
    %cst_58 = arith.constant 0.353553385 : f32
    %89 = vector.broadcast %cst_58 : f32 to vector<8x8xf32>
    %90 = arith.mulf %88, %89 : vector<8x8xf32>
    %cst_59 = arith.constant dense<0xFF800000> : vector<8xf32>
    %91 = vector.multi_reduction <maximumf>, %90, %cst_59 [1] : vector<8x8xf32> to vector<8xf32>
    %92 = vector.shape_cast %91 : vector<8xf32> to vector<8x1xf32>
    %93 = vector.broadcast %92 : vector<8x1xf32> to vector<8x8xf32>
    %94 = arith.subf %90, %93 : vector<8x8xf32>
    %95 = math.exp %94 : vector<8x8xf32>
    %cst_60 = arith.constant dense<0.000000e+00> : vector<8xf32>
    %96 = vector.multi_reduction <add>, %95, %cst_60 [1] : vector<8x8xf32> to vector<8xf32>
    %97 = vector.shape_cast %96 : vector<8xf32> to vector<8x1xf32>
    %98 = tpu.reciprocal %97 {approx = true} : vector<8x1xf32> -> vector<8x1xf32>
    %99 = vector.broadcast %98 : vector<8x1xf32> to vector<8x8xf32>
    %100 = arith.mulf %95, %99 : vector<8x8xf32>
    %cst_61 = arith.constant dense<0.000000e+00> : vector<8x8xf32>
    %101 = tpu.matmul %100, %87, %cst_61 {dimension_numbers = #tpu.dot_dimension_numbers<[1], [0], [0], [1], [0, 0, 1, 1], [], []>} : vector<8x8xf32>, vector<8x8xf32>, vector<8x8xf32> -> vector<8x8xf32>
    %c0_62 = arith.constant 0 : index
    %c24 = arith.constant 24 : index
    %102 = vector.load %arg20[%c0_62, %c24] : memref<16x32xf32, #tpu.memory_space<vmem>>, vector<8x8xf32>
    tpu.vector_store %arg20[%c0_62, %c24], %101 {strides = array<i32>} : memref<16x32xf32, #tpu.memory_space<vmem>>, vector<8x8xf32>,
    %103 = vector.extract_strided_slice %30 {offsets = [8, 0], sizes = [8, 8], strides = [1, 1]} : vector<16x96xf32> to vector<8x8xf32>
    %104 = vector.extract_strided_slice %30 {offsets = [8, 32], sizes = [8, 8], strides = [1, 1]} : vector<16x96xf32> to vector<8x8xf32>
    %105 = vector.extract_strided_slice %30 {offsets = [8, 64], sizes = [8, 8], strides = [1, 1]} : vector<16x96xf32> to vector<8x8xf32>
    %cst_63 = arith.constant dense<0.000000e+00> : vector<8x8xf32>
    %106 = tpu.matmul %103, %104, %cst_63 {dimension_numbers = #tpu.dot_dimension_numbers<[1], [1], [0], [0], [0, 0, 1, 0], [], []>} : vector<8x8xf32>, vector<8x8xf32>, vector<8x8xf32> -> vector<8x8xf32>
    %cst_64 = arith.constant 0.353553385 : f32
    %107 = vector.broadcast %cst_64 : f32 to vector<8x8xf32>
    %108 = arith.mulf %106, %107 : vector<8x8xf32>
    %cst_65 = arith.constant dense<0xFF800000> : vector<8xf32>
    %109 = vector.multi_reduction <maximumf>, %108, %cst_65 [1] : vector<8x8xf32> to vector<8xf32>
    %110 = vector.shape_cast %109 : vector<8xf32> to vector<8x1xf32>
    %111 = vector.broadcast %110 : vector<8x1xf32> to vector<8x8xf32>
    %112 = arith.subf %108, %111 : vector<8x8xf32>
    %113 = math.exp %112 : vector<8x8xf32>
    %cst_66 = arith.constant dense<0.000000e+00> : vector<8xf32>
    %114 = vector.multi_reduction <add>, %113, %cst_66 [1] : vector<8x8xf32> to vector<8xf32>
    %115 = vector.shape_cast %114 : vector<8xf32> to vector<8x1xf32>
    %116 = tpu.reciprocal %115 {approx = true} : vector<8x1xf32> -> vector<8x1xf32>
    %117 = vector.broadcast %116 : vector<8x1xf32> to vector<8x8xf32>
    %118 = arith.mulf %113, %117 : vector<8x8xf32>
    %cst_67 = arith.constant dense<0.000000e+00> : vector<8x8xf32>
    %119 = tpu.matmul %118, %105, %cst_67 {dimension_numbers = #tpu.dot_dimension_numbers<[1], [0], [0], [1], [0, 0, 1, 1], [], []>} : vector<8x8xf32>, vector<8x8xf32>, vector<8x8xf32> -> vector<8x8xf32>
    %c8_68 = arith.constant 8 : index
    %c0_69 = arith.constant 0 : index
    %120 = vector.load %arg20[%c8_68, %c0_69] : memref<16x32xf32, #tpu.memory_space<vmem>>, vector<8x8xf32>
    tpu.vector_store %arg20[%c8_68, %c0_69], %119 {strides = array<i32>} : memref<16x32xf32, #tpu.memory_space<vmem>>, vector<8x8xf32>,
    %121 = vector.extract_strided_slice %30 {offsets = [8, 8], sizes = [8, 8], strides = [1, 1]} : vector<16x96xf32> to vector<8x8xf32>
    %122 = vector.extract_strided_slice %30 {offsets = [8, 40], sizes = [8, 8], strides = [1, 1]} : vector<16x96xf32> to vector<8x8xf32>
    %123 = vector.extract_strided_slice %30 {offsets = [8, 72], sizes = [8, 8], strides = [1, 1]} : vector<16x96xf32> to vector<8x8xf32>
    %cst_70 = arith.constant dense<0.000000e+00> : vector<8x8xf32>
    %124 = tpu.matmul %121, %122, %cst_70 {dimension_numbers = #tpu.dot_dimension_numbers<[1], [1], [0], [0], [0, 0, 1, 0], [], []>} : vector<8x8xf32>, vector<8x8xf32>, vector<8x8xf32> -> vector<8x8xf32>
    %cst_71 = arith.constant 0.353553385 : f32
    %125 = vector.broadcast %cst_71 : f32 to vector<8x8xf32>
    %126 = arith.mulf %124, %125 : vector<8x8xf32>
    %cst_72 = arith.constant dense<0xFF800000> : vector<8xf32>
    %127 = vector.multi_reduction <maximumf>, %126, %cst_72 [1] : vector<8x8xf32> to vector<8xf32>
    %128 = vector.shape_cast %127 : vector<8xf32> to vector<8x1xf32>
    %129 = vector.broadcast %128 : vector<8x1xf32> to vector<8x8xf32>
    %130 = arith.subf %126, %129 : vector<8x8xf32>
    %131 = math.exp %130 : vector<8x8xf32>
    %cst_73 = arith.constant dense<0.000000e+00> : vector<8xf32>
    %132 = vector.multi_reduction <add>, %131, %cst_73 [1] : vector<8x8xf32> to vector<8xf32>
    %133 = vector.shape_cast %132 : vector<8xf32> to vector<8x1xf32>
    %134 = tpu.reciprocal %133 {approx = true} : vector<8x1xf32> -> vector<8x1xf32>
    %135 = vector.broadcast %134 : vector<8x1xf32> to vector<8x8xf32>
    %136 = arith.mulf %131, %135 : vector<8x8xf32>
    %cst_74 = arith.constant dense<0.000000e+00> : vector<8x8xf32>
    %137 = tpu.matmul %136, %123, %cst_74 {dimension_numbers = #tpu.dot_dimension_numbers<[1], [0], [0], [1], [0, 0, 1, 1], [], []>} : vector<8x8xf32>, vector<8x8xf32>, vector<8x8xf32> -> vector<8x8xf32>
    %c8_75 = arith.constant 8 : index
    %c8_76 = arith.constant 8 : index
    %138 = vector.load %arg20[%c8_75, %c8_76] : memref<16x32xf32, #tpu.memory_space<vmem>>, vector<8x8xf32>
    tpu.vector_store %arg20[%c8_75, %c8_76], %137 {strides = array<i32>} : memref<16x32xf32, #tpu.memory_space<vmem>>, vector<8x8xf32>,
    %139 = vector.extract_strided_slice %30 {offsets = [8, 16], sizes = [8, 8], strides = [1, 1]} : vector<16x96xf32> to vector<8x8xf32>
    %140 = vector.extract_strided_slice %30 {offsets = [8, 48], sizes = [8, 8], strides = [1, 1]} : vector<16x96xf32> to vector<8x8xf32>
    %141 = vector.extract_strided_slice %30 {offsets = [8, 80], sizes = [8, 8], strides = [1, 1]} : vector<16x96xf32> to vector<8x8xf32>
    %cst_77 = arith.constant dense<0.000000e+00> : vector<8x8xf32>
    %142 = tpu.matmul %139, %140, %cst_77 {dimension_numbers = #tpu.dot_dimension_numbers<[1], [1], [0], [0], [0, 0, 1, 0], [], []>} : vector<8x8xf32>, vector<8x8xf32>, vector<8x8xf32> -> vector<8x8xf32>
    %cst_78 = arith.constant 0.353553385 : f32
    %143 = vector.broadcast %cst_78 : f32 to vector<8x8xf32>
    %144 = arith.mulf %142, %143 : vector<8x8xf32>
    %cst_79 = arith.constant dense<0xFF800000> : vector<8xf32>
    %145 = vector.multi_reduction <maximumf>, %144, %cst_79 [1] : vector<8x8xf32> to vector<8xf32>
    %146 = vector.shape_cast %145 : vector<8xf32> to vector<8x1xf32>
    %147 = vector.broadcast %146 : vector<8x1xf32> to vector<8x8xf32>
    %148 = arith.subf %144, %147 : vector<8x8xf32>
    %149 = math.exp %148 : vector<8x8xf32>
    %cst_80 = arith.constant dense<0.000000e+00> : vector<8xf32>
    %150 = vector.multi_reduction <add>, %149, %cst_80 [1] : vector<8x8xf32> to vector<8xf32>
    %151 = vector.shape_cast %150 : vector<8xf32> to vector<8x1xf32>
    %152 = tpu.reciprocal %151 {approx = true} : vector<8x1xf32> -> vector<8x1xf32>
    %153 = vector.broadcast %152 : vector<8x1xf32> to vector<8x8xf32>
    %154 = arith.mulf %149, %153 : vector<8x8xf32>
    %cst_81 = arith.constant dense<0.000000e+00> : vector<8x8xf32>
    %155 = tpu.matmul %154, %141, %cst_81 {dimension_numbers = #tpu.dot_dimension_numbers<[1], [0], [0], [1], [0, 0, 1, 1], [], []>} : vector<8x8xf32>, vector<8x8xf32>, vector<8x8xf32> -> vector<8x8xf32>
    %c8_82 = arith.constant 8 : index
    %c16_83 = arith.constant 16 : index
    %156 = vector.load %arg20[%c8_82, %c16_83] : memref<16x32xf32, #tpu.memory_space<vmem>>, vector<8x8xf32>
    tpu.vector_store %arg20[%c8_82, %c16_83], %155 {strides = array<i32>} : memref<16x32xf32, #tpu.memory_space<vmem>>, vector<8x8xf32>,
    %157 = vector.extract_strided_slice %30 {offsets = [8, 24], sizes = [8, 8], strides = [1, 1]} : vector<16x96xf32> to vector<8x8xf32>
    %158 = vector.extract_strided_slice %30 {offsets = [8, 56], sizes = [8, 8], strides = [1, 1]} : vector<16x96xf32> to vector<8x8xf32>
    %159 = vector.extract_strided_slice %30 {offsets = [8, 88], sizes = [8, 8], strides = [1, 1]} : vector<16x96xf32> to vector<8x8xf32>
    %cst_84 = arith.constant dense<0.000000e+00> : vector<8x8xf32>
    %160 = tpu.matmul %157, %158, %cst_84 {dimension_numbers = #tpu.dot_dimension_numbers<[1], [1], [0], [0], [0, 0, 1, 0], [], []>} : vector<8x8xf32>, vector<8x8xf32>, vector<8x8xf32> -> vector<8x8xf32>
    %cst_85 = arith.constant 0.353553385 : f32
    %161 = vector.broadcast %cst_85 : f32 to vector<8x8xf32>
    %162 = arith.mulf %160, %161 : vector<8x8xf32>
    %cst_86 = arith.constant dense<0xFF800000> : vector<8xf32>
    %163 = vector.multi_reduction <maximumf>, %162, %cst_86 [1] : vector<8x8xf32> to vector<8xf32>
    %164 = vector.shape_cast %163 : vector<8xf32> to vector<8x1xf32>
    %165 = vector.broadcast %164 : vector<8x1xf32> to vector<8x8xf32>
    %166 = arith.subf %162, %165 : vector<8x8xf32>
    %167 = math.exp %166 : vector<8x8xf32>
    %cst_87 = arith.constant dense<0.000000e+00> : vector<8xf32>
    %168 = vector.multi_reduction <add>, %167, %cst_87 [1] : vector<8x8xf32> to vector<8xf32>
    %169 = vector.shape_cast %168 : vector<8xf32> to vector<8x1xf32>
    %170 = tpu.reciprocal %169 {approx = true} : vector<8x1xf32> -> vector<8x1xf32>
    %171 = vector.broadcast %170 : vector<8x1xf32> to vector<8x8xf32>
    %172 = arith.mulf %167, %171 : vector<8x8xf32>
    %cst_88 = arith.constant dense<0.000000e+00> : vector<8x8xf32>
    %173 = tpu.matmul %172, %159, %cst_88 {dimension_numbers = #tpu.dot_dimension_numbers<[1], [0], [0], [1], [0, 0, 1, 1], [], []>} : vector<8x8xf32>, vector<8x8xf32>, vector<8x8xf32> -> vector<8x8xf32>
    %c8_89 = arith.constant 8 : index
    %c24_90 = arith.constant 24 : index
    %174 = vector.load %arg20[%c8_89, %c24_90] : memref<16x32xf32, #tpu.memory_space<vmem>>, vector<8x8xf32>
    tpu.vector_store %arg20[%c8_89, %c24_90], %173 {strides = array<i32>} : memref<16x32xf32, #tpu.memory_space<vmem>>, vector<8x8xf32>,
    %c0_91 = arith.constant 0 : index
    %c0_92 = arith.constant 0 : index
    %175 = vector.load %arg20[%c0_91, %c0_92] : memref<16x32xf32, #tpu.memory_space<vmem>>, vector<16x32xf32>
    %cst_93 = arith.constant dense<0.000000e+00> : vector<16x32xf32>
    %176 = tpu.matmul %175, %9, %cst_93 {dimension_numbers = #tpu.dot_dimension_numbers<[1], [0], [0], [1], [0, 0, 1, 1], [], []>} : vector<16x32xf32>, vector<32x32xf32>, vector<16x32xf32> -> vector<16x32xf32>
    %177 = vector.broadcast %11 : vector<1x32xf32> to vector<16x32xf32>
    %178 = arith.addf %176, %177 : vector<16x32xf32>
    %179 = arith.addf %3, %178 : vector<16x32xf32>
    %cst_94 = arith.constant dense<0.000000e+00> : vector<16xf32>
    %180 = vector.multi_reduction <add>, %179, %cst_94 [1] : vector<16x32xf32> to vector<16xf32>
    %181 = vector.shape_cast %180 : vector<16xf32> to vector<16x1xf32>
    %cst_95 = arith.constant 3.200000e+01 : f32
    %182 = vector.broadcast %cst_95 : f32 to vector<16x1xf32>
    %183 = arith.divf %181, %182 : vector<16x1xf32>
    %184 = vector.broadcast %183 : vector<16x1xf32> to vector<16x32xf32>
    %185 = arith.subf %179, %184 : vector<16x32xf32>
    %186 = arith.mulf %185, %185 : vector<16x32xf32>
    %cst_96 = arith.constant dense<0.000000e+00> : vector<16xf32>
    %187 = vector.multi_reduction <add>, %186, %cst_96 [1] : vector<16x32xf32> to vector<16xf32>
    %188 = vector.shape_cast %187 : vector<16xf32> to vector<16x1xf32>
    %cst_97 = arith.constant 3.200000e+01 : f32
    %189 = vector.broadcast %cst_97 : f32 to vector<16x1xf32>
    %190 = arith.divf %188, %189 : vector<16x1xf32>
    %cst_98 = arith.constant 9.99999997E-7 : f32
    %191 = vector.broadcast %cst_98 : f32 to vector<16x1xf32>
    %192 = arith.addf %190, %191 : vector<16x1xf32>
    %193 = math.rsqrt %192 : vector<16x1xf32>
    %194 = vector.broadcast %193 : vector<16x1xf32> to vector<16x32xf32>
    %195 = arith.mulf %185, %194 : vector<16x32xf32>
    %196 = vector.broadcast %13 : vector<1x32xf32> to vector<16x32xf32>
    %197 = arith.mulf %195, %196 : vector<16x32xf32>
    %198 = vector.broadcast %15 : vector<1x32xf32> to vector<16x32xf32>
    %199 = arith.addf %197, %198 : vector<16x32xf32>
    %cst_99 = arith.constant dense<0.000000e+00> : vector<16x64xf32>
    %200 = tpu.matmul %199, %17, %cst_99 {dimension_numbers = #tpu.dot_dimension_numbers<[1], [0], [0], [1], [0, 0, 1, 1], [], []>} : vector<16x32xf32>, vector<32x64xf32>, vector<16x64xf32> -> vector<16x64xf32>
    %201 = vector.broadcast %19 : vector<1x64xf32> to vector<16x64xf32>
    %202 = arith.addf %200, %201 : vector<16x64xf32>
    %cst_100 = arith.constant 0.000000e+00 : f32
    %203 = vector.broadcast %cst_100 : f32 to vector<16x64xf32>
    %204 = arith.maximumf %202, %203 : vector<16x64xf32>
    %cst_101 = arith.constant dense<0.000000e+00> : vector<16x32xf32>
    %205 = tpu.matmul %204, %21, %cst_101 {dimension_numbers = #tpu.dot_dimension_numbers<[1], [0], [0], [1], [0, 0, 1, 1], [], []>} : vector<16x64xf32>, vector<64x32xf32>, vector<16x32xf32> -> vector<16x32xf32>
    %206 = vector.broadcast %23 : vector<1x32xf32> to vector<16x32xf32>
    %207 = arith.addf %205, %206 : vector<16x32xf32>
    %208 = arith.addf %199, %207 : vector<16x32xf32>
    %cst_102 = arith.constant dense<0.000000e+00> : vector<16xf32>
    %209 = vector.multi_reduction <add>, %208, %cst_102 [1] : vector<16x32xf32> to vector<16xf32>
    %210 = vector.shape_cast %209 : vector<16xf32> to vector<16x1xf32>
    %cst_103 = arith.constant 3.200000e+01 : f32
    %211 = vector.broadcast %cst_103 : f32 to vector<16x1xf32>
    %212 = arith.divf %210, %211 : vector<16x1xf32>
    %213 = vector.broadcast %212 : vector<16x1xf32> to vector<16x32xf32>
    %214 = arith.subf %208, %213 : vector<16x32xf32>
    %215 = arith.mulf %214, %214 : vector<16x32xf32>
    %cst_104 = arith.constant dense<0.000000e+00> : vector<16xf32>
    %216 = vector.multi_reduction <add>, %215, %cst_104 [1] : vector<16x32xf32> to vector<16xf32>
    %217 = vector.shape_cast %216 : vector<16xf32> to vector<16x1xf32>
    %cst_105 = arith.constant 3.200000e+01 : f32
    %218 = vector.broadcast %cst_105 : f32 to vector<16x1xf32>
    %219 = arith.divf %217, %218 : vector<16x1xf32>
    %cst_106 = arith.constant 9.99999997E-7 : f32
    %220 = vector.broadcast %cst_106 : f32 to vector<16x1xf32>
    %221 = arith.addf %219, %220 : vector<16x1xf32>
    %222 = math.rsqrt %221 : vector<16x1xf32>
    %223 = vector.broadcast %222 : vector<16x1xf32> to vector<16x32xf32>
    %224 = arith.mulf %214, %223 : vector<16x32xf32>
    %225 = vector.broadcast %25 : vector<1x32xf32> to vector<16x32xf32>
    %226 = arith.mulf %224, %225 : vector<16x32xf32>
    %227 = vector.broadcast %27 : vector<1x32xf32> to vector<16x32xf32>
    %228 = arith.addf %226, %227 : vector<16x32xf32>
    %c0_107 = arith.constant 0 : index
    %c0_108 = arith.constant 0 : index
    %229 = vector.load %arg19[%c0_107, %c0_108] : memref<16x32xf32, #tpu.memory_space<vmem>>, vector<16x32xf32>
    tpu.vector_store %arg19[%c0_107, %c0_108], %228 {strides = array<i32>} : memref<16x32xf32, #tpu.memory_space<vmem>>, vector<16x32xf32>,
    %c1_i32 = arith.constant 1 : i32
    %230 = arith.cmpi eq, %arg1, %c1_i32 : i32
    %231 = arith.extui %230 : i1 to i32
    %c0_i32_109 = arith.constant 0 : i32
    %232 = arith.cmpi ne, %231, %c0_i32_109 : i32
    scf.if %232 {
      %233 = vector.shape_cast %228 : vector<16x32xf32> to vector<2x8x32xf32>
      %c0_110 = arith.constant 0 : index
      %c0_111 = arith.constant 0 : index
      %c0_112 = arith.constant 0 : index
      %234 = vector.load %arg18[%c0_110, %c0_111, %c0_112] : memref<2x8x32xf32, #tpu.memory_space<vmem>>, vector<2x8x32xf32>
      tpu.vector_store %arg18[%c0_110, %c0_111, %c0_112], %233 {strides = array<i32>} : memref<2x8x32xf32, #tpu.memory_space<vmem>>, vector<2x8x32xf32>,
    } else {
    }
    return
  }
  func.func @transform_0(%arg0: i32, %arg1: i32) -> (i32, i32, i32) {
    %c0_i32 = arith.constant 0 : i32
    %c0_i32_0 = arith.constant 0 : i32
    %c0_i32_1 = arith.constant 0 : i32
    return %arg0, %c0_i32, %c0_i32_0 : i32, i32, i32
  }
  func.func @transform_1(%arg0: i32, %arg1: i32) -> (i32, i32) {
    %c0_i32 = arith.constant 0 : i32
    %c0_i32_0 = arith.constant 0 : i32
    %c0_i32_1 = arith.constant 0 : i32
    return %c0_i32, %c0_i32_0 : i32, i32
  }
  func.func @transform_2(%arg0: i32, %arg1: i32) -> (i32, i32) {
    %c0_i32 = arith.constant 0 : i32
    %c0_i32_0 = arith.constant 0 : i32
    %c0_i32_1 = arith.constant 0 : i32
    return %c0_i32, %c0_i32_0 : i32, i32
  }
  func.func @transform_3(%arg0: i32, %arg1: i32) -> (i32, i32) {
    %c0_i32 = arith.constant 0 : i32
    %c0_i32_0 = arith.constant 0 : i32
    %c0_i32_1 = arith.constant 0 : i32
    return %c0_i32, %c0_i32_0 : i32, i32
  }
  func.func @transform_4(%arg0: i32, %arg1: i32) -> (i32, i32, i32) {
    %c0_i32 = arith.constant 0 : i32
    %c0_i32_0 = arith.constant 0 : i32
    %c0_i32_1 = arith.constant 0 : i32
    return %arg1, %c0_i32, %c0_i32_0 : i32, i32, i32
  }
  func.func @transform_5(%arg0: i32, %arg1: i32) -> (i32, i32, i32) {
    %c0_i32 = arith.constant 0 : i32
    %c0_i32_0 = arith.constant 0 : i32
    %c0_i32_1 = arith.constant 0 : i32
    return %arg1, %c0_i32, %c0_i32_0 : i32, i32, i32
  }
  func.func @transform_6(%arg0: i32, %arg1: i32) -> (i32, i32, i32) {
    %c0_i32 = arith.constant 0 : i32
    %c0_i32_0 = arith.constant 0 : i32
    %c0_i32_1 = arith.constant 0 : i32
    return %arg1, %c0_i32, %c0_i32_0 : i32, i32, i32
  }
  func.func @transform_7(%arg0: i32, %arg1: i32) -> (i32, i32, i32) {
    %c0_i32 = arith.constant 0 : i32
    %c0_i32_0 = arith.constant 0 : i32
    %c0_i32_1 = arith.constant 0 : i32
    return %arg1, %c0_i32, %c0_i32_0 : i32, i32, i32
  }
  func.func @transform_8(%arg0: i32, %arg1: i32) -> (i32, i32, i32) {
    %c0_i32 = arith.constant 0 : i32
    %c0_i32_0 = arith.constant 0 : i32
    %c0_i32_1 = arith.constant 0 : i32
    return %arg1, %c0_i32, %c0_i32_0 : i32, i32, i32
  }
  func.func @transform_9(%arg0: i32, %arg1: i32) -> (i32, i32, i32) {
    %c0_i32 = arith.constant 0 : i32
    %c0_i32_0 = arith.constant 0 : i32
    %c0_i32_1 = arith.constant 0 : i32
    return %arg1, %c0_i32, %c0_i32_0 : i32, i32, i32
  }
  func.func @transform_10(%arg0: i32, %arg1: i32) -> (i32, i32, i32) {
    %c0_i32 = arith.constant 0 : i32
    %c0_i32_0 = arith.constant 0 : i32
    %c0_i32_1 = arith.constant 0 : i32
    return %arg1, %c0_i32, %c0_i32_0 : i32, i32, i32
  }
  func.func @transform_11(%arg0: i32, %arg1: i32) -> (i32, i32, i32) {
    %c0_i32 = arith.constant 0 : i32
    %c0_i32_0 = arith.constant 0 : i32
    %c0_i32_1 = arith.constant 0 : i32
    return %arg1, %c0_i32, %c0_i32_0 : i32, i32, i32
  }
  func.func @transform_12(%arg0: i32, %arg1: i32) -> (i32, i32, i32) {
    %c0_i32 = arith.constant 0 : i32
    %c0_i32_0 = arith.constant 0 : i32
    %c0_i32_1 = arith.constant 0 : i32
    return %arg1, %c0_i32, %c0_i32_0 : i32, i32, i32
  }
  func.func @transform_13(%arg0: i32, %arg1: i32) -> (i32, i32, i32) {
    %c0_i32 = arith.constant 0 : i32
    %c0_i32_0 = arith.constant 0 : i32
    %c0_i32_1 = arith.constant 0 : i32
    return %arg1, %c0_i32, %c0_i32_0 : i32, i32, i32
  }
  func.func @transform_14(%arg0: i32, %arg1: i32) -> (i32, i32, i32) {
    %c0_i32 = arith.constant 0 : i32
    %c0_i32_0 = arith.constant 0 : i32
    %c0_i32_1 = arith.constant 0 : i32
    return %arg1, %c0_i32, %c0_i32_0 : i32, i32, i32
  }
  func.func @transform_15(%arg0: i32, %arg1: i32) -> (i32, i32, i32) {
    %c0_i32 = arith.constant 0 : i32
    %c0_i32_0 = arith.constant 0 : i32
    %c0_i32_1 = arith.constant 0 : i32
    return %arg1, %c0_i32, %c0_i32_0 : i32, i32, i32
  }
  func.func @transform_16(%arg0: i32, %arg1: i32) -> (i32, i32, i32) {
    %c0_i32 = arith.constant 0 : i32
    %c0_i32_0 = arith.constant 0 : i32
    %c0_i32_1 = arith.constant 0 : i32
    return %arg0, %c0_i32, %c0_i32_0 : i32, i32, i32
  }
}

module attributes {stable_mosaic.version = 11 : i64} {
  func.func @_vq_kernel(%arg0: i32, %arg1: memref<16x32xf32, #tpu.memory_space<vmem>>, %arg2: memref<64x32xf32, #tpu.memory_space<vmem>>, %arg3: memref<16x32xf32, #tpu.memory_space<vmem>>, %arg4: memref<1x1x64xf32, #tpu.memory_space<vmem>>, %arg5: memref<1x1x1xf32, #tpu.memory_space<vmem>>) attributes {dimension_semantics = [#tpu.dimension_semantics<parallel>], iteration_bounds = array<i64: 1>, scalar_prefetch = 0 : i64, scratch_operands = 0 : i64, tpu.core_type = #tpu.core_type<tc>, window_params = [{transform_indices = @transform_0, window_bounds = array<i64: 16, 32>}, {pipeline_mode = #tpu.pipeline_mode<synchronous>, transform_indices = @transform_1, window_bounds = array<i64: 64, 32>}, {transform_indices = @transform_2, window_bounds = array<i64: 16, 32>}, {transform_indices = @transform_3, window_bounds = array<i64: 1, 1, 64>}, {transform_indices = @transform_4, window_bounds = array<i64: 1, 1, 1>}]} {
    %c0 = arith.constant 0 : index
    %c0_0 = arith.constant 0 : index
    %0 = vector.load %arg1[%c0, %c0_0] : memref<16x32xf32, #tpu.memory_space<vmem>>, vector<16x32xf32>
    %c0_1 = arith.constant 0 : index
    %c0_2 = arith.constant 0 : index
    %1 = vector.load %arg2[%c0_1, %c0_2] : memref<64x32xf32, #tpu.memory_space<vmem>>, vector<64x32xf32>
    %2 = arith.mulf %0, %0 : vector<16x32xf32>
    %cst = arith.constant dense<0.000000e+00> : vector<16xf32>
    %3 = vector.multi_reduction <add>, %2, %cst [1] : vector<16x32xf32> to vector<16xf32>
    %4 = vector.shape_cast %3 : vector<16xf32> to vector<16x1xf32>
    %5 = arith.mulf %1, %1 : vector<64x32xf32>
    %cst_3 = arith.constant dense<0.000000e+00> : vector<64xf32>
    %6 = vector.multi_reduction <add>, %5, %cst_3 [1] : vector<64x32xf32> to vector<64xf32>
    %7 = vector.shape_cast %6 : vector<64xf32> to vector<64x1xf32>
    %8 = tpu.transpose %7, [1, 0] : vector<64x1xf32> -> vector<1x64xf32>
    %9 = vector.broadcast %4 : vector<16x1xf32> to vector<16x64xf32>
    %10 = vector.broadcast %8 : vector<1x64xf32> to vector<16x64xf32>
    %11 = arith.addf %9, %10 : vector<16x64xf32>
    %cst_4 = arith.constant dense<0.000000e+00> : vector<16x64xf32>
    %12 = tpu.matmul %0, %1, %cst_4 {dimension_numbers = #tpu.dot_dimension_numbers<[1], [1], [0], [0], [0, 0, 1, 0], [], []>} : vector<16x32xf32>, vector<64x32xf32>, vector<16x64xf32> -> vector<16x64xf32>
    %cst_5 = arith.constant 2.000000e+00 : f32
    %13 = vector.broadcast %cst_5 : f32 to vector<16x64xf32>
    %14 = arith.mulf %13, %12 : vector<16x64xf32>
    %15 = arith.subf %11, %14 : vector<16x64xf32>
    %cst_6 = arith.constant dense<0x7F800000> : vector<16xf32>
    %16 = vector.multi_reduction <minimumf>, %15, %cst_6 [1] : vector<16x64xf32> to vector<16xf32>
    %17 = vector.shape_cast %16 : vector<16xf32> to vector<16x1xf32>
    %18 = tpu.iota {dimensions = array<i32: 1>} : vector<16x64xi32>
    %19 = vector.broadcast %17 : vector<16x1xf32> to vector<16x64xf32>
    %20 = arith.cmpf ole, %15, %19 : vector<16x64xf32>
    %c64_i32 = arith.constant 64 : i32
    %21 = vector.broadcast %c64_i32 : i32 to vector<16x64xi32>
    %22 = arith.select %20, %18, %21 : vector<16x64xi1>, vector<16x64xi32>
    %cst_7 = arith.constant dense<2147483647> : vector<16xi32>
    %23 = vector.multi_reduction <minsi>, %22, %cst_7 [1] : vector<16x64xi32> to vector<16xi32>
    %24 = vector.shape_cast %23 : vector<16xi32> to vector<16x1xi32>
    %25 = vector.broadcast %24 : vector<16x1xi32> to vector<16x64xi32>
    %26 = arith.cmpi eq, %18, %25 : vector<16x64xi32>
    %27 = arith.extui %26 : vector<16x64xi1> to vector<16x64xi32>
    %28 = arith.sitofp %27 : vector<16x64xi32> to vector<16x64xf32>
    %cst_8 = arith.constant dense<0.000000e+00> : vector<16x32xf32>
    %29 = tpu.matmul %28, %1, %cst_8 {dimension_numbers = #tpu.dot_dimension_numbers<[1], [0], [0], [1], [0, 0, 1, 1], [], []>} : vector<16x64xf32>, vector<64x32xf32>, vector<16x32xf32> -> vector<16x32xf32>
    %c0_9 = arith.constant 0 : index
    %c0_10 = arith.constant 0 : index
    %30 = vector.load %arg3[%c0_9, %c0_10] : memref<16x32xf32, #tpu.memory_space<vmem>>, vector<16x32xf32>
    tpu.vector_store %arg3[%c0_9, %c0_10], %29 {strides = array<i32>} : memref<16x32xf32, #tpu.memory_space<vmem>>, vector<16x32xf32>,
    %cst_11 = arith.constant dense<0.000000e+00> : vector<64xf32>
    %31 = vector.multi_reduction <add>, %28, %cst_11 [0] : vector<16x64xf32> to vector<64xf32>
    %32 = vector.shape_cast %31 : vector<64xf32> to vector<1x64xf32>
    %c0_12 = arith.constant 0 : index
    %c0_13 = arith.constant 0 : index
    %c0_14 = arith.constant 0 : index
    %33 = vector.load %arg4[%c0_12, %c0_13, %c0_14] : memref<1x1x64xf32, #tpu.memory_space<vmem>>, vector<1x1x64xf32>
    %34 = vector.shape_cast %33 : vector<1x1x64xf32> to vector<1x64xf32>
    %35 = vector.shape_cast %32 : vector<1x64xf32> to vector<1x1x64xf32>
    tpu.vector_store %arg4[%c0_12, %c0_13, %c0_14], %35 {strides = array<i32>} : memref<1x1x64xf32, #tpu.memory_space<vmem>>, vector<1x1x64xf32>,
    %36 = arith.subf %29, %0 : vector<16x32xf32>
    %37 = arith.mulf %36, %36 : vector<16x32xf32>
    %cst_15 = arith.constant dense<0.000000e+00> : vector<16xf32>
    %38 = vector.multi_reduction <add>, %37, %cst_15 [1] : vector<16x32xf32> to vector<16xf32>
    %39 = vector.shape_cast %38 : vector<16xf32> to vector<16x1xf32>
    %cst_16 = arith.constant dense<0.000000e+00> : vector<1xf32>
    %40 = vector.multi_reduction <add>, %39, %cst_16 [0] : vector<16x1xf32> to vector<1xf32>
    %41 = vector.shape_cast %40 : vector<1xf32> to vector<1x1xf32>
    %c0_17 = arith.constant 0 : index
    %c0_18 = arith.constant 0 : index
    %c0_19 = arith.constant 0 : index
    %42 = vector.load %arg5[%c0_17, %c0_18, %c0_19] : memref<1x1x1xf32, #tpu.memory_space<vmem>>, vector<1x1x1xf32>
    %43 = vector.shape_cast %42 : vector<1x1x1xf32> to vector<1x1xf32>
    %44 = vector.shape_cast %41 : vector<1x1xf32> to vector<1x1x1xf32>
    tpu.vector_store %arg5[%c0_17, %c0_18, %c0_19], %44 {strides = array<i32>} : memref<1x1x1xf32, #tpu.memory_space<vmem>>, vector<1x1x1xf32>,
    return
  }
  func.func @transform_0(%arg0: i32) -> (i32, i32) {
    %c0_i32 = arith.constant 0 : i32
    %c0_i32_0 = arith.constant 0 : i32
    return %arg0, %c0_i32 : i32, i32
  }
  func.func @transform_1(%arg0: i32) -> (i32, i32) {
    %c0_i32 = arith.constant 0 : i32
    %c0_i32_0 = arith.constant 0 : i32
    %c0_i32_1 = arith.constant 0 : i32
    return %c0_i32, %c0_i32_0 : i32, i32
  }
  func.func @transform_2(%arg0: i32) -> (i32, i32) {
    %c0_i32 = arith.constant 0 : i32
    %c0_i32_0 = arith.constant 0 : i32
    return %arg0, %c0_i32 : i32, i32
  }
  func.func @transform_3(%arg0: i32) -> (i32, i32, i32) {
    %c0_i32 = arith.constant 0 : i32
    %c0_i32_0 = arith.constant 0 : i32
    %c0_i32_1 = arith.constant 0 : i32
    return %arg0, %c0_i32, %c0_i32_0 : i32, i32, i32
  }
  func.func @transform_4(%arg0: i32) -> (i32, i32, i32) {
    %c0_i32 = arith.constant 0 : i32
    %c0_i32_0 = arith.constant 0 : i32
    %c0_i32_1 = arith.constant 0 : i32
    return %arg0, %c0_i32, %c0_i32_0 : i32, i32, i32
  }
}

module attributes {stable_mosaic.version = 11 : i64} {
  func.func @_decoder_stack_kernel(%arg0: i32, %arg1: i32, %arg2: memref<2x8x32xf32, #tpu.memory_space<vmem>>, %arg3: memref<16x32xf32, #tpu.memory_space<vmem>>, %arg4: memref<2x8x6xf32, #tpu.memory_space<vmem>>, %arg5: memref<32x6xf32, #tpu.memory_space<vmem>>, %arg6: memref<1x6xf32, #tpu.memory_space<vmem>>, %arg7: memref<1x32x96xf32, #tpu.memory_space<vmem>>, %arg8: memref<1x1x96xf32, #tpu.memory_space<vmem>>, %arg9: memref<1x32x32xf32, #tpu.memory_space<vmem>>, %arg10: memref<1x1x32xf32, #tpu.memory_space<vmem>>, %arg11: memref<1x1x32xf32, #tpu.memory_space<vmem>>, %arg12: memref<1x1x32xf32, #tpu.memory_space<vmem>>, %arg13: memref<1x32x64xf32, #tpu.memory_space<vmem>>, %arg14: memref<1x1x64xf32, #tpu.memory_space<vmem>>, %arg15: memref<1x64x32xf32, #tpu.memory_space<vmem>>, %arg16: memref<1x1x32xf32, #tpu.memory_space<vmem>>, %arg17: memref<1x1x32xf32, #tpu.memory_space<vmem>>, %arg18: memref<1x1x32xf32, #tpu.memory_space<vmem>>, %arg19: memref<2x8x6xf32, #tpu.memory_space<vmem>>, %arg20: memref<2x1x1xf32, #tpu.memory_space<vmem>>, %arg21: memref<16x32xf32, #tpu.memory_space<vmem>>, %arg22: memref<16x32xf32, #tpu.memory_space<vmem>>) attributes {dimension_semantics = [#tpu.dimension_semantics<parallel>, #tpu.dimension_semantics<arbitrary>], iteration_bounds = array<i64: 1, 2>, scalar_prefetch = 0 : i64, scratch_operands = 2 : i64, tpu.core_type = #tpu.core_type<tc>, window_params = [{transform_indices = @transform_0, window_bounds = array<i64: 2, 8, 32>}, {pipeline_mode = #tpu.pipeline_mode<synchronous>, transform_indices = @transform_1, window_bounds = array<i64: 16, 32>}, {transform_indices = @transform_2, window_bounds = array<i64: 2, 8, 6>}, {pipeline_mode = #tpu.pipeline_mode<synchronous>, transform_indices = @transform_3, window_bounds = array<i64: 32, 6>}, {pipeline_mode = #tpu.pipeline_mode<synchronous>, transform_indices = @transform_4, window_bounds = array<i64: 1, 6>}, {transform_indices = @transform_5, window_bounds = array<i64: 1, 32, 96>}, {transform_indices = @transform_6, window_bounds = array<i64: 1, 1, 96>}, {transform_indices = @transform_7, window_bounds = array<i64: 1, 32, 32>}, {transform_indices = @transform_8, window_bounds = array<i64: 1, 1, 32>}, {transform_indices = @transform_9, window_bounds = array<i64: 1, 1, 32>}, {transform_indices = @transform_10, window_bounds = array<i64: 1, 1, 32>}, {transform_indices = @transform_11, window_bounds = array<i64: 1, 32, 64>}, {transform_indices = @transform_12, window_bounds = array<i64: 1, 1, 64>}, {transform_indices = @transform_13, window_bounds = array<i64: 1, 64, 32>}, {transform_indices = @transform_14, window_bounds = array<i64: 1, 1, 32>}, {transform_indices = @transform_15, window_bounds = array<i64: 1, 1, 32>}, {transform_indices = @transform_16, window_bounds = array<i64: 1, 1, 32>}, {transform_indices = @transform_17, window_bounds = array<i64: 2, 8, 6>}, {transform_indices = @transform_18, window_bounds = array<i64: 2, 1, 1>}]} {
    %c0_i32 = arith.constant 0 : i32
    %0 = arith.cmpi eq, %arg1, %c0_i32 : i32
    %1 = arith.extui %0 : i1 to i32
    %c0_i32_0 = arith.constant 0 : i32
    %2 = arith.cmpi ne, %1, %c0_i32_0 : i32
    scf.if %2 {
      %c0_110 = arith.constant 0 : index
      %c0_111 = arith.constant 0 : index
      %c0_112 = arith.constant 0 : index
      %233 = vector.load %arg2[%c0_110, %c0_111, %c0_112] : memref<2x8x32xf32, #tpu.memory_space<vmem>>, vector<2x8x32xf32>
      %234 = vector.shape_cast %233 : vector<2x8x32xf32> to vector<16x32xf32>
      %c0_113 = arith.constant 0 : index
      %c0_114 = arith.constant 0 : index
      %235 = vector.load %arg3[%c0_113, %c0_114] : memref<16x32xf32, #tpu.memory_space<vmem>>, vector<16x32xf32>
      %236 = arith.addf %234, %235 : vector<16x32xf32>
      %c0_115 = arith.constant 0 : index
      %c0_116 = arith.constant 0 : index
      %237 = vector.load %arg21[%c0_115, %c0_116] : memref<16x32xf32, #tpu.memory_space<vmem>>, vector<16x32xf32>
      tpu.vector_store %arg21[%c0_115, %c0_116], %236 {strides = array<i32>} : memref<16x32xf32, #tpu.memory_space<vmem>>, vector<16x32xf32>,
    } else {
    }
    %c0 = arith.constant 0 : index
    %c0_1 = arith.constant 0 : index
    %3 = vector.load %arg21[%c0, %c0_1] : memref<16x32xf32, #tpu.memory_space<vmem>>, vector<16x32xf32>
    %c0_2 = arith.constant 0 : index
    %c0_3 = arith.constant 0 : index
    %c0_4 = arith.constant 0 : index
    %4 = vector.load %arg7[%c0_2, %c0_3, %c0_4] : memref<1x32x96xf32, #tpu.memory_space<vmem>>, vector<1x32x96xf32>
    %5 = vector.shape_cast %4 : vector<1x32x96xf32> to vector<32x96xf32>
    %c0_5 = arith.constant 0 : index
    %c0_6 = arith.constant 0 : index
    %c0_7 = arith.constant 0 : index
    %6 = vector.load %arg8[%c0_5, %c0_6, %c0_7] : memref<1x1x96xf32, #tpu.memory_space<vmem>>, vector<1x1x96xf32>
    %7 = vector.shape_cast %6 : vector<1x1x96xf32> to vector<1x96xf32>
    %c0_8 = arith.constant 0 : index
    %c0_9 = arith.constant 0 : index
    %c0_10 = arith.constant 0 : index
    %8 = vector.load %arg9[%c0_8, %c0_9, %c0_10] : memref<1x32x32xf32, #tpu.memory_space<vmem>>, vector<1x32x32xf32>
    %9 = vector.shape_cast %8 : vector<1x32x32xf32> to vector<32x32xf32>
    %c0_11 = arith.constant 0 : index
    %c0_12 = arith.constant 0 : index
    %c0_13 = arith.constant 0 : index
    %10 = vector.load %arg10[%c0_11, %c0_12, %c0_13] : memref<1x1x32xf32, #tpu.memory_space<vmem>>, vector<1x1x32xf32>
    %11 = vector.shape_cast %10 : vector<1x1x32xf32> to vector<1x32xf32>
    %c0_14 = arith.constant 0 : index
    %c0_15 = arith.constant 0 : index
    %c0_16 = arith.constant 0 : index
    %12 = vector.load %arg11[%c0_14, %c0_15, %c0_16] : memref<1x1x32xf32, #tpu.memory_space<vmem>>, vector<1x1x32xf32>
    %13 = vector.shape_cast %12 : vector<1x1x32xf32> to vector<1x32xf32>
    %c0_17 = arith.constant 0 : index
    %c0_18 = arith.constant 0 : index
    %c0_19 = arith.constant 0 : index
    %14 = vector.load %arg12[%c0_17, %c0_18, %c0_19] : memref<1x1x32xf32, #tpu.memory_space<vmem>>, vector<1x1x32xf32>
    %15 = vector.shape_cast %14 : vector<1x1x32xf32> to vector<1x32xf32>
    %c0_20 = arith.constant 0 : index
    %c0_21 = arith.constant 0 : index
    %c0_22 = arith.constant 0 : index
    %16 = vector.load %arg13[%c0_20, %c0_21, %c0_22] : memref<1x32x64xf32, #tpu.memory_space<vmem>>, vector<1x32x64xf32>
    %17 = vector.shape_cast %16 : vector<1x32x64xf32> to vector<32x64xf32>
    %c0_23 = arith.constant 0 : index
    %c0_24 = arith.constant 0 : index
    %c0_25 = arith.constant 0 : index
    %18 = vector.load %arg14[%c0_23, %c0_24, %c0_25] : memref<1x1x64xf32, #tpu.memory_space<vmem>>, vector<1x1x64xf32>
    %19 = vector.shape_cast %18 : vector<1x1x64xf32> to vector<1x64xf32>
    %c0_26 = arith.constant 0 : index
    %c0_27 = arith.constant 0 : index
    %c0_28 = arith.constant 0 : index
    %20 = vector.load %arg15[%c0_26, %c0_27, %c0_28] : memref<1x64x32xf32, #tpu.memory_space<vmem>>, vector<1x64x32xf32>
    %21 = vector.shape_cast %20 : vector<1x64x32xf32> to vector<64x32xf32>
    %c0_29 = arith.constant 0 : index
    %c0_30 = arith.constant 0 : index
    %c0_31 = arith.constant 0 : index
    %22 = vector.load %arg16[%c0_29, %c0_30, %c0_31] : memref<1x1x32xf32, #tpu.memory_space<vmem>>, vector<1x1x32xf32>
    %23 = vector.shape_cast %22 : vector<1x1x32xf32> to vector<1x32xf32>
    %c0_32 = arith.constant 0 : index
    %c0_33 = arith.constant 0 : index
    %c0_34 = arith.constant 0 : index
    %24 = vector.load %arg17[%c0_32, %c0_33, %c0_34] : memref<1x1x32xf32, #tpu.memory_space<vmem>>, vector<1x1x32xf32>
    %25 = vector.shape_cast %24 : vector<1x1x32xf32> to vector<1x32xf32>
    %c0_35 = arith.constant 0 : index
    %c0_36 = arith.constant 0 : index
    %c0_37 = arith.constant 0 : index
    %26 = vector.load %arg18[%c0_35, %c0_36, %c0_37] : memref<1x1x32xf32, #tpu.memory_space<vmem>>, vector<1x1x32xf32>
    %27 = vector.shape_cast %26 : vector<1x1x32xf32> to vector<1x32xf32>
    %cst = arith.constant dense<0.000000e+00> : vector<16x96xf32>
    %28 = tpu.matmul %3, %5, %cst {dimension_numbers = #tpu.dot_dimension_numbers<[1], [0], [0], [1], [0, 0, 1, 1], [], []>} : vector<16x32xf32>, vector<32x96xf32>, vector<16x96xf32> -> vector<16x96xf32>
    %29 = vector.broadcast %7 : vector<1x96xf32> to vector<16x96xf32>
    %30 = arith.addf %28, %29 : vector<16x96xf32>
    %31 = vector.extract_strided_slice %30 {offsets = [0, 0], sizes = [8, 8], strides = [1, 1]} : vector<16x96xf32> to vector<8x8xf32>
    %32 = vector.extract_strided_slice %30 {offsets = [0, 32], sizes = [8, 8], strides = [1, 1]} : vector<16x96xf32> to vector<8x8xf32>
    %33 = vector.extract_strided_slice %30 {offsets = [0, 64], sizes = [8, 8], strides = [1, 1]} : vector<16x96xf32> to vector<8x8xf32>
    %cst_38 = arith.constant dense<0.000000e+00> : vector<8x8xf32>
    %34 = tpu.matmul %31, %32, %cst_38 {dimension_numbers = #tpu.dot_dimension_numbers<[1], [1], [0], [0], [0, 0, 1, 0], [], []>} : vector<8x8xf32>, vector<8x8xf32>, vector<8x8xf32> -> vector<8x8xf32>
    %cst_39 = arith.constant 0.353553385 : f32
    %35 = vector.broadcast %cst_39 : f32 to vector<8x8xf32>
    %36 = arith.mulf %34, %35 : vector<8x8xf32>
    %cst_40 = arith.constant dense<0xFF800000> : vector<8xf32>
    %37 = vector.multi_reduction <maximumf>, %36, %cst_40 [1] : vector<8x8xf32> to vector<8xf32>
    %38 = vector.shape_cast %37 : vector<8xf32> to vector<8x1xf32>
    %39 = vector.broadcast %38 : vector<8x1xf32> to vector<8x8xf32>
    %40 = arith.subf %36, %39 : vector<8x8xf32>
    %41 = math.exp %40 : vector<8x8xf32>
    %cst_41 = arith.constant dense<0.000000e+00> : vector<8xf32>
    %42 = vector.multi_reduction <add>, %41, %cst_41 [1] : vector<8x8xf32> to vector<8xf32>
    %43 = vector.shape_cast %42 : vector<8xf32> to vector<8x1xf32>
    %44 = tpu.reciprocal %43 {approx = true} : vector<8x1xf32> -> vector<8x1xf32>
    %45 = vector.broadcast %44 : vector<8x1xf32> to vector<8x8xf32>
    %46 = arith.mulf %41, %45 : vector<8x8xf32>
    %cst_42 = arith.constant dense<0.000000e+00> : vector<8x8xf32>
    %47 = tpu.matmul %46, %33, %cst_42 {dimension_numbers = #tpu.dot_dimension_numbers<[1], [0], [0], [1], [0, 0, 1, 1], [], []>} : vector<8x8xf32>, vector<8x8xf32>, vector<8x8xf32> -> vector<8x8xf32>
    %c0_43 = arith.constant 0 : index
    %c0_44 = arith.constant 0 : index
    %48 = vector.load %arg22[%c0_43, %c0_44] : memref<16x32xf32, #tpu.memory_space<vmem>>, vector<8x8xf32>
    tpu.vector_store %arg22[%c0_43, %c0_44], %47 {strides = array<i32>} : memref<16x32xf32, #tpu.memory_space<vmem>>, vector<8x8xf32>,
    %49 = vector.extract_strided_slice %30 {offsets = [0, 8], sizes = [8, 8], strides = [1, 1]} : vector<16x96xf32> to vector<8x8xf32>
    %50 = vector.extract_strided_slice %30 {offsets = [0, 40], sizes = [8, 8], strides = [1, 1]} : vector<16x96xf32> to vector<8x8xf32>
    %51 = vector.extract_strided_slice %30 {offsets = [0, 72], sizes = [8, 8], strides = [1, 1]} : vector<16x96xf32> to vector<8x8xf32>
    %cst_45 = arith.constant dense<0.000000e+00> : vector<8x8xf32>
    %52 = tpu.matmul %49, %50, %cst_45 {dimension_numbers = #tpu.dot_dimension_numbers<[1], [1], [0], [0], [0, 0, 1, 0], [], []>} : vector<8x8xf32>, vector<8x8xf32>, vector<8x8xf32> -> vector<8x8xf32>
    %cst_46 = arith.constant 0.353553385 : f32
    %53 = vector.broadcast %cst_46 : f32 to vector<8x8xf32>
    %54 = arith.mulf %52, %53 : vector<8x8xf32>
    %cst_47 = arith.constant dense<0xFF800000> : vector<8xf32>
    %55 = vector.multi_reduction <maximumf>, %54, %cst_47 [1] : vector<8x8xf32> to vector<8xf32>
    %56 = vector.shape_cast %55 : vector<8xf32> to vector<8x1xf32>
    %57 = vector.broadcast %56 : vector<8x1xf32> to vector<8x8xf32>
    %58 = arith.subf %54, %57 : vector<8x8xf32>
    %59 = math.exp %58 : vector<8x8xf32>
    %cst_48 = arith.constant dense<0.000000e+00> : vector<8xf32>
    %60 = vector.multi_reduction <add>, %59, %cst_48 [1] : vector<8x8xf32> to vector<8xf32>
    %61 = vector.shape_cast %60 : vector<8xf32> to vector<8x1xf32>
    %62 = tpu.reciprocal %61 {approx = true} : vector<8x1xf32> -> vector<8x1xf32>
    %63 = vector.broadcast %62 : vector<8x1xf32> to vector<8x8xf32>
    %64 = arith.mulf %59, %63 : vector<8x8xf32>
    %cst_49 = arith.constant dense<0.000000e+00> : vector<8x8xf32>
    %65 = tpu.matmul %64, %51, %cst_49 {dimension_numbers = #tpu.dot_dimension_numbers<[1], [0], [0], [1], [0, 0, 1, 1], [], []>} : vector<8x8xf32>, vector<8x8xf32>, vector<8x8xf32> -> vector<8x8xf32>
    %c0_50 = arith.constant 0 : index
    %c8 = arith.constant 8 : index
    %66 = vector.load %arg22[%c0_50, %c8] : memref<16x32xf32, #tpu.memory_space<vmem>>, vector<8x8xf32>
    tpu.vector_store %arg22[%c0_50, %c8], %65 {strides = array<i32>} : memref<16x32xf32, #tpu.memory_space<vmem>>, vector<8x8xf32>,
    %67 = vector.extract_strided_slice %30 {offsets = [0, 16], sizes = [8, 8], strides = [1, 1]} : vector<16x96xf32> to vector<8x8xf32>
    %68 = vector.extract_strided_slice %30 {offsets = [0, 48], sizes = [8, 8], strides = [1, 1]} : vector<16x96xf32> to vector<8x8xf32>
    %69 = vector.extract_strided_slice %30 {offsets = [0, 80], sizes = [8, 8], strides = [1, 1]} : vector<16x96xf32> to vector<8x8xf32>
    %cst_51 = arith.constant dense<0.000000e+00> : vector<8x8xf32>
    %70 = tpu.matmul %67, %68, %cst_51 {dimension_numbers = #tpu.dot_dimension_numbers<[1], [1], [0], [0], [0, 0, 1, 0], [], []>} : vector<8x8xf32>, vector<8x8xf32>, vector<8x8xf32> -> vector<8x8xf32>
    %cst_52 = arith.constant 0.353553385 : f32
    %71 = vector.broadcast %cst_52 : f32 to vector<8x8xf32>
    %72 = arith.mulf %70, %71 : vector<8x8xf32>
    %cst_53 = arith.constant dense<0xFF800000> : vector<8xf32>
    %73 = vector.multi_reduction <maximumf>, %72, %cst_53 [1] : vector<8x8xf32> to vector<8xf32>
    %74 = vector.shape_cast %73 : vector<8xf32> to vector<8x1xf32>
    %75 = vector.broadcast %74 : vector<8x1xf32> to vector<8x8xf32>
    %76 = arith.subf %72, %75 : vector<8x8xf32>
    %77 = math.exp %76 : vector<8x8xf32>
    %cst_54 = arith.constant dense<0.000000e+00> : vector<8xf32>
    %78 = vector.multi_reduction <add>, %77, %cst_54 [1] : vector<8x8xf32> to vector<8xf32>
    %79 = vector.shape_cast %78 : vector<8xf32> to vector<8x1xf32>
    %80 = tpu.reciprocal %79 {approx = true} : vector<8x1xf32> -> vector<8x1xf32>
    %81 = vector.broadcast %80 : vector<8x1xf32> to vector<8x8xf32>
    %82 = arith.mulf %77, %81 : vector<8x8xf32>
    %cst_55 = arith.constant dense<0.000000e+00> : vector<8x8xf32>
    %83 = tpu.matmul %82, %69, %cst_55 {dimension_numbers = #tpu.dot_dimension_numbers<[1], [0], [0], [1], [0, 0, 1, 1], [], []>} : vector<8x8xf32>, vector<8x8xf32>, vector<8x8xf32> -> vector<8x8xf32>
    %c0_56 = arith.constant 0 : index
    %c16 = arith.constant 16 : index
    %84 = vector.load %arg22[%c0_56, %c16] : memref<16x32xf32, #tpu.memory_space<vmem>>, vector<8x8xf32>
    tpu.vector_store %arg22[%c0_56, %c16], %83 {strides = array<i32>} : memref<16x32xf32, #tpu.memory_space<vmem>>, vector<8x8xf32>,
    %85 = vector.extract_strided_slice %30 {offsets = [0, 24], sizes = [8, 8], strides = [1, 1]} : vector<16x96xf32> to vector<8x8xf32>
    %86 = vector.extract_strided_slice %30 {offsets = [0, 56], sizes = [8, 8], strides = [1, 1]} : vector<16x96xf32> to vector<8x8xf32>
    %87 = vector.extract_strided_slice %30 {offsets = [0, 88], sizes = [8, 8], strides = [1, 1]} : vector<16x96xf32> to vector<8x8xf32>
    %cst_57 = arith.constant dense<0.000000e+00> : vector<8x8xf32>
    %88 = tpu.matmul %85, %86, %cst_57 {dimension_numbers = #tpu.dot_dimension_numbers<[1], [1], [0], [0], [0, 0, 1, 0], [], []>} : vector<8x8xf32>, vector<8x8xf32>, vector<8x8xf32> -> vector<8x8xf32>
    %cst_58 = arith.constant 0.353553385 : f32
    %89 = vector.broadcast %cst_58 : f32 to vector<8x8xf32>
    %90 = arith.mulf %88, %89 : vector<8x8xf32>
    %cst_59 = arith.constant dense<0xFF800000> : vector<8xf32>
    %91 = vector.multi_reduction <maximumf>, %90, %cst_59 [1] : vector<8x8xf32> to vector<8xf32>
    %92 = vector.shape_cast %91 : vector<8xf32> to vector<8x1xf32>
    %93 = vector.broadcast %92 : vector<8x1xf32> to vector<8x8xf32>
    %94 = arith.subf %90, %93 : vector<8x8xf32>
    %95 = math.exp %94 : vector<8x8xf32>
    %cst_60 = arith.constant dense<0.000000e+00> : vector<8xf32>
    %96 = vector.multi_reduction <add>, %95, %cst_60 [1] : vector<8x8xf32> to vector<8xf32>
    %97 = vector.shape_cast %96 : vector<8xf32> to vector<8x1xf32>
    %98 = tpu.reciprocal %97 {approx = true} : vector<8x1xf32> -> vector<8x1xf32>
    %99 = vector.broadcast %98 : vector<8x1xf32> to vector<8x8xf32>
    %100 = arith.mulf %95, %99 : vector<8x8xf32>
    %cst_61 = arith.constant dense<0.000000e+00> : vector<8x8xf32>
    %101 = tpu.matmul %100, %87, %cst_61 {dimension_numbers = #tpu.dot_dimension_numbers<[1], [0], [0], [1], [0, 0, 1, 1], [], []>} : vector<8x8xf32>, vector<8x8xf32>, vector<8x8xf32> -> vector<8x8xf32>
    %c0_62 = arith.constant 0 : index
    %c24 = arith.constant 24 : index
    %102 = vector.load %arg22[%c0_62, %c24] : memref<16x32xf32, #tpu.memory_space<vmem>>, vector<8x8xf32>
    tpu.vector_store %arg22[%c0_62, %c24], %101 {strides = array<i32>} : memref<16x32xf32, #tpu.memory_space<vmem>>, vector<8x8xf32>,
    %103 = vector.extract_strided_slice %30 {offsets = [8, 0], sizes = [8, 8], strides = [1, 1]} : vector<16x96xf32> to vector<8x8xf32>
    %104 = vector.extract_strided_slice %30 {offsets = [8, 32], sizes = [8, 8], strides = [1, 1]} : vector<16x96xf32> to vector<8x8xf32>
    %105 = vector.extract_strided_slice %30 {offsets = [8, 64], sizes = [8, 8], strides = [1, 1]} : vector<16x96xf32> to vector<8x8xf32>
    %cst_63 = arith.constant dense<0.000000e+00> : vector<8x8xf32>
    %106 = tpu.matmul %103, %104, %cst_63 {dimension_numbers = #tpu.dot_dimension_numbers<[1], [1], [0], [0], [0, 0, 1, 0], [], []>} : vector<8x8xf32>, vector<8x8xf32>, vector<8x8xf32> -> vector<8x8xf32>
    %cst_64 = arith.constant 0.353553385 : f32
    %107 = vector.broadcast %cst_64 : f32 to vector<8x8xf32>
    %108 = arith.mulf %106, %107 : vector<8x8xf32>
    %cst_65 = arith.constant dense<0xFF800000> : vector<8xf32>
    %109 = vector.multi_reduction <maximumf>, %108, %cst_65 [1] : vector<8x8xf32> to vector<8xf32>
    %110 = vector.shape_cast %109 : vector<8xf32> to vector<8x1xf32>
    %111 = vector.broadcast %110 : vector<8x1xf32> to vector<8x8xf32>
    %112 = arith.subf %108, %111 : vector<8x8xf32>
    %113 = math.exp %112 : vector<8x8xf32>
    %cst_66 = arith.constant dense<0.000000e+00> : vector<8xf32>
    %114 = vector.multi_reduction <add>, %113, %cst_66 [1] : vector<8x8xf32> to vector<8xf32>
    %115 = vector.shape_cast %114 : vector<8xf32> to vector<8x1xf32>
    %116 = tpu.reciprocal %115 {approx = true} : vector<8x1xf32> -> vector<8x1xf32>
    %117 = vector.broadcast %116 : vector<8x1xf32> to vector<8x8xf32>
    %118 = arith.mulf %113, %117 : vector<8x8xf32>
    %cst_67 = arith.constant dense<0.000000e+00> : vector<8x8xf32>
    %119 = tpu.matmul %118, %105, %cst_67 {dimension_numbers = #tpu.dot_dimension_numbers<[1], [0], [0], [1], [0, 0, 1, 1], [], []>} : vector<8x8xf32>, vector<8x8xf32>, vector<8x8xf32> -> vector<8x8xf32>
    %c8_68 = arith.constant 8 : index
    %c0_69 = arith.constant 0 : index
    %120 = vector.load %arg22[%c8_68, %c0_69] : memref<16x32xf32, #tpu.memory_space<vmem>>, vector<8x8xf32>
    tpu.vector_store %arg22[%c8_68, %c0_69], %119 {strides = array<i32>} : memref<16x32xf32, #tpu.memory_space<vmem>>, vector<8x8xf32>,
    %121 = vector.extract_strided_slice %30 {offsets = [8, 8], sizes = [8, 8], strides = [1, 1]} : vector<16x96xf32> to vector<8x8xf32>
    %122 = vector.extract_strided_slice %30 {offsets = [8, 40], sizes = [8, 8], strides = [1, 1]} : vector<16x96xf32> to vector<8x8xf32>
    %123 = vector.extract_strided_slice %30 {offsets = [8, 72], sizes = [8, 8], strides = [1, 1]} : vector<16x96xf32> to vector<8x8xf32>
    %cst_70 = arith.constant dense<0.000000e+00> : vector<8x8xf32>
    %124 = tpu.matmul %121, %122, %cst_70 {dimension_numbers = #tpu.dot_dimension_numbers<[1], [1], [0], [0], [0, 0, 1, 0], [], []>} : vector<8x8xf32>, vector<8x8xf32>, vector<8x8xf32> -> vector<8x8xf32>
    %cst_71 = arith.constant 0.353553385 : f32
    %125 = vector.broadcast %cst_71 : f32 to vector<8x8xf32>
    %126 = arith.mulf %124, %125 : vector<8x8xf32>
    %cst_72 = arith.constant dense<0xFF800000> : vector<8xf32>
    %127 = vector.multi_reduction <maximumf>, %126, %cst_72 [1] : vector<8x8xf32> to vector<8xf32>
    %128 = vector.shape_cast %127 : vector<8xf32> to vector<8x1xf32>
    %129 = vector.broadcast %128 : vector<8x1xf32> to vector<8x8xf32>
    %130 = arith.subf %126, %129 : vector<8x8xf32>
    %131 = math.exp %130 : vector<8x8xf32>
    %cst_73 = arith.constant dense<0.000000e+00> : vector<8xf32>
    %132 = vector.multi_reduction <add>, %131, %cst_73 [1] : vector<8x8xf32> to vector<8xf32>
    %133 = vector.shape_cast %132 : vector<8xf32> to vector<8x1xf32>
    %134 = tpu.reciprocal %133 {approx = true} : vector<8x1xf32> -> vector<8x1xf32>
    %135 = vector.broadcast %134 : vector<8x1xf32> to vector<8x8xf32>
    %136 = arith.mulf %131, %135 : vector<8x8xf32>
    %cst_74 = arith.constant dense<0.000000e+00> : vector<8x8xf32>
    %137 = tpu.matmul %136, %123, %cst_74 {dimension_numbers = #tpu.dot_dimension_numbers<[1], [0], [0], [1], [0, 0, 1, 1], [], []>} : vector<8x8xf32>, vector<8x8xf32>, vector<8x8xf32> -> vector<8x8xf32>
    %c8_75 = arith.constant 8 : index
    %c8_76 = arith.constant 8 : index
    %138 = vector.load %arg22[%c8_75, %c8_76] : memref<16x32xf32, #tpu.memory_space<vmem>>, vector<8x8xf32>
    tpu.vector_store %arg22[%c8_75, %c8_76], %137 {strides = array<i32>} : memref<16x32xf32, #tpu.memory_space<vmem>>, vector<8x8xf32>,
    %139 = vector.extract_strided_slice %30 {offsets = [8, 16], sizes = [8, 8], strides = [1, 1]} : vector<16x96xf32> to vector<8x8xf32>
    %140 = vector.extract_strided_slice %30 {offsets = [8, 48], sizes = [8, 8], strides = [1, 1]} : vector<16x96xf32> to vector<8x8xf32>
    %141 = vector.extract_strided_slice %30 {offsets = [8, 80], sizes = [8, 8], strides = [1, 1]} : vector<16x96xf32> to vector<8x8xf32>
    %cst_77 = arith.constant dense<0.000000e+00> : vector<8x8xf32>
    %142 = tpu.matmul %139, %140, %cst_77 {dimension_numbers = #tpu.dot_dimension_numbers<[1], [1], [0], [0], [0, 0, 1, 0], [], []>} : vector<8x8xf32>, vector<8x8xf32>, vector<8x8xf32> -> vector<8x8xf32>
    %cst_78 = arith.constant 0.353553385 : f32
    %143 = vector.broadcast %cst_78 : f32 to vector<8x8xf32>
    %144 = arith.mulf %142, %143 : vector<8x8xf32>
    %cst_79 = arith.constant dense<0xFF800000> : vector<8xf32>
    %145 = vector.multi_reduction <maximumf>, %144, %cst_79 [1] : vector<8x8xf32> to vector<8xf32>
    %146 = vector.shape_cast %145 : vector<8xf32> to vector<8x1xf32>
    %147 = vector.broadcast %146 : vector<8x1xf32> to vector<8x8xf32>
    %148 = arith.subf %144, %147 : vector<8x8xf32>
    %149 = math.exp %148 : vector<8x8xf32>
    %cst_80 = arith.constant dense<0.000000e+00> : vector<8xf32>
    %150 = vector.multi_reduction <add>, %149, %cst_80 [1] : vector<8x8xf32> to vector<8xf32>
    %151 = vector.shape_cast %150 : vector<8xf32> to vector<8x1xf32>
    %152 = tpu.reciprocal %151 {approx = true} : vector<8x1xf32> -> vector<8x1xf32>
    %153 = vector.broadcast %152 : vector<8x1xf32> to vector<8x8xf32>
    %154 = arith.mulf %149, %153 : vector<8x8xf32>
    %cst_81 = arith.constant dense<0.000000e+00> : vector<8x8xf32>
    %155 = tpu.matmul %154, %141, %cst_81 {dimension_numbers = #tpu.dot_dimension_numbers<[1], [0], [0], [1], [0, 0, 1, 1], [], []>} : vector<8x8xf32>, vector<8x8xf32>, vector<8x8xf32> -> vector<8x8xf32>
    %c8_82 = arith.constant 8 : index
    %c16_83 = arith.constant 16 : index
    %156 = vector.load %arg22[%c8_82, %c16_83] : memref<16x32xf32, #tpu.memory_space<vmem>>, vector<8x8xf32>
    tpu.vector_store %arg22[%c8_82, %c16_83], %155 {strides = array<i32>} : memref<16x32xf32, #tpu.memory_space<vmem>>, vector<8x8xf32>,
    %157 = vector.extract_strided_slice %30 {offsets = [8, 24], sizes = [8, 8], strides = [1, 1]} : vector<16x96xf32> to vector<8x8xf32>
    %158 = vector.extract_strided_slice %30 {offsets = [8, 56], sizes = [8, 8], strides = [1, 1]} : vector<16x96xf32> to vector<8x8xf32>
    %159 = vector.extract_strided_slice %30 {offsets = [8, 88], sizes = [8, 8], strides = [1, 1]} : vector<16x96xf32> to vector<8x8xf32>
    %cst_84 = arith.constant dense<0.000000e+00> : vector<8x8xf32>
    %160 = tpu.matmul %157, %158, %cst_84 {dimension_numbers = #tpu.dot_dimension_numbers<[1], [1], [0], [0], [0, 0, 1, 0], [], []>} : vector<8x8xf32>, vector<8x8xf32>, vector<8x8xf32> -> vector<8x8xf32>
    %cst_85 = arith.constant 0.353553385 : f32
    %161 = vector.broadcast %cst_85 : f32 to vector<8x8xf32>
    %162 = arith.mulf %160, %161 : vector<8x8xf32>
    %cst_86 = arith.constant dense<0xFF800000> : vector<8xf32>
    %163 = vector.multi_reduction <maximumf>, %162, %cst_86 [1] : vector<8x8xf32> to vector<8xf32>
    %164 = vector.shape_cast %163 : vector<8xf32> to vector<8x1xf32>
    %165 = vector.broadcast %164 : vector<8x1xf32> to vector<8x8xf32>
    %166 = arith.subf %162, %165 : vector<8x8xf32>
    %167 = math.exp %166 : vector<8x8xf32>
    %cst_87 = arith.constant dense<0.000000e+00> : vector<8xf32>
    %168 = vector.multi_reduction <add>, %167, %cst_87 [1] : vector<8x8xf32> to vector<8xf32>
    %169 = vector.shape_cast %168 : vector<8xf32> to vector<8x1xf32>
    %170 = tpu.reciprocal %169 {approx = true} : vector<8x1xf32> -> vector<8x1xf32>
    %171 = vector.broadcast %170 : vector<8x1xf32> to vector<8x8xf32>
    %172 = arith.mulf %167, %171 : vector<8x8xf32>
    %cst_88 = arith.constant dense<0.000000e+00> : vector<8x8xf32>
    %173 = tpu.matmul %172, %159, %cst_88 {dimension_numbers = #tpu.dot_dimension_numbers<[1], [0], [0], [1], [0, 0, 1, 1], [], []>} : vector<8x8xf32>, vector<8x8xf32>, vector<8x8xf32> -> vector<8x8xf32>
    %c8_89 = arith.constant 8 : index
    %c24_90 = arith.constant 24 : index
    %174 = vector.load %arg22[%c8_89, %c24_90] : memref<16x32xf32, #tpu.memory_space<vmem>>, vector<8x8xf32>
    tpu.vector_store %arg22[%c8_89, %c24_90], %173 {strides = array<i32>} : memref<16x32xf32, #tpu.memory_space<vmem>>, vector<8x8xf32>,
    %c0_91 = arith.constant 0 : index
    %c0_92 = arith.constant 0 : index
    %175 = vector.load %arg22[%c0_91, %c0_92] : memref<16x32xf32, #tpu.memory_space<vmem>>, vector<16x32xf32>
    %cst_93 = arith.constant dense<0.000000e+00> : vector<16x32xf32>
    %176 = tpu.matmul %175, %9, %cst_93 {dimension_numbers = #tpu.dot_dimension_numbers<[1], [0], [0], [1], [0, 0, 1, 1], [], []>} : vector<16x32xf32>, vector<32x32xf32>, vector<16x32xf32> -> vector<16x32xf32>
    %177 = vector.broadcast %11 : vector<1x32xf32> to vector<16x32xf32>
    %178 = arith.addf %176, %177 : vector<16x32xf32>
    %179 = arith.addf %3, %178 : vector<16x32xf32>
    %cst_94 = arith.constant dense<0.000000e+00> : vector<16xf32>
    %180 = vector.multi_reduction <add>, %179, %cst_94 [1] : vector<16x32xf32> to vector<16xf32>
    %181 = vector.shape_cast %180 : vector<16xf32> to vector<16x1xf32>
    %cst_95 = arith.constant 3.200000e+01 : f32
    %182 = vector.broadcast %cst_95 : f32 to vector<16x1xf32>
    %183 = arith.divf %181, %182 : vector<16x1xf32>
    %184 = vector.broadcast %183 : vector<16x1xf32> to vector<16x32xf32>
    %185 = arith.subf %179, %184 : vector<16x32xf32>
    %186 = arith.mulf %185, %185 : vector<16x32xf32>
    %cst_96 = arith.constant dense<0.000000e+00> : vector<16xf32>
    %187 = vector.multi_reduction <add>, %186, %cst_96 [1] : vector<16x32xf32> to vector<16xf32>
    %188 = vector.shape_cast %187 : vector<16xf32> to vector<16x1xf32>
    %cst_97 = arith.constant 3.200000e+01 : f32
    %189 = vector.broadcast %cst_97 : f32 to vector<16x1xf32>
    %190 = arith.divf %188, %189 : vector<16x1xf32>
    %cst_98 = arith.constant 9.99999997E-7 : f32
    %191 = vector.broadcast %cst_98 : f32 to vector<16x1xf32>
    %192 = arith.addf %190, %191 : vector<16x1xf32>
    %193 = math.rsqrt %192 : vector<16x1xf32>
    %194 = vector.broadcast %193 : vector<16x1xf32> to vector<16x32xf32>
    %195 = arith.mulf %185, %194 : vector<16x32xf32>
    %196 = vector.broadcast %13 : vector<1x32xf32> to vector<16x32xf32>
    %197 = arith.mulf %195, %196 : vector<16x32xf32>
    %198 = vector.broadcast %15 : vector<1x32xf32> to vector<16x32xf32>
    %199 = arith.addf %197, %198 : vector<16x32xf32>
    %cst_99 = arith.constant dense<0.000000e+00> : vector<16x64xf32>
    %200 = tpu.matmul %199, %17, %cst_99 {dimension_numbers = #tpu.dot_dimension_numbers<[1], [0], [0], [1], [0, 0, 1, 1], [], []>} : vector<16x32xf32>, vector<32x64xf32>, vector<16x64xf32> -> vector<16x64xf32>
    %201 = vector.broadcast %19 : vector<1x64xf32> to vector<16x64xf32>
    %202 = arith.addf %200, %201 : vector<16x64xf32>
    %cst_100 = arith.constant 0.000000e+00 : f32
    %203 = vector.broadcast %cst_100 : f32 to vector<16x64xf32>
    %204 = arith.maximumf %202, %203 : vector<16x64xf32>
    %cst_101 = arith.constant dense<0.000000e+00> : vector<16x32xf32>
    %205 = tpu.matmul %204, %21, %cst_101 {dimension_numbers = #tpu.dot_dimension_numbers<[1], [0], [0], [1], [0, 0, 1, 1], [], []>} : vector<16x64xf32>, vector<64x32xf32>, vector<16x32xf32> -> vector<16x32xf32>
    %206 = vector.broadcast %23 : vector<1x32xf32> to vector<16x32xf32>
    %207 = arith.addf %205, %206 : vector<16x32xf32>
    %208 = arith.addf %199, %207 : vector<16x32xf32>
    %cst_102 = arith.constant dense<0.000000e+00> : vector<16xf32>
    %209 = vector.multi_reduction <add>, %208, %cst_102 [1] : vector<16x32xf32> to vector<16xf32>
    %210 = vector.shape_cast %209 : vector<16xf32> to vector<16x1xf32>
    %cst_103 = arith.constant 3.200000e+01 : f32
    %211 = vector.broadcast %cst_103 : f32 to vector<16x1xf32>
    %212 = arith.divf %210, %211 : vector<16x1xf32>
    %213 = vector.broadcast %212 : vector<16x1xf32> to vector<16x32xf32>
    %214 = arith.subf %208, %213 : vector<16x32xf32>
    %215 = arith.mulf %214, %214 : vector<16x32xf32>
    %cst_104 = arith.constant dense<0.000000e+00> : vector<16xf32>
    %216 = vector.multi_reduction <add>, %215, %cst_104 [1] : vector<16x32xf32> to vector<16xf32>
    %217 = vector.shape_cast %216 : vector<16xf32> to vector<16x1xf32>
    %cst_105 = arith.constant 3.200000e+01 : f32
    %218 = vector.broadcast %cst_105 : f32 to vector<16x1xf32>
    %219 = arith.divf %217, %218 : vector<16x1xf32>
    %cst_106 = arith.constant 9.99999997E-7 : f32
    %220 = vector.broadcast %cst_106 : f32 to vector<16x1xf32>
    %221 = arith.addf %219, %220 : vector<16x1xf32>
    %222 = math.rsqrt %221 : vector<16x1xf32>
    %223 = vector.broadcast %222 : vector<16x1xf32> to vector<16x32xf32>
    %224 = arith.mulf %214, %223 : vector<16x32xf32>
    %225 = vector.broadcast %25 : vector<1x32xf32> to vector<16x32xf32>
    %226 = arith.mulf %224, %225 : vector<16x32xf32>
    %227 = vector.broadcast %27 : vector<1x32xf32> to vector<16x32xf32>
    %228 = arith.addf %226, %227 : vector<16x32xf32>
    %c0_107 = arith.constant 0 : index
    %c0_108 = arith.constant 0 : index
    %229 = vector.load %arg21[%c0_107, %c0_108] : memref<16x32xf32, #tpu.memory_space<vmem>>, vector<16x32xf32>
    tpu.vector_store %arg21[%c0_107, %c0_108], %228 {strides = array<i32>} : memref<16x32xf32, #tpu.memory_space<vmem>>, vector<16x32xf32>,
    %c1_i32 = arith.constant 1 : i32
    %230 = arith.cmpi eq, %arg1, %c1_i32 : i32
    %231 = arith.extui %230 : i1 to i32
    %c0_i32_109 = arith.constant 0 : i32
    %232 = arith.cmpi ne, %231, %c0_i32_109 : i32
    scf.if %232 {
      %c0_110 = arith.constant 0 : index
      %c0_111 = arith.constant 0 : index
      %233 = vector.load %arg5[%c0_110, %c0_111] : memref<32x6xf32, #tpu.memory_space<vmem>>, vector<32x6xf32>
      %cst_112 = arith.constant dense<0.000000e+00> : vector<16x6xf32>
      %234 = tpu.matmul %228, %233, %cst_112 {dimension_numbers = #tpu.dot_dimension_numbers<[1], [0], [0], [1], [0, 0, 1, 1], [], []>} : vector<16x32xf32>, vector<32x6xf32>, vector<16x6xf32> -> vector<16x6xf32>
      %c0_113 = arith.constant 0 : index
      %c0_114 = arith.constant 0 : index
      %235 = vector.load %arg6[%c0_113, %c0_114] : memref<1x6xf32, #tpu.memory_space<vmem>>, vector<1x6xf32>
      %236 = vector.broadcast %235 : vector<1x6xf32> to vector<16x6xf32>
      %237 = arith.addf %234, %236 : vector<16x6xf32>
      %cst_115 = arith.constant 0.000000e+00 : f32
      %238 = vector.broadcast %cst_115 : f32 to vector<16x6xf32>
      %239 = arith.subf %238, %237 : vector<16x6xf32>
      %240 = math.exp %239 : vector<16x6xf32>
      %cst_116 = arith.constant 1.000000e+00 : f32
      %241 = vector.broadcast %cst_116 : f32 to vector<16x6xf32>
      %242 = arith.addf %241, %240 : vector<16x6xf32>
      %cst_117 = arith.constant 1.000000e+00 : f32
      %243 = vector.broadcast %cst_117 : f32 to vector<16x6xf32>
      %244 = arith.divf %243, %242 : vector<16x6xf32>
      %245 = vector.shape_cast %244 : vector<16x6xf32> to vector<2x8x6xf32>
      %c0_118 = arith.constant 0 : index
      %c0_119 = arith.constant 0 : index
      %c0_120 = arith.constant 0 : index
      %246 = vector.load %arg19[%c0_118, %c0_119, %c0_120] : memref<2x8x6xf32, #tpu.memory_space<vmem>>, vector<2x8x6xf32>
      tpu.vector_store %arg19[%c0_118, %c0_119, %c0_120], %245 {strides = array<i32>} : memref<2x8x6xf32, #tpu.memory_space<vmem>>, vector<2x8x6xf32>,
      %c0_121 = arith.constant 0 : index
      %c0_122 = arith.constant 0 : index
      %c0_123 = arith.constant 0 : index
      %247 = vector.load %arg4[%c0_121, %c0_122, %c0_123] : memref<2x8x6xf32, #tpu.memory_space<vmem>>, vector<2x8x6xf32>
      %248 = arith.subf %245, %247 : vector<2x8x6xf32>
      %249 = arith.mulf %248, %248 : vector<2x8x6xf32>
      %cst_124 = arith.constant dense<0.000000e+00> : vector<2x8xf32>
      %250 = vector.multi_reduction <add>, %249, %cst_124 [2] : vector<2x8x6xf32> to vector<2x8xf32>
      %251 = vector.shape_cast %250 : vector<2x8xf32> to vector<2x8x1xf32>
      %cst_125 = arith.constant dense<0.000000e+00> : vector<2x1xf32>
      %252 = vector.multi_reduction <add>, %251, %cst_125 [1] : vector<2x8x1xf32> to vector<2x1xf32>
      %253 = vector.shape_cast %252 : vector<2x1xf32> to vector<2x1x1xf32>
      %c0_126 = arith.constant 0 : index
      %c0_127 = arith.constant 0 : index
      %c0_128 = arith.constant 0 : index
      %254 = vector.load %arg20[%c0_126, %c0_127, %c0_128] : memref<2x1x1xf32, #tpu.memory_space<vmem>>, vector<2x1x1xf32>
      tpu.vector_store %arg20[%c0_126, %c0_127, %c0_128], %253 {strides = array<i32>} : memref<2x1x1xf32, #tpu.memory_space<vmem>>, vector<2x1x1xf32>,
    } else {
    }
    return
  }
  func.func @transform_0(%arg0: i32, %arg1: i32) -> (i32, i32, i32) {
    %c0_i32 = arith.constant 0 : i32
    %c0_i32_0 = arith.constant 0 : i32
    %c0_i32_1 = arith.constant 0 : i32
    return %arg0, %c0_i32, %c0_i32_0 : i32, i32, i32
  }
  func.func @transform_1(%arg0: i32, %arg1: i32) -> (i32, i32) {
    %c0_i32 = arith.constant 0 : i32
    %c0_i32_0 = arith.constant 0 : i32
    %c0_i32_1 = arith.constant 0 : i32
    return %c0_i32, %c0_i32_0 : i32, i32
  }
  func.func @transform_2(%arg0: i32, %arg1: i32) -> (i32, i32, i32) {
    %c0_i32 = arith.constant 0 : i32
    %c0_i32_0 = arith.constant 0 : i32
    %c0_i32_1 = arith.constant 0 : i32
    return %arg0, %c0_i32, %c0_i32_0 : i32, i32, i32
  }
  func.func @transform_3(%arg0: i32, %arg1: i32) -> (i32, i32) {
    %c0_i32 = arith.constant 0 : i32
    %c0_i32_0 = arith.constant 0 : i32
    %c0_i32_1 = arith.constant 0 : i32
    return %c0_i32, %c0_i32_0 : i32, i32
  }
  func.func @transform_4(%arg0: i32, %arg1: i32) -> (i32, i32) {
    %c0_i32 = arith.constant 0 : i32
    %c0_i32_0 = arith.constant 0 : i32
    %c0_i32_1 = arith.constant 0 : i32
    return %c0_i32, %c0_i32_0 : i32, i32
  }
  func.func @transform_5(%arg0: i32, %arg1: i32) -> (i32, i32, i32) {
    %c0_i32 = arith.constant 0 : i32
    %c0_i32_0 = arith.constant 0 : i32
    %c0_i32_1 = arith.constant 0 : i32
    return %arg1, %c0_i32, %c0_i32_0 : i32, i32, i32
  }
  func.func @transform_6(%arg0: i32, %arg1: i32) -> (i32, i32, i32) {
    %c0_i32 = arith.constant 0 : i32
    %c0_i32_0 = arith.constant 0 : i32
    %c0_i32_1 = arith.constant 0 : i32
    return %arg1, %c0_i32, %c0_i32_0 : i32, i32, i32
  }
  func.func @transform_7(%arg0: i32, %arg1: i32) -> (i32, i32, i32) {
    %c0_i32 = arith.constant 0 : i32
    %c0_i32_0 = arith.constant 0 : i32
    %c0_i32_1 = arith.constant 0 : i32
    return %arg1, %c0_i32, %c0_i32_0 : i32, i32, i32
  }
  func.func @transform_8(%arg0: i32, %arg1: i32) -> (i32, i32, i32) {
    %c0_i32 = arith.constant 0 : i32
    %c0_i32_0 = arith.constant 0 : i32
    %c0_i32_1 = arith.constant 0 : i32
    return %arg1, %c0_i32, %c0_i32_0 : i32, i32, i32
  }
  func.func @transform_9(%arg0: i32, %arg1: i32) -> (i32, i32, i32) {
    %c0_i32 = arith.constant 0 : i32
    %c0_i32_0 = arith.constant 0 : i32
    %c0_i32_1 = arith.constant 0 : i32
    return %arg1, %c0_i32, %c0_i32_0 : i32, i32, i32
  }
  func.func @transform_10(%arg0: i32, %arg1: i32) -> (i32, i32, i32) {
    %c0_i32 = arith.constant 0 : i32
    %c0_i32_0 = arith.constant 0 : i32
    %c0_i32_1 = arith.constant 0 : i32
    return %arg1, %c0_i32, %c0_i32_0 : i32, i32, i32
  }
  func.func @transform_11(%arg0: i32, %arg1: i32) -> (i32, i32, i32) {
    %c0_i32 = arith.constant 0 : i32
    %c0_i32_0 = arith.constant 0 : i32
    %c0_i32_1 = arith.constant 0 : i32
    return %arg1, %c0_i32, %c0_i32_0 : i32, i32, i32
  }
  func.func @transform_12(%arg0: i32, %arg1: i32) -> (i32, i32, i32) {
    %c0_i32 = arith.constant 0 : i32
    %c0_i32_0 = arith.constant 0 : i32
    %c0_i32_1 = arith.constant 0 : i32
    return %arg1, %c0_i32, %c0_i32_0 : i32, i32, i32
  }
  func.func @transform_13(%arg0: i32, %arg1: i32) -> (i32, i32, i32) {
    %c0_i32 = arith.constant 0 : i32
    %c0_i32_0 = arith.constant 0 : i32
    %c0_i32_1 = arith.constant 0 : i32
    return %arg1, %c0_i32, %c0_i32_0 : i32, i32, i32
  }
  func.func @transform_14(%arg0: i32, %arg1: i32) -> (i32, i32, i32) {
    %c0_i32 = arith.constant 0 : i32
    %c0_i32_0 = arith.constant 0 : i32
    %c0_i32_1 = arith.constant 0 : i32
    return %arg1, %c0_i32, %c0_i32_0 : i32, i32, i32
  }
  func.func @transform_15(%arg0: i32, %arg1: i32) -> (i32, i32, i32) {
    %c0_i32 = arith.constant 0 : i32
    %c0_i32_0 = arith.constant 0 : i32
    %c0_i32_1 = arith.constant 0 : i32
    return %arg1, %c0_i32, %c0_i32_0 : i32, i32, i32
  }
  func.func @transform_16(%arg0: i32, %arg1: i32) -> (i32, i32, i32) {
    %c0_i32 = arith.constant 0 : i32
    %c0_i32_0 = arith.constant 0 : i32
    %c0_i32_1 = arith.constant 0 : i32
    return %arg1, %c0_i32, %c0_i32_0 : i32, i32, i32
  }
  func.func @transform_17(%arg0: i32, %arg1: i32) -> (i32, i32, i32) {
    %c0_i32 = arith.constant 0 : i32
    %c0_i32_0 = arith.constant 0 : i32
    %c0_i32_1 = arith.constant 0 : i32
    return %arg0, %c0_i32, %c0_i32_0 : i32, i32, i32
  }
  func.func @transform_18(%arg0: i32, %arg1: i32) -> (i32, i32, i32) {
    %c0_i32 = arith.constant 0 : i32
    %c0_i32_0 = arith.constant 0 : i32
    %c0_i32_1 = arith.constant 0 : i32
    return %arg0, %c0_i32, %c0_i32_0 : i32, i32, i32
  }
}

</mosaic_0001>

<llo_original>
// kernel: continuous_transformer_forward.4
$region0: #{continuous_transformer_forward.4}
  #allocation0 [shape = 'u32[]', space=smem, size = 0x4, offset = 0x4, fixed_abs, tag = 'smem constant byte address 0x4 - core index']
  #allocation1 [shape = 'u32[144,128]{1,0:T(1,128)}', space=vmem, size = 0x12000, scoped, tag = 'internal scratch']
  %s0 = inlined_call_operand.vmem [shape: f32[16,32], index: 0, kind: input, shape index: {}]
  %s1 = inlined_call_operand.vmem [shape: f32[64,32], index: 1, kind: input, shape index: {}]
  %s2 = inlined_call_operand.vmem [shape: f32[16,32], index: 2, kind: output, shape index: {0}]
  %s3 = inlined_call_operand.vmem [shape: f32[1,1,64], index: 3, kind: output, shape index: {1}]
  %s4 = inlined_call_operand.hbm [shape: f32[1,1,1], index: 4, kind: output, shape index: {2}]
  %5 = xla_tuple %s2, %s3, %s4
  %s6 = sld [smem:[#allocation0]]
  $region34: #{continuous_transformer_forward.4} parent=0
    _
  %s8 = ssub.s32 1, %s6
  %s9 = scalar_select 0, %s8, %s6
  $region1: #{continuous_transformer_forward.4} parent=0
    #allocation2 [shape = 'u8[512]{0}', space=vmem, size = 0x400, scoped, tag = 'output window, operand 2, single buffered']
    #allocation3 [shape = 's32[1]{0}', space=sflag, size = 0x4, scoped, tag = 'scoped memory for continuous_transformer_forward.4']
    %10 = vsyncpa [#allocation3], 0
    // Predicated region
    $region2: #{continuous_transformer_forward.4} parent=1 // pred_check
      _
    $region3: #{continuous_transformer_forward.4} parent=1 // pred_check_branch
      %12 = sbr.rel (0) target = $region5
    $region4: #{continuous_transformer_forward.4} parent=1 // pred_region
      _
    $region5: #{continuous_transformer_forward.4} parent=1 // pred_fallthru
      _
    // Predicated region
    $region6: #{continuous_transformer_forward.4} parent=1 // pred_check
      _
    $region7: #{continuous_transformer_forward.4} parent=1 // pred_check_branch
      %14 = sbr.rel (0) target = $region9
    $region8: #{continuous_transformer_forward.4} parent=1 // pred_region
      _
    $region9: #{continuous_transformer_forward.4} parent=1 // pred_fallthru
      _
    %v15 = vld [vmem:[%s0] sm:$0xff]
    %v16 = vld [vmem:[%s0 + $0x8] sm:$0xff]
    %v17 = vld [vmem:[%s1] sm:$0xff]
    %v18 = vld [vmem:[%s1 + $0x8] sm:$0xff]
    %v19 = vld [vmem:[%s1 + $0x10] sm:$0xff]
    %v20 = vld [vmem:[%s1 + $0x18] sm:$0xff]
    %v21 = vld [vmem:[%s1 + $0x20] sm:$0xff]
    %v22 = vld [vmem:[%s1 + $0x28] sm:$0xff]
    %v23 = vld [vmem:[%s1 + $0x30] sm:$0xff]
    %v24 = vld [vmem:[%s1 + $0x38] sm:$0xff]
    %v25 = vmul.f32 %v15, %v15
    %v26 = vmul.f32 %v16, %v16
    %vm27 = vcmask 261120
    %v28 = vsel %vm27, %v25, 0.0
    %29 = vadd.xlane.f32.xlu0 %v28
    %v30 = vpop.xlane.xlu0 %29
    %v31 = vsel %vm27, %v26, 0.0
    %32 = vadd.xlane.f32.xlu0 %v31
    %v33 = vpop.xlane.xlu0 %32
    %v34 = vmul.f32 %v17, %v17
    %v35 = vmul.f32 %v18, %v18
    %v36 = vmul.f32 %v19, %v19
    %v37 = vmul.f32 %v20, %v20
    %v38 = vmul.f32 %v21, %v21
    %v39 = vmul.f32 %v22, %v22
    %v40 = vmul.f32 %v23, %v23
    %v41 = vmul.f32 %v24, %v24
    %v42 = vsel %vm27, %v34, 0.0
    %43 = vadd.xlane.f32.xlu0 %v42
    %v44 = vpop.xlane.xlu0 %43
    %v45 = vsel %vm27, %v35, 0.0
    %46 = vadd.xlane.f32.xlu0 %v45
    %v47 = vpop.xlane.xlu0 %46
    %v48 = vsel %vm27, %v36, 0.0
    %49 = vadd.xlane.f32.xlu0 %v48
    %v50 = vpop.xlane.xlu0 %49
    %v51 = vsel %vm27, %v37, 0.0
    %52 = vadd.xlane.f32.xlu0 %v51
    %v53 = vpop.xlane.xlu0 %52
    %v54 = vsel %vm27, %v38, 0.0
    %55 = vadd.xlane.f32.xlu0 %v54
    %v56 = vpop.xlane.xlu0 %55
    %v57 = vsel %vm27, %v39, 0.0
    %58 = vadd.xlane.f32.xlu0 %v57
    %v59 = vpop.xlane.xlu0 %58
    %v60 = vsel %vm27, %v40, 0.0
    %61 = vadd.xlane.f32.xlu0 %v60
    %v62 = vpop.xlane.xlu0 %61
    %v63 = vsel %vm27, %v41, 0.0
    %64 = vadd.xlane.f32.xlu0 %v63
    %v65 = vpop.xlane.xlu0 %64
    %66 = vxpose.xlu0.b32.start [1/16] %v44, 128
    %67 = vxpose.xlu0.b32.cont [2/16] %v47, 128
    %68 = vxpose.xlu0.b32.cont [3/16] %v50, 128
    %69 = vxpose.xlu0.b32.cont [4/16] %v53, 128
    %70 = vxpose.xlu0.b32.cont [5/16] %v56, 128
    %71 = vxpose.xlu0.b32.cont [6/16] %v59, 128
    %72 = vxpose.xlu0.b32.cont [7/16] %v62, 128
    %73 = vxpose.xlu0.b32.cont [8/16] %v65, 128
    %74 = vxpose.xlu0.b32.cont [9/16] 0.0, 128
    %75 = vxpose.xlu0.b32.cont [10/16] 0.0, 128
    %76 = vxpose.xlu0.b32.cont [11/16] 0.0, 128
    %77 = vxpose.xlu0.b32.cont [12/16] 0.0, 128
    %78 = vxpose.xlu0.b32.cont [13/16] 0.0, 128
    %79 = vxpose.xlu0.b32.cont [14/16] 0.0, 128
    %80 = vxpose.xlu0.b32.cont [15/16] 0.0, 128
    %81 = vxpose.xlu0.b32.end [16/16] 0.0, 128
    %v82 = vpop.trf.xlu0
    %v83 = vpop.trf.xlu0
    %v84 = vpop.trf.xlu0
    %v85 = vpop.trf.xlu0
    %v86 = vpop.trf.xlu0
    %v87 = vpop.trf.xlu0
    %v88 = vpop.trf.xlu0
    %v89 = vpop.trf.xlu0
    %v90 = vpop.trf.xlu0
    %v91 = vpop.trf.xlu0
    %v92 = vpop.trf.xlu0
    %v93 = vpop.trf.xlu0
    %v94 = vpop.trf.xlu0
    %v95 = vpop.trf.xlu0
    %v96 = vpop.trf.xlu0
    %v97 = vpop.trf.xlu0
    %v98 = vlaneseq
    %v99 = vshrl.u32 %v98, 7
    %v100 = vsub.s32 0, %v99
    %v101 = vrot.slane %v82, %v100
    %v102 = vadd.f32 %v30, %v101
    %v103 = vadd.f32 %v33, %v101
    %v105 = vsel %vm27, %v15, 0
    %v108 = vsel %vm27, %v16, 0
    %v111 = vsel %vm27, %v17, 0
    %v114 = vsel %vm27, %v18, 0
    %v117 = vsel %vm27, %v19, 0
    %v120 = vsel %vm27, %v20, 0
    %v123 = vsel %vm27, %v21, 0
    %v126 = vsel %vm27, %v22, 0
    %v129 = vsel %vm27, %v23, 0
    %v132 = vsel %vm27, %v24, 0
    %134 = vmatprep.subr.mxu0 0.0
    %135 = vmatpush1.xpose.msra.mxu0 0.0
    %136 = vmatprep.subr.mxu0 0.0
    %137 = vmatpush1.xpose.msra.mxu0 0.0
    %138 = vmatprep.subr.mxu0 0.0
    %139 = vmatpush1.xpose.msra.mxu0 0.0
    %140 = vmatprep.subr.mxu0 0.0
    %141 = vmatpush1.xpose.msra.mxu0 0.0
    %142 = vmatprep.subr.mxu0 0.0
    %143 = vmatpush1.xpose.msra.mxu0 0.0
    %144 = vmatprep.subr.mxu0 0.0
    %145 = vmatpush1.xpose.msra.mxu0 0.0
    %146 = vmatprep.subr.mxu0 0.0
    %147 = vmatpush1.xpose.msra.mxu0 0.0
    %148 = vmatprep.subr.mxu0 0.0
    %149 = vmatpush1.xpose.msra.mxu0 0.0
    %150 = vmatprep.subr.mxu0 0.0
    %151 = vmatpush1.xpose.msra.mxu0 %v132
    %152 = vmatprep.subr.mxu0 0.0
    %153 = vmatpush1.xpose.msra.mxu0 %v129
    %154 = vmatprep.subr.mxu0 0.0
    %155 = vmatpush1.xpose.msra.mxu0 %v126
    %156 = vmatprep.subr.mxu0 0.0
    %157 = vmatpush1.xpose.msra.mxu0 %v123
    %158 = vmatprep.subr.mxu0 0.0
    %159 = vmatpush1.xpose.msra.mxu0 %v120
    %160 = vmatprep.subr.mxu0 0.0
    %161 = vmatpush1.xpose.msra.mxu0 %v117
    %162 = vmatprep.subr.mxu0 0.0
    %163 = vmatpush1.xpose.msra.mxu0 %v114
    %164 = vmatprep.subr.mxu0 0.0
    %165 = vmatpush1.xpose.msra.mxu0 %v111
    %166 = vmatprep.subr.mxu0 0.0
    %167 = vmatpush2.xpose.msra.mxu0 0.0
    %168 = vmatprep.subr.mxu0 0.0
    %169 = vmatpush2.xpose.msra.mxu0 0.0
    %170 = vmatprep.subr.mxu0 0.0
    %171 = vmatpush2.xpose.msra.mxu0 0.0
    %172 = vmatprep.subr.mxu0 0.0
    %173 = vmatpush2.xpose.msra.mxu0 0.0
    %174 = vmatprep.subr.mxu0 0.0
    %175 = vmatpush2.xpose.msra.mxu0 0.0
    %176 = vmatprep.subr.mxu0 0.0
    %177 = vmatpush2.xpose.msra.mxu0 0.0
    %178 = vmatprep.subr.mxu0 0.0
    %179 = vmatpush2.xpose.msra.mxu0 0.0
    %180 = vmatprep.subr.mxu0 0.0
    %181 = vmatpush2.xpose.msra.mxu0 0.0
    %182 = vmatprep.subr.mxu0 0.0
    %183 = vmatpush2.xpose.msra.mxu0 0.0
    %184 = vmatprep.subr.mxu0 0.0
    %185 = vmatpush2.xpose.msra.mxu0 0.0
    %186 = vmatprep.subr.mxu0 0.0
    %187 = vmatpush2.xpose.msra.mxu0 0.0
    %188 = vmatprep.subr.mxu0 0.0
    %189 = vmatpush2.xpose.msra.mxu0 0.0
    %190 = vmatprep.subr.mxu0 0.0
    %191 = vmatpush2.xpose.msra.mxu0 0.0
    %192 = vmatprep.subr.mxu0 0.0
    %193 = vmatpush2.xpose.msra.mxu0 0.0
    %194 = vmatprep.subr.mxu0 0.0
    %195 = vmatpush2.xpose.msra.mxu0 0.0
    %196 = vmatprep.subr.mxu0 0.0
    %197 = vmatpush2.xpose.msra.mxu0 0.0
    %198 = vmatprep.mubr.f32.mxu0 0.0
    %199 = vmatmul.mubr.f32.gmra.mxu0 %v105
    %v200 = vpop.f32.mrf.mxu0
    %v201 = vadd.f32 0.0, %v200
    %v202 = vpop.f32.mrf.mxu0
    %203 = vmatprep.mubr.f32.mxu0 0.0
    %204 = vmatmul.mubr.f32.gmra.mxu0 %v108
    %v205 = vpop.f32.mrf.mxu0
    %v206 = vadd.f32 0.0, %v205
    %v207 = vpop.f32.mrf.mxu0
    %208 = vdwg.mxu0
    %v209 = vmul.f32 %v201, 2.0
    %v210 = vmul.f32 %v206, 2.0
    %v211 = vsub.f32 %v102, %v209
    %v212 = vsub.f32 %v103, %v210
    %vm213 = vcmask 523264
    %v214 = vsel %vm213, %v211, inf
    %215 = vmin.xlane.f32.xlu0 %v214
    %v216 = vpop.xlane.xlu0 %215
    %v217 = vsel %vm213, %v212, inf
    %218 = vmin.xlane.f32.xlu0 %v217
    %v219 = vpop.xlane.xlu0 %218
    %v220 = vlaneseq
    %v221 = vand.u32 %v220, 127
    %vm222 = vcmp.le.f32.partialorder %v211, %v216
    %vm223 = vcmp.le.f32.partialorder %v212, %v219
    %v224 = vsel %vm222, %v221, 64
    %v225 = vsel %vm223, %v221, 64
    %v226 = vsel %vm213, %v224, 2147483647
    %v227 = vand.u32 %v226, 65535
    %v228 = vshra.s32 %v226, 16
    %v229 = vcvt.s32.f32 %v227
    %v230 = vcvt.s32.f32 %v228
    %231 = vmin.xlane.f32.xlu0 %v230
    %v232 = vpop.xlane.xlu0 %231
    %vm233 = vcmp.eq.f32.partialorder %v230, %v232
    %v234 = vsel %vm233, %v229, inf
    %235 = vmin.xlane.f32.xlu0 %v234
    %v236 = vpop.xlane.xlu0 %235
    %v237 = vcvt.f32.s32 %v236
    %v238 = vcvt.f32.s32 %v232
    %v239 = vshll.u32 %v238, 16
    %v240 = vadd.s32 %v239, %v237
    %v241 = vsel %vm213, %v225, 2147483647
    %v242 = vand.u32 %v241, 65535
    %v243 = vshra.s32 %v241, 16
    %v244 = vcvt.s32.f32 %v242
    %v245 = vcvt.s32.f32 %v243
    %246 = vmin.xlane.f32.xlu0 %v245
    %v247 = vpop.xlane.xlu0 %246
    %vm248 = vcmp.eq.f32.partialorder %v245, %v247
    %v249 = vsel %vm248, %v244, inf
    %250 = vmin.xlane.f32.xlu0 %v249
    %v251 = vpop.xlane.xlu0 %250
    %v252 = vcvt.f32.s32 %v251
    %v253 = vcvt.f32.s32 %v247
    %v254 = vshll.u32 %v253, 16
    %v255 = vadd.s32 %v254, %v252
    %vm256 = vcmp.eq.s32.totalorder %v221, %v240
    %vm257 = vcmp.eq.s32.totalorder %v221, %v255
    %v258 = vsel %vm256, 1, 0
    %v259 = vsel %vm257, 1, 0
    %v260 = vcvt.s32.f32 %v258
    %v261 = vcvt.s32.f32 %v259
    %v263 = vsel %vm213, %v260, 0
    %v266 = vsel %vm213, %v261, 0
    %268 = vmatprep.subr.mxu0 0.0
    %269 = vmatpush1.msra.mxu0 0.0
    %270 = vmatprep.subr.mxu0 0.0
    %271 = vmatpush1.msra.mxu0 0.0
    %272 = vmatprep.subr.mxu0 0.0
    %273 = vmatpush1.msra.mxu0 0.0
    %274 = vmatprep.subr.mxu0 0.0
    %275 = vmatpush1.msra.mxu0 0.0
    %276 = vmatprep.subr.mxu0 0.0
    %277 = vmatpush1.msra.mxu0 0.0
    %278 = vmatprep.subr.mxu0 0.0
    %279 = vmatpush1.msra.mxu0 0.0
    %280 = vmatprep.subr.mxu0 0.0
    %281 = vmatpush1.msra.mxu0 0.0
    %282 = vmatprep.subr.mxu0 0.0
    %283 = vmatpush1.msra.mxu0 0.0
    %284 = vmatprep.subr.mxu0 0.0
    %285 = vmatpush1.msra.mxu0 %v24
    %286 = vmatprep.subr.mxu0 0.0
    %287 = vmatpush1.msra.mxu0 %v23
    %288 = vmatprep.subr.mxu0 0.0
    %289 = vmatpush1.msra.mxu0 %v22
    %290 = vmatprep.subr.mxu0 0.0
    %291 = vmatpush1.msra.mxu0 %v21
    %292 = vmatprep.subr.mxu0 0.0
    %293 = vmatpush1.msra.mxu0 %v20
    %294 = vmatprep.subr.mxu0 0.0
    %295 = vmatpush1.msra.mxu0 %v19
    %296 = vmatprep.subr.mxu0 0.0
    %297 = vmatpush1.msra.mxu0 %v18
    %298 = vmatprep.subr.mxu0 0.0
    %299 = vmatpush1.msra.mxu0 %v17
    %300 = vmatprep.subr.mxu0 0.0
    %301 = vmatpush2.msra.mxu0 0.0
    %302 = vmatprep.subr.mxu0 0.0
    %303 = vmatpush2.msra.mxu0 0.0
    %304 = vmatprep.subr.mxu0 0.0
    %305 = vmatpush2.msra.mxu0 0.0
    %306 = vmatprep.subr.mxu0 0.0
    %307 = vmatpush2.msra.mxu0 0.0
    %308 = vmatprep.subr.mxu0 0.0
    %309 = vmatpush2.msra.mxu0 0.0
    %310 = vmatprep.subr.mxu0 0.0
    %311 = vmatpush2.msra.mxu0 0.0
    %312 = vmatprep.subr.mxu0 0.0
    %313 = vmatpush2.msra.mxu0 0.0
    %314 = vmatprep.subr.mxu0 0.0
    %315 = vmatpush2.msra.mxu0 0.0
    %316 = vmatprep.subr.mxu0 0.0
    %317 = vmatpush2.msra.mxu0 0.0
    %318 = vmatprep.subr.mxu0 0.0
    %319 = vmatpush2.msra.mxu0 0.0
    %320 = vmatprep.subr.mxu0 0.0
    %321 = vmatpush2.msra.mxu0 0.0
    %322 = vmatprep.subr.mxu0 0.0
    %323 = vmatpush2.msra.mxu0 0.0
    %324 = vmatprep.subr.mxu0 0.0
    %325 = vmatpush2.msra.mxu0 0.0
    %326 = vmatprep.subr.mxu0 0.0
    %327 = vmatpush2.msra.mxu0 0.0
    %328 = vmatprep.subr.mxu0 0.0
    %329 = vmatpush2.msra.mxu0 0.0
    %330 = vmatprep.subr.mxu0 0.0
    %331 = vmatpush2.msra.mxu0 0.0
    %332 = vmatprep.mubr.f32.mxu0 0.0
    %333 = vmatmul.mubr.f32.gmra.mxu0 %v263
    %v334 = vpop.f32.mrf.mxu0
    %v335 = vadd.f32 0.0, %v334
    %v336 = vpop.f32.mrf.mxu0
    %337 = vmatprep.mubr.f32.mxu0 0.0
    %338 = vmatmul.mubr.f32.gmra.mxu0 %v266
    %v339 = vpop.f32.mrf.mxu0
    %v340 = vadd.f32 0.0, %v339
    %v341 = vpop.f32.mrf.mxu0
    %342 = vdwg.mxu0
    %343 = vst.msk [vmem:[%s2] sm:$0xff] %vm27, %v335
    %344 = vst.msk [vmem:[%s2 + $0x8] sm:$0xff] %vm27, %v340
    %v345 = vsel %vm213, %v260, 0.0
    %v346 = vsel %vm213, %v261, 0.0
    %v347 = vadd.f32 %v345, %v346
    %v348 = vrot.slane %v347, 4
    %v349 = vadd.f32 %v347, %v348
    %v350 = vrot.slane %v349, 2
    %v351 = vadd.f32 %v349, %v350
    %v352 = vrot.slane %v351, 1
    %v353 = vadd.f32 %v351, %v352
    %vm354 = vcmask 516096
    %355 = vst.msk [vmem:[%s3] sm:$0x1] %vm354, %v353
    %v356 = vsub.f32 %v335, %v15
    %v357 = vsub.f32 %v340, %v16
    %v358 = vmul.f32 %v356, %v356
    %v359 = vmul.f32 %v357, %v357
    %v360 = vsel %vm27, %v358, 0.0
    %361 = vadd.xlane.f32.xlu0 %v360
    %v362 = vpop.xlane.xlu0 %361
    %v363 = vsel %vm27, %v359, 0.0
    %364 = vadd.xlane.f32.xlu0 %v363
    %v365 = vpop.xlane.xlu0 %364
    %v366 = vadd.f32 %v362, %v365
    %v367 = vrot.slane %v366, 4
    %v368 = vadd.f32 %v366, %v367
    %v369 = vrot.slane %v368, 2
    %v370 = vadd.f32 %v368, %v369
    %v371 = vrot.slane %v370, 1
    %v372 = vadd.f32 %v370, %v371
    %vm373 = vcmask 0
    %374 = vst.msk [vmem:[#allocation2] sm:$0x1] %vm373, %v372
    // Predicated region
    $region10: #{continuous_transformer_forward.4} parent=1 // pred_check
      _
    $region11: #{continuous_transformer_forward.4} parent=1 // pred_check_branch
      %376 = sbr.rel (0) target = $region13
    $region12: #{continuous_transformer_forward.4} parent=1 // pred_region
      _
    $region13: #{continuous_transformer_forward.4} parent=1 // pred_fallthru
      _
    // Predicated region
    $region14: #{continuous_transformer_forward.4} parent=1 // pred_check
      _
    $region15: #{continuous_transformer_forward.4} parent=1 // pred_check_branch
      %378 = sbr.rel (0) target = $region17
    $region16: #{continuous_transformer_forward.4} parent=1 // pred_region
      _
    $region17: #{continuous_transformer_forward.4} parent=1 // pred_fallthru
      _
    // Predicated region
    $region18: #{continuous_transformer_forward.4} parent=1 // pred_check
      _
    $region19: #{continuous_transformer_forward.4} parent=1 // pred_check_branch
      %380 = sbr.rel (0) target = $region21
    $region20: #{continuous_transformer_forward.4} parent=1 // pred_region
      %s382 = ssub.s32 16, 16
      %383 = vsyncadd [#allocation3], %s382
      %s385 = sshll.u32 [#allocation2], 4
      %s386 = int_to_ptr.vmem [resolvable:$true] %s385
      %388 = dma.vmem_to_hbm [thread:$0]  %s386, 16, %s4, [#allocation3]
    $region21: #{continuous_transformer_forward.4} parent=1 // pred_fallthru
      _
    // Predicated region
    $region22: #{continuous_transformer_forward.4} parent=1 // pred_check
      _
    $region23: #{continuous_transformer_forward.4} parent=1 // pred_check_branch
      %390 = sbr.rel (0) target = $region25
    $region24: #{continuous_transformer_forward.4} parent=1 // pred_region
      _
    $region25: #{continuous_transformer_forward.4} parent=1 // pred_fallthru
      _
    // Predicated region
    $region26: #{continuous_transformer_forward.4} parent=1 // pred_check
      _
    $region27: #{continuous_transformer_forward.4} parent=1 // pred_check_branch
      %392 = sbr.rel (0) target = $region29
    $region28: #{continuous_transformer_forward.4} parent=1 // pred_region
      _
    $region29: #{continuous_transformer_forward.4} parent=1 // pred_fallthru
      _
    // Predicated region
    $region30: #{continuous_transformer_forward.4} parent=1 // pred_check
      _
    $region31: #{continuous_transformer_forward.4} parent=1 // pred_check_branch
      %394 = sbr.rel (0) target = $region33
    $region32: #{continuous_transformer_forward.4} parent=1 // pred_region
      %395 = dma.done [#allocation3], 16
    $region33: #{continuous_transformer_forward.4} parent=1 // pred_fallthru
      _
    %396 = vsyncpa [#allocation3], 1

// kernel: continuous_transformer_forward.3
$region0: #{continuous_transformer_forward.3}
  #allocation0 [shape = 'u32[]', space=smem, size = 0x4, offset = 0x4, fixed_abs, tag = 'smem constant byte address 0x4 - core index']
  #allocation1 [shape = 'u32[144,128]{1,0:T(1,128)}', space=vmem, size = 0x12000, scoped, tag = 'internal scratch']
  #allocation2 [shape = 'f32[16,32]{1,0:T(8,128)}', space=vmem, size = 0x2000, scoped, tag = 'scratch operand']
  #allocation3 [shape = 'f32[16,32]{1,0:T(8,128)}', space=vmem, size = 0x2000, scoped, tag = 'scratch operand']
  %s0 = inlined_call_operand.vmem [shape: f32[2,8,6], index: 0, kind: input, shape index: {}]
  %s1 = inlined_call_operand.vmem [shape: f32[16,32], index: 1, kind: input, shape index: {}]
  %s2 = inlined_call_operand.vmem [shape: f32[6,32], index: 2, kind: input, shape index: {}]
  %s3 = inlined_call_operand.vmem [shape: f32[1,32], index: 3, kind: input, shape index: {}]
  %s4 = inlined_call_operand.vmem [shape: f32[2,32,96], index: 4, kind: input, shape index: {}]
  %s5 = inlined_call_operand.vmem [shape: f32[2,1,96], index: 5, kind: input, shape index: {}]
  %s6 = inlined_call_operand.vmem [shape: f32[2,32,32], index: 6, kind: input, shape index: {}]
  %s7 = inlined_call_operand.vmem [shape: f32[2,1,32], index: 7, kind: input, shape index: {}]
  %s8 = inlined_call_operand.vmem [shape: f32[2,1,32], index: 8, kind: input, shape index: {}]
  %s9 = inlined_call_operand.vmem [shape: f32[2,1,32], index: 9, kind: input, shape index: {}]
  %s10 = inlined_call_operand.vmem [shape: f32[2,32,64], index: 10, kind: input, shape index: {}]
  %s11 = inlined_call_operand.vmem [shape: f32[2,1,64], index: 11, kind: input, shape index: {}]
  %s12 = inlined_call_operand.vmem [shape: f32[2,64,32], index: 12, kind: input, shape index: {}]
  %s13 = inlined_call_operand.vmem [shape: f32[2,1,32], index: 13, kind: input, shape index: {}]
  %s14 = inlined_call_operand.vmem [shape: f32[2,1,32], index: 14, kind: input, shape index: {}]
  %s15 = inlined_call_operand.vmem [shape: f32[2,1,32], index: 15, kind: input, shape index: {}]
  %s16 = inlined_call_operand.vmem [shape: f32[2,8,32], index: 16, kind: output, shape index: {}]
  %s17 = sld [smem:[#allocation0]]
  $region105: #{continuous_transformer_forward.3} parent=0
    _
  %s19 = ssub.s32 1, %s17
  %s20 = scalar_select 0, %s19, %s17
  loop: start=0, step=1, limit=4
  $region2: #{continuous_transformer_forward.3} parent=0 // loop_pre_header
    _
  $region3: #{continuous_transformer_forward.3} parent=0 // loop_header
    %s22 = sphi 0, %s26
    %p23 = scmp.ge.s32.totalorder %s22, 4
    %s29 = sphi 0, %s41
    %s30 = sphi 0, %s37
    %s31 = sphi 0, %s29
    %s32 = sphi 0, %s30
    %s33 = sphi 0, %s31
    %s34 = sphi 0, %s32
    %s44 = sphi 0, %s46
    %s47 = sphi 0, %s44
    %s48 = sphi 0, %s47
    %s64 = sphi 0, %s48
    %s68 = sphi 0, %s68
    %s70 = sphi 0, %s68
    %s71 = sphi 0, %s70
    %s85 = sphi 0, %s71
    %s89 = sphi 0, %s89
    %s91 = sphi 0, %s89
    %s92 = sphi 0, %s91
    %s106 = sphi 0, %s92
    %s110 = sphi 0, %s110
    %s112 = sphi 0, %s110
    %s113 = sphi 0, %s112
    %s127 = sphi 0, %s113
    %s133 = sphi 0, %s135
    %s136 = sphi 0, %s133
    %s137 = sphi 0, %s136
    %s153 = sphi 0, %s137
    %s159 = sphi 0, %s161
    %s162 = sphi 0, %s159
    %s163 = sphi 0, %s162
    %s179 = sphi 0, %s163
    %s185 = sphi 0, %s187
    %s188 = sphi 0, %s185
    %s189 = sphi 0, %s188
    %s205 = sphi 0, %s189
    %s211 = sphi 0, %s213
    %s214 = sphi 0, %s211
    %s215 = sphi 0, %s214
    %s231 = sphi 0, %s215
    %s237 = sphi 0, %s239
    %s240 = sphi 0, %s237
    %s241 = sphi 0, %s240
    %s257 = sphi 0, %s241
    %s263 = sphi 0, %s265
    %s266 = sphi 0, %s263
    %s267 = sphi 0, %s266
    %s283 = sphi 0, %s267
    %s289 = sphi 0, %s291
    %s292 = sphi 0, %s289
    %s293 = sphi 0, %s292
    %s309 = sphi 0, %s293
    %s315 = sphi 0, %s317
    %s318 = sphi 0, %s315
    %s319 = sphi 0, %s318
    %s335 = sphi 0, %s319
    %s341 = sphi 0, %s343
    %s344 = sphi 0, %s341
    %s345 = sphi 0, %s344
    %s361 = sphi 0, %s345
    %s367 = sphi 0, %s369
    %s370 = sphi 0, %s367
    %s371 = sphi 0, %s370
    %s387 = sphi 0, %s371
    %s393 = sphi 0, %s395
    %s396 = sphi 0, %s393
    %s397 = sphi 0, %s396
    %s413 = sphi 0, %s397
    %s419 = sphi 0, %s421
    %s422 = sphi 0, %s419
    %s423 = sphi 0, %s422
    %s439 = sphi 0, %s423
    %s445 = sphi 0, %s447
    %s448 = sphi 0, %s445
    %s449 = sphi 0, %s448
    %s465 = sphi 0, %s449
  $region4: #{continuous_transformer_forward.3} parent=0 // loop_header_branch
    %25 = sbr.rel (%p23) target = $region8
  $region5: #{continuous_transformer_forward.3} parent=0 // loop_body
    %s27 = ssub.s32 %s22, 1
    %s28 = ssub.s32 %s22, 2
    %s35 = sadd.s32 1, %s30
    %p36 = scmp.ge.s32.totalorder %s35, 2
    %s37 = scalar_select %p36, 0, %s35
    %s38 = sadd.s32 1, %s29
    %s39 = scalar_select %p36, %s38, %s29
    %p40 = scmp.ge.s32.totalorder %s39, 1
    %s41 = scalar_select %p40, 0, %s39
    %s42 = ssub.s32 %s29, %s41
    %p43 = scmp.eq.s32.totalorder %s42, 0
    %s45 = sadd.s32 %s44, 1
    %s46 = scalar_select %p43, %s44, %s45
    %p49 = pneg %p43
    %p50 = scmp.eq.s32.totalorder %s22, 1
    %p51 = por %p49, %p50
    %p52 = scmp.ne.s32.totalorder %s44, %s47
    %p53 = scmp.eq.s32.totalorder %s22, 0
    %p54 = por %p52, %p53
    %p55 = scmp.ne.s32.totalorder %s44, %s47
    %p56 = scmp.eq.s32.totalorder %s27, 1
    %p57 = por %p55, %p56
    %p58 = scmp.ne.s32.totalorder %s47, %s48
    %p59 = scmp.eq.s32.totalorder %s27, 0
    %p60 = por %p58, %p59
    %p61 = scmp.ne.s32.totalorder %s47, %s48
    %p62 = scmp.eq.s32.totalorder %s28, 1
    %p63 = por %p61, %p62
    %p65 = scmp.ne.s32.totalorder %s48, %s64
    %p66 = scmp.eq.s32.totalorder %s28, 0
    %p67 = por %p65, %p66
    %s69 = sadd.s32 %s68, 1
    %p72 = scmp.eq.s32.totalorder %s22, 1
    %p73 = scmp.ne.s32.totalorder %s68, %s70
    %p74 = scmp.eq.s32.totalorder %s22, 0
    %p75 = por %p73, %p74
    %p76 = scmp.ne.s32.totalorder %s68, %s70
    %p77 = scmp.eq.s32.totalorder %s27, 1
    %p78 = por %p76, %p77
    %p79 = scmp.ne.s32.totalorder %s70, %s71
    %p80 = scmp.eq.s32.totalorder %s27, 0
    %p81 = por %p79, %p80
    %p82 = scmp.ne.s32.totalorder %s70, %s71
    %p83 = scmp.eq.s32.totalorder %s28, 1
    %p84 = por %p82, %p83
    %p86 = scmp.ne.s32.totalorder %s71, %s85
    %p87 = scmp.eq.s32.totalorder %s28, 0
    %p88 = por %p86, %p87
    %s90 = sadd.s32 %s89, 1
    %p93 = scmp.eq.s32.totalorder %s22, 1
    %p94 = scmp.ne.s32.totalorder %s89, %s91
    %p95 = scmp.eq.s32.totalorder %s22, 0
    %p96 = por %p94, %p95
    %p97 = scmp.ne.s32.totalorder %s89, %s91
    %p98 = scmp.eq.s32.totalorder %s27, 1
    %p99 = por %p97, %p98
    %p100 = scmp.ne.s32.totalorder %s91, %s92
    %p101 = scmp.eq.s32.totalorder %s27, 0
    %p102 = por %p100, %p101
    %p103 = scmp.ne.s32.totalorder %s91, %s92
    %p104 = scmp.eq.s32.totalorder %s28, 1
    %p105 = por %p103, %p104
    %p107 = scmp.ne.s32.totalorder %s92, %s106
    %p108 = scmp.eq.s32.totalorder %s28, 0
    %p109 = por %p107, %p108
    %s111 = sadd.s32 %s110, 1
    %p114 = scmp.eq.s32.totalorder %s22, 1
    %p115 = scmp.ne.s32.totalorder %s110, %s112
    %p116 = scmp.eq.s32.totalorder %s22, 0
    %p117 = por %p115, %p116
    %p118 = scmp.ne.s32.totalorder %s110, %s112
    %p119 = scmp.eq.s32.totalorder %s27, 1
    %p120 = por %p118, %p119
    %p121 = scmp.ne.s32.totalorder %s112, %s113
    %p122 = scmp.eq.s32.totalorder %s27, 0
    %p123 = por %p121, %p122
    %p124 = scmp.ne.s32.totalorder %s112, %s113
    %p125 = scmp.eq.s32.totalorder %s28, 1
    %p126 = por %p124, %p125
    %p128 = scmp.ne.s32.totalorder %s113, %s127
    %p129 = scmp.eq.s32.totalorder %s28, 0
    %p130 = por %p128, %p129
    %s131 = ssub.s32 %s30, %s37
    %p132 = scmp.eq.s32.totalorder %s131, 0
    %s134 = sadd.s32 %s133, 1
    %s135 = scalar_select %p132, %s133, %s134
    %p138 = pneg %p132
    %p139 = scmp.eq.s32.totalorder %s22, 1
    %p140 = por %p138, %p139
    %p141 = scmp.ne.s32.totalorder %s133, %s136
    %p142 = scmp.eq.s32.totalorder %s22, 0
    %p143 = por %p141, %p142
    %p144 = scmp.ne.s32.totalorder %s133, %s136
    %p145 = scmp.eq.s32.totalorder %s27, 1
    %p146 = por %p144, %p145
    %p147 = scmp.ne.s32.totalorder %s136, %s137
    %p148 = scmp.eq.s32.totalorder %s27, 0
    %p149 = por %p147, %p148
    %p150 = scmp.ne.s32.totalorder %s136, %s137
    %p151 = scmp.eq.s32.totalorder %s28, 1
    %p152 = por %p150, %p151
    %p154 = scmp.ne.s32.totalorder %s137, %s153
    %p155 = scmp.eq.s32.totalorder %s28, 0
    %p156 = por %p154, %p155
    %s157 = ssub.s32 %s30, %s37
    %p158 = scmp.eq.s32.totalorder %s157, 0
    %s160 = sadd.s32 %s159, 1
    %s161 = scalar_select %p158, %s159, %s160
    %p164 = pneg %p158
    %p165 = scmp.eq.s32.totalorder %s22, 1
    %p166 = por %p164, %p165
    %p167 = scmp.ne.s32.totalorder %s159, %s162
    %p168 = scmp.eq.s32.totalorder %s22, 0
    %p169 = por %p167, %p168
    %p170 = scmp.ne.s32.totalorder %s159, %s162
    %p171 = scmp.eq.s32.totalorder %s27, 1
    %p172 = por %p170, %p171
    %p173 = scmp.ne.s32.totalorder %s162, %s163
    %p174 = scmp.eq.s32.totalorder %s27, 0
    %p175 = por %p173, %p174
    %p176 = scmp.ne.s32.totalorder %s162, %s163
    %p177 = scmp.eq.s32.totalorder %s28, 1
    %p178 = por %p176, %p177
    %p180 = scmp.ne.s32.totalorder %s163, %s179
    %p181 = scmp.eq.s32.totalorder %s28, 0
    %p182 = por %p180, %p181
    %s183 = ssub.s32 %s30, %s37
    %p184 = scmp.eq.s32.totalorder %s183, 0
    %s186 = sadd.s32 %s185, 1
    %s187 = scalar_select %p184, %s185, %s186
    %p190 = pneg %p184
    %p191 = scmp.eq.s32.totalorder %s22, 1
    %p192 = por %p190, %p191
    %p193 = scmp.ne.s32.totalorder %s185, %s188
    %p194 = scmp.eq.s32.totalorder %s22, 0
    %p195 = por %p193, %p194
    %p196 = scmp.ne.s32.totalorder %s185, %s188
    %p197 = scmp.eq.s32.totalorder %s27, 1
    %p198 = por %p196, %p197
    %p199 = scmp.ne.s32.totalorder %s188, %s189
    %p200 = scmp.eq.s32.totalorder %s27, 0
    %p201 = por %p199, %p200
    %p202 = scmp.ne.s32.totalorder %s188, %s189
    %p203 = scmp.eq.s32.totalorder %s28, 1
    %p204 = por %p202, %p203
    %p206 = scmp.ne.s32.totalorder %s189, %s205
    %p207 = scmp.eq.s32.totalorder %s28, 0
    %p208 = por %p206, %p207
    %s209 = ssub.s32 %s30, %s37
    %p210 = scmp.eq.s32.totalorder %s209, 0
    %s212 = sadd.s32 %s211, 1
    %s213 = scalar_select %p210, %s211, %s212
    %p216 = pneg %p210
    %p217 = scmp.eq.s32.totalorder %s22, 1
    %p218 = por %p216, %p217
    %p219 = scmp.ne.s32.totalorder %s211, %s214
    %p220 = scmp.eq.s32.totalorder %s22, 0
    %p221 = por %p219, %p220
    %p222 = scmp.ne.s32.totalorder %s211, %s214
    %p223 = scmp.eq.s32.totalorder %s27, 1
    %p224 = por %p222, %p223
    %p225 = scmp.ne.s32.totalorder %s214, %s215
    %p226 = scmp.eq.s32.totalorder %s27, 0
    %p227 = por %p225, %p226
    %p228 = scmp.ne.s32.totalorder %s214, %s215
    %p229 = scmp.eq.s32.totalorder %s28, 1
    %p230 = por %p228, %p229
    %p232 = scmp.ne.s32.totalorder %s215, %s231
    %p233 = scmp.eq.s32.totalorder %s28, 0
    %p234 = por %p232, %p233
    %s235 = ssub.s32 %s30, %s37
    %p236 = scmp.eq.s32.totalorder %s235, 0
    %s238 = sadd.s32 %s237, 1
    %s239 = scalar_select %p236, %s237, %s238
    %p242 = pneg %p236
    %p243 = scmp.eq.s32.totalorder %s22, 1
    %p244 = por %p242, %p243
    %p245 = scmp.ne.s32.totalorder %s237, %s240
    %p246 = scmp.eq.s32.totalorder %s22, 0
    %p247 = por %p245, %p246
    %p248 = scmp.ne.s32.totalorder %s237, %s240
    %p249 = scmp.eq.s32.totalorder %s27, 1
    %p250 = por %p248, %p249
    %p251 = scmp.ne.s32.totalorder %s240, %s241
    %p252 = scmp.eq.s32.totalorder %s27, 0
    %p253 = por %p251, %p252
    %p254 = scmp.ne.s32.totalorder %s240, %s241
    %p255 = scmp.eq.s32.totalorder %s28, 1
    %p256 = por %p254, %p255
    %p258 = scmp.ne.s32.totalorder %s241, %s257
    %p259 = scmp.eq.s32.totalorder %s28, 0
    %p260 = por %p258, %p259
    %s261 = ssub.s32 %s30, %s37
    %p262 = scmp.eq.s32.totalorder %s261, 0
    %s264 = sadd.s32 %s263, 1
    %s265 = scalar_select %p262, %s263, %s264
    %p268 = pneg %p262
    %p269 = scmp.eq.s32.totalorder %s22, 1
    %p270 = por %p268, %p269
    %p271 = scmp.ne.s32.totalorder %s263, %s266
    %p272 = scmp.eq.s32.totalorder %s22, 0
    %p273 = por %p271, %p272
    %p274 = scmp.ne.s32.totalorder %s263, %s266
    %p275 = scmp.eq.s32.totalorder %s27, 1
    %p276 = por %p274, %p275
    %p277 = scmp.ne.s32.totalorder %s266, %s267
    %p278 = scmp.eq.s32.totalorder %s27, 0
    %p279 = por %p277, %p278
    %p280 = scmp.ne.s32.totalorder %s266, %s267
    %p281 = scmp.eq.s32.totalorder %s28, 1
    %p282 = por %p280, %p281
    %p284 = scmp.ne.s32.totalorder %s267, %s283
    %p285 = scmp.eq.s32.totalorder %s28, 0
    %p286 = por %p284, %p285
    %s287 = ssub.s32 %s30, %s37
    %p288 = scmp.eq.s32.totalorder %s287, 0
    %s290 = sadd.s32 %s289, 1
    %s291 = scalar_select %p288, %s289, %s290
    %p294 = pneg %p288
    %p295 = scmp.eq.s32.totalorder %s22, 1
    %p296 = por %p294, %p295
    %p297 = scmp.ne.s32.totalorder %s289, %s292
    %p298 = scmp.eq.s32.totalorder %s22, 0
    %p299 = por %p297, %p298
    %p300 = scmp.ne.s32.totalorder %s289, %s292
    %p301 = scmp.eq.s32.totalorder %s27, 1
    %p302 = por %p300, %p301
    %p303 = scmp.ne.s32.totalorder %s292, %s293
    %p304 = scmp.eq.s32.totalorder %s27, 0
    %p305 = por %p303, %p304
    %p306 = scmp.ne.s32.totalorder %s292, %s293
    %p307 = scmp.eq.s32.totalorder %s28, 1
    %p308 = por %p306, %p307
    %p310 = scmp.ne.s32.totalorder %s293, %s309
    %p311 = scmp.eq.s32.totalorder %s28, 0
    %p312 = por %p310, %p311
    %s313 = ssub.s32 %s30, %s37
    %p314 = scmp.eq.s32.totalorder %s313, 0
    %s316 = sadd.s32 %s315, 1
    %s317 = scalar_select %p314, %s315, %s316
    %p320 = pneg %p314
    %p321 = scmp.eq.s32.totalorder %s22, 1
    %p322 = por %p320, %p321
    %p323 = scmp.ne.s32.totalorder %s315, %s318
    %p324 = scmp.eq.s32.totalorder %s22, 0
    %p325 = por %p323, %p324
    %p326 = scmp.ne.s32.totalorder %s315, %s318
    %p327 = scmp.eq.s32.totalorder %s27, 1
    %p328 = por %p326, %p327
    %p329 = scmp.ne.s32.totalorder %s318, %s319
    %p330 = scmp.eq.s32.totalorder %s27, 0
    %p331 = por %p329, %p330
    %p332 = scmp.ne.s32.totalorder %s318, %s319
    %p333 = scmp.eq.s32.totalorder %s28, 1
    %p334 = por %p332, %p333
    %p336 = scmp.ne.s32.totalorder %s319, %s335
    %p337 = scmp.eq.s32.totalorder %s28, 0
    %p338 = por %p336, %p337
    %s339 = ssub.s32 %s30, %s37
    %p340 = scmp.eq.s32.totalorder %s339, 0
    %s342 = sadd.s32 %s341, 1
    %s343 = scalar_select %p340, %s341, %s342
    %p346 = pneg %p340
    %p347 = scmp.eq.s32.totalorder %s22, 1
    %p348 = por %p346, %p347
    %p349 = scmp.ne.s32.totalorder %s341, %s344
    %p350 = scmp.eq.s32.totalorder %s22, 0
    %p351 = por %p349, %p350
    %p352 = scmp.ne.s32.totalorder %s341, %s344
    %p353 = scmp.eq.s32.totalorder %s27, 1
    %p354 = por %p352, %p353
    %p355 = scmp.ne.s32.totalorder %s344, %s345
    %p356 = scmp.eq.s32.totalorder %s27, 0
    %p357 = por %p355, %p356
    %p358 = scmp.ne.s32.totalorder %s344, %s345
    %p359 = scmp.eq.s32.totalorder %s28, 1
    %p360 = por %p358, %p359
    %p362 = scmp.ne.s32.totalorder %s345, %s361
    %p363 = scmp.eq.s32.totalorder %s28, 0
    %p364 = por %p362, %p363
    %s365 = ssub.s32 %s30, %s37
    %p366 = scmp.eq.s32.totalorder %s365, 0
    %s368 = sadd.s32 %s367, 1
    %s369 = scalar_select %p366, %s367, %s368
    %p372 = pneg %p366
    %p373 = scmp.eq.s32.totalorder %s22, 1
    %p374 = por %p372, %p373
    %p375 = scmp.ne.s32.totalorder %s367, %s370
    %p376 = scmp.eq.s32.totalorder %s22, 0
    %p377 = por %p375, %p376
    %p378 = scmp.ne.s32.totalorder %s367, %s370
    %p379 = scmp.eq.s32.totalorder %s27, 1
    %p380 = por %p378, %p379
    %p381 = scmp.ne.s32.totalorder %s370, %s371
    %p382 = scmp.eq.s32.totalorder %s27, 0
    %p383 = por %p381, %p382
    %p384 = scmp.ne.s32.totalorder %s370, %s371
    %p385 = scmp.eq.s32.totalorder %s28, 1
    %p386 = por %p384, %p385
    %p388 = scmp.ne.s32.totalorder %s371, %s387
    %p389 = scmp.eq.s32.totalorder %s28, 0
    %p390 = por %p388, %p389
    %s391 = ssub.s32 %s30, %s37
    %p392 = scmp.eq.s32.totalorder %s391, 0
    %s394 = sadd.s32 %s393, 1
    %s395 = scalar_select %p392, %s393, %s394
    %p398 = pneg %p392
    %p399 = scmp.eq.s32.totalorder %s22, 1
    %p400 = por %p398, %p399
    %p401 = scmp.ne.s32.totalorder %s393, %s396
    %p402 = scmp.eq.s32.totalorder %s22, 0
    %p403 = por %p401, %p402
    %p404 = scmp.ne.s32.totalorder %s393, %s396
    %p405 = scmp.eq.s32.totalorder %s27, 1
    %p406 = por %p404, %p405
    %p407 = scmp.ne.s32.totalorder %s396, %s397
    %p408 = scmp.eq.s32.totalorder %s27, 0
    %p409 = por %p407, %p408
    %p410 = scmp.ne.s32.totalorder %s396, %s397
    %p411 = scmp.eq.s32.totalorder %s28, 1
    %p412 = por %p410, %p411
    %p414 = scmp.ne.s32.totalorder %s397, %s413
    %p415 = scmp.eq.s32.totalorder %s28, 0
    %p416 = por %p414, %p415
    %s417 = ssub.s32 %s30, %s37
    %p418 = scmp.eq.s32.totalorder %s417, 0
    %s420 = sadd.s32 %s419, 1
    %s421 = scalar_select %p418, %s419, %s420
    %p424 = pneg %p418
    %p425 = scmp.eq.s32.totalorder %s22, 1
    %p426 = por %p424, %p425
    %p427 = scmp.ne.s32.totalorder %s419, %s422
    %p428 = scmp.eq.s32.totalorder %s22, 0
    %p429 = por %p427, %p428
    %p430 = scmp.ne.s32.totalorder %s419, %s422
    %p431 = scmp.eq.s32.totalorder %s27, 1
    %p432 = por %p430, %p431
    %p433 = scmp.ne.s32.totalorder %s422, %s423
    %p434 = scmp.eq.s32.totalorder %s27, 0
    %p435 = por %p433, %p434
    %p436 = scmp.ne.s32.totalorder %s422, %s423
    %p437 = scmp.eq.s32.totalorder %s28, 1
    %p438 = por %p436, %p437
    %p440 = scmp.ne.s32.totalorder %s423, %s439
    %p441 = scmp.eq.s32.totalorder %s28, 0
    %p442 = por %p440, %p441
    %s443 = ssub.s32 %s29, %s41
    %p444 = scmp.eq.s32.totalorder %s443, 0
    %s446 = sadd.s32 %s445, 1
    %s447 = scalar_select %p444, %s445, %s446
    %p450 = pneg %p444
    %p451 = scmp.eq.s32.totalorder %s22, 1
    %p452 = por %p450, %p451
    %p453 = scmp.ne.s32.totalorder %s445, %s448
    %p454 = scmp.eq.s32.totalorder %s22, 0
    %p455 = por %p453, %p454
    %p456 = scmp.ne.s32.totalorder %s445, %s448
    %p457 = scmp.eq.s32.totalorder %s27, 1
    %p458 = por %p456, %p457
    %p459 = scmp.ne.s32.totalorder %s448, %s449
    %p460 = scmp.eq.s32.totalorder %s27, 0
    %p461 = por %p459, %p460
    %p462 = scmp.ne.s32.totalorder %s448, %s449
    %p463 = scmp.eq.s32.totalorder %s28, 1
    %p464 = por %p462, %p463
    %p466 = scmp.ne.s32.totalorder %s449, %s465
    %p467 = scmp.eq.s32.totalorder %s28, 0
    %p468 = por %p466, %p467
    %p469 = scmp.le.s32.totalorder 1, %s22
    %p470 = scmp.lt.s32.totalorder %s22, 3
    %p471 = pnand %p469, %p470
    %p472 = pneg %p471
    // Predicated region
    $region9: #{continuous_transformer_forward.3} parent=5 // pred_check
      _
    $region10: #{continuous_transformer_forward.3} parent=5 // pred_check_branch
      %474 = sbr.rel (%p471) target = $region12
    $region11: #{continuous_transformer_forward.3} parent=5 // pred_region
      %s475 = ssub.s32 %s22, 1
      // Predicated region
      $region13: #{continuous_transformer_forward.3} parent=11 // pred_check
        %p476 = pneg %p60
      $region14: #{continuous_transformer_forward.3} parent=11 // pred_check_branch
        %478 = sbr.rel (%p476) target = $region16
      $region15: #{continuous_transformer_forward.3} parent=11 // pred_region
        %s479 = smul.u32 2, %s31
        %p480 = scmp.lt.s32.totalorder %s479, 1
        %s481 = scalar_select %p480, %s479, 1
        %s482 = smul.addr %s481, 8
        %s483 = scalar_lea.vmem %s0, %s482
        %s484 = smul.u32 2, %s31
      $region16: #{continuous_transformer_forward.3} parent=11 // pred_fallthru
        _
      // Predicated region
      $region17: #{continuous_transformer_forward.3} parent=11 // pred_check
        %p485 = pneg %p81
      $region18: #{continuous_transformer_forward.3} parent=11 // pred_check_branch
        %487 = sbr.rel (%p485) target = $region20
      $region19: #{continuous_transformer_forward.3} parent=11 // pred_region
        _
      $region20: #{continuous_transformer_forward.3} parent=11 // pred_fallthru
        _
      // Predicated region
      $region21: #{continuous_transformer_forward.3} parent=11 // pred_check
        %p488 = pneg %p102
      $region22: #{continuous_transformer_forward.3} parent=11 // pred_check_branch
        %490 = sbr.rel (%p488) target = $region24
      $region23: #{continuous_transformer_forward.3} parent=11 // pred_region
        _
      $region24: #{continuous_transformer_forward.3} parent=11 // pred_fallthru
        _
      // Predicated region
      $region25: #{continuous_transformer_forward.3} parent=11 // pred_check
        %p491 = pneg %p123
      $region26: #{continuous_transformer_forward.3} parent=11 // pred_check_branch
        %493 = sbr.rel (%p491) target = $region28
      $region27: #{continuous_transformer_forward.3} parent=11 // pred_region
        _
      $region28: #{continuous_transformer_forward.3} parent=11 // pred_fallthru
        _
    $region12: #{continuous_transformer_forward.3} parent=5 // pred_fallthru
      _
    %p494 = scmp.lt.s32.totalorder %s22, 2
    // Predicated region
    $region29: #{continuous_transformer_forward.3} parent=5 // pred_check
      %p495 = pneg %p494
    $region30: #{continuous_transformer_forward.3} parent=5 // pred_check_branch
      %497 = sbr.rel (%p495) target = $region32
    $region31: #{continuous_transformer_forward.3} parent=5 // pred_region
      // Predicated region
      $region33: #{continuous_transformer_forward.3} parent=31 // pred_check
        %p498 = pneg %p143
      $region34: #{continuous_transformer_forward.3} parent=31 // pred_check_branch
        %500 = sbr.rel (%p498) target = $region36
      $region35: #{continuous_transformer_forward.3} parent=31 // pred_region
        %p501 = scmp.lt.s32.totalorder %s30, 1
        %s502 = scalar_select %p501, %s30, 1
        %s503 = smul.addr %s502, 4
        %s504 = smul.addr %s503, 8
        %s505 = scalar_lea.vmem %s4, %s504
      $region36: #{continuous_transformer_forward.3} parent=31 // pred_fallthru
        _
      // Predicated region
      $region37: #{continuous_transformer_forward.3} parent=31 // pred_check
        %p506 = pneg %p169
      $region38: #{continuous_transformer_forward.3} parent=31 // pred_check_branch
        %508 = sbr.rel (%p506) target = $region40
      $region39: #{continuous_transformer_forward.3} parent=31 // pred_region
        %p509 = scmp.lt.s32.totalorder %s30, 1
        %s510 = scalar_select %p509, %s30, 1
        %s511 = scalar_lea.vmem %s5, %s510
      $region40: #{continuous_transformer_forward.3} parent=31 // pred_fallthru
        _
      // Predicated region
      $region41: #{continuous_transformer_forward.3} parent=31 // pred_check
        %p512 = pneg %p195
      $region42: #{continuous_transformer_forward.3} parent=31 // pred_check_branch
        %514 = sbr.rel (%p512) target = $region44
      $region43: #{continuous_transformer_forward.3} parent=31 // pred_region
        %p515 = scmp.lt.s32.totalorder %s30, 1
        %s516 = scalar_select %p515, %s30, 1
        %s517 = smul.addr %s516, 4
        %s518 = smul.addr %s517, 8
        %s519 = scalar_lea.vmem %s6, %s518
      $region44: #{continuous_transformer_forward.3} parent=31 // pred_fallthru
        _
      // Predicated region
      $region45: #{continuous_transformer_forward.3} parent=31 // pred_check
        %p520 = pneg %p221
      $region46: #{continuous_transformer_forward.3} parent=31 // pred_check_branch
        %522 = sbr.rel (%p520) target = $region48
      $region47: #{continuous_transformer_forward.3} parent=31 // pred_region
        %p523 = scmp.lt.s32.totalorder %s30, 1
        %s524 = scalar_select %p523, %s30, 1
        %s525 = scalar_lea.vmem %s7, %s524
      $region48: #{continuous_transformer_forward.3} parent=31 // pred_fallthru
        _
      // Predicated region
      $region49: #{continuous_transformer_forward.3} parent=31 // pred_check
        %p526 = pneg %p247
      $region50: #{continuous_transformer_forward.3} parent=31 // pred_check_branch
        %528 = sbr.rel (%p526) target = $region52
      $region51: #{continuous_transformer_forward.3} parent=31 // pred_region
        %p529 = scmp.lt.s32.totalorder %s30, 1
        %s530 = scalar_select %p529, %s30, 1
        %s531 = scalar_lea.vmem %s8, %s530
      $region52: #{continuous_transformer_forward.3} parent=31 // pred_fallthru
        _
      // Predicated region
      $region53: #{continuous_transformer_forward.3} parent=31 // pred_check
        %p532 = pneg %p273
      $region54: #{continuous_transformer_forward.3} parent=31 // pred_check_branch
        %534 = sbr.rel (%p532) target = $region56
      $region55: #{continuous_transformer_forward.3} parent=31 // pred_region
        %p535 = scmp.lt.s32.totalorder %s30, 1
        %s536 = scalar_select %p535, %s30, 1
        %s537 = scalar_lea.vmem %s9, %s536
      $region56: #{continuous_transformer_forward.3} parent=31 // pred_fallthru
        _
      // Predicated region
      $region57: #{continuous_transformer_forward.3} parent=31 // pred_check
        %p538 = pneg %p299
      $region58: #{continuous_transformer_forward.3} parent=31 // pred_check_branch
        %540 = sbr.rel (%p538) target = $region60
      $region59: #{continuous_transformer_forward.3} parent=31 // pred_region
        %p541 = scmp.lt.s32.totalorder %s30, 1
        %s542 = scalar_select %p541, %s30, 1
        %s543 = smul.addr %s542, 4
        %s544 = smul.addr %s543, 8
        %s545 = scalar_lea.vmem %s10, %s544
      $region60: #{continuous_transformer_forward.3} parent=31 // pred_fallthru
        _
      // Predicated region
      $region61: #{continuous_transformer_forward.3} parent=31 // pred_check
        %p546 = pneg %p325
      $region62: #{continuous_transformer_forward.3} parent=31 // pred_check_branch
        %548 = sbr.rel (%p546) target = $region64
      $region63: #{continuous_transformer_forward.3} parent=31 // pred_region
        %p549 = scmp.lt.s32.totalorder %s30, 1
        %s550 = scalar_select %p549, %s30, 1
        %s551 = scalar_lea.vmem %s11, %s550
      $region64: #{continuous_transformer_forward.3} parent=31 // pred_fallthru
        _
      // Predicated region
      $region65: #{continuous_transformer_forward.3} parent=31 // pred_check
        %p552 = pneg %p351
      $region66: #{continuous_transformer_forward.3} parent=31 // pred_check_branch
        %554 = sbr.rel (%p552) target = $region68
      $region67: #{continuous_transformer_forward.3} parent=31 // pred_region
        %p555 = scmp.lt.s32.totalorder %s30, 1
        %s556 = scalar_select %p555, %s30, 1
        %s557 = smul.addr %s556, 8
        %s558 = smul.addr %s557, 8
        %s559 = scalar_lea.vmem %s12, %s558
      $region68: #{continuous_transformer_forward.3} parent=31 // pred_fallthru
        _
      // Predicated region
      $region69: #{continuous_transformer_forward.3} parent=31 // pred_check
        %p560 = pneg %p377
      $region70: #{continuous_transformer_forward.3} parent=31 // pred_check_branch
        %562 = sbr.rel (%p560) target = $region72
      $region71: #{continuous_transformer_forward.3} parent=31 // pred_region
        %p563 = scmp.lt.s32.totalorder %s30, 1
        %s564 = scalar_select %p563, %s30, 1
        %s565 = scalar_lea.vmem %s13, %s564
      $region72: #{continuous_transformer_forward.3} parent=31 // pred_fallthru
        _
      // Predicated region
      $region73: #{continuous_transformer_forward.3} parent=31 // pred_check
        %p566 = pneg %p403
      $region74: #{continuous_transformer_forward.3} parent=31 // pred_check_branch
        %568 = sbr.rel (%p566) target = $region76
      $region75: #{continuous_transformer_forward.3} parent=31 // pred_region
        %p569 = scmp.lt.s32.totalorder %s30, 1
        %s570 = scalar_select %p569, %s30, 1
        %s571 = scalar_lea.vmem %s14, %s570
      $region76: #{continuous_transformer_forward.3} parent=31 // pred_fallthru
        _
      // Predicated region
      $region77: #{continuous_transformer_forward.3} parent=31 // pred_check
        %p572 = pneg %p429
      $region78: #{continuous_transformer_forward.3} parent=31 // pred_check_branch
        %574 = sbr.rel (%p572) target = $region80
      $region79: #{continuous_transformer_forward.3} parent=31 // pred_region
        %p575 = scmp.lt.s32.totalorder %s30, 1
        %s576 = scalar_select %p575, %s30, 1
        %s577 = scalar_lea.vmem %s15, %s576
      $region80: #{continuous_transformer_forward.3} parent=31 // pred_fallthru
        _
    $region32: #{continuous_transformer_forward.3} parent=5 // pred_fallthru
      _
    %p578 = scmp.le.s32.totalorder 1, %s22
    %p579 = scmp.lt.s32.totalorder %s22, 3
    %p580 = pnand %p578, %p579
    %p581 = pneg %p580
    // Predicated region
    $region81: #{continuous_transformer_forward.3} parent=5 // pred_check
      _
    $region82: #{continuous_transformer_forward.3} parent=5 // pred_check_branch
      %583 = sbr.rel (%p580) target = $region84
    $region83: #{continuous_transformer_forward.3} parent=5 // pred_region
      %s584 = ssub.s32 %s22, 1
      %s585 = smul.u32 2, %s31
      %p586 = scmp.lt.s32.totalorder %s585, 1
      %s587 = scalar_select %p586, %s585, 1
      %s588 = smul.addr %s587, 8
      %s589 = scalar_lea.vmem %s0, %s588
      %p590 = pneg %p60
      %p591 = pneg %p57
      %p592 = pneg %p81
      %p593 = pneg %p78
      %p594 = pneg %p102
      %p595 = pneg %p99
      %p596 = pneg %p123
      %p597 = pneg %p120
      %p598 = scmp.lt.s32.totalorder %s32, 1
      %s599 = scalar_select %p598, %s32, 1
      %s600 = smul.addr %s599, 4
      %s601 = smul.addr %s600, 8
      %s602 = scalar_lea.vmem %s4, %s601
      %p603 = pneg %p149
      %p604 = pneg %p146
      %p605 = scmp.lt.s32.totalorder %s32, 1
      %s606 = scalar_select %p605, %s32, 1
      %s607 = scalar_lea.vmem %s5, %s606
      %p608 = pneg %p175
      %p609 = pneg %p172
      %p610 = scmp.lt.s32.totalorder %s32, 1
      %s611 = scalar_select %p610, %s32, 1
      %s612 = smul.addr %s611, 4
      %s613 = smul.addr %s612, 8
      %s614 = scalar_lea.vmem %s6, %s613
      %p615 = pneg %p201
      %p616 = pneg %p198
      %p617 = scmp.lt.s32.totalorder %s32, 1
      %s618 = scalar_select %p617, %s32, 1
      %s619 = scalar_lea.vmem %s7, %s618
      %p620 = pneg %p227
      %p621 = pneg %p224
      %p622 = scmp.lt.s32.totalorder %s32, 1
      %s623 = scalar_select %p622, %s32, 1
      %s624 = scalar_lea.vmem %s8, %s623
      %p625 = pneg %p253
      %p626 = pneg %p250
      %p627 = scmp.lt.s32.totalorder %s32, 1
      %s628 = scalar_select %p627, %s32, 1
      %s629 = scalar_lea.vmem %s9, %s628
      %p630 = pneg %p279
      %p631 = pneg %p276
      %p632 = scmp.lt.s32.totalorder %s32, 1
      %s633 = scalar_select %p632, %s32, 1
      %s634 = smul.addr %s633, 4
      %s635 = smul.addr %s634, 8
      %s636 = scalar_lea.vmem %s10, %s635
      %p637 = pneg %p305
      %p638 = pneg %p302
      %p639 = scmp.lt.s32.totalorder %s32, 1
      %s640 = scalar_select %p639, %s32, 1
      %s641 = scalar_lea.vmem %s11, %s640
      %p642 = pneg %p331
      %p643 = pneg %p328
      %p644 = scmp.lt.s32.totalorder %s32, 1
      %s645 = scalar_select %p644, %s32, 1
      %s646 = smul.addr %s645, 8
      %s647 = smul.addr %s646, 8
      %s648 = scalar_lea.vmem %s12, %s647
      %p649 = pneg %p357
      %p650 = pneg %p354
      %p651 = scmp.lt.s32.totalorder %s32, 1
      %s652 = scalar_select %p651, %s32, 1
      %s653 = scalar_lea.vmem %s13, %s652
      %p654 = pneg %p383
      %p655 = pneg %p380
      %p656 = scmp.lt.s32.totalorder %s32, 1
      %s657 = scalar_select %p656, %s32, 1
      %s658 = scalar_lea.vmem %s14, %s657
      %p659 = pneg %p409
      %p660 = pneg %p406
      %p661 = scmp.lt.s32.totalorder %s32, 1
      %s662 = scalar_select %p661, %s32, 1
      %s663 = scalar_lea.vmem %s15, %s662
      %p664 = pneg %p435
      %p665 = pneg %p432
      %p666 = pneg %p461
      %p667 = pneg %p458
      %s668 = smul.u32 2, %s31
      %p669 = scmp.lt.s32.totalorder %s668, 1
      %s670 = scalar_select %p669, %s668, 1
      %s671 = smul.addr %s670, 8
      %s672 = scalar_lea.vmem %s16, %s671
      %s673 = smul.u32 2, %s31
      %p674 = scmp.lt.s32.totalorder %s673, 1
      %s675 = scalar_select %p674, %s673, 1
      %s676 = smul.addr %s675, 8
      %s677 = scalar_lea.vmem %s0, %s676
      %s678 = smul.u32 2, %s31
      %p679 = scmp.lt.s32.totalorder %s32, 1
      %s680 = scalar_select %p679, %s32, 1
      %s681 = smul.addr %s680, 4
      %s682 = smul.addr %s681, 8
      %s683 = scalar_lea.vmem %s4, %s682
      %p684 = scmp.lt.s32.totalorder %s32, 1
      %s685 = scalar_select %p684, %s32, 1
      %s686 = scalar_lea.vmem %s5, %s685
      %p687 = scmp.lt.s32.totalorder %s32, 1
      %s688 = scalar_select %p687, %s32, 1
      %s689 = smul.addr %s688, 4
      %s690 = smul.addr %s689, 8
      %s691 = scalar_lea.vmem %s6, %s690
      %p692 = scmp.lt.s32.totalorder %s32, 1
      %s693 = scalar_select %p692, %s32, 1
      %s694 = scalar_lea.vmem %s7, %s693
      %p695 = scmp.lt.s32.totalorder %s32, 1
      %s696 = scalar_select %p695, %s32, 1
      %s697 = scalar_lea.vmem %s8, %s696
      %p698 = scmp.lt.s32.totalorder %s32, 1
      %s699 = scalar_select %p698, %s32, 1
      %s700 = scalar_lea.vmem %s9, %s699
      %p701 = scmp.lt.s32.totalorder %s32, 1
      %s702 = scalar_select %p701, %s32, 1
      %s703 = smul.addr %s702, 4
      %s704 = smul.addr %s703, 8
      %s705 = scalar_lea.vmem %s10, %s704
      %p706 = scmp.lt.s32.totalorder %s32, 1
      %s707 = scalar_select %p706, %s32, 1
      %s708 = scalar_lea.vmem %s11, %s707
      %p709 = scmp.lt.s32.totalorder %s32, 1
      %s710 = scalar_select %p709, %s32, 1
      %s711 = smul.addr %s710, 8
      %s712 = smul.addr %s711, 8
      %s713 = scalar_lea.vmem %s12, %s712
      %p714 = scmp.lt.s32.totalorder %s32, 1
      %s715 = scalar_select %p714, %s32, 1
      %s716 = scalar_lea.vmem %s13, %s715
      %p717 = scmp.lt.s32.totalorder %s32, 1
      %s718 = scalar_select %p717, %s32, 1
      %s719 = scalar_lea.vmem %s14, %s718
      %p720 = scmp.lt.s32.totalorder %s32, 1
      %s721 = scalar_select %p720, %s32, 1
      %s722 = scalar_lea.vmem %s15, %s721
      %s723 = smul.u32 2, %s31
      %p724 = scmp.lt.s32.totalorder %s723, 1
      %s725 = scalar_select %p724, %s723, 1
      %s726 = smul.addr %s725, 8
      %s727 = scalar_lea.vmem %s16, %s726
      %s728 = smul.u32 2, %s31
      %p729 = scmp.eq.s32.totalorder %s32, 0
      // Predicated region
      $region85: #{continuous_transformer_forward.3} parent=83 // pred_check
        %p730 = pneg %p729
      $region86: #{continuous_transformer_forward.3} parent=83 // pred_check_branch
        %732 = sbr.rel (%p730) target = $region88
      $region87: #{continuous_transformer_forward.3} parent=83 // pred_region
        %v733 = vld [vmem:[%s677] sm:$0xff]
        %v734 = vld [vmem:[%s677 + $0x8] sm:$0xff]
        %v735 = vld [vmem:[%s2] sm:$0x3f]
        %v736 = vld [vmem:[%s3] sm:$0x1]
        %v738 = vlaneseq
        %v739 = vshrl.u32 %v738, 7
        %v740 = vsub.s32 0, %v739
        %v741 = vrot.slane %v736, %v740
        %vm743 = vcmask 48128
        %v745 = vsel %vm743, %v733, 0
        %v748 = vsel %vm743, %v734, 0
        %vm750 = vcmask 1045504
        %v752 = vsel %vm750, %v735, 0
        %754 = vmatprep.subr.mxu0 0.0
        %755 = vmatpush1.msra.mxu0 0.0
        %756 = vmatprep.subr.mxu0 0.0
        %757 = vmatpush1.msra.mxu0 0.0
        %758 = vmatprep.subr.mxu0 0.0
        %759 = vmatpush1.msra.mxu0 0.0
        %760 = vmatprep.subr.mxu0 0.0
        %761 = vmatpush1.msra.mxu0 0.0
        %762 = vmatprep.subr.mxu0 0.0
        %763 = vmatpush1.msra.mxu0 0.0
        %764 = vmatprep.subr.mxu0 0.0
        %765 = vmatpush1.msra.mxu0 0.0
        %766 = vmatprep.subr.mxu0 0.0
        %767 = vmatpush1.msra.mxu0 0.0
        %768 = vmatprep.subr.mxu0 0.0
        %769 = vmatpush1.msra.mxu0 0.0
        %770 = vmatprep.subr.mxu0 0.0
        %771 = vmatpush1.msra.mxu0 0.0
        %772 = vmatprep.subr.mxu0 0.0
        %773 = vmatpush1.msra.mxu0 0.0
        %774 = vmatprep.subr.mxu0 0.0
        %775 = vmatpush1.msra.mxu0 0.0
        %776 = vmatprep.subr.mxu0 0.0
        %777 = vmatpush1.msra.mxu0 0.0
        %778 = vmatprep.subr.mxu0 0.0
        %779 = vmatpush1.msra.mxu0 0.0
        %780 = vmatprep.subr.mxu0 0.0
        %781 = vmatpush1.msra.mxu0 0.0
        %782 = vmatprep.subr.mxu0 0.0
        %783 = vmatpush1.msra.mxu0 0.0
        %784 = vmatprep.subr.mxu0 0.0
        %785 = vmatpush1.msra.mxu0 %v752
        %786 = vmatprep.subr.mxu0 0.0
        %787 = vmatpush2.msra.mxu0 0.0
        %788 = vmatprep.subr.mxu0 0.0
        %789 = vmatpush2.msra.mxu0 0.0
        %790 = vmatprep.subr.mxu0 0.0
        %791 = vmatpush2.msra.mxu0 0.0
        %792 = vmatprep.subr.mxu0 0.0
        %793 = vmatpush2.msra.mxu0 0.0
        %794 = vmatprep.subr.mxu0 0.0
        %795 = vmatpush2.msra.mxu0 0.0
        %796 = vmatprep.subr.mxu0 0.0
        %797 = vmatpush2.msra.mxu0 0.0
        %798 = vmatprep.subr.mxu0 0.0
        %799 = vmatpush2.msra.mxu0 0.0
        %800 = vmatprep.subr.mxu0 0.0
        %801 = vmatpush2.msra.mxu0 0.0
        %802 = vmatprep.subr.mxu0 0.0
        %803 = vmatpush2.msra.mxu0 0.0
        %804 = vmatprep.subr.mxu0 0.0
        %805 = vmatpush2.msra.mxu0 0.0
        %806 = vmatprep.subr.mxu0 0.0
        %807 = vmatpush2.msra.mxu0 0.0
        %808 = vmatprep.subr.mxu0 0.0
        %809 = vmatpush2.msra.mxu0 0.0
        %810 = vmatprep.subr.mxu0 0.0
        %811 = vmatpush2.msra.mxu0 0.0
        %812 = vmatprep.subr.mxu0 0.0
        %813 = vmatpush2.msra.mxu0 0.0
        %814 = vmatprep.subr.mxu0 0.0
        %815 = vmatpush2.msra.mxu0 0.0
        %816 = vmatprep.subr.mxu0 0.0
        %817 = vmatpush2.msra.mxu0 0.0
        %818 = vmatprep.mubr.f32.mxu0 0.0
        %819 = vmatmul.mubr.f32.gmra.mxu0 %v745
        %v820 = vpop.f32.mrf.mxu0
        %v821 = vadd.f32 %v741, %v820
        %v822 = vpop.f32.mrf.mxu0
        %823 = vmatprep.mubr.f32.mxu0 0.0
        %824 = vmatmul.mubr.f32.gmra.mxu0 %v748
        %v825 = vpop.f32.mrf.mxu0
        %v826 = vadd.f32 %v741, %v825
        %v827 = vpop.f32.mrf.mxu0
        %828 = vdwg.mxu0
        %v829 = vld [vmem:[%s1] sm:$0xff]
        %v830 = vld [vmem:[%s1 + $0x8] sm:$0xff]
        %v831 = vadd.f32 %v821, %v829
        %v832 = vadd.f32 %v826, %v830
        %vm833 = vcmask 261120
        %834 = vst.msk [vmem:[#allocation2] sm:$0xff] %vm833, %v831
        %835 = vst.msk [vmem:[#allocation2 + $0x8] sm:$0xff] %vm833, %v832
      $region88: #{continuous_transformer_forward.3} parent=83 // pred_fallthru
        _
      %v836 = vld [vmem:[#allocation2] sm:$0xff]
      %v837 = vld [vmem:[#allocation2 + $0x8] sm:$0xff]
      %v838 = vld [vmem:[%s683] sm:$0xff]
      %v839 = vld [vmem:[%s683 + $0x8] sm:$0xff]
      %v840 = vld [vmem:[%s683 + $0x10] sm:$0xff]
      %v841 = vld [vmem:[%s683 + $0x18] sm:$0xff]
      %v842 = vld [vmem:[%s686] sm:$0x1]
      %v843 = vld [vmem:[%s691] sm:$0xff]
      %v844 = vld [vmem:[%s691 + $0x8] sm:$0xff]
      %v845 = vld [vmem:[%s691 + $0x10] sm:$0xff]
      %v846 = vld [vmem:[%s691 + $0x18] sm:$0xff]
      %v847 = vld [vmem:[%s694] sm:$0x1]
      %v848 = vld [vmem:[%s697] sm:$0x1]
      %v849 = vld [vmem:[%s700] sm:$0x1]
      %v850 = vld [vmem:[%s705] sm:$0xff]
      %v851 = vld [vmem:[%s705 + $0x8] sm:$0xff]
      %v852 = vld [vmem:[%s705 + $0x10] sm:$0xff]
      %v853 = vld [vmem:[%s705 + $0x18] sm:$0xff]
      %v854 = vld [vmem:[%s708] sm:$0x1]
      %v855 = vld [vmem:[%s713] sm:$0xff]
      %v856 = vld [vmem:[%s713 + $0x8] sm:$0xff]
      %v857 = vld [vmem:[%s713 + $0x10] sm:$0xff]
      %v858 = vld [vmem:[%s713 + $0x18] sm:$0xff]
      %v859 = vld [vmem:[%s713 + $0x20] sm:$0xff]
      %v860 = vld [vmem:[%s713 + $0x28] sm:$0xff]
      %v861 = vld [vmem:[%s713 + $0x30] sm:$0xff]
      %v862 = vld [vmem:[%s713 + $0x38] sm:$0xff]
      %v863 = vld [vmem:[%s716] sm:$0x1]
      %v864 = vld [vmem:[%s719] sm:$0x1]
      %v865 = vld [vmem:[%s722] sm:$0x1]
      %v867 = vlaneseq
      %v868 = vshrl.u32 %v867, 7
      %v869 = vsub.s32 0, %v868
      %v870 = vrot.slane %v842, %v869
      %vm872 = vcmask 261120
      %v874 = vsel %vm872, %v836, 0
      %v877 = vsel %vm872, %v837, 0
      %879 = vmatprep.subr.mxu0 0.0
      %880 = vmatpush1.msra.mxu0 0.0
      %881 = vmatprep.subr.mxu0 0.0
      %882 = vmatpush1.msra.mxu0 0.0
      %883 = vmatprep.subr.mxu0 0.0
      %884 = vmatpush1.msra.mxu0 0.0
      %885 = vmatprep.subr.mxu0 0.0
      %886 = vmatpush1.msra.mxu0 0.0
      %887 = vmatprep.subr.mxu0 0.0
      %888 = vmatpush1.msra.mxu0 0.0
      %889 = vmatprep.subr.mxu0 0.0
      %890 = vmatpush1.msra.mxu0 0.0
      %891 = vmatprep.subr.mxu0 0.0
      %892 = vmatpush1.msra.mxu0 0.0
      %893 = vmatprep.subr.mxu0 0.0
      %894 = vmatpush1.msra.mxu0 0.0
      %895 = vmatprep.subr.mxu0 0.0
      %896 = vmatpush1.msra.mxu0 0.0
      %897 = vmatprep.subr.mxu0 0.0
      %898 = vmatpush1.msra.mxu0 0.0
      %899 = vmatprep.subr.mxu0 0.0
      %900 = vmatpush1.msra.mxu0 0.0
      %901 = vmatprep.subr.mxu0 0.0
      %902 = vmatpush1.msra.mxu0 0.0
      %903 = vmatprep.subr.mxu0 0.0
      %904 = vmatpush1.msra.mxu0 %v841
      %905 = vmatprep.subr.mxu0 0.0
      %906 = vmatpush1.msra.mxu0 %v840
      %907 = vmatprep.subr.mxu0 0.0
      %908 = vmatpush1.msra.mxu0 %v839
      %909 = vmatprep.subr.mxu0 0.0
      %910 = vmatpush1.msra.mxu0 %v838
      %911 = vmatprep.subr.mxu0 0.0
      %912 = vmatpush2.msra.mxu0 0.0
      %913 = vmatprep.subr.mxu0 0.0
      %914 = vmatpush2.msra.mxu0 0.0
      %915 = vmatprep.subr.mxu0 0.0
      %916 = vmatpush2.msra.mxu0 0.0
      %917 = vmatprep.subr.mxu0 0.0
      %918 = vmatpush2.msra.mxu0 0.0
      %919 = vmatprep.subr.mxu0 0.0
      %920 = vmatpush2.msra.mxu0 0.0
      %921 = vmatprep.subr.mxu0 0.0
      %922 = vmatpush2.msra.mxu0 0.0
      %923 = vmatprep.subr.mxu0 0.0
      %924 = vmatpush2.msra.mxu0 0.0
      %925 = vmatprep.subr.mxu0 0.0
      %926 = vmatpush2.msra.mxu0 0.0
      %927 = vmatprep.subr.mxu0 0.0
      %928 = vmatpush2.msra.mxu0 0.0
      %929 = vmatprep.subr.mxu0 0.0
      %930 = vmatpush2.msra.mxu0 0.0
      %931 = vmatprep.subr.mxu0 0.0
      %932 = vmatpush2.msra.mxu0 0.0
      %933 = vmatprep.subr.mxu0 0.0
      %934 = vmatpush2.msra.mxu0 0.0
      %935 = vmatprep.subr.mxu0 0.0
      %936 = vmatpush2.msra.mxu0 0.0
      %937 = vmatprep.subr.mxu0 0.0
      %938 = vmatpush2.msra.mxu0 0.0
      %939 = vmatprep.subr.mxu0 0.0
      %940 = vmatpush2.msra.mxu0 0.0
      %941 = vmatprep.subr.mxu0 0.0
      %942 = vmatpush2.msra.mxu0 0.0
      %943 = vmatprep.mubr.f32.mxu0 0.0
      %944 = vmatmul.mubr.f32.gmra.mxu0 %v874
      %v945 = vpop.f32.mrf.mxu0
      %v946 = vadd.f32 %v870, %v945
      %v947 = vpop.f32.mrf.mxu0
      %948 = vmatprep.mubr.f32.mxu0 0.0
      %949 = vmatmul.mubr.f32.gmra.mxu0 %v877
      %v950 = vpop.f32.mrf.mxu0
      %v951 = vadd.f32 %v870, %v950
      %v952 = vpop.f32.mrf.mxu0
      %953 = vdwg.mxu0
      %955 = vrot.lane.b32.xlu0 %v946, 96
      %v956 = vpop.permute.xlu0 %955
      %vm957 = vcmask 64512
      %v958 = vsel %vm957, %v946, 0
      %v960 = vsel %vm957, %v956, 0
      %962 = vmatprep.subr.mxu0 0.0
      %963 = vmatpush1.xpose.msra.mxu0 0.0
      %964 = vmatprep.subr.mxu0 0.0
      %965 = vmatpush1.xpose.msra.mxu0 0.0
      %966 = vmatprep.subr.mxu0 0.0
      %967 = vmatpush1.xpose.msra.mxu0 0.0
      %968 = vmatprep.subr.mxu0 0.0
      %969 = vmatpush1.xpose.msra.mxu0 0.0
      %970 = vmatprep.subr.mxu0 0.0
      %971 = vmatpush1.xpose.msra.mxu0 0.0
      %972 = vmatprep.subr.mxu0 0.0
      %973 = vmatpush1.xpose.msra.mxu0 0.0
      %974 = vmatprep.subr.mxu0 0.0
      %975 = vmatpush1.xpose.msra.mxu0 0.0
      %976 = vmatprep.subr.mxu0 0.0
      %977 = vmatpush1.xpose.msra.mxu0 0.0
      %978 = vmatprep.subr.mxu0 0.0
      %979 = vmatpush1.xpose.msra.mxu0 0.0
      %980 = vmatprep.subr.mxu0 0.0
      %981 = vmatpush1.xpose.msra.mxu0 0.0
      %982 = vmatprep.subr.mxu0 0.0
      %983 = vmatpush1.xpose.msra.mxu0 0.0
      %984 = vmatprep.subr.mxu0 0.0
      %985 = vmatpush1.xpose.msra.mxu0 0.0
      %986 = vmatprep.subr.mxu0 0.0
      %987 = vmatpush1.xpose.msra.mxu0 0.0
      %988 = vmatprep.subr.mxu0 0.0
      %989 = vmatpush1.xpose.msra.mxu0 0.0
      %990 = vmatprep.subr.mxu0 0.0
      %991 = vmatpush1.xpose.msra.mxu0 0.0
      %992 = vmatprep.subr.mxu0 0.0
      %993 = vmatpush1.xpose.msra.mxu0 %v960
      %994 = vmatprep.subr.mxu0 0.0
      %995 = vmatpush2.xpose.msra.mxu0 0.0
      %996 = vmatprep.subr.mxu0 0.0
      %997 = vmatpush2.xpose.msra.mxu0 0.0
      %998 = vmatprep.subr.mxu0 0.0
      %999 = vmatpush2.xpose.msra.mxu0 0.0
      %1000 = vmatprep.subr.mxu0 0.0
      %1001 = vmatpush2.xpose.msra.mxu0 0.0
      %1002 = vmatprep.subr.mxu0 0.0
      %1003 = vmatpush2.xpose.msra.mxu0 0.0
      %1004 = vmatprep.subr.mxu0 0.0
      %1005 = vmatpush2.xpose.msra.mxu0 0.0
      %1006 = vmatprep.subr.mxu0 0.0
      %1007 = vmatpush2.xpose.msra.mxu0 0.0
      %1008 = vmatprep.subr.mxu0 0.0
      %1009 = vmatpush2.xpose.msra.mxu0 0.0
      %1010 = vmatprep.subr.mxu0 0.0
      %1011 = vmatpush2.xpose.msra.mxu0 0.0
      %1012 = vmatprep.subr.mxu0 0.0
      %1013 = vmatpush2.xpose.msra.mxu0 0.0
      %1014 = vmatprep.subr.mxu0 0.0
      %1015 = vmatpush2.xpose.msra.mxu0 0.0
      %1016 = vmatprep.subr.mxu0 0.0
      %1017 = vmatpush2.xpose.msra.mxu0 0.0
      %1018 = vmatprep.subr.mxu0 0.0
      %1019 = vmatpush2.xpose.msra.mxu0 0.0
      %1020 = vmatprep.subr.mxu0 0.0
      %1021 = vmatpush2.xpose.msra.mxu0 0.0
      %1022 = vmatprep.subr.mxu0 0.0
      %1023 = vmatpush2.xpose.msra.mxu0 0.0
      %1024 = vmatprep.subr.mxu0 0.0
      %1025 = vmatpush2.xpose.msra.mxu0 0.0
      %1026 = vmatprep.mubr.f32.mxu0 0.0
      %1027 = vmatmul.mubr.f32.gmra.mxu0 %v958
      %v1028 = vpop.f32.mrf.mxu0
      %v1029 = vadd.f32 0.0, %v1028
      %v1030 = vpop.f32.mrf.mxu0
      %1031 = vdwg.mxu0
      %v1032 = vmul.f32 %v1029, 0.35355338
      %v1033 = vsel %vm957, %v1032, -inf
      %1034 = vmax.xlane.f32.xlu0 %v1033
      %v1035 = vpop.xlane.xlu0 %1034
      %v1036 = vsub.f32 %v1032, %v1035
      %v1037 = vmul.f32 %v1036, 1.442695
      %v1038 = vpow.pop %v1037
      %v1039 = vsel %vm957, %v1038, 0.0
      %1040 = vadd.xlane.f32.xlu0 %v1039
      %v1041 = vpop.xlane.xlu0 %1040
      %v1042 = vrcp.pop %v1041
      %v1043 = vmul.f32 %v1038, %v1042
      %1044 = vrot.lane.b32.xlu0 %v946, 64
      %v1045 = vpop.permute.xlu0 %1044
      %v1048 = vsel %vm957, %v1043, 0
      %1050 = vmatprep.subr.mxu0 0.0
      %1051 = vmatpush1.msra.mxu0 0.0
      %1052 = vmatprep.subr.mxu0 0.0
      %1053 = vmatpush1.msra.mxu0 0.0
      %1054 = vmatprep.subr.mxu0 0.0
      %1055 = vmatpush1.msra.mxu0 0.0
      %1056 = vmatprep.subr.mxu0 0.0
      %1057 = vmatpush1.msra.mxu0 0.0
      %1058 = vmatprep.subr.mxu0 0.0
      %1059 = vmatpush1.msra.mxu0 0.0
      %1060 = vmatprep.subr.mxu0 0.0
      %1061 = vmatpush1.msra.mxu0 0.0
      %1062 = vmatprep.subr.mxu0 0.0
      %1063 = vmatpush1.msra.mxu0 0.0
      %1064 = vmatprep.subr.mxu0 0.0
      %1065 = vmatpush1.msra.mxu0 0.0
      %1066 = vmatprep.subr.mxu0 0.0
      %1067 = vmatpush1.msra.mxu0 0.0
      %1068 = vmatprep.subr.mxu0 0.0
      %1069 = vmatpush1.msra.mxu0 0.0
      %1070 = vmatprep.subr.mxu0 0.0
      %1071 = vmatpush1.msra.mxu0 0.0
      %1072 = vmatprep.subr.mxu0 0.0
      %1073 = vmatpush1.msra.mxu0 0.0
      %1074 = vmatprep.subr.mxu0 0.0
      %1075 = vmatpush1.msra.mxu0 0.0
      %1076 = vmatprep.subr.mxu0 0.0
      %1077 = vmatpush1.msra.mxu0 0.0
      %1078 = vmatprep.subr.mxu0 0.0
      %1079 = vmatpush1.msra.mxu0 0.0
      %1080 = vmatprep.subr.mxu0 0.0
      %1081 = vmatpush1.msra.mxu0 %v1045
      %1082 = vmatprep.subr.mxu0 0.0
      %1083 = vmatpush2.msra.mxu0 0.0
      %1084 = vmatprep.subr.mxu0 0.0
      %1085 = vmatpush2.msra.mxu0 0.0
      %1086 = vmatprep.subr.mxu0 0.0
      %1087 = vmatpush2.msra.mxu0 0.0
      %1088 = vmatprep.subr.mxu0 0.0
      %1089 = vmatpush2.msra.mxu0 0.0
      %1090 = vmatprep.subr.mxu0 0.0
      %1091 = vmatpush2.msra.mxu0 0.0
      %1092 = vmatprep.subr.mxu0 0.0
      %1093 = vmatpush2.msra.mxu0 0.0
      %1094 = vmatprep.subr.mxu0 0.0
      %1095 = vmatpush2.msra.mxu0 0.0
      %1096 = vmatprep.subr.mxu0 0.0
      %1097 = vmatpush2.msra.mxu0 0.0
      %1098 = vmatprep.subr.mxu0 0.0
      %1099 = vmatpush2.msra.mxu0 0.0
      %1100 = vmatprep.subr.mxu0 0.0
      %1101 = vmatpush2.msra.mxu0 0.0
      %1102 = vmatprep.subr.mxu0 0.0
      %1103 = vmatpush2.msra.mxu0 0.0
      %1104 = vmatprep.subr.mxu0 0.0
      %1105 = vmatpush2.msra.mxu0 0.0
      %1106 = vmatprep.subr.mxu0 0.0
      %1107 = vmatpush2.msra.mxu0 0.0
      %1108 = vmatprep.subr.mxu0 0.0
      %1109 = vmatpush2.msra.mxu0 0.0
      %1110 = vmatprep.subr.mxu0 0.0
      %1111 = vmatpush2.msra.mxu0 0.0
      %1112 = vmatprep.subr.mxu0 0.0
      %1113 = vmatpush2.msra.mxu0 0.0
      %1114 = vmatprep.mubr.f32.mxu0 0.0
      %1115 = vmatmul.mubr.f32.gmra.mxu0 %v1048
      %v1116 = vpop.f32.mrf.mxu0
      %v1117 = vadd.f32 0.0, %v1116
      %v1118 = vpop.f32.mrf.mxu0
      %1119 = vdwg.mxu0
      %1120 = vst.msk [vmem:[#allocation3] sm:$0xff] %vm957, %v1117
      %1121 = vrot.lane.b32.xlu0 %v946, 120
      %v1122 = vpop.permute.xlu0 %1121
      %1123 = vrot.lane.b32.xlu0 %v946, 88
      %v1124 = vpop.permute.xlu0 %1123
      %v1125 = vsel %vm957, %v1122, 0
      %v1127 = vsel %vm957, %v1124, 0
      %1129 = vmatprep.subr.mxu0 0.0
      %1130 = vmatpush1.xpose.msra.mxu0 0.0
      %1131 = vmatprep.subr.mxu0 0.0
      %1132 = vmatpush1.xpose.msra.mxu0 0.0
      %1133 = vmatprep.subr.mxu0 0.0
      %1134 = vmatpush1.xpose.msra.mxu0 0.0
      %1135 = vmatprep.subr.mxu0 0.0
      %1136 = vmatpush1.xpose.msra.mxu0 0.0
      %1137 = vmatprep.subr.mxu0 0.0
      %1138 = vmatpush1.xpose.msra.mxu0 0.0
      %1139 = vmatprep.subr.mxu0 0.0
      %1140 = vmatpush1.xpose.msra.mxu0 0.0
      %1141 = vmatprep.subr.mxu0 0.0
      %1142 = vmatpush1.xpose.msra.mxu0 0.0
      %1143 = vmatprep.subr.mxu0 0.0
      %1144 = vmatpush1.xpose.msra.mxu0 0.0
      %1145 = vmatprep.subr.mxu0 0.0
      %1146 = vmatpush1.xpose.msra.mxu0 0.0
      %1147 = vmatprep.subr.mxu0 0.0
      %1148 = vmatpush1.xpose.msra.mxu0 0.0
      %1149 = vmatprep.subr.mxu0 0.0
      %1150 = vmatpush1.xpose.msra.mxu0 0.0
      %1151 = vmatprep.subr.mxu0 0.0
      %1152 = vmatpush1.xpose.msra.mxu0 0.0
      %1153 = vmatprep.subr.mxu0 0.0
      %1154 = vmatpush1.xpose.msra.mxu0 0.0
      %1155 = vmatprep.subr.mxu0 0.0
      %1156 = vmatpush1.xpose.msra.mxu0 0.0
      %1157 = vmatprep.subr.mxu0 0.0
      %1158 = vmatpush1.xpose.msra.mxu0 0.0
      %1159 = vmatprep.subr.mxu0 0.0
      %1160 = vmatpush1.xpose.msra.mxu0 %v1127
      %1161 = vmatprep.subr.mxu0 0.0
      %1162 = vmatpush2.xpose.msra.mxu0 0.0
      %1163 = vmatprep.subr.mxu0 0.0
      %1164 = vmatpush2.xpose.msra.mxu0 0.0
      %1165 = vmatprep.subr.mxu0 0.0
      %1166 = vmatpush2.xpose.msra.mxu0 0.0
      %1167 = vmatprep.subr.mxu0 0.0
      %1168 = vmatpush2.xpose.msra.mxu0 0.0
      %1169 = vmatprep.subr.mxu0 0.0
      %1170 = vmatpush2.xpose.msra.mxu0 0.0
      %1171 = vmatprep.subr.mxu0 0.0
      %1172 = vmatpush2.xpose.msra.mxu0 0.0
      %1173 = vmatprep.subr.mxu0 0.0
      %1174 = vmatpush2.xpose.msra.mxu0 0.0
      %1175 = vmatprep.subr.mxu0 0.0
      %1176 = vmatpush2.xpose.msra.mxu0 0.0
      %1177 = vmatprep.subr.mxu0 0.0
      %1178 = vmatpush2.xpose.msra.mxu0 0.0
      %1179 = vmatprep.subr.mxu0 0.0
      %1180 = vmatpush2.xpose.msra.mxu0 0.0
      %1181 = vmatprep.subr.mxu0 0.0
      %1182 = vmatpush2.xpose.msra.mxu0 0.0
      %1183 = vmatprep.subr.mxu0 0.0
      %1184 = vmatpush2.xpose.msra.mxu0 0.0
      %1185 = vmatprep.subr.mxu0 0.0
      %1186 = vmatpush2.xpose.msra.mxu0 0.0
      %1187 = vmatprep.subr.mxu0 0.0
      %1188 = vmatpush2.xpose.msra.mxu0 0.0
      %1189 = vmatprep.subr.mxu0 0.0
      %1190 = vmatpush2.xpose.msra.mxu0 0.0
      %1191 = vmatprep.subr.mxu0 0.0
      %1192 = vmatpush2.xpose.msra.mxu0 0.0
      %1193 = vmatprep.mubr.f32.mxu0 0.0
      %1194 = vmatmul.mubr.f32.gmra.mxu0 %v1125
      %v1195 = vpop.f32.mrf.mxu0
      %v1196 = vadd.f32 0.0, %v1195
      %v1197 = vpop.f32.mrf.mxu0
      %1198 = vdwg.mxu0
      %v1199 = vmul.f32 %v1196, 0.35355338
      %v1200 = vsel %vm957, %v1199, -inf
      %1201 = vmax.xlane.f32.xlu0 %v1200
      %v1202 = vpop.xlane.xlu0 %1201
      %v1203 = vsub.f32 %v1199, %v1202
      %v1204 = vmul.f32 %v1203, 1.442695
      %v1205 = vpow.pop %v1204
      %v1206 = vsel %vm957, %v1205, 0.0
      %1207 = vadd.xlane.f32.xlu0 %v1206
      %v1208 = vpop.xlane.xlu0 %1207
      %v1209 = vrcp.pop %v1208
      %v1210 = vmul.f32 %v1205, %v1209
      %1211 = vrot.lane.b32.xlu0 %v946, 56
      %v1212 = vpop.permute.xlu0 %1211
      %v1215 = vsel %vm957, %v1210, 0
      %1217 = vmatprep.subr.mxu0 0.0
      %1218 = vmatpush1.msra.mxu0 0.0
      %1219 = vmatprep.subr.mxu0 0.0
      %1220 = vmatpush1.msra.mxu0 0.0
      %1221 = vmatprep.subr.mxu0 0.0
      %1222 = vmatpush1.msra.mxu0 0.0
      %1223 = vmatprep.subr.mxu0 0.0
      %1224 = vmatpush1.msra.mxu0 0.0
      %1225 = vmatprep.subr.mxu0 0.0
      %1226 = vmatpush1.msra.mxu0 0.0
      %1227 = vmatprep.subr.mxu0 0.0
      %1228 = vmatpush1.msra.mxu0 0.0
      %1229 = vmatprep.subr.mxu0 0.0
      %1230 = vmatpush1.msra.mxu0 0.0
      %1231 = vmatprep.subr.mxu0 0.0
      %1232 = vmatpush1.msra.mxu0 0.0
      %1233 = vmatprep.subr.mxu0 0.0
      %1234 = vmatpush1.msra.mxu0 0.0
      %1235 = vmatprep.subr.mxu0 0.0
      %1236 = vmatpush1.msra.mxu0 0.0
      %1237 = vmatprep.subr.mxu0 0.0
      %1238 = vmatpush1.msra.mxu0 0.0
      %1239 = vmatprep.subr.mxu0 0.0
      %1240 = vmatpush1.msra.mxu0 0.0
      %1241 = vmatprep.subr.mxu0 0.0
      %1242 = vmatpush1.msra.mxu0 0.0
      %1243 = vmatprep.subr.mxu0 0.0
      %1244 = vmatpush1.msra.mxu0 0.0
      %1245 = vmatprep.subr.mxu0 0.0
      %1246 = vmatpush1.msra.mxu0 0.0
      %1247 = vmatprep.subr.mxu0 0.0
      %1248 = vmatpush1.msra.mxu0 %v1212
      %1249 = vmatprep.subr.mxu0 0.0
      %1250 = vmatpush2.msra.mxu0 0.0
      %1251 = vmatprep.subr.mxu0 0.0
      %1252 = vmatpush2.msra.mxu0 0.0
      %1253 = vmatprep.subr.mxu0 0.0
      %1254 = vmatpush2.msra.mxu0 0.0
      %1255 = vmatprep.subr.mxu0 0.0
      %1256 = vmatpush2.msra.mxu0 0.0
      %1257 = vmatprep.subr.mxu0 0.0
      %1258 = vmatpush2.msra.mxu0 0.0
      %1259 = vmatprep.subr.mxu0 0.0
      %1260 = vmatpush2.msra.mxu0 0.0
      %1261 = vmatprep.subr.mxu0 0.0
      %1262 = vmatpush2.msra.mxu0 0.0
      %1263 = vmatprep.subr.mxu0 0.0
      %1264 = vmatpush2.msra.mxu0 0.0
      %1265 = vmatprep.subr.mxu0 0.0
      %1266 = vmatpush2.msra.mxu0 0.0
      %1267 = vmatprep.subr.mxu0 0.0
      %1268 = vmatpush2.msra.mxu0 0.0
      %1269 = vmatprep.subr.mxu0 0.0
      %1270 = vmatpush2.msra.mxu0 0.0
      %1271 = vmatprep.subr.mxu0 0.0
      %1272 = vmatpush2.msra.mxu0 0.0
      %1273 = vmatprep.subr.mxu0 0.0
      %1274 = vmatpush2.msra.mxu0 0.0
      %1275 = vmatprep.subr.mxu0 0.0
      %1276 = vmatpush2.msra.mxu0 0.0
      %1277 = vmatprep.subr.mxu0 0.0
      %1278 = vmatpush2.msra.mxu0 0.0
      %1279 = vmatprep.subr.mxu0 0.0
      %1280 = vmatpush2.msra.mxu0 0.0
      %1281 = vmatprep.mubr.f32.mxu0 0.0
      %1282 = vmatmul.mubr.f32.gmra.mxu0 %v1215
      %v1283 = vpop.f32.mrf.mxu0
      %v1284 = vadd.f32 0.0, %v1283
      %v1285 = vpop.f32.mrf.mxu0
      %1286 = vdwg.mxu0
      %1288 = vrot.lane.b32.xlu0 %v1284, 8
      %v1289 = vpop.permute.xlu0 %1288
      %vm1291 = vcmask 130112
      %1292 = vst.msk [vmem:[#allocation3] sm:$0xff] %vm1291, %v1289
      %1293 = vrot.lane.b32.xlu0 %v946, 112
      %v1294 = vpop.permute.xlu0 %1293
      %1295 = vrot.lane.b32.xlu0 %v946, 80
      %v1296 = vpop.permute.xlu0 %1295
      %v1297 = vsel %vm957, %v1294, 0
      %v1299 = vsel %vm957, %v1296, 0
      %1301 = vmatprep.subr.mxu0 0.0
      %1302 = vmatpush1.xpose.msra.mxu0 0.0
      %1303 = vmatprep.subr.mxu0 0.0
      %1304 = vmatpush1.xpose.msra.mxu0 0.0
      %1305 = vmatprep.subr.mxu0 0.0
      %1306 = vmatpush1.xpose.msra.mxu0 0.0
      %1307 = vmatprep.subr.mxu0 0.0
      %1308 = vmatpush1.xpose.msra.mxu0 0.0
      %1309 = vmatprep.subr.mxu0 0.0
      %1310 = vmatpush1.xpose.msra.mxu0 0.0
      %1311 = vmatprep.subr.mxu0 0.0
      %1312 = vmatpush1.xpose.msra.mxu0 0.0
      %1313 = vmatprep.subr.mxu0 0.0
      %1314 = vmatpush1.xpose.msra.mxu0 0.0
      %1315 = vmatprep.subr.mxu0 0.0
      %1316 = vmatpush1.xpose.msra.mxu0 0.0
      %1317 = vmatprep.subr.mxu0 0.0
      %1318 = vmatpush1.xpose.msra.mxu0 0.0
      %1319 = vmatprep.subr.mxu0 0.0
      %1320 = vmatpush1.xpose.msra.mxu0 0.0
      %1321 = vmatprep.subr.mxu0 0.0
      %1322 = vmatpush1.xpose.msra.mxu0 0.0
      %1323 = vmatprep.subr.mxu0 0.0
      %1324 = vmatpush1.xpose.msra.mxu0 0.0
      %1325 = vmatprep.subr.mxu0 0.0
      %1326 = vmatpush1.xpose.msra.mxu0 0.0
      %1327 = vmatprep.subr.mxu0 0.0
      %1328 = vmatpush1.xpose.msra.mxu0 0.0
      %1329 = vmatprep.subr.mxu0 0.0
      %1330 = vmatpush1.xpose.msra.mxu0 0.0
      %1331 = vmatprep.subr.mxu0 0.0
      %1332 = vmatpush1.xpose.msra.mxu0 %v1299
      %1333 = vmatprep.subr.mxu0 0.0
      %1334 = vmatpush2.xpose.msra.mxu0 0.0
      %1335 = vmatprep.subr.mxu0 0.0
      %1336 = vmatpush2.xpose.msra.mxu0 0.0
      %1337 = vmatprep.subr.mxu0 0.0
      %1338 = vmatpush2.xpose.msra.mxu0 0.0
      %1339 = vmatprep.subr.mxu0 0.0
      %1340 = vmatpush2.xpose.msra.mxu0 0.0
      %1341 = vmatprep.subr.mxu0 0.0
      %1342 = vmatpush2.xpose.msra.mxu0 0.0
      %1343 = vmatprep.subr.mxu0 0.0
      %1344 = vmatpush2.xpose.msra.mxu0 0.0
      %1345 = vmatprep.subr.mxu0 0.0
      %1346 = vmatpush2.xpose.msra.mxu0 0.0
      %1347 = vmatprep.subr.mxu0 0.0
      %1348 = vmatpush2.xpose.msra.mxu0 0.0
      %1349 = vmatprep.subr.mxu0 0.0
      %1350 = vmatpush2.xpose.msra.mxu0 0.0
      %1351 = vmatprep.subr.mxu0 0.0
      %1352 = vmatpush2.xpose.msra.mxu0 0.0
      %1353 = vmatprep.subr.mxu0 0.0
      %1354 = vmatpush2.xpose.msra.mxu0 0.0
      %1355 = vmatprep.subr.mxu0 0.0
      %1356 = vmatpush2.xpose.msra.mxu0 0.0
      %1357 = vmatprep.subr.mxu0 0.0
      %1358 = vmatpush2.xpose.msra.mxu0 0.0
      %1359 = vmatprep.subr.mxu0 0.0
      %1360 = vmatpush2.xpose.msra.mxu0 0.0
      %1361 = vmatprep.subr.mxu0 0.0
      %1362 = vmatpush2.xpose.msra.mxu0 0.0
      %1363 = vmatprep.subr.mxu0 0.0
      %1364 = vmatpush2.xpose.msra.mxu0 0.0
      %1365 = vmatprep.mubr.f32.mxu0 0.0
      %1366 = vmatmul.mubr.f32.gmra.mxu0 %v1297
      %v1367 = vpop.f32.mrf.mxu0
      %v1368 = vadd.f32 0.0, %v1367
      %v1369 = vpop.f32.mrf.mxu0
      %1370 = vdwg.mxu0
      %v1371 = vmul.f32 %v1368, 0.35355338
      %v1372 = vsel %vm957, %v1371, -inf
      %1373 = vmax.xlane.f32.xlu0 %v1372
      %v1374 = vpop.xlane.xlu0 %1373
      %v1375 = vsub.f32 %v1371, %v1374
      %v1376 = vmul.f32 %v1375, 1.442695
      %v1377 = vpow.pop %v1376
      %v1378 = vsel %vm957, %v1377, 0.0
      %1379 = vadd.xlane.f32.xlu0 %v1378
      %v1380 = vpop.xlane.xlu0 %1379
      %v1381 = vrcp.pop %v1380
      %v1382 = vmul.f32 %v1377, %v1381
      %1383 = vrot.lane.b32.xlu0 %v946, 48
      %v1384 = vpop.permute.xlu0 %1383
      %v1387 = vsel %vm957, %v1382, 0
      %1389 = vmatprep.subr.mxu0 0.0
      %1390 = vmatpush1.msra.mxu0 0.0
      %1391 = vmatprep.subr.mxu0 0.0
      %1392 = vmatpush1.msra.mxu0 0.0
      %1393 = vmatprep.subr.mxu0 0.0
      %1394 = vmatpush1.msra.mxu0 0.0
      %1395 = vmatprep.subr.mxu0 0.0
      %1396 = vmatpush1.msra.mxu0 0.0
      %1397 = vmatprep.subr.mxu0 0.0
      %1398 = vmatpush1.msra.mxu0 0.0
      %1399 = vmatprep.subr.mxu0 0.0
      %1400 = vmatpush1.msra.mxu0 0.0
      %1401 = vmatprep.subr.mxu0 0.0
      %1402 = vmatpush1.msra.mxu0 0.0
      %1403 = vmatprep.subr.mxu0 0.0
      %1404 = vmatpush1.msra.mxu0 0.0
      %1405 = vmatprep.subr.mxu0 0.0
      %1406 = vmatpush1.msra.mxu0 0.0
      %1407 = vmatprep.subr.mxu0 0.0
      %1408 = vmatpush1.msra.mxu0 0.0
      %1409 = vmatprep.subr.mxu0 0.0
      %1410 = vmatpush1.msra.mxu0 0.0
      %1411 = vmatprep.subr.mxu0 0.0
      %1412 = vmatpush1.msra.mxu0 0.0
      %1413 = vmatprep.subr.mxu0 0.0
      %1414 = vmatpush1.msra.mxu0 0.0
      %1415 = vmatprep.subr.mxu0 0.0
      %1416 = vmatpush1.msra.mxu0 0.0
      %1417 = vmatprep.subr.mxu0 0.0
      %1418 = vmatpush1.msra.mxu0 0.0
      %1419 = vmatprep.subr.mxu0 0.0
      %1420 = vmatpush1.msra.mxu0 %v1384
      %1421 = vmatprep.subr.mxu0 0.0
      %1422 = vmatpush2.msra.mxu0 0.0
      %1423 = vmatprep.subr.mxu0 0.0
      %1424 = vmatpush2.msra.mxu0 0.0
      %1425 = vmatprep.subr.mxu0 0.0
      %1426 = vmatpush2.msra.mxu0 0.0
      %1427 = vmatprep.subr.mxu0 0.0
      %1428 = vmatpush2.msra.mxu0 0.0
      %1429 = vmatprep.subr.mxu0 0.0
      %1430 = vmatpush2.msra.mxu0 0.0
      %1431 = vmatprep.subr.mxu0 0.0
      %1432 = vmatpush2.msra.mxu0 0.0
      %1433 = vmatprep.subr.mxu0 0.0
      %1434 = vmatpush2.msra.mxu0 0.0
      %1435 = vmatprep.subr.mxu0 0.0
      %1436 = vmatpush2.msra.mxu0 0.0
      %1437 = vmatprep.subr.mxu0 0.0
      %1438 = vmatpush2.msra.mxu0 0.0
      %1439 = vmatprep.subr.mxu0 0.0
      %1440 = vmatpush2.msra.mxu0 0.0
      %1441 = vmatprep.subr.mxu0 0.0
      %1442 = vmatpush2.msra.mxu0 0.0
      %1443 = vmatprep.subr.mxu0 0.0
      %1444 = vmatpush2.msra.mxu0 0.0
      %1445 = vmatprep.subr.mxu0 0.0
      %1446 = vmatpush2.msra.mxu0 0.0
      %1447 = vmatprep.subr.mxu0 0.0
      %1448 = vmatpush2.msra.mxu0 0.0
      %1449 = vmatprep.subr.mxu0 0.0
      %1450 = vmatpush2.msra.mxu0 0.0
      %1451 = vmatprep.subr.mxu0 0.0
      %1452 = vmatpush2.msra.mxu0 0.0
      %1453 = vmatprep.mubr.f32.mxu0 0.0
      %1454 = vmatmul.mubr.f32.gmra.mxu0 %v1387
      %v1455 = vpop.f32.mrf.mxu0
      %v1456 = vadd.f32 0.0, %v1455
      %v1457 = vpop.f32.mrf.mxu0
      %1458 = vdwg.mxu0
      %1460 = vrot.lane.b32.xlu0 %v1456, 16
      %v1461 = vpop.permute.xlu0 %1460
      %vm1463 = vcmask 195712
      %1464 = vst.msk [vmem:[#allocation3] sm:$0xff] %vm1463, %v1461
      %1465 = vrot.lane.b32.xlu0 %v946, 104
      %v1466 = vpop.permute.xlu0 %1465
      %1467 = vrot.lane.b32.xlu0 %v946, 72
      %v1468 = vpop.permute.xlu0 %1467
      %v1469 = vsel %vm957, %v1466, 0
      %v1471 = vsel %vm957, %v1468, 0
      %1473 = vmatprep.subr.mxu0 0.0
      %1474 = vmatpush1.xpose.msra.mxu0 0.0
      %1475 = vmatprep.subr.mxu0 0.0
      %1476 = vmatpush1.xpose.msra.mxu0 0.0
      %1477 = vmatprep.subr.mxu0 0.0
      %1478 = vmatpush1.xpose.msra.mxu0 0.0
      %1479 = vmatprep.subr.mxu0 0.0
      %1480 = vmatpush1.xpose.msra.mxu0 0.0
      %1481 = vmatprep.subr.mxu0 0.0
      %1482 = vmatpush1.xpose.msra.mxu0 0.0
      %1483 = vmatprep.subr.mxu0 0.0
      %1484 = vmatpush1.xpose.msra.mxu0 0.0
      %1485 = vmatprep.subr.mxu0 0.0
      %1486 = vmatpush1.xpose.msra.mxu0 0.0
      %1487 = vmatprep.subr.mxu0 0.0
      %1488 = vmatpush1.xpose.msra.mxu0 0.0
      %1489 = vmatprep.subr.mxu0 0.0
      %1490 = vmatpush1.xpose.msra.mxu0 0.0
      %1491 = vmatprep.subr.mxu0 0.0
      %1492 = vmatpush1.xpose.msra.mxu0 0.0
      %1493 = vmatprep.subr.mxu0 0.0
      %1494 = vmatpush1.xpose.msra.mxu0 0.0
      %1495 = vmatprep.subr.mxu0 0.0
      %1496 = vmatpush1.xpose.msra.mxu0 0.0
      %1497 = vmatprep.subr.mxu0 0.0
      %1498 = vmatpush1.xpose.msra.mxu0 0.0
      %1499 = vmatprep.subr.mxu0 0.0
      %1500 = vmatpush1.xpose.msra.mxu0 0.0
      %1501 = vmatprep.subr.mxu0 0.0
      %1502 = vmatpush1.xpose.msra.mxu0 0.0
      %1503 = vmatprep.subr.mxu0 0.0
      %1504 = vmatpush1.xpose.msra.mxu0 %v1471
      %1505 = vmatprep.subr.mxu0 0.0
      %1506 = vmatpush2.xpose.msra.mxu0 0.0
      %1507 = vmatprep.subr.mxu0 0.0
      %1508 = vmatpush2.xpose.msra.mxu0 0.0
      %1509 = vmatprep.subr.mxu0 0.0
      %1510 = vmatpush2.xpose.msra.mxu0 0.0
      %1511 = vmatprep.subr.mxu0 0.0
      %1512 = vmatpush2.xpose.msra.mxu0 0.0
      %1513 = vmatprep.subr.mxu0 0.0
      %1514 = vmatpush2.xpose.msra.mxu0 0.0
      %1515 = vmatprep.subr.mxu0 0.0
      %1516 = vmatpush2.xpose.msra.mxu0 0.0
      %1517 = vmatprep.subr.mxu0 0.0
      %1518 = vmatpush2.xpose.msra.mxu0 0.0
      %1519 = vmatprep.subr.mxu0 0.0
      %1520 = vmatpush2.xpose.msra.mxu0 0.0
      %1521 = vmatprep.subr.mxu0 0.0
      %1522 = vmatpush2.xpose.msra.mxu0 0.0
      %1523 = vmatprep.subr.mxu0 0.0
      %1524 = vmatpush2.xpose.msra.mxu0 0.0
      %1525 = vmatprep.subr.mxu0 0.0
      %1526 = vmatpush2.xpose.msra.mxu0 0.0
      %1527 = vmatprep.subr.mxu0 0.0
      %1528 = vmatpush2.xpose.msra.mxu0 0.0
      %1529 = vmatprep.subr.mxu0 0.0
      %1530 = vmatpush2.xpose.msra.mxu0 0.0
      %1531 = vmatprep.subr.mxu0 0.0
      %1532 = vmatpush2.xpose.msra.mxu0 0.0
      %1533 = vmatprep.subr.mxu0 0.0
      %1534 = vmatpush2.xpose.msra.mxu0 0.0
      %1535 = vmatprep.subr.mxu0 0.0
      %1536 = vmatpush2.xpose.msra.mxu0 0.0
      %1537 = vmatprep.mubr.f32.mxu0 0.0
      %1538 = vmatmul.mubr.f32.gmra.mxu0 %v1469
      %v1539 = vpop.f32.mrf.mxu0
      %v1540 = vadd.f32 0.0, %v1539
      %v1541 = vpop.f32.mrf.mxu0
      %1542 = vdwg.mxu0
      %v1543 = vmul.f32 %v1540, 0.35355338
      %v1544 = vsel %vm957, %v1543, -inf
      %1545 = vmax.xlane.f32.xlu0 %v1544
      %v1546 = vpop.xlane.xlu0 %1545
      %v1547 = vsub.f32 %v1543, %v1546
      %v1548 = vmul.f32 %v1547, 1.442695
      %v1549 = vpow.pop %v1548
      %v1550 = vsel %vm957, %v1549, 0.0
      %1551 = vadd.xlane.f32.xlu0 %v1550
      %v1552 = vpop.xlane.xlu0 %1551
      %v1553 = vrcp.pop %v1552
      %v1554 = vmul.f32 %v1549, %v1553
      %1555 = vrot.lane.b32.xlu0 %v946, 40
      %v1556 = vpop.permute.xlu0 %1555
      %v1559 = vsel %vm957, %v1554, 0
      %1561 = vmatprep.subr.mxu0 0.0
      %1562 = vmatpush1.msra.mxu0 0.0
      %1563 = vmatprep.subr.mxu0 0.0
      %1564 = vmatpush1.msra.mxu0 0.0
      %1565 = vmatprep.subr.mxu0 0.0
      %1566 = vmatpush1.msra.mxu0 0.0
      %1567 = vmatprep.subr.mxu0 0.0
      %1568 = vmatpush1.msra.mxu0 0.0
      %1569 = vmatprep.subr.mxu0 0.0
      %1570 = vmatpush1.msra.mxu0 0.0
      %1571 = vmatprep.subr.mxu0 0.0
      %1572 = vmatpush1.msra.mxu0 0.0
      %1573 = vmatprep.subr.mxu0 0.0
      %1574 = vmatpush1.msra.mxu0 0.0
      %1575 = vmatprep.subr.mxu0 0.0
      %1576 = vmatpush1.msra.mxu0 0.0
      %1577 = vmatprep.subr.mxu0 0.0
      %1578 = vmatpush1.msra.mxu0 0.0
      %1579 = vmatprep.subr.mxu0 0.0
      %1580 = vmatpush1.msra.mxu0 0.0
      %1581 = vmatprep.subr.mxu0 0.0
      %1582 = vmatpush1.msra.mxu0 0.0
      %1583 = vmatprep.subr.mxu0 0.0
      %1584 = vmatpush1.msra.mxu0 0.0
      %1585 = vmatprep.subr.mxu0 0.0
      %1586 = vmatpush1.msra.mxu0 0.0
      %1587 = vmatprep.subr.mxu0 0.0
      %1588 = vmatpush1.msra.mxu0 0.0
      %1589 = vmatprep.subr.mxu0 0.0
      %1590 = vmatpush1.msra.mxu0 0.0
      %1591 = vmatprep.subr.mxu0 0.0
      %1592 = vmatpush1.msra.mxu0 %v1556
      %1593 = vmatprep.subr.mxu0 0.0
      %1594 = vmatpush2.msra.mxu0 0.0
      %1595 = vmatprep.subr.mxu0 0.0
      %1596 = vmatpush2.msra.mxu0 0.0
      %1597 = vmatprep.subr.mxu0 0.0
      %1598 = vmatpush2.msra.mxu0 0.0
      %1599 = vmatprep.subr.mxu0 0.0
      %1600 = vmatpush2.msra.mxu0 0.0
      %1601 = vmatprep.subr.mxu0 0.0
      %1602 = vmatpush2.msra.mxu0 0.0
      %1603 = vmatprep.subr.mxu0 0.0
      %1604 = vmatpush2.msra.mxu0 0.0
      %1605 = vmatprep.subr.mxu0 0.0
      %1606 = vmatpush2.msra.mxu0 0.0
      %1607 = vmatprep.subr.mxu0 0.0
      %1608 = vmatpush2.msra.mxu0 0.0
      %1609 = vmatprep.subr.mxu0 0.0
      %1610 = vmatpush2.msra.mxu0 0.0
      %1611 = vmatprep.subr.mxu0 0.0
      %1612 = vmatpush2.msra.mxu0 0.0
      %1613 = vmatprep.subr.mxu0 0.0
      %1614 = vmatpush2.msra.mxu0 0.0
      %1615 = vmatprep.subr.mxu0 0.0
      %1616 = vmatpush2.msra.mxu0 0.0
      %1617 = vmatprep.subr.mxu0 0.0
      %1618 = vmatpush2.msra.mxu0 0.0
      %1619 = vmatprep.subr.mxu0 0.0
      %1620 = vmatpush2.msra.mxu0 0.0
      %1621 = vmatprep.subr.mxu0 0.0
      %1622 = vmatpush2.msra.mxu0 0.0
      %1623 = vmatprep.subr.mxu0 0.0
      %1624 = vmatpush2.msra.mxu0 0.0
      %1625 = vmatprep.mubr.f32.mxu0 0.0
      %1626 = vmatmul.mubr.f32.gmra.mxu0 %v1559
      %v1627 = vpop.f32.mrf.mxu0
      %v1628 = vadd.f32 0.0, %v1627
      %v1629 = vpop.f32.mrf.mxu0
      %1630 = vdwg.mxu0
      %1632 = vrot.lane.b32.xlu0 %v1628, 24
      %v1633 = vpop.permute.xlu0 %1632
      %vm1635 = vcmask 261312
      %1636 = vst.msk [vmem:[#allocation3] sm:$0xff] %vm1635, %v1633
      %1638 = vrot.lane.b32.xlu0 %v951, 96
      %v1639 = vpop.permute.xlu0 %1638
      %v1640 = vsel %vm957, %v951, 0
      %v1642 = vsel %vm957, %v1639, 0
      %1644 = vmatprep.subr.mxu0 0.0
      %1645 = vmatpush1.xpose.msra.mxu0 0.0
      %1646 = vmatprep.subr.mxu0 0.0
      %1647 = vmatpush1.xpose.msra.mxu0 0.0
      %1648 = vmatprep.subr.mxu0 0.0
      %1649 = vmatpush1.xpose.msra.mxu0 0.0
      %1650 = vmatprep.subr.mxu0 0.0
      %1651 = vmatpush1.xpose.msra.mxu0 0.0
      %1652 = vmatprep.subr.mxu0 0.0
      %1653 = vmatpush1.xpose.msra.mxu0 0.0
      %1654 = vmatprep.subr.mxu0 0.0
      %1655 = vmatpush1.xpose.msra.mxu0 0.0
      %1656 = vmatprep.subr.mxu0 0.0
      %1657 = vmatpush1.xpose.msra.mxu0 0.0
      %1658 = vmatprep.subr.mxu0 0.0
      %1659 = vmatpush1.xpose.msra.mxu0 0.0
      %1660 = vmatprep.subr.mxu0 0.0
      %1661 = vmatpush1.xpose.msra.mxu0 0.0
      %1662 = vmatprep.subr.mxu0 0.0
      %1663 = vmatpush1.xpose.msra.mxu0 0.0
      %1664 = vmatprep.subr.mxu0 0.0
      %1665 = vmatpush1.xpose.msra.mxu0 0.0
      %1666 = vmatprep.subr.mxu0 0.0
      %1667 = vmatpush1.xpose.msra.mxu0 0.0
      %1668 = vmatprep.subr.mxu0 0.0
      %1669 = vmatpush1.xpose.msra.mxu0 0.0
      %1670 = vmatprep.subr.mxu0 0.0
      %1671 = vmatpush1.xpose.msra.mxu0 0.0
      %1672 = vmatprep.subr.mxu0 0.0
      %1673 = vmatpush1.xpose.msra.mxu0 0.0
      %1674 = vmatprep.subr.mxu0 0.0
      %1675 = vmatpush1.xpose.msra.mxu0 %v1642
      %1676 = vmatprep.subr.mxu0 0.0
      %1677 = vmatpush2.xpose.msra.mxu0 0.0
      %1678 = vmatprep.subr.mxu0 0.0
      %1679 = vmatpush2.xpose.msra.mxu0 0.0
      %1680 = vmatprep.subr.mxu0 0.0
      %1681 = vmatpush2.xpose.msra.mxu0 0.0
      %1682 = vmatprep.subr.mxu0 0.0
      %1683 = vmatpush2.xpose.msra.mxu0 0.0
      %1684 = vmatprep.subr.mxu0 0.0
      %1685 = vmatpush2.xpose.msra.mxu0 0.0
      %1686 = vmatprep.subr.mxu0 0.0
      %1687 = vmatpush2.xpose.msra.mxu0 0.0
      %1688 = vmatprep.subr.mxu0 0.0
      %1689 = vmatpush2.xpose.msra.mxu0 0.0
      %1690 = vmatprep.subr.mxu0 0.0
      %1691 = vmatpush2.xpose.msra.mxu0 0.0
      %1692 = vmatprep.subr.mxu0 0.0
      %1693 = vmatpush2.xpose.msra.mxu0 0.0
      %1694 = vmatprep.subr.mxu0 0.0
      %1695 = vmatpush2.xpose.msra.mxu0 0.0
      %1696 = vmatprep.subr.mxu0 0.0
      %1697 = vmatpush2.xpose.msra.mxu0 0.0
      %1698 = vmatprep.subr.mxu0 0.0
      %1699 = vmatpush2.xpose.msra.mxu0 0.0
      %1700 = vmatprep.subr.mxu0 0.0
      %1701 = vmatpush2.xpose.msra.mxu0 0.0
      %1702 = vmatprep.subr.mxu0 0.0
      %1703 = vmatpush2.xpose.msra.mxu0 0.0
      %1704 = vmatprep.subr.mxu0 0.0
      %1705 = vmatpush2.xpose.msra.mxu0 0.0
      %1706 = vmatprep.subr.mxu0 0.0
      %1707 = vmatpush2.xpose.msra.mxu0 0.0
      %1708 = vmatprep.mubr.f32.mxu0 0.0
      %1709 = vmatmul.mubr.f32.gmra.mxu0 %v1640
      %v1710 = vpop.f32.mrf.mxu0
      %v1711 = vadd.f32 0.0, %v1710
      %v1712 = vpop.f32.mrf.mxu0
      %1713 = vdwg.mxu0
      %v1714 = vmul.f32 %v1711, 0.35355338
      %v1715 = vsel %vm957, %v1714, -inf
      %1716 = vmax.xlane.f32.xlu0 %v1715
      %v1717 = vpop.xlane.xlu0 %1716
      %v1718 = vsub.f32 %v1714, %v1717
      %v1719 = vmul.f32 %v1718, 1.442695
      %v1720 = vpow.pop %v1719
      %v1721 = vsel %vm957, %v1720, 0.0
      %1722 = vadd.xlane.f32.xlu0 %v1721
      %v1723 = vpop.xlane.xlu0 %1722
      %v1724 = vrcp.pop %v1723
      %v1725 = vmul.f32 %v1720, %v1724
      %1726 = vrot.lane.b32.xlu0 %v951, 64
      %v1727 = vpop.permute.xlu0 %1726
      %v1730 = vsel %vm957, %v1725, 0
      %1732 = vmatprep.subr.mxu0 0.0
      %1733 = vmatpush1.msra.mxu0 0.0
      %1734 = vmatprep.subr.mxu0 0.0
      %1735 = vmatpush1.msra.mxu0 0.0
      %1736 = vmatprep.subr.mxu0 0.0
      %1737 = vmatpush1.msra.mxu0 0.0
      %1738 = vmatprep.subr.mxu0 0.0
      %1739 = vmatpush1.msra.mxu0 0.0
      %1740 = vmatprep.subr.mxu0 0.0
      %1741 = vmatpush1.msra.mxu0 0.0
      %1742 = vmatprep.subr.mxu0 0.0
      %1743 = vmatpush1.msra.mxu0 0.0
      %1744 = vmatprep.subr.mxu0 0.0
      %1745 = vmatpush1.msra.mxu0 0.0
      %1746 = vmatprep.subr.mxu0 0.0
      %1747 = vmatpush1.msra.mxu0 0.0
      %1748 = vmatprep.subr.mxu0 0.0
      %1749 = vmatpush1.msra.mxu0 0.0
      %1750 = vmatprep.subr.mxu0 0.0
      %1751 = vmatpush1.msra.mxu0 0.0
      %1752 = vmatprep.subr.mxu0 0.0
      %1753 = vmatpush1.msra.mxu0 0.0
      %1754 = vmatprep.subr.mxu0 0.0
      %1755 = vmatpush1.msra.mxu0 0.0
      %1756 = vmatprep.subr.mxu0 0.0
      %1757 = vmatpush1.msra.mxu0 0.0
      %1758 = vmatprep.subr.mxu0 0.0
      %1759 = vmatpush1.msra.mxu0 0.0
      %1760 = vmatprep.subr.mxu0 0.0
      %1761 = vmatpush1.msra.mxu0 0.0
      %1762 = vmatprep.subr.mxu0 0.0
      %1763 = vmatpush1.msra.mxu0 %v1727
      %1764 = vmatprep.subr.mxu0 0.0
      %1765 = vmatpush2.msra.mxu0 0.0
      %1766 = vmatprep.subr.mxu0 0.0
      %1767 = vmatpush2.msra.mxu0 0.0
      %1768 = vmatprep.subr.mxu0 0.0
      %1769 = vmatpush2.msra.mxu0 0.0
      %1770 = vmatprep.subr.mxu0 0.0
      %1771 = vmatpush2.msra.mxu0 0.0
      %1772 = vmatprep.subr.mxu0 0.0
      %1773 = vmatpush2.msra.mxu0 0.0
      %1774 = vmatprep.subr.mxu0 0.0
      %1775 = vmatpush2.msra.mxu0 0.0
      %1776 = vmatprep.subr.mxu0 0.0
      %1777 = vmatpush2.msra.mxu0 0.0
      %1778 = vmatprep.subr.mxu0 0.0
      %1779 = vmatpush2.msra.mxu0 0.0
      %1780 = vmatprep.subr.mxu0 0.0
      %1781 = vmatpush2.msra.mxu0 0.0
      %1782 = vmatprep.subr.mxu0 0.0
      %1783 = vmatpush2.msra.mxu0 0.0
      %1784 = vmatprep.subr.mxu0 0.0
      %1785 = vmatpush2.msra.mxu0 0.0
      %1786 = vmatprep.subr.mxu0 0.0
      %1787 = vmatpush2.msra.mxu0 0.0
      %1788 = vmatprep.subr.mxu0 0.0
      %1789 = vmatpush2.msra.mxu0 0.0
      %1790 = vmatprep.subr.mxu0 0.0
      %1791 = vmatpush2.msra.mxu0 0.0
      %1792 = vmatprep.subr.mxu0 0.0
      %1793 = vmatpush2.msra.mxu0 0.0
      %1794 = vmatprep.subr.mxu0 0.0
      %1795 = vmatpush2.msra.mxu0 0.0
      %1796 = vmatprep.mubr.f32.mxu0 0.0
      %1797 = vmatmul.mubr.f32.gmra.mxu0 %v1730
      %v1798 = vpop.f32.mrf.mxu0
      %v1799 = vadd.f32 0.0, %v1798
      %v1800 = vpop.f32.mrf.mxu0
      %1801 = vdwg.mxu0
      %1802 = vst.msk [vmem:[#allocation3 + $0x8] sm:$0xff] %vm957, %v1799
      %1803 = vrot.lane.b32.xlu0 %v951, 120
      %v1804 = vpop.permute.xlu0 %1803
      %1805 = vrot.lane.b32.xlu0 %v951, 88
      %v1806 = vpop.permute.xlu0 %1805
      %v1807 = vsel %vm957, %v1804, 0
      %v1809 = vsel %vm957, %v1806, 0
      %1811 = vmatprep.subr.mxu0 0.0
      %1812 = vmatpush1.xpose.msra.mxu0 0.0
      %1813 = vmatprep.subr.mxu0 0.0
      %1814 = vmatpush1.xpose.msra.mxu0 0.0
      %1815 = vmatprep.subr.mxu0 0.0
      %1816 = vmatpush1.xpose.msra.mxu0 0.0
      %1817 = vmatprep.subr.mxu0 0.0
      %1818 = vmatpush1.xpose.msra.mxu0 0.0
      %1819 = vmatprep.subr.mxu0 0.0
      %1820 = vmatpush1.xpose.msra.mxu0 0.0
      %1821 = vmatprep.subr.mxu0 0.0
      %1822 = vmatpush1.xpose.msra.mxu0 0.0
      %1823 = vmatprep.subr.mxu0 0.0
      %1824 = vmatpush1.xpose.msra.mxu0 0.0
      %1825 = vmatprep.subr.mxu0 0.0
      %1826 = vmatpush1.xpose.msra.mxu0 0.0
      %1827 = vmatprep.subr.mxu0 0.0
      %1828 = vmatpush1.xpose.msra.mxu0 0.0
      %1829 = vmatprep.subr.mxu0 0.0
      %1830 = vmatpush1.xpose.msra.mxu0 0.0
      %1831 = vmatprep.subr.mxu0 0.0
      %1832 = vmatpush1.xpose.msra.mxu0 0.0
      %1833 = vmatprep.subr.mxu0 0.0
      %1834 = vmatpush1.xpose.msra.mxu0 0.0
      %1835 = vmatprep.subr.mxu0 0.0
      %1836 = vmatpush1.xpose.msra.mxu0 0.0
      %1837 = vmatprep.subr.mxu0 0.0
      %1838 = vmatpush1.xpose.msra.mxu0 0.0
      %1839 = vmatprep.subr.mxu0 0.0
      %1840 = vmatpush1.xpose.msra.mxu0 0.0
      %1841 = vmatprep.subr.mxu0 0.0
      %1842 = vmatpush1.xpose.msra.mxu0 %v1809
      %1843 = vmatprep.subr.mxu0 0.0
      %1844 = vmatpush2.xpose.msra.mxu0 0.0
      %1845 = vmatprep.subr.mxu0 0.0
      %1846 = vmatpush2.xpose.msra.mxu0 0.0
      %1847 = vmatprep.subr.mxu0 0.0
      %1848 = vmatpush2.xpose.msra.mxu0 0.0
      %1849 = vmatprep.subr.mxu0 0.0
      %1850 = vmatpush2.xpose.msra.mxu0 0.0
      %1851 = vmatprep.subr.mxu0 0.0
      %1852 = vmatpush2.xpose.msra.mxu0 0.0
      %1853 = vmatprep.subr.mxu0 0.0
      %1854 = vmatpush2.xpose.msra.mxu0 0.0
      %1855 = vmatprep.subr.mxu0 0.0
      %1856 = vmatpush2.xpose.msra.mxu0 0.0
      %1857 = vmatprep.subr.mxu0 0.0
      %1858 = vmatpush2.xpose.msra.mxu0 0.0
      %1859 = vmatprep.subr.mxu0 0.0
      %1860 = vmatpush2.xpose.msra.mxu0 0.0
      %1861 = vmatprep.subr.mxu0 0.0
      %1862 = vmatpush2.xpose.msra.mxu0 0.0
      %1863 = vmatprep.subr.mxu0 0.0
      %1864 = vmatpush2.xpose.msra.mxu0 0.0
      %1865 = vmatprep.subr.mxu0 0.0
      %1866 = vmatpush2.xpose.msra.mxu0 0.0
      %1867 = vmatprep.subr.mxu0 0.0
      %1868 = vmatpush2.xpose.msra.mxu0 0.0
      %1869 = vmatprep.subr.mxu0 0.0
      %1870 = vmatpush2.xpose.msra.mxu0 0.0
      %1871 = vmatprep.subr.mxu0 0.0
      %1872 = vmatpush2.xpose.msra.mxu0 0.0
      %1873 = vmatprep.subr.mxu0 0.0
      %1874 = vmatpush2.xpose.msra.mxu0 0.0
      %1875 = vmatprep.mubr.f32.mxu0 0.0
      %1876 = vmatmul.mubr.f32.gmra.mxu0 %v1807
      %v1877 = vpop.f32.mrf.mxu0
      %v1878 = vadd.f32 0.0, %v1877
      %v1879 = vpop.f32.mrf.mxu0
      %1880 = vdwg.mxu0
      %v1881 = vmul.f32 %v1878, 0.35355338
      %v1882 = vsel %vm957, %v1881, -inf
      %1883 = vmax.xlane.f32.xlu0 %v1882
      %v1884 = vpop.xlane.xlu0 %1883
      %v1885 = vsub.f32 %v1881, %v1884
      %v1886 = vmul.f32 %v1885, 1.442695
      %v1887 = vpow.pop %v1886
      %v1888 = vsel %vm957, %v1887, 0.0
      %1889 = vadd.xlane.f32.xlu0 %v1888
      %v1890 = vpop.xlane.xlu0 %1889
      %v1891 = vrcp.pop %v1890
      %v1892 = vmul.f32 %v1887, %v1891
      %1893 = vrot.lane.b32.xlu0 %v951, 56
      %v1894 = vpop.permute.xlu0 %1893
      %v1897 = vsel %vm957, %v1892, 0
      %1899 = vmatprep.subr.mxu0 0.0
      %1900 = vmatpush1.msra.mxu0 0.0
      %1901 = vmatprep.subr.mxu0 0.0
      %1902 = vmatpush1.msra.mxu0 0.0
      %1903 = vmatprep.subr.mxu0 0.0
      %1904 = vmatpush1.msra.mxu0 0.0
      %1905 = vmatprep.subr.mxu0 0.0
      %1906 = vmatpush1.msra.mxu0 0.0
      %1907 = vmatprep.subr.mxu0 0.0
      %1908 = vmatpush1.msra.mxu0 0.0
      %1909 = vmatprep.subr.mxu0 0.0
      %1910 = vmatpush1.msra.mxu0 0.0
      %1911 = vmatprep.subr.mxu0 0.0
      %1912 = vmatpush1.msra.mxu0 0.0
      %1913 = vmatprep.subr.mxu0 0.0
      %1914 = vmatpush1.msra.mxu0 0.0
      %1915 = vmatprep.subr.mxu0 0.0
      %1916 = vmatpush1.msra.mxu0 0.0
      %1917 = vmatprep.subr.mxu0 0.0
      %1918 = vmatpush1.msra.mxu0 0.0
      %1919 = vmatprep.subr.mxu0 0.0
      %1920 = vmatpush1.msra.mxu0 0.0
      %1921 = vmatprep.subr.mxu0 0.0
      %1922 = vmatpush1.msra.mxu0 0.0
      %1923 = vmatprep.subr.mxu0 0.0
      %1924 = vmatpush1.msra.mxu0 0.0
      %1925 = vmatprep.subr.mxu0 0.0
      %1926 = vmatpush1.msra.mxu0 0.0
      %1927 = vmatprep.subr.mxu0 0.0
      %1928 = vmatpush1.msra.mxu0 0.0
      %1929 = vmatprep.subr.mxu0 0.0
      %1930 = vmatpush1.msra.mxu0 %v1894
      %1931 = vmatprep.subr.mxu0 0.0
      %1932 = vmatpush2.msra.mxu0 0.0
      %1933 = vmatprep.subr.mxu0 0.0
      %1934 = vmatpush2.msra.mxu0 0.0
      %1935 = vmatprep.subr.mxu0 0.0
      %1936 = vmatpush2.msra.mxu0 0.0
      %1937 = vmatprep.subr.mxu0 0.0
      %1938 = vmatpush2.msra.mxu0 0.0
      %1939 = vmatprep.subr.mxu0 0.0
      %1940 = vmatpush2.msra.mxu0 0.0
      %1941 = vmatprep.subr.mxu0 0.0
      %1942 = vmatpush2.msra.mxu0 0.0
      %1943 = vmatprep.subr.mxu0 0.0
      %1944 = vmatpush2.msra.mxu0 0.0
      %1945 = vmatprep.subr.mxu0 0.0
      %1946 = vmatpush2.msra.mxu0 0.0
      %1947 = vmatprep.subr.mxu0 0.0
      %1948 = vmatpush2.msra.mxu0 0.0
      %1949 = vmatprep.subr.mxu0 0.0
      %1950 = vmatpush2.msra.mxu0 0.0
      %1951 = vmatprep.subr.mxu0 0.0
      %1952 = vmatpush2.msra.mxu0 0.0
      %1953 = vmatprep.subr.mxu0 0.0
      %1954 = vmatpush2.msra.mxu0 0.0
      %1955 = vmatprep.subr.mxu0 0.0
      %1956 = vmatpush2.msra.mxu0 0.0
      %1957 = vmatprep.subr.mxu0 0.0
      %1958 = vmatpush2.msra.mxu0 0.0
      %1959 = vmatprep.subr.mxu0 0.0
      %1960 = vmatpush2.msra.mxu0 0.0
      %1961 = vmatprep.subr.mxu0 0.0
      %1962 = vmatpush2.msra.mxu0 0.0
      %1963 = vmatprep.mubr.f32.mxu0 0.0
      %1964 = vmatmul.mubr.f32.gmra.mxu0 %v1897
      %v1965 = vpop.f32.mrf.mxu0
      %v1966 = vadd.f32 0.0, %v1965
      %v1967 = vpop.f32.mrf.mxu0
      %1968 = vdwg.mxu0
      %1970 = vrot.lane.b32.xlu0 %v1966, 8
      %v1971 = vpop.permute.xlu0 %1970
      %1973 = vst.msk [vmem:[#allocation3 + $0x8] sm:$0xff] %vm1291, %v1971
      %1974 = vrot.lane.b32.xlu0 %v951, 112
      %v1975 = vpop.permute.xlu0 %1974
      %1976 = vrot.lane.b32.xlu0 %v951, 80
      %v1977 = vpop.permute.xlu0 %1976
      %v1978 = vsel %vm957, %v1975, 0
      %v1980 = vsel %vm957, %v1977, 0
      %1982 = vmatprep.subr.mxu0 0.0
      %1983 = vmatpush1.xpose.msra.mxu0 0.0
      %1984 = vmatprep.subr.mxu0 0.0
      %1985 = vmatpush1.xpose.msra.mxu0 0.0
      %1986 = vmatprep.subr.mxu0 0.0
      %1987 = vmatpush1.xpose.msra.mxu0 0.0
      %1988 = vmatprep.subr.mxu0 0.0
      %1989 = vmatpush1.xpose.msra.mxu0 0.0
      %1990 = vmatprep.subr.mxu0 0.0
      %1991 = vmatpush1.xpose.msra.mxu0 0.0
      %1992 = vmatprep.subr.mxu0 0.0
      %1993 = vmatpush1.xpose.msra.mxu0 0.0
      %1994 = vmatprep.subr.mxu0 0.0
      %1995 = vmatpush1.xpose.msra.mxu0 0.0
      %1996 = vmatprep.subr.mxu0 0.0
      %1997 = vmatpush1.xpose.msra.mxu0 0.0
      %1998 = vmatprep.subr.mxu0 0.0
      %1999 = vmatpush1.xpose.msra.mxu0 0.0
      %2000 = vmatprep.subr.mxu0 0.0
      %2001 = vmatpush1.xpose.msra.mxu0 0.0
      %2002 = vmatprep.subr.mxu0 0.0
      %2003 = vmatpush1.xpose.msra.mxu0 0.0
      %2004 = vmatprep.subr.mxu0 0.0
      %2005 = vmatpush1.xpose.msra.mxu0 0.0
      %2006 = vmatprep.subr.mxu0 0.0
      %2007 = vmatpush1.xpose.msra.mxu0 0.0
      %2008 = vmatprep.subr.mxu0 0.0
      %2009 = vmatpush1.xpose.msra.mxu0 0.0
      %2010 = vmatprep.subr.mxu0 0.0
      %2011 = vmatpush1.xpose.msra.mxu0 0.0
      %2012 = vmatprep.subr.mxu0 0.0
      %2013 = vmatpush1.xpose.msra.mxu0 %v1980
      %2014 = vmatprep.subr.mxu0 0.0
      %2015 = vmatpush2.xpose.msra.mxu0 0.0
      %2016 = vmatprep.subr.mxu0 0.0
      %2017 = vmatpush2.xpose.msra.mxu0 0.0
      %2018 = vmatprep.subr.mxu0 0.0
      %2019 = vmatpush2.xpose.msra.mxu0 0.0
      %2020 = vmatprep.subr.mxu0 0.0
      %2021 = vmatpush2.xpose.msra.mxu0 0.0
      %2022 = vmatprep.subr.mxu0 0.0
      %2023 = vmatpush2.xpose.msra.mxu0 0.0
      %2024 = vmatprep.subr.mxu0 0.0
      %2025 = vmatpush2.xpose.msra.mxu0 0.0
      %2026 = vmatprep.subr.mxu0 0.0
      %2027 = vmatpush2.xpose.msra.mxu0 0.0
      %2028 = vmatprep.subr.mxu0 0.0
      %2029 = vmatpush2.xpose.msra.mxu0 0.0
      %2030 = vmatprep.subr.mxu0 0.0
      %2031 = vmatpush2.xpose.msra.mxu0 0.0
      %2032 = vmatprep.subr.mxu0 0.0
      %2033 = vmatpush2.xpose.msra.mxu0 0.0
      %2034 = vmatprep.subr.mxu0 0.0
      %2035 = vmatpush2.xpose.msra.mxu0 0.0
      %2036 = vmatprep.subr.mxu0 0.0
      %2037 = vmatpush2.xpose.msra.mxu0 0.0
      %2038 = vmatprep.subr.mxu0 0.0
      %2039 = vmatpush2.xpose.msra.mxu0 0.0
      %2040 = vmatprep.subr.mxu0 0.0
      %2041 = vmatpush2.xpose.msra.mxu0 0.0
      %2042 = vmatprep.subr.mxu0 0.0
      %2043 = vmatpush2.xpose.msra.mxu0 0.0
      %2044 = vmatprep.subr.mxu0 0.0
      %2045 = vmatpush2.xpose.msra.mxu0 0.0
      %2046 = vmatprep.mubr.f32.mxu0 0.0
      %2047 = vmatmul.mubr.f32.gmra.mxu0 %v1978
      %v2048 = vpop.f32.mrf.mxu0
      %v2049 = vadd.f32 0.0, %v2048
      %v2050 = vpop.f32.mrf.mxu0
      %2051 = vdwg.mxu0
      %v2052 = vmul.f32 %v2049, 0.35355338
      %v2053 = vsel %vm957, %v2052, -inf
      %2054 = vmax.xlane.f32.xlu0 %v2053
      %v2055 = vpop.xlane.xlu0 %2054
      %v2056 = vsub.f32 %v2052, %v2055
      %v2057 = vmul.f32 %v2056, 1.442695
      %v2058 = vpow.pop %v2057
      %v2059 = vsel %vm957, %v2058, 0.0
      %2060 = vadd.xlane.f32.xlu0 %v2059
      %v2061 = vpop.xlane.xlu0 %2060
      %v2062 = vrcp.pop %v2061
      %v2063 = vmul.f32 %v2058, %v2062
      %2064 = vrot.lane.b32.xlu0 %v951, 48
      %v2065 = vpop.permute.xlu0 %2064
      %v2068 = vsel %vm957, %v2063, 0
      %2070 = vmatprep.subr.mxu0 0.0
      %2071 = vmatpush1.msra.mxu0 0.0
      %2072 = vmatprep.subr.mxu0 0.0
      %2073 = vmatpush1.msra.mxu0 0.0
      %2074 = vmatprep.subr.mxu0 0.0
      %2075 = vmatpush1.msra.mxu0 0.0
      %2076 = vmatprep.subr.mxu0 0.0
      %2077 = vmatpush1.msra.mxu0 0.0
      %2078 = vmatprep.subr.mxu0 0.0
      %2079 = vmatpush1.msra.mxu0 0.0
      %2080 = vmatprep.subr.mxu0 0.0
      %2081 = vmatpush1.msra.mxu0 0.0
      %2082 = vmatprep.subr.mxu0 0.0
      %2083 = vmatpush1.msra.mxu0 0.0
      %2084 = vmatprep.subr.mxu0 0.0
      %2085 = vmatpush1.msra.mxu0 0.0
      %2086 = vmatprep.subr.mxu0 0.0
      %2087 = vmatpush1.msra.mxu0 0.0
      %2088 = vmatprep.subr.mxu0 0.0
      %2089 = vmatpush1.msra.mxu0 0.0
      %2090 = vmatprep.subr.mxu0 0.0
      %2091 = vmatpush1.msra.mxu0 0.0
      %2092 = vmatprep.subr.mxu0 0.0
      %2093 = vmatpush1.msra.mxu0 0.0
      %2094 = vmatprep.subr.mxu0 0.0
      %2095 = vmatpush1.msra.mxu0 0.0
      %2096 = vmatprep.subr.mxu0 0.0
      %2097 = vmatpush1.msra.mxu0 0.0
      %2098 = vmatprep.subr.mxu0 0.0
      %2099 = vmatpush1.msra.mxu0 0.0
      %2100 = vmatprep.subr.mxu0 0.0
      %2101 = vmatpush1.msra.mxu0 %v2065
      %2102 = vmatprep.subr.mxu0 0.0
      %2103 = vmatpush2.msra.mxu0 0.0
      %2104 = vmatprep.subr.mxu0 0.0
      %2105 = vmatpush2.msra.mxu0 0.0
      %2106 = vmatprep.subr.mxu0 0.0
      %2107 = vmatpush2.msra.mxu0 0.0
      %2108 = vmatprep.subr.mxu0 0.0
      %2109 = vmatpush2.msra.mxu0 0.0
      %2110 = vmatprep.subr.mxu0 0.0
      %2111 = vmatpush2.msra.mxu0 0.0
      %2112 = vmatprep.subr.mxu0 0.0
      %2113 = vmatpush2.msra.mxu0 0.0
      %2114 = vmatprep.subr.mxu0 0.0
      %2115 = vmatpush2.msra.mxu0 0.0
      %2116 = vmatprep.subr.mxu0 0.0
      %2117 = vmatpush2.msra.mxu0 0.0
      %2118 = vmatprep.subr.mxu0 0.0
      %2119 = vmatpush2.msra.mxu0 0.0
      %2120 = vmatprep.subr.mxu0 0.0
      %2121 = vmatpush2.msra.mxu0 0.0
      %2122 = vmatprep.subr.mxu0 0.0
      %2123 = vmatpush2.msra.mxu0 0.0
      %2124 = vmatprep.subr.mxu0 0.0
      %2125 = vmatpush2.msra.mxu0 0.0
      %2126 = vmatprep.subr.mxu0 0.0
      %2127 = vmatpush2.msra.mxu0 0.0
      %2128 = vmatprep.subr.mxu0 0.0
      %2129 = vmatpush2.msra.mxu0 0.0
      %2130 = vmatprep.subr.mxu0 0.0
      %2131 = vmatpush2.msra.mxu0 0.0
      %2132 = vmatprep.subr.mxu0 0.0
      %2133 = vmatpush2.msra.mxu0 0.0
      %2134 = vmatprep.mubr.f32.mxu0 0.0
      %2135 = vmatmul.mubr.f32.gmra.mxu0 %v2068
      %v2136 = vpop.f32.mrf.mxu0
      %v2137 = vadd.f32 0.0, %v2136
      %v2138 = vpop.f32.mrf.mxu0
      %2139 = vdwg.mxu0
      %2141 = vrot.lane.b32.xlu0 %v2137, 16
      %v2142 = vpop.permute.xlu0 %2141
      %2144 = vst.msk [vmem:[#allocation3 + $0x8] sm:$0xff] %vm1463, %v2142
      %2145 = vrot.lane.b32.xlu0 %v951, 104
      %v2146 = vpop.permute.xlu0 %2145
      %2147 = vrot.lane.b32.xlu0 %v951, 72
      %v2148 = vpop.permute.xlu0 %2147
      %v2149 = vsel %vm957, %v2146, 0
      %v2151 = vsel %vm957, %v2148, 0
      %2153 = vmatprep.subr.mxu0 0.0
      %2154 = vmatpush1.xpose.msra.mxu0 0.0
      %2155 = vmatprep.subr.mxu0 0.0
      %2156 = vmatpush1.xpose.msra.mxu0 0.0
      %2157 = vmatprep.subr.mxu0 0.0
      %2158 = vmatpush1.xpose.msra.mxu0 0.0
      %2159 = vmatprep.subr.mxu0 0.0
      %2160 = vmatpush1.xpose.msra.mxu0 0.0
      %2161 = vmatprep.subr.mxu0 0.0
      %2162 = vmatpush1.xpose.msra.mxu0 0.0
      %2163 = vmatprep.subr.mxu0 0.0
      %2164 = vmatpush1.xpose.msra.mxu0 0.0
      %2165 = vmatprep.subr.mxu0 0.0
      %2166 = vmatpush1.xpose.msra.mxu0 0.0
      %2167 = vmatprep.subr.mxu0 0.0
      %2168 = vmatpush1.xpose.msra.mxu0 0.0
      %2169 = vmatprep.subr.mxu0 0.0
      %2170 = vmatpush1.xpose.msra.mxu0 0.0
      %2171 = vmatprep.subr.mxu0 0.0
      %2172 = vmatpush1.xpose.msra.mxu0 0.0
      %2173 = vmatprep.subr.mxu0 0.0
      %2174 = vmatpush1.xpose.msra.mxu0 0.0
      %2175 = vmatprep.subr.mxu0 0.0
      %2176 = vmatpush1.xpose.msra.mxu0 0.0
      %2177 = vmatprep.subr.mxu0 0.0
      %2178 = vmatpush1.xpose.msra.mxu0 0.0
      %2179 = vmatprep.subr.mxu0 0.0
      %2180 = vmatpush1.xpose.msra.mxu0 0.0
      %2181 = vmatprep.subr.mxu0 0.0
      %2182 = vmatpush1.xpose.msra.mxu0 0.0
      %2183 = vmatprep.subr.mxu0 0.0
      %2184 = vmatpush1.xpose.msra.mxu0 %v2151
      %2185 = vmatprep.subr.mxu0 0.0
      %2186 = vmatpush2.xpose.msra.mxu0 0.0
      %2187 = vmatprep.subr.mxu0 0.0
      %2188 = vmatpush2.xpose.msra.mxu0 0.0
      %2189 = vmatprep.subr.mxu0 0.0
      %2190 = vmatpush2.xpose.msra.mxu0 0.0
      %2191 = vmatprep.subr.mxu0 0.0
      %2192 = vmatpush2.xpose.msra.mxu0 0.0
      %2193 = vmatprep.subr.mxu0 0.0
      %2194 = vmatpush2.xpose.msra.mxu0 0.0
      %2195 = vmatprep.subr.mxu0 0.0
      %2196 = vmatpush2.xpose.msra.mxu0 0.0
      %2197 = vmatprep.subr.mxu0 0.0
      %2198 = vmatpush2.xpose.msra.mxu0 0.0
      %2199 = vmatprep.subr.mxu0 0.0
      %2200 = vmatpush2.xpose.msra.mxu0 0.0
      %2201 = vmatprep.subr.mxu0 0.0
      %2202 = vmatpush2.xpose.msra.mxu0 0.0
      %2203 = vmatprep.subr.mxu0 0.0
      %2204 = vmatpush2.xpose.msra.mxu0 0.0
      %2205 = vmatprep.subr.mxu0 0.0
      %2206 = vmatpush2.xpose.msra.mxu0 0.0
      %2207 = vmatprep.subr.mxu0 0.0
      %2208 = vmatpush2.xpose.msra.mxu0 0.0
      %2209 = vmatprep.subr.mxu0 0.0
      %2210 = vmatpush2.xpose.msra.mxu0 0.0
      %2211 = vmatprep.subr.mxu0 0.0
      %2212 = vmatpush2.xpose.msra.mxu0 0.0
      %2213 = vmatprep.subr.mxu0 0.0
      %2214 = vmatpush2.xpose.msra.mxu0 0.0
      %2215 = vmatprep.subr.mxu0 0.0
      %2216 = vmatpush2.xpose.msra.mxu0 0.0
      %2217 = vmatprep.mubr.f32.mxu0 0.0
      %2218 = vmatmul.mubr.f32.gmra.mxu0 %v2149
      %v2219 = vpop.f32.mrf.mxu0
      %v2220 = vadd.f32 0.0, %v2219
      %v2221 = vpop.f32.mrf.mxu0
      %2222 = vdwg.mxu0
      %v2223 = vmul.f32 %v2220, 0.35355338
      %v2224 = vsel %vm957, %v2223, -inf
      %2225 = vmax.xlane.f32.xlu0 %v2224
      %v2226 = vpop.xlane.xlu0 %2225
      %v2227 = vsub.f32 %v2223, %v2226
      %v2228 = vmul.f32 %v2227, 1.442695
      %v2229 = vpow.pop %v2228
      %v2230 = vsel %vm957, %v2229, 0.0
      %2231 = vadd.xlane.f32.xlu0 %v2230
      %v2232 = vpop.xlane.xlu0 %2231
      %v2233 = vrcp.pop %v2232
      %v2234 = vmul.f32 %v2229, %v2233
      %2235 = vrot.lane.b32.xlu0 %v951, 40
      %v2236 = vpop.permute.xlu0 %2235
      %v2239 = vsel %vm957, %v2234, 0
      %2241 = vmatprep.subr.mxu0 0.0
      %2242 = vmatpush1.msra.mxu0 0.0
      %2243 = vmatprep.subr.mxu0 0.0
      %2244 = vmatpush1.msra.mxu0 0.0
      %2245 = vmatprep.subr.mxu0 0.0
      %2246 = vmatpush1.msra.mxu0 0.0
      %2247 = vmatprep.subr.mxu0 0.0
      %2248 = vmatpush1.msra.mxu0 0.0
      %2249 = vmatprep.subr.mxu0 0.0
      %2250 = vmatpush1.msra.mxu0 0.0
      %2251 = vmatprep.subr.mxu0 0.0
      %2252 = vmatpush1.msra.mxu0 0.0
      %2253 = vmatprep.subr.mxu0 0.0
      %2254 = vmatpush1.msra.mxu0 0.0
      %2255 = vmatprep.subr.mxu0 0.0
      %2256 = vmatpush1.msra.mxu0 0.0
      %2257 = vmatprep.subr.mxu0 0.0
      %2258 = vmatpush1.msra.mxu0 0.0
      %2259 = vmatprep.subr.mxu0 0.0
      %2260 = vmatpush1.msra.mxu0 0.0
      %2261 = vmatprep.subr.mxu0 0.0
      %2262 = vmatpush1.msra.mxu0 0.0
      %2263 = vmatprep.subr.mxu0 0.0
      %2264 = vmatpush1.msra.mxu0 0.0
      %2265 = vmatprep.subr.mxu0 0.0
      %2266 = vmatpush1.msra.mxu0 0.0
      %2267 = vmatprep.subr.mxu0 0.0
      %2268 = vmatpush1.msra.mxu0 0.0
      %2269 = vmatprep.subr.mxu0 0.0
      %2270 = vmatpush1.msra.mxu0 0.0
      %2271 = vmatprep.subr.mxu0 0.0
      %2272 = vmatpush1.msra.mxu0 %v2236
      %2273 = vmatprep.subr.mxu0 0.0
      %2274 = vmatpush2.msra.mxu0 0.0
      %2275 = vmatprep.subr.mxu0 0.0
      %2276 = vmatpush2.msra.mxu0 0.0
      %2277 = vmatprep.subr.mxu0 0.0
      %2278 = vmatpush2.msra.mxu0 0.0
      %2279 = vmatprep.subr.mxu0 0.0
      %2280 = vmatpush2.msra.mxu0 0.0
      %2281 = vmatprep.subr.mxu0 0.0
      %2282 = vmatpush2.msra.mxu0 0.0
      %2283 = vmatprep.subr.mxu0 0.0
      %2284 = vmatpush2.msra.mxu0 0.0
      %2285 = vmatprep.subr.mxu0 0.0
      %2286 = vmatpush2.msra.mxu0 0.0
      %2287 = vmatprep.subr.mxu0 0.0
      %2288 = vmatpush2.msra.mxu0 0.0
      %2289 = vmatprep.subr.mxu0 0.0
      %2290 = vmatpush2.msra.mxu0 0.0
      %2291 = vmatprep.subr.mxu0 0.0
      %2292 = vmatpush2.msra.mxu0 0.0
      %2293 = vmatprep.subr.mxu0 0.0
      %2294 = vmatpush2.msra.mxu0 0.0
      %2295 = vmatprep.subr.mxu0 0.0
      %2296 = vmatpush2.msra.mxu0 0.0
      %2297 = vmatprep.subr.mxu0 0.0
      %2298 = vmatpush2.msra.mxu0 0.0
      %2299 = vmatprep.subr.mxu0 0.0
      %2300 = vmatpush2.msra.mxu0 0.0
      %2301 = vmatprep.subr.mxu0 0.0
      %2302 = vmatpush2.msra.mxu0 0.0
      %2303 = vmatprep.subr.mxu0 0.0
      %2304 = vmatpush2.msra.mxu0 0.0
      %2305 = vmatprep.mubr.f32.mxu0 0.0
      %2306 = vmatmul.mubr.f32.gmra.mxu0 %v2239
      %v2307 = vpop.f32.mrf.mxu0
      %v2308 = vadd.f32 0.0, %v2307
      %v2309 = vpop.f32.mrf.mxu0
      %2310 = vdwg.mxu0
      %2312 = vrot.lane.b32.xlu0 %v2308, 24
      %v2313 = vpop.permute.xlu0 %2312
      %2315 = vst.msk [vmem:[#allocation3 + $0x8] sm:$0xff] %vm1635, %v2313
      %v2316 = vld [vmem:[#allocation3] sm:$0xff]
      %v2317 = vld [vmem:[#allocation3 + $0x8] sm:$0xff]
      %v2319 = vlaneseq
      %v2320 = vshrl.u32 %v2319, 7
      %v2321 = vsub.s32 0, %v2320
      %v2322 = vrot.slane %v847, %v2321
      %v2325 = vsel %vm872, %v2316, 0
      %v2328 = vsel %vm872, %v2317, 0
      %2330 = vmatprep.subr.mxu0 0.0
      %2331 = vmatpush1.msra.mxu0 0.0
      %2332 = vmatprep.subr.mxu0 0.0
      %2333 = vmatpush1.msra.mxu0 0.0
      %2334 = vmatprep.subr.mxu0 0.0
      %2335 = vmatpush1.msra.mxu0 0.0
      %2336 = vmatprep.subr.mxu0 0.0
      %2337 = vmatpush1.msra.mxu0 0.0
      %2338 = vmatprep.subr.mxu0 0.0
      %2339 = vmatpush1.msra.mxu0 0.0
      %2340 = vmatprep.subr.mxu0 0.0
      %2341 = vmatpush1.msra.mxu0 0.0
      %2342 = vmatprep.subr.mxu0 0.0
      %2343 = vmatpush1.msra.mxu0 0.0
      %2344 = vmatprep.subr.mxu0 0.0
      %2345 = vmatpush1.msra.mxu0 0.0
      %2346 = vmatprep.subr.mxu0 0.0
      %2347 = vmatpush1.msra.mxu0 0.0
      %2348 = vmatprep.subr.mxu0 0.0
      %2349 = vmatpush1.msra.mxu0 0.0
      %2350 = vmatprep.subr.mxu0 0.0
      %2351 = vmatpush1.msra.mxu0 0.0
      %2352 = vmatprep.subr.mxu0 0.0
      %2353 = vmatpush1.msra.mxu0 0.0
      %2354 = vmatprep.subr.mxu0 0.0
      %2355 = vmatpush1.msra.mxu0 %v846
      %2356 = vmatprep.subr.mxu0 0.0
      %2357 = vmatpush1.msra.mxu0 %v845
      %2358 = vmatprep.subr.mxu0 0.0
      %2359 = vmatpush1.msra.mxu0 %v844
      %2360 = vmatprep.subr.mxu0 0.0
      %2361 = vmatpush1.msra.mxu0 %v843
      %2362 = vmatprep.subr.mxu0 0.0
      %2363 = vmatpush2.msra.mxu0 0.0
      %2364 = vmatprep.subr.mxu0 0.0
      %2365 = vmatpush2.msra.mxu0 0.0
      %2366 = vmatprep.subr.mxu0 0.0
      %2367 = vmatpush2.msra.mxu0 0.0
      %2368 = vmatprep.subr.mxu0 0.0
      %2369 = vmatpush2.msra.mxu0 0.0
      %2370 = vmatprep.subr.mxu0 0.0
      %2371 = vmatpush2.msra.mxu0 0.0
      %2372 = vmatprep.subr.mxu0 0.0
      %2373 = vmatpush2.msra.mxu0 0.0
      %2374 = vmatprep.subr.mxu0 0.0
      %2375 = vmatpush2.msra.mxu0 0.0
      %2376 = vmatprep.subr.mxu0 0.0
      %2377 = vmatpush2.msra.mxu0 0.0
      %2378 = vmatprep.subr.mxu0 0.0
      %2379 = vmatpush2.msra.mxu0 0.0
      %2380 = vmatprep.subr.mxu0 0.0
      %2381 = vmatpush2.msra.mxu0 0.0
      %2382 = vmatprep.subr.mxu0 0.0
      %2383 = vmatpush2.msra.mxu0 0.0
      %2384 = vmatprep.subr.mxu0 0.0
      %2385 = vmatpush2.msra.mxu0 0.0
      %2386 = vmatprep.subr.mxu0 0.0
      %2387 = vmatpush2.msra.mxu0 0.0
      %2388 = vmatprep.subr.mxu0 0.0
      %2389 = vmatpush2.msra.mxu0 0.0
      %2390 = vmatprep.subr.mxu0 0.0
      %2391 = vmatpush2.msra.mxu0 0.0
      %2392 = vmatprep.subr.mxu0 0.0
      %2393 = vmatpush2.msra.mxu0 0.0
      %2394 = vmatprep.mubr.f32.mxu0 0.0
      %2395 = vmatmul.mubr.f32.gmra.mxu0 %v2325
      %v2396 = vpop.f32.mrf.mxu0
      %v2397 = vadd.f32 %v2322, %v2396
      %v2398 = vpop.f32.mrf.mxu0
      %2399 = vmatprep.mubr.f32.mxu0 0.0
      %2400 = vmatmul.mubr.f32.gmra.mxu0 %v2328
      %v2401 = vpop.f32.mrf.mxu0
      %v2402 = vadd.f32 %v2322, %v2401
      %v2403 = vpop.f32.mrf.mxu0
      %2404 = vdwg.mxu0
      %v2405 = vadd.f32 %v836, %v2397
      %v2406 = vadd.f32 %v837, %v2402
      %v2407 = vsel %vm872, %v2405, 0.0
      %2408 = vadd.xlane.f32.xlu0 %v2407
      %v2409 = vpop.xlane.xlu0 %2408
      %v2410 = vsel %vm872, %v2406, 0.0
      %2411 = vadd.xlane.f32.xlu0 %v2410
      %v2412 = vpop.xlane.xlu0 %2411
      %v2413 = vrcp.pop 32.0
      %v2414 = vmul.f32 %v2409, %v2413
      %v2415 = vmul.f32 %v2412, %v2413
      %v2416 = vsub.f32 %v2405, %v2414
      %v2417 = vsub.f32 %v2406, %v2415
      %v2418 = vmul.f32 %v2416, %v2416
      %v2419 = vmul.f32 %v2417, %v2417
      %v2420 = vsel %vm872, %v2418, 0.0
      %2421 = vadd.xlane.f32.xlu0 %v2420
      %v2422 = vpop.xlane.xlu0 %2421
      %v2423 = vsel %vm872, %v2419, 0.0
      %2424 = vadd.xlane.f32.xlu0 %v2423
      %v2425 = vpop.xlane.xlu0 %2424
      %v2426 = vmul.f32 %v2422, %v2413
      %v2427 = vmul.f32 %v2425, %v2413
      %v2428 = vadd.f32 %v2426, 1e-06
      %v2429 = vadd.f32 %v2427, 1e-06
      %v2430 = vrsqrt.pop %v2428
      %v2431 = vrsqrt.pop %v2429
      %v2432 = vmul.f32 %v2416, %v2430
      %v2433 = vmul.f32 %v2417, %v2431
      %v2435 = vlaneseq
      %v2436 = vshrl.u32 %v2435, 7
      %v2437 = vsub.s32 0, %v2436
      %v2438 = vrot.slane %v848, %v2437
      %v2440 = vmul.f32 %v2432, %v2438
      %v2441 = vmul.f32 %v2433, %v2438
      %v2443 = vlaneseq
      %v2444 = vshrl.u32 %v2443, 7
      %v2445 = vsub.s32 0, %v2444
      %v2446 = vrot.slane %v849, %v2445
      %v2448 = vadd.f32 %v2440, %v2446
      %v2449 = vadd.f32 %v2441, %v2446
      %v2451 = vlaneseq
      %v2452 = vshrl.u32 %v2451, 7
      %v2453 = vsub.s32 0, %v2452
      %v2454 = vrot.slane %v854, %v2453
      %v2457 = vsel %vm872, %v2448, 0
      %v2460 = vsel %vm872, %v2449, 0
      %2462 = vmatprep.subr.mxu0 0.0
      %2463 = vmatpush1.msra.mxu0 0.0
      %2464 = vmatprep.subr.mxu0 0.0
      %2465 = vmatpush1.msra.mxu0 0.0
      %2466 = vmatprep.subr.mxu0 0.0
      %2467 = vmatpush1.msra.mxu0 0.0
      %2468 = vmatprep.subr.mxu0 0.0
      %2469 = vmatpush1.msra.mxu0 0.0
      %2470 = vmatprep.subr.mxu0 0.0
      %2471 = vmatpush1.msra.mxu0 0.0
      %2472 = vmatprep.subr.mxu0 0.0
      %2473 = vmatpush1.msra.mxu0 0.0
      %2474 = vmatprep.subr.mxu0 0.0
      %2475 = vmatpush1.msra.mxu0 0.0
      %2476 = vmatprep.subr.mxu0 0.0
      %2477 = vmatpush1.msra.mxu0 0.0
      %2478 = vmatprep.subr.mxu0 0.0
      %2479 = vmatpush1.msra.mxu0 0.0
      %2480 = vmatprep.subr.mxu0 0.0
      %2481 = vmatpush1.msra.mxu0 0.0
      %2482 = vmatprep.subr.mxu0 0.0
      %2483 = vmatpush1.msra.mxu0 0.0
      %2484 = vmatprep.subr.mxu0 0.0
      %2485 = vmatpush1.msra.mxu0 0.0
      %2486 = vmatprep.subr.mxu0 0.0
      %2487 = vmatpush1.msra.mxu0 %v853
      %2488 = vmatprep.subr.mxu0 0.0
      %2489 = vmatpush1.msra.mxu0 %v852
      %2490 = vmatprep.subr.mxu0 0.0
      %2491 = vmatpush1.msra.mxu0 %v851
      %2492 = vmatprep.subr.mxu0 0.0
      %2493 = vmatpush1.msra.mxu0 %v850
      %2494 = vmatprep.subr.mxu0 0.0
      %2495 = vmatpush2.msra.mxu0 0.0
      %2496 = vmatprep.subr.mxu0 0.0
      %2497 = vmatpush2.msra.mxu0 0.0
      %2498 = vmatprep.subr.mxu0 0.0
      %2499 = vmatpush2.msra.mxu0 0.0
      %2500 = vmatprep.subr.mxu0 0.0
      %2501 = vmatpush2.msra.mxu0 0.0
      %2502 = vmatprep.subr.mxu0 0.0
      %2503 = vmatpush2.msra.mxu0 0.0
      %2504 = vmatprep.subr.mxu0 0.0
      %2505 = vmatpush2.msra.mxu0 0.0
      %2506 = vmatprep.subr.mxu0 0.0
      %2507 = vmatpush2.msra.mxu0 0.0
      %2508 = vmatprep.subr.mxu0 0.0
      %2509 = vmatpush2.msra.mxu0 0.0
      %2510 = vmatprep.subr.mxu0 0.0
      %2511 = vmatpush2.msra.mxu0 0.0
      %2512 = vmatprep.subr.mxu0 0.0
      %2513 = vmatpush2.msra.mxu0 0.0
      %2514 = vmatprep.subr.mxu0 0.0
      %2515 = vmatpush2.msra.mxu0 0.0
      %2516 = vmatprep.subr.mxu0 0.0
      %2517 = vmatpush2.msra.mxu0 0.0
      %2518 = vmatprep.subr.mxu0 0.0
      %2519 = vmatpush2.msra.mxu0 0.0
      %2520 = vmatprep.subr.mxu0 0.0
      %2521 = vmatpush2.msra.mxu0 0.0
      %2522 = vmatprep.subr.mxu0 0.0
      %2523 = vmatpush2.msra.mxu0 0.0
      %2524 = vmatprep.subr.mxu0 0.0
      %2525 = vmatpush2.msra.mxu0 0.0
      %2526 = vmatprep.mubr.f32.mxu0 0.0
      %2527 = vmatmul.mubr.f32.gmra.mxu0 %v2457
      %v2528 = vpop.f32.mrf.mxu0
      %v2529 = vadd.f32 %v2454, %v2528
      %v2530 = vpop.f32.mrf.mxu0
      %2531 = vmatprep.mubr.f32.mxu0 0.0
      %2532 = vmatmul.mubr.f32.gmra.mxu0 %v2460
      %v2533 = vpop.f32.mrf.mxu0
      %v2534 = vadd.f32 %v2454, %v2533
      %v2535 = vpop.f32.mrf.mxu0
      %2536 = vdwg.mxu0
      %v2537 = vmax.f32 %v2529, 0.0
      %v2538 = vmax.f32 %v2534, 0.0
      %v2540 = vlaneseq
      %v2541 = vshrl.u32 %v2540, 7
      %v2542 = vsub.s32 0, %v2541
      %v2543 = vrot.slane %v863, %v2542
      %vm2545 = vcmask 523264
      %v2547 = vsel %vm2545, %v2537, 0
      %v2550 = vsel %vm2545, %v2538, 0
      %2552 = vmatprep.subr.mxu0 0.0
      %2553 = vmatpush1.msra.mxu0 0.0
      %2554 = vmatprep.subr.mxu0 0.0
      %2555 = vmatpush1.msra.mxu0 0.0
      %2556 = vmatprep.subr.mxu0 0.0
      %2557 = vmatpush1.msra.mxu0 0.0
      %2558 = vmatprep.subr.mxu0 0.0
      %2559 = vmatpush1.msra.mxu0 0.0
      %2560 = vmatprep.subr.mxu0 0.0
      %2561 = vmatpush1.msra.mxu0 0.0
      %2562 = vmatprep.subr.mxu0 0.0
      %2563 = vmatpush1.msra.mxu0 0.0
      %2564 = vmatprep.subr.mxu0 0.0
      %2565 = vmatpush1.msra.mxu0 0.0
      %2566 = vmatprep.subr.mxu0 0.0
      %2567 = vmatpush1.msra.mxu0 0.0
      %2568 = vmatprep.subr.mxu0 0.0
      %2569 = vmatpush1.msra.mxu0 %v862
      %2570 = vmatprep.subr.mxu0 0.0
      %2571 = vmatpush1.msra.mxu0 %v861
      %2572 = vmatprep.subr.mxu0 0.0
      %2573 = vmatpush1.msra.mxu0 %v860
      %2574 = vmatprep.subr.mxu0 0.0
      %2575 = vmatpush1.msra.mxu0 %v859
      %2576 = vmatprep.subr.mxu0 0.0
      %2577 = vmatpush1.msra.mxu0 %v858
      %2578 = vmatprep.subr.mxu0 0.0
      %2579 = vmatpush1.msra.mxu0 %v857
      %2580 = vmatprep.subr.mxu0 0.0
      %2581 = vmatpush1.msra.mxu0 %v856
      %2582 = vmatprep.subr.mxu0 0.0
      %2583 = vmatpush1.msra.mxu0 %v855
      %2584 = vmatprep.subr.mxu0 0.0
      %2585 = vmatpush2.msra.mxu0 0.0
      %2586 = vmatprep.subr.mxu0 0.0
      %2587 = vmatpush2.msra.mxu0 0.0
      %2588 = vmatprep.subr.mxu0 0.0
      %2589 = vmatpush2.msra.mxu0 0.0
      %2590 = vmatprep.subr.mxu0 0.0
      %2591 = vmatpush2.msra.mxu0 0.0
      %2592 = vmatprep.subr.mxu0 0.0
      %2593 = vmatpush2.msra.mxu0 0.0
      %2594 = vmatprep.subr.mxu0 0.0
      %2595 = vmatpush2.msra.mxu0 0.0
      %2596 = vmatprep.subr.mxu0 0.0
      %2597 = vmatpush2.msra.mxu0 0.0
      %2598 = vmatprep.subr.mxu0 0.0
      %2599 = vmatpush2.msra.mxu0 0.0
      %2600 = vmatprep.subr.mxu0 0.0
      %2601 = vmatpush2.msra.mxu0 0.0
      %2602 = vmatprep.subr.mxu0 0.0
      %2603 = vmatpush2.msra.mxu0 0.0
      %2604 = vmatprep.subr.mxu0 0.0
      %2605 = vmatpush2.msra.mxu0 0.0
      %2606 = vmatprep.subr.mxu0 0.0
      %2607 = vmatpush2.msra.mxu0 0.0
      %2608 = vmatprep.subr.mxu0 0.0
      %2609 = vmatpush2.msra.mxu0 0.0
      %2610 = vmatprep.subr.mxu0 0.0
      %2611 = vmatpush2.msra.mxu0 0.0
      %2612 = vmatprep.subr.mxu0 0.0
      %2613 = vmatpush2.msra.mxu0 0.0
      %2614 = vmatprep.subr.mxu0 0.0
      %2615 = vmatpush2.msra.mxu0 0.0
      %2616 = vmatprep.mubr.f32.mxu0 0.0
      %2617 = vmatmul.mubr.f32.gmra.mxu0 %v2547
      %v2618 = vpop.f32.mrf.mxu0
      %v2619 = vadd.f32 %v2543, %v2618
      %v2620 = vpop.f32.mrf.mxu0
      %2621 = vmatprep.mubr.f32.mxu0 0.0
      %2622 = vmatmul.mubr.f32.gmra.mxu0 %v2550
      %v2623 = vpop.f32.mrf.mxu0
      %v2624 = vadd.f32 %v2543, %v2623
      %v2625 = vpop.f32.mrf.mxu0
      %2626 = vdwg.mxu0
      %v2627 = vadd.f32 %v2448, %v2619
      %v2628 = vadd.f32 %v2449, %v2624
      %v2629 = vsel %vm872, %v2627, 0.0
      %2630 = vadd.xlane.f32.xlu0 %v2629
      %v2631 = vpop.xlane.xlu0 %2630
      %v2632 = vsel %vm872, %v2628, 0.0
      %2633 = vadd.xlane.f32.xlu0 %v2632
      %v2634 = vpop.xlane.xlu0 %2633
      %v2635 = vmul.f32 %v2631, %v2413
      %v2636 = vmul.f32 %v2634, %v2413
      %v2637 = vsub.f32 %v2627, %v2635
      %v2638 = vsub.f32 %v2628, %v2636
      %v2639 = vmul.f32 %v2637, %v2637
      %v2640 = vmul.f32 %v2638, %v2638
      %v2641 = vsel %vm872, %v2639, 0.0
      %2642 = vadd.xlane.f32.xlu0 %v2641
      %v2643 = vpop.xlane.xlu0 %2642
      %v2644 = vsel %vm872, %v2640, 0.0
      %2645 = vadd.xlane.f32.xlu0 %v2644
      %v2646 = vpop.xlane.xlu0 %2645
      %v2647 = vmul.f32 %v2643, %v2413
      %v2648 = vmul.f32 %v2646, %v2413
      %v2649 = vadd.f32 %v2647, 1e-06
      %v2650 = vadd.f32 %v2648, 1e-06
      %v2651 = vrsqrt.pop %v2649
      %v2652 = vrsqrt.pop %v2650
      %v2653 = vmul.f32 %v2637, %v2651
      %v2654 = vmul.f32 %v2638, %v2652
      %v2656 = vlaneseq
      %v2657 = vshrl.u32 %v2656, 7
      %v2658 = vsub.s32 0, %v2657
      %v2659 = vrot.slane %v864, %v2658
      %v2661 = vmul.f32 %v2653, %v2659
      %v2662 = vmul.f32 %v2654, %v2659
      %v2664 = vlaneseq
      %v2665 = vshrl.u32 %v2664, 7
      %v2666 = vsub.s32 0, %v2665
      %v2667 = vrot.slane %v865, %v2666
      %v2669 = vadd.f32 %v2661, %v2667
      %v2670 = vadd.f32 %v2662, %v2667
      %2671 = vst.msk [vmem:[#allocation2] sm:$0xff] %vm872, %v2669
      %2672 = vst.msk [vmem:[#allocation2 + $0x8] sm:$0xff] %vm872, %v2670
      %p2673 = scmp.eq.s32.totalorder %s32, 1
      // Predicated region
      $region89: #{continuous_transformer_forward.3} parent=83 // pred_check
        %p2674 = pneg %p2673
      $region90: #{continuous_transformer_forward.3} parent=83 // pred_check_branch
        %2676 = sbr.rel (%p2674) target = $region92
      $region91: #{continuous_transformer_forward.3} parent=83 // pred_region
        %2677 = vst.msk [vmem:[%s727] sm:$0xff] %vm872, %v2669
        %2678 = vst.msk [vmem:[%s727 + $0x8] sm:$0xff] %vm872, %v2670
      $region92: #{continuous_transformer_forward.3} parent=83 // pred_fallthru
        _
      %s2679 = smul.u32 2, %s31
      %p2680 = scmp.lt.s32.totalorder %s2679, 1
      %s2681 = scalar_select %p2680, %s2679, 1
      %s2682 = smul.addr %s2681, 8
      %s2683 = scalar_lea.vmem %s16, %s2682
      // Predicated region
      $region93: #{continuous_transformer_forward.3} parent=83 // pred_check
        %p2684 = pneg %p458
      $region94: #{continuous_transformer_forward.3} parent=83 // pred_check_branch
        %2686 = sbr.rel (%p2684) target = $region96
      $region95: #{continuous_transformer_forward.3} parent=83 // pred_region
        %s2687 = smul.u32 2, %s31
      $region96: #{continuous_transformer_forward.3} parent=83 // pred_fallthru
        _
      // Predicated region
      $region97: #{continuous_transformer_forward.3} parent=83 // pred_check
        %p2688 = pneg %p458
      $region98: #{continuous_transformer_forward.3} parent=83 // pred_check_branch
        %2690 = sbr.rel (%p2688) target = $region100
      $region99: #{continuous_transformer_forward.3} parent=83 // pred_region
        %s2691 = smul.u32 2, %s31
        %p2692 = scmp.lt.s32.totalorder %s2691, 1
        %s2693 = scalar_select %p2692, %s2691, 1
        %s2694 = smul.addr %s2693, 8
        %s2695 = scalar_lea.vmem %s16, %s2694
      $region100: #{continuous_transformer_forward.3} parent=83 // pred_fallthru
        _
    $region84: #{continuous_transformer_forward.3} parent=5 // pred_fallthru
      _
    %p2696 = scmp.le.s32.totalorder 2, %s22
    // Predicated region
    $region101: #{continuous_transformer_forward.3} parent=5 // pred_check
      %p2697 = pneg %p2696
    $region102: #{continuous_transformer_forward.3} parent=5 // pred_check_branch
      %2699 = sbr.rel (%p2697) target = $region104
    $region103: #{continuous_transformer_forward.3} parent=5 // pred_region
      %s2700 = ssub.s32 %s22, 2
    $region104: #{continuous_transformer_forward.3} parent=5 // pred_fallthru
      _
  $region6: #{continuous_transformer_forward.3} parent=0 // loop_footer
    %s26 = sadd.s32 1, %s22
  $region7: #{continuous_transformer_forward.3} parent=0 // loop_footer_branch
    %21 = sbr.rel target = $region3
  $region8: #{continuous_transformer_forward.3} parent=0 // loop_exit
    _

// kernel: continuous_transformer_forward.5
$region0: #{continuous_transformer_forward.5}
  #allocation0 [shape = 'u32[]', space=smem, size = 0x4, offset = 0x4, fixed_abs, tag = 'smem constant byte address 0x4 - core index']
  #allocation1 [shape = 'u32[144,128]{1,0:T(1,128)}', space=vmem, size = 0x12000, scoped, tag = 'internal scratch']
  #allocation2 [shape = 'f32[16,32]{1,0:T(8,128)}', space=vmem, size = 0x2000, scoped, tag = 'scratch operand']
  #allocation3 [shape = 'f32[16,32]{1,0:T(8,128)}', space=vmem, size = 0x2000, scoped, tag = 'scratch operand']
  %s0 = inlined_call_operand.vmem [shape: f32[2,8,32], index: 0, kind: input, shape index: {}]
  %s1 = inlined_call_operand.vmem [shape: f32[16,32], index: 1, kind: input, shape index: {}]
  %s2 = inlined_call_operand.vmem [shape: f32[2,8,6], index: 2, kind: input, shape index: {}]
  %s3 = inlined_call_operand.vmem [shape: f32[32,6], index: 3, kind: input, shape index: {}]
  %s4 = inlined_call_operand.vmem [shape: f32[1,6], index: 4, kind: input, shape index: {}]
  %s5 = inlined_call_operand.vmem [shape: f32[2,32,96], index: 5, kind: input, shape index: {}]
  %s6 = inlined_call_operand.vmem [shape: f32[2,1,96], index: 6, kind: input, shape index: {}]
  %s7 = inlined_call_operand.vmem [shape: f32[2,32,32], index: 7, kind: input, shape index: {}]
  %s8 = inlined_call_operand.vmem [shape: f32[2,1,32], index: 8, kind: input, shape index: {}]
  %s9 = inlined_call_operand.vmem [shape: f32[2,1,32], index: 9, kind: input, shape index: {}]
  %s10 = inlined_call_operand.vmem [shape: f32[2,1,32], index: 10, kind: input, shape index: {}]
  %s11 = inlined_call_operand.vmem [shape: f32[2,32,64], index: 11, kind: input, shape index: {}]
  %s12 = inlined_call_operand.vmem [shape: f32[2,1,64], index: 12, kind: input, shape index: {}]
  %s13 = inlined_call_operand.vmem [shape: f32[2,64,32], index: 13, kind: input, shape index: {}]
  %s14 = inlined_call_operand.vmem [shape: f32[2,1,32], index: 14, kind: input, shape index: {}]
  %s15 = inlined_call_operand.vmem [shape: f32[2,1,32], index: 15, kind: input, shape index: {}]
  %s16 = inlined_call_operand.vmem [shape: f32[2,1,32], index: 16, kind: input, shape index: {}]
  %s17 = inlined_call_operand.vmem [shape: f32[2,8,6], index: 17, kind: output, shape index: {0}]
  %s18 = inlined_call_operand.vmem [shape: f32[2,1,1], index: 18, kind: output, shape index: {1}]
  %19 = xla_tuple %s17, %s18
  %s20 = sld [smem:[#allocation0]]
  $region117: #{continuous_transformer_forward.5} parent=0
    _
  %s22 = ssub.s32 1, %s20
  %s23 = scalar_select 0, %s22, %s20
  loop: start=0, step=1, limit=4
  $region2: #{continuous_transformer_forward.5} parent=0 // loop_pre_header
    _
  $region3: #{continuous_transformer_forward.5} parent=0 // loop_header
    %s25 = sphi 0, %s29
    %p26 = scmp.ge.s32.totalorder %s25, 4
    %s32 = sphi 0, %s44
    %s33 = sphi 0, %s40
    %s34 = sphi 0, %s32
    %s35 = sphi 0, %s33
    %s36 = sphi 0, %s34
    %s37 = sphi 0, %s35
    %s47 = sphi 0, %s49
    %s50 = sphi 0, %s47
    %s51 = sphi 0, %s50
    %s67 = sphi 0, %s51
    %s71 = sphi 0, %s71
    %s73 = sphi 0, %s71
    %s74 = sphi 0, %s73
    %s88 = sphi 0, %s74
    %s94 = sphi 0, %s96
    %s97 = sphi 0, %s94
    %s98 = sphi 0, %s97
    %s114 = sphi 0, %s98
    %s118 = sphi 0, %s118
    %s120 = sphi 0, %s118
    %s121 = sphi 0, %s120
    %s135 = sphi 0, %s121
    %s139 = sphi 0, %s139
    %s141 = sphi 0, %s139
    %s142 = sphi 0, %s141
    %s156 = sphi 0, %s142
    %s162 = sphi 0, %s164
    %s165 = sphi 0, %s162
    %s166 = sphi 0, %s165
    %s182 = sphi 0, %s166
    %s188 = sphi 0, %s190
    %s191 = sphi 0, %s188
    %s192 = sphi 0, %s191
    %s208 = sphi 0, %s192
    %s214 = sphi 0, %s216
    %s217 = sphi 0, %s214
    %s218 = sphi 0, %s217
    %s234 = sphi 0, %s218
    %s240 = sphi 0, %s242
    %s243 = sphi 0, %s240
    %s244 = sphi 0, %s243
    %s260 = sphi 0, %s244
    %s266 = sphi 0, %s268
    %s269 = sphi 0, %s266
    %s270 = sphi 0, %s269
    %s286 = sphi 0, %s270
    %s292 = sphi 0, %s294
    %s295 = sphi 0, %s292
    %s296 = sphi 0, %s295
    %s312 = sphi 0, %s296
    %s318 = sphi 0, %s320
    %s321 = sphi 0, %s318
    %s322 = sphi 0, %s321
    %s338 = sphi 0, %s322
    %s344 = sphi 0, %s346
    %s347 = sphi 0, %s344
    %s348 = sphi 0, %s347
    %s364 = sphi 0, %s348
    %s370 = sphi 0, %s372
    %s373 = sphi 0, %s370
    %s374 = sphi 0, %s373
    %s390 = sphi 0, %s374
    %s396 = sphi 0, %s398
    %s399 = sphi 0, %s396
    %s400 = sphi 0, %s399
    %s416 = sphi 0, %s400
    %s422 = sphi 0, %s424
    %s425 = sphi 0, %s422
    %s426 = sphi 0, %s425
    %s442 = sphi 0, %s426
    %s448 = sphi 0, %s450
    %s451 = sphi 0, %s448
    %s452 = sphi 0, %s451
    %s468 = sphi 0, %s452
    %s474 = sphi 0, %s476
    %s477 = sphi 0, %s474
    %s478 = sphi 0, %s477
    %s494 = sphi 0, %s478
    %s500 = sphi 0, %s502
    %s503 = sphi 0, %s500
    %s504 = sphi 0, %s503
    %s520 = sphi 0, %s504
  $region4: #{continuous_transformer_forward.5} parent=0 // loop_header_branch
    %28 = sbr.rel (%p26) target = $region8
  $region5: #{continuous_transformer_forward.5} parent=0 // loop_body
    %s30 = ssub.s32 %s25, 1
    %s31 = ssub.s32 %s25, 2
    %s38 = sadd.s32 1, %s33
    %p39 = scmp.ge.s32.totalorder %s38, 2
    %s40 = scalar_select %p39, 0, %s38
    %s41 = sadd.s32 1, %s32
    %s42 = scalar_select %p39, %s41, %s32
    %p43 = scmp.ge.s32.totalorder %s42, 1
    %s44 = scalar_select %p43, 0, %s42
    %s45 = ssub.s32 %s32, %s44
    %p46 = scmp.eq.s32.totalorder %s45, 0
    %s48 = sadd.s32 %s47, 1
    %s49 = scalar_select %p46, %s47, %s48
    %p52 = pneg %p46
    %p53 = scmp.eq.s32.totalorder %s25, 1
    %p54 = por %p52, %p53
    %p55 = scmp.ne.s32.totalorder %s47, %s50
    %p56 = scmp.eq.s32.totalorder %s25, 0
    %p57 = por %p55, %p56
    %p58 = scmp.ne.s32.totalorder %s47, %s50
    %p59 = scmp.eq.s32.totalorder %s30, 1
    %p60 = por %p58, %p59
    %p61 = scmp.ne.s32.totalorder %s50, %s51
    %p62 = scmp.eq.s32.totalorder %s30, 0
    %p63 = por %p61, %p62
    %p64 = scmp.ne.s32.totalorder %s50, %s51
    %p65 = scmp.eq.s32.totalorder %s31, 1
    %p66 = por %p64, %p65
    %p68 = scmp.ne.s32.totalorder %s51, %s67
    %p69 = scmp.eq.s32.totalorder %s31, 0
    %p70 = por %p68, %p69
    %s72 = sadd.s32 %s71, 1
    %p75 = scmp.eq.s32.totalorder %s25, 1
    %p76 = scmp.ne.s32.totalorder %s71, %s73
    %p77 = scmp.eq.s32.totalorder %s25, 0
    %p78 = por %p76, %p77
    %p79 = scmp.ne.s32.totalorder %s71, %s73
    %p80 = scmp.eq.s32.totalorder %s30, 1
    %p81 = por %p79, %p80
    %p82 = scmp.ne.s32.totalorder %s73, %s74
    %p83 = scmp.eq.s32.totalorder %s30, 0
    %p84 = por %p82, %p83
    %p85 = scmp.ne.s32.totalorder %s73, %s74
    %p86 = scmp.eq.s32.totalorder %s31, 1
    %p87 = por %p85, %p86
    %p89 = scmp.ne.s32.totalorder %s74, %s88
    %p90 = scmp.eq.s32.totalorder %s31, 0
    %p91 = por %p89, %p90
    %s92 = ssub.s32 %s32, %s44
    %p93 = scmp.eq.s32.totalorder %s92, 0
    %s95 = sadd.s32 %s94, 1
    %s96 = scalar_select %p93, %s94, %s95
    %p99 = pneg %p93
    %p100 = scmp.eq.s32.totalorder %s25, 1
    %p101 = por %p99, %p100
    %p102 = scmp.ne.s32.totalorder %s94, %s97
    %p103 = scmp.eq.s32.totalorder %s25, 0
    %p104 = por %p102, %p103
    %p105 = scmp.ne.s32.totalorder %s94, %s97
    %p106 = scmp.eq.s32.totalorder %s30, 1
    %p107 = por %p105, %p106
    %p108 = scmp.ne.s32.totalorder %s97, %s98
    %p109 = scmp.eq.s32.totalorder %s30, 0
    %p110 = por %p108, %p109
    %p111 = scmp.ne.s32.totalorder %s97, %s98
    %p112 = scmp.eq.s32.totalorder %s31, 1
    %p113 = por %p111, %p112
    %p115 = scmp.ne.s32.totalorder %s98, %s114
    %p116 = scmp.eq.s32.totalorder %s31, 0
    %p117 = por %p115, %p116
    %s119 = sadd.s32 %s118, 1
    %p122 = scmp.eq.s32.totalorder %s25, 1
    %p123 = scmp.ne.s32.totalorder %s118, %s120
    %p124 = scmp.eq.s32.totalorder %s25, 0
    %p125 = por %p123, %p124
    %p126 = scmp.ne.s32.totalorder %s118, %s120
    %p127 = scmp.eq.s32.totalorder %s30, 1
    %p128 = por %p126, %p127
    %p129 = scmp.ne.s32.totalorder %s120, %s121
    %p130 = scmp.eq.s32.totalorder %s30, 0
    %p131 = por %p129, %p130
    %p132 = scmp.ne.s32.totalorder %s120, %s121
    %p133 = scmp.eq.s32.totalorder %s31, 1
    %p134 = por %p132, %p133
    %p136 = scmp.ne.s32.totalorder %s121, %s135
    %p137 = scmp.eq.s32.totalorder %s31, 0
    %p138 = por %p136, %p137
    %s140 = sadd.s32 %s139, 1
    %p143 = scmp.eq.s32.totalorder %s25, 1
    %p144 = scmp.ne.s32.totalorder %s139, %s141
    %p145 = scmp.eq.s32.totalorder %s25, 0
    %p146 = por %p144, %p145
    %p147 = scmp.ne.s32.totalorder %s139, %s141
    %p148 = scmp.eq.s32.totalorder %s30, 1
    %p149 = por %p147, %p148
    %p150 = scmp.ne.s32.totalorder %s141, %s142
    %p151 = scmp.eq.s32.totalorder %s30, 0
    %p152 = por %p150, %p151
    %p153 = scmp.ne.s32.totalorder %s141, %s142
    %p154 = scmp.eq.s32.totalorder %s31, 1
    %p155 = por %p153, %p154
    %p157 = scmp.ne.s32.totalorder %s142, %s156
    %p158 = scmp.eq.s32.totalorder %s31, 0
    %p159 = por %p157, %p158
    %s160 = ssub.s32 %s33, %s40
    %p161 = scmp.eq.s32.totalorder %s160, 0
    %s163 = sadd.s32 %s162, 1
    %s164 = scalar_select %p161, %s162, %s163
    %p167 = pneg %p161
    %p168 = scmp.eq.s32.totalorder %s25, 1
    %p169 = por %p167, %p168
    %p170 = scmp.ne.s32.totalorder %s162, %s165
    %p171 = scmp.eq.s32.totalorder %s25, 0
    %p172 = por %p170, %p171
    %p173 = scmp.ne.s32.totalorder %s162, %s165
    %p174 = scmp.eq.s32.totalorder %s30, 1
    %p175 = por %p173, %p174
    %p176 = scmp.ne.s32.totalorder %s165, %s166
    %p177 = scmp.eq.s32.totalorder %s30, 0
    %p178 = por %p176, %p177
    %p179 = scmp.ne.s32.totalorder %s165, %s166
    %p180 = scmp.eq.s32.totalorder %s31, 1
    %p181 = por %p179, %p180
    %p183 = scmp.ne.s32.totalorder %s166, %s182
    %p184 = scmp.eq.s32.totalorder %s31, 0
    %p185 = por %p183, %p184
    %s186 = ssub.s32 %s33, %s40
    %p187 = scmp.eq.s32.totalorder %s186, 0
    %s189 = sadd.s32 %s188, 1
    %s190 = scalar_select %p187, %s188, %s189
    %p193 = pneg %p187
    %p194 = scmp.eq.s32.totalorder %s25, 1
    %p195 = por %p193, %p194
    %p196 = scmp.ne.s32.totalorder %s188, %s191
    %p197 = scmp.eq.s32.totalorder %s25, 0
    %p198 = por %p196, %p197
    %p199 = scmp.ne.s32.totalorder %s188, %s191
    %p200 = scmp.eq.s32.totalorder %s30, 1
    %p201 = por %p199, %p200
    %p202 = scmp.ne.s32.totalorder %s191, %s192
    %p203 = scmp.eq.s32.totalorder %s30, 0
    %p204 = por %p202, %p203
    %p205 = scmp.ne.s32.totalorder %s191, %s192
    %p206 = scmp.eq.s32.totalorder %s31, 1
    %p207 = por %p205, %p206
    %p209 = scmp.ne.s32.totalorder %s192, %s208
    %p210 = scmp.eq.s32.totalorder %s31, 0
    %p211 = por %p209, %p210
    %s212 = ssub.s32 %s33, %s40
    %p213 = scmp.eq.s32.totalorder %s212, 0
    %s215 = sadd.s32 %s214, 1
    %s216 = scalar_select %p213, %s214, %s215
    %p219 = pneg %p213
    %p220 = scmp.eq.s32.totalorder %s25, 1
    %p221 = por %p219, %p220
    %p222 = scmp.ne.s32.totalorder %s214, %s217
    %p223 = scmp.eq.s32.totalorder %s25, 0
    %p224 = por %p222, %p223
    %p225 = scmp.ne.s32.totalorder %s214, %s217
    %p226 = scmp.eq.s32.totalorder %s30, 1
    %p227 = por %p225, %p226
    %p228 = scmp.ne.s32.totalorder %s217, %s218
    %p229 = scmp.eq.s32.totalorder %s30, 0
    %p230 = por %p228, %p229
    %p231 = scmp.ne.s32.totalorder %s217, %s218
    %p232 = scmp.eq.s32.totalorder %s31, 1
    %p233 = por %p231, %p232
    %p235 = scmp.ne.s32.totalorder %s218, %s234
    %p236 = scmp.eq.s32.totalorder %s31, 0
    %p237 = por %p235, %p236
    %s238 = ssub.s32 %s33, %s40
    %p239 = scmp.eq.s32.totalorder %s238, 0
    %s241 = sadd.s32 %s240, 1
    %s242 = scalar_select %p239, %s240, %s241
    %p245 = pneg %p239
    %p246 = scmp.eq.s32.totalorder %s25, 1
    %p247 = por %p245, %p246
    %p248 = scmp.ne.s32.totalorder %s240, %s243
    %p249 = scmp.eq.s32.totalorder %s25, 0
    %p250 = por %p248, %p249
    %p251 = scmp.ne.s32.totalorder %s240, %s243
    %p252 = scmp.eq.s32.totalorder %s30, 1
    %p253 = por %p251, %p252
    %p254 = scmp.ne.s32.totalorder %s243, %s244
    %p255 = scmp.eq.s32.totalorder %s30, 0
    %p256 = por %p254, %p255
    %p257 = scmp.ne.s32.totalorder %s243, %s244
    %p258 = scmp.eq.s32.totalorder %s31, 1
    %p259 = por %p257, %p258
    %p261 = scmp.ne.s32.totalorder %s244, %s260
    %p262 = scmp.eq.s32.totalorder %s31, 0
    %p263 = por %p261, %p262
    %s264 = ssub.s32 %s33, %s40
    %p265 = scmp.eq.s32.totalorder %s264, 0
    %s267 = sadd.s32 %s266, 1
    %s268 = scalar_select %p265, %s266, %s267
    %p271 = pneg %p265
    %p272 = scmp.eq.s32.totalorder %s25, 1
    %p273 = por %p271, %p272
    %p274 = scmp.ne.s32.totalorder %s266, %s269
    %p275 = scmp.eq.s32.totalorder %s25, 0
    %p276 = por %p274, %p275
    %p277 = scmp.ne.s32.totalorder %s266, %s269
    %p278 = scmp.eq.s32.totalorder %s30, 1
    %p279 = por %p277, %p278
    %p280 = scmp.ne.s32.totalorder %s269, %s270
    %p281 = scmp.eq.s32.totalorder %s30, 0
    %p282 = por %p280, %p281
    %p283 = scmp.ne.s32.totalorder %s269, %s270
    %p284 = scmp.eq.s32.totalorder %s31, 1
    %p285 = por %p283, %p284
    %p287 = scmp.ne.s32.totalorder %s270, %s286
    %p288 = scmp.eq.s32.totalorder %s31, 0
    %p289 = por %p287, %p288
    %s290 = ssub.s32 %s33, %s40
    %p291 = scmp.eq.s32.totalorder %s290, 0
    %s293 = sadd.s32 %s292, 1
    %s294 = scalar_select %p291, %s292, %s293
    %p297 = pneg %p291
    %p298 = scmp.eq.s32.totalorder %s25, 1
    %p299 = por %p297, %p298
    %p300 = scmp.ne.s32.totalorder %s292, %s295
    %p301 = scmp.eq.s32.totalorder %s25, 0
    %p302 = por %p300, %p301
    %p303 = scmp.ne.s32.totalorder %s292, %s295
    %p304 = scmp.eq.s32.totalorder %s30, 1
    %p305 = por %p303, %p304
    %p306 = scmp.ne.s32.totalorder %s295, %s296
    %p307 = scmp.eq.s32.totalorder %s30, 0
    %p308 = por %p306, %p307
    %p309 = scmp.ne.s32.totalorder %s295, %s296
    %p310 = scmp.eq.s32.totalorder %s31, 1
    %p311 = por %p309, %p310
    %p313 = scmp.ne.s32.totalorder %s296, %s312
    %p314 = scmp.eq.s32.totalorder %s31, 0
    %p315 = por %p313, %p314
    %s316 = ssub.s32 %s33, %s40
    %p317 = scmp.eq.s32.totalorder %s316, 0
    %s319 = sadd.s32 %s318, 1
    %s320 = scalar_select %p317, %s318, %s319
    %p323 = pneg %p317
    %p324 = scmp.eq.s32.totalorder %s25, 1
    %p325 = por %p323, %p324
    %p326 = scmp.ne.s32.totalorder %s318, %s321
    %p327 = scmp.eq.s32.totalorder %s25, 0
    %p328 = por %p326, %p327
    %p329 = scmp.ne.s32.totalorder %s318, %s321
    %p330 = scmp.eq.s32.totalorder %s30, 1
    %p331 = por %p329, %p330
    %p332 = scmp.ne.s32.totalorder %s321, %s322
    %p333 = scmp.eq.s32.totalorder %s30, 0
    %p334 = por %p332, %p333
    %p335 = scmp.ne.s32.totalorder %s321, %s322
    %p336 = scmp.eq.s32.totalorder %s31, 1
    %p337 = por %p335, %p336
    %p339 = scmp.ne.s32.totalorder %s322, %s338
    %p340 = scmp.eq.s32.totalorder %s31, 0
    %p341 = por %p339, %p340
    %s342 = ssub.s32 %s33, %s40
    %p343 = scmp.eq.s32.totalorder %s342, 0
    %s345 = sadd.s32 %s344, 1
    %s346 = scalar_select %p343, %s344, %s345
    %p349 = pneg %p343
    %p350 = scmp.eq.s32.totalorder %s25, 1
    %p351 = por %p349, %p350
    %p352 = scmp.ne.s32.totalorder %s344, %s347
    %p353 = scmp.eq.s32.totalorder %s25, 0
    %p354 = por %p352, %p353
    %p355 = scmp.ne.s32.totalorder %s344, %s347
    %p356 = scmp.eq.s32.totalorder %s30, 1
    %p357 = por %p355, %p356
    %p358 = scmp.ne.s32.totalorder %s347, %s348
    %p359 = scmp.eq.s32.totalorder %s30, 0
    %p360 = por %p358, %p359
    %p361 = scmp.ne.s32.totalorder %s347, %s348
    %p362 = scmp.eq.s32.totalorder %s31, 1
    %p363 = por %p361, %p362
    %p365 = scmp.ne.s32.totalorder %s348, %s364
    %p366 = scmp.eq.s32.totalorder %s31, 0
    %p367 = por %p365, %p366
    %s368 = ssub.s32 %s33, %s40
    %p369 = scmp.eq.s32.totalorder %s368, 0
    %s371 = sadd.s32 %s370, 1
    %s372 = scalar_select %p369, %s370, %s371
    %p375 = pneg %p369
    %p376 = scmp.eq.s32.totalorder %s25, 1
    %p377 = por %p375, %p376
    %p378 = scmp.ne.s32.totalorder %s370, %s373
    %p379 = scmp.eq.s32.totalorder %s25, 0
    %p380 = por %p378, %p379
    %p381 = scmp.ne.s32.totalorder %s370, %s373
    %p382 = scmp.eq.s32.totalorder %s30, 1
    %p383 = por %p381, %p382
    %p384 = scmp.ne.s32.totalorder %s373, %s374
    %p385 = scmp.eq.s32.totalorder %s30, 0
    %p386 = por %p384, %p385
    %p387 = scmp.ne.s32.totalorder %s373, %s374
    %p388 = scmp.eq.s32.totalorder %s31, 1
    %p389 = por %p387, %p388
    %p391 = scmp.ne.s32.totalorder %s374, %s390
    %p392 = scmp.eq.s32.totalorder %s31, 0
    %p393 = por %p391, %p392
    %s394 = ssub.s32 %s33, %s40
    %p395 = scmp.eq.s32.totalorder %s394, 0
    %s397 = sadd.s32 %s396, 1
    %s398 = scalar_select %p395, %s396, %s397
    %p401 = pneg %p395
    %p402 = scmp.eq.s32.totalorder %s25, 1
    %p403 = por %p401, %p402
    %p404 = scmp.ne.s32.totalorder %s396, %s399
    %p405 = scmp.eq.s32.totalorder %s25, 0
    %p406 = por %p404, %p405
    %p407 = scmp.ne.s32.totalorder %s396, %s399
    %p408 = scmp.eq.s32.totalorder %s30, 1
    %p409 = por %p407, %p408
    %p410 = scmp.ne.s32.totalorder %s399, %s400
    %p411 = scmp.eq.s32.totalorder %s30, 0
    %p412 = por %p410, %p411
    %p413 = scmp.ne.s32.totalorder %s399, %s400
    %p414 = scmp.eq.s32.totalorder %s31, 1
    %p415 = por %p413, %p414
    %p417 = scmp.ne.s32.totalorder %s400, %s416
    %p418 = scmp.eq.s32.totalorder %s31, 0
    %p419 = por %p417, %p418
    %s420 = ssub.s32 %s33, %s40
    %p421 = scmp.eq.s32.totalorder %s420, 0
    %s423 = sadd.s32 %s422, 1
    %s424 = scalar_select %p421, %s422, %s423
    %p427 = pneg %p421
    %p428 = scmp.eq.s32.totalorder %s25, 1
    %p429 = por %p427, %p428
    %p430 = scmp.ne.s32.totalorder %s422, %s425
    %p431 = scmp.eq.s32.totalorder %s25, 0
    %p432 = por %p430, %p431
    %p433 = scmp.ne.s32.totalorder %s422, %s425
    %p434 = scmp.eq.s32.totalorder %s30, 1
    %p435 = por %p433, %p434
    %p436 = scmp.ne.s32.totalorder %s425, %s426
    %p437 = scmp.eq.s32.totalorder %s30, 0
    %p438 = por %p436, %p437
    %p439 = scmp.ne.s32.totalorder %s425, %s426
    %p440 = scmp.eq.s32.totalorder %s31, 1
    %p441 = por %p439, %p440
    %p443 = scmp.ne.s32.totalorder %s426, %s442
    %p444 = scmp.eq.s32.totalorder %s31, 0
    %p445 = por %p443, %p444
    %s446 = ssub.s32 %s33, %s40
    %p447 = scmp.eq.s32.totalorder %s446, 0
    %s449 = sadd.s32 %s448, 1
    %s450 = scalar_select %p447, %s448, %s449
    %p453 = pneg %p447
    %p454 = scmp.eq.s32.totalorder %s25, 1
    %p455 = por %p453, %p454
    %p456 = scmp.ne.s32.totalorder %s448, %s451
    %p457 = scmp.eq.s32.totalorder %s25, 0
    %p458 = por %p456, %p457
    %p459 = scmp.ne.s32.totalorder %s448, %s451
    %p460 = scmp.eq.s32.totalorder %s30, 1
    %p461 = por %p459, %p460
    %p462 = scmp.ne.s32.totalorder %s451, %s452
    %p463 = scmp.eq.s32.totalorder %s30, 0
    %p464 = por %p462, %p463
    %p465 = scmp.ne.s32.totalorder %s451, %s452
    %p466 = scmp.eq.s32.totalorder %s31, 1
    %p467 = por %p465, %p466
    %p469 = scmp.ne.s32.totalorder %s452, %s468
    %p470 = scmp.eq.s32.totalorder %s31, 0
    %p471 = por %p469, %p470
    %s472 = ssub.s32 %s32, %s44
    %p473 = scmp.eq.s32.totalorder %s472, 0
    %s475 = sadd.s32 %s474, 1
    %s476 = scalar_select %p473, %s474, %s475
    %p479 = pneg %p473
    %p480 = scmp.eq.s32.totalorder %s25, 1
    %p481 = por %p479, %p480
    %p482 = scmp.ne.s32.totalorder %s474, %s477
    %p483 = scmp.eq.s32.totalorder %s25, 0
    %p484 = por %p482, %p483
    %p485 = scmp.ne.s32.totalorder %s474, %s477
    %p486 = scmp.eq.s32.totalorder %s30, 1
    %p487 = por %p485, %p486
    %p488 = scmp.ne.s32.totalorder %s477, %s478
    %p489 = scmp.eq.s32.totalorder %s30, 0
    %p490 = por %p488, %p489
    %p491 = scmp.ne.s32.totalorder %s477, %s478
    %p492 = scmp.eq.s32.totalorder %s31, 1
    %p493 = por %p491, %p492
    %p495 = scmp.ne.s32.totalorder %s478, %s494
    %p496 = scmp.eq.s32.totalorder %s31, 0
    %p497 = por %p495, %p496
    %s498 = ssub.s32 %s32, %s44
    %p499 = scmp.eq.s32.totalorder %s498, 0
    %s501 = sadd.s32 %s500, 1
    %s502 = scalar_select %p499, %s500, %s501
    %p505 = pneg %p499
    %p506 = scmp.eq.s32.totalorder %s25, 1
    %p507 = por %p505, %p506
    %p508 = scmp.ne.s32.totalorder %s500, %s503
    %p509 = scmp.eq.s32.totalorder %s25, 0
    %p510 = por %p508, %p509
    %p511 = scmp.ne.s32.totalorder %s500, %s503
    %p512 = scmp.eq.s32.totalorder %s30, 1
    %p513 = por %p511, %p512
    %p514 = scmp.ne.s32.totalorder %s503, %s504
    %p515 = scmp.eq.s32.totalorder %s30, 0
    %p516 = por %p514, %p515
    %p517 = scmp.ne.s32.totalorder %s503, %s504
    %p518 = scmp.eq.s32.totalorder %s31, 1
    %p519 = por %p517, %p518
    %p521 = scmp.ne.s32.totalorder %s504, %s520
    %p522 = scmp.eq.s32.totalorder %s31, 0
    %p523 = por %p521, %p522
    %p524 = scmp.le.s32.totalorder 1, %s25
    %p525 = scmp.lt.s32.totalorder %s25, 3
    %p526 = pnand %p524, %p525
    %p527 = pneg %p526
    // Predicated region
    $region9: #{continuous_transformer_forward.5} parent=5 // pred_check
      _
    $region10: #{continuous_transformer_forward.5} parent=5 // pred_check_branch
      %529 = sbr.rel (%p526) target = $region12
    $region11: #{continuous_transformer_forward.5} parent=5 // pred_region
      %s530 = ssub.s32 %s25, 1
      // Predicated region
      $region13: #{continuous_transformer_forward.5} parent=11 // pred_check
        %p531 = pneg %p63
      $region14: #{continuous_transformer_forward.5} parent=11 // pred_check_branch
        %533 = sbr.rel (%p531) target = $region16
      $region15: #{continuous_transformer_forward.5} parent=11 // pred_region
        %s534 = smul.u32 2, %s34
        %p535 = scmp.lt.s32.totalorder %s534, 1
        %s536 = scalar_select %p535, %s534, 1
        %s537 = smul.addr %s536, 8
        %s538 = scalar_lea.vmem %s0, %s537
        %s539 = smul.u32 2, %s34
      $region16: #{continuous_transformer_forward.5} parent=11 // pred_fallthru
        _
      // Predicated region
      $region17: #{continuous_transformer_forward.5} parent=11 // pred_check
        %p540 = pneg %p84
      $region18: #{continuous_transformer_forward.5} parent=11 // pred_check_branch
        %542 = sbr.rel (%p540) target = $region20
      $region19: #{continuous_transformer_forward.5} parent=11 // pred_region
        _
      $region20: #{continuous_transformer_forward.5} parent=11 // pred_fallthru
        _
      // Predicated region
      $region21: #{continuous_transformer_forward.5} parent=11 // pred_check
        %p543 = pneg %p110
      $region22: #{continuous_transformer_forward.5} parent=11 // pred_check_branch
        %545 = sbr.rel (%p543) target = $region24
      $region23: #{continuous_transformer_forward.5} parent=11 // pred_region
        %s546 = smul.u32 2, %s34
        %p547 = scmp.lt.s32.totalorder %s546, 1
        %s548 = scalar_select %p547, %s546, 1
        %s549 = smul.addr %s548, 8
        %s550 = scalar_lea.vmem %s2, %s549
        %s551 = smul.u32 2, %s34
      $region24: #{continuous_transformer_forward.5} parent=11 // pred_fallthru
        _
      // Predicated region
      $region25: #{continuous_transformer_forward.5} parent=11 // pred_check
        %p552 = pneg %p131
      $region26: #{continuous_transformer_forward.5} parent=11 // pred_check_branch
        %554 = sbr.rel (%p552) target = $region28
      $region27: #{continuous_transformer_forward.5} parent=11 // pred_region
        _
      $region28: #{continuous_transformer_forward.5} parent=11 // pred_fallthru
        _
      // Predicated region
      $region29: #{continuous_transformer_forward.5} parent=11 // pred_check
        %p555 = pneg %p152
      $region30: #{continuous_transformer_forward.5} parent=11 // pred_check_branch
        %557 = sbr.rel (%p555) target = $region32
      $region31: #{continuous_transformer_forward.5} parent=11 // pred_region
        _
      $region32: #{continuous_transformer_forward.5} parent=11 // pred_fallthru
        _
    $region12: #{continuous_transformer_forward.5} parent=5 // pred_fallthru
      _
    %p558 = scmp.lt.s32.totalorder %s25, 2
    // Predicated region
    $region33: #{continuous_transformer_forward.5} parent=5 // pred_check
      %p559 = pneg %p558
    $region34: #{continuous_transformer_forward.5} parent=5 // pred_check_branch
      %561 = sbr.rel (%p559) target = $region36
    $region35: #{continuous_transformer_forward.5} parent=5 // pred_region
      // Predicated region
      $region37: #{continuous_transformer_forward.5} parent=35 // pred_check
        %p562 = pneg %p172
      $region38: #{continuous_transformer_forward.5} parent=35 // pred_check_branch
        %564 = sbr.rel (%p562) target = $region40
      $region39: #{continuous_transformer_forward.5} parent=35 // pred_region
        %p565 = scmp.lt.s32.totalorder %s33, 1
        %s566 = scalar_select %p565, %s33, 1
        %s567 = smul.addr %s566, 4
        %s568 = smul.addr %s567, 8
        %s569 = scalar_lea.vmem %s5, %s568
      $region40: #{continuous_transformer_forward.5} parent=35 // pred_fallthru
        _
      // Predicated region
      $region41: #{continuous_transformer_forward.5} parent=35 // pred_check
        %p570 = pneg %p198
      $region42: #{continuous_transformer_forward.5} parent=35 // pred_check_branch
        %572 = sbr.rel (%p570) target = $region44
      $region43: #{continuous_transformer_forward.5} parent=35 // pred_region
        %p573 = scmp.lt.s32.totalorder %s33, 1
        %s574 = scalar_select %p573, %s33, 1
        %s575 = scalar_lea.vmem %s6, %s574
      $region44: #{continuous_transformer_forward.5} parent=35 // pred_fallthru
        _
      // Predicated region
      $region45: #{continuous_transformer_forward.5} parent=35 // pred_check
        %p576 = pneg %p224
      $region46: #{continuous_transformer_forward.5} parent=35 // pred_check_branch
        %578 = sbr.rel (%p576) target = $region48
      $region47: #{continuous_transformer_forward.5} parent=35 // pred_region
        %p579 = scmp.lt.s32.totalorder %s33, 1
        %s580 = scalar_select %p579, %s33, 1
        %s581 = smul.addr %s580, 4
        %s582 = smul.addr %s581, 8
        %s583 = scalar_lea.vmem %s7, %s582
      $region48: #{continuous_transformer_forward.5} parent=35 // pred_fallthru
        _
      // Predicated region
      $region49: #{continuous_transformer_forward.5} parent=35 // pred_check
        %p584 = pneg %p250
      $region50: #{continuous_transformer_forward.5} parent=35 // pred_check_branch
        %586 = sbr.rel (%p584) target = $region52
      $region51: #{continuous_transformer_forward.5} parent=35 // pred_region
        %p587 = scmp.lt.s32.totalorder %s33, 1
        %s588 = scalar_select %p587, %s33, 1
        %s589 = scalar_lea.vmem %s8, %s588
      $region52: #{continuous_transformer_forward.5} parent=35 // pred_fallthru
        _
      // Predicated region
      $region53: #{continuous_transformer_forward.5} parent=35 // pred_check
        %p590 = pneg %p276
      $region54: #{continuous_transformer_forward.5} parent=35 // pred_check_branch
        %592 = sbr.rel (%p590) target = $region56
      $region55: #{continuous_transformer_forward.5} parent=35 // pred_region
        %p593 = scmp.lt.s32.totalorder %s33, 1
        %s594 = scalar_select %p593, %s33, 1
        %s595 = scalar_lea.vmem %s9, %s594
      $region56: #{continuous_transformer_forward.5} parent=35 // pred_fallthru
        _
      // Predicated region
      $region57: #{continuous_transformer_forward.5} parent=35 // pred_check
        %p596 = pneg %p302
      $region58: #{continuous_transformer_forward.5} parent=35 // pred_check_branch
        %598 = sbr.rel (%p596) target = $region60
      $region59: #{continuous_transformer_forward.5} parent=35 // pred_region
        %p599 = scmp.lt.s32.totalorder %s33, 1
        %s600 = scalar_select %p599, %s33, 1
        %s601 = scalar_lea.vmem %s10, %s600
      $region60: #{continuous_transformer_forward.5} parent=35 // pred_fallthru
        _
      // Predicated region
      $region61: #{continuous_transformer_forward.5} parent=35 // pred_check
        %p602 = pneg %p328
      $region62: #{continuous_transformer_forward.5} parent=35 // pred_check_branch
        %604 = sbr.rel (%p602) target = $region64
      $region63: #{continuous_transformer_forward.5} parent=35 // pred_region
        %p605 = scmp.lt.s32.totalorder %s33, 1
        %s606 = scalar_select %p605, %s33, 1
        %s607 = smul.addr %s606, 4
        %s608 = smul.addr %s607, 8
        %s609 = scalar_lea.vmem %s11, %s608
      $region64: #{continuous_transformer_forward.5} parent=35 // pred_fallthru
        _
      // Predicated region
      $region65: #{continuous_transformer_forward.5} parent=35 // pred_check
        %p610 = pneg %p354
      $region66: #{continuous_transformer_forward.5} parent=35 // pred_check_branch
        %612 = sbr.rel (%p610) target = $region68
      $region67: #{continuous_transformer_forward.5} parent=35 // pred_region
        %p613 = scmp.lt.s32.totalorder %s33, 1
        %s614 = scalar_select %p613, %s33, 1
        %s615 = scalar_lea.vmem %s12, %s614
      $region68: #{continuous_transformer_forward.5} parent=35 // pred_fallthru
        _
      // Predicated region
      $region69: #{continuous_transformer_forward.5} parent=35 // pred_check
        %p616 = pneg %p380
      $region70: #{continuous_transformer_forward.5} parent=35 // pred_check_branch
        %618 = sbr.rel (%p616) target = $region72
      $region71: #{continuous_transformer_forward.5} parent=35 // pred_region
        %p619 = scmp.lt.s32.totalorder %s33, 1
        %s620 = scalar_select %p619, %s33, 1
        %s621 = smul.addr %s620, 8
        %s622 = smul.addr %s621, 8
        %s623 = scalar_lea.vmem %s13, %s622
      $region72: #{continuous_transformer_forward.5} parent=35 // pred_fallthru
        _
      // Predicated region
      $region73: #{continuous_transformer_forward.5} parent=35 // pred_check
        %p624 = pneg %p406
      $region74: #{continuous_transformer_forward.5} parent=35 // pred_check_branch
        %626 = sbr.rel (%p624) target = $region76
      $region75: #{continuous_transformer_forward.5} parent=35 // pred_region
        %p627 = scmp.lt.s32.totalorder %s33, 1
        %s628 = scalar_select %p627, %s33, 1
        %s629 = scalar_lea.vmem %s14, %s628
      $region76: #{continuous_transformer_forward.5} parent=35 // pred_fallthru
        _
      // Predicated region
      $region77: #{continuous_transformer_forward.5} parent=35 // pred_check
        %p630 = pneg %p432
      $region78: #{continuous_transformer_forward.5} parent=35 // pred_check_branch
        %632 = sbr.rel (%p630) target = $region80
      $region79: #{continuous_transformer_forward.5} parent=35 // pred_region
        %p633 = scmp.lt.s32.totalorder %s33, 1
        %s634 = scalar_select %p633, %s33, 1
        %s635 = scalar_lea.vmem %s15, %s634
      $region80: #{continuous_transformer_forward.5} parent=35 // pred_fallthru
        _
      // Predicated region
      $region81: #{continuous_transformer_forward.5} parent=35 // pred_check
        %p636 = pneg %p458
      $region82: #{continuous_transformer_forward.5} parent=35 // pred_check_branch
        %638 = sbr.rel (%p636) target = $region84
      $region83: #{continuous_transformer_forward.5} parent=35 // pred_region
        %p639 = scmp.lt.s32.totalorder %s33, 1
        %s640 = scalar_select %p639, %s33, 1
        %s641 = scalar_lea.vmem %s16, %s640
      $region84: #{continuous_transformer_forward.5} parent=35 // pred_fallthru
        _
    $region36: #{continuous_transformer_forward.5} parent=5 // pred_fallthru
      _
    %p642 = scmp.le.s32.totalorder 1, %s25
    %p643 = scmp.lt.s32.totalorder %s25, 3
    %p644 = pnand %p642, %p643
    %p645 = pneg %p644
    // Predicated region
    $region85: #{continuous_transformer_forward.5} parent=5 // pred_check
      _
    $region86: #{continuous_transformer_forward.5} parent=5 // pred_check_branch
      %647 = sbr.rel (%p644) target = $region88
    $region87: #{continuous_transformer_forward.5} parent=5 // pred_region
      %s648 = ssub.s32 %s25, 1
      %s649 = smul.u32 2, %s34
      %p650 = scmp.lt.s32.totalorder %s649, 1
      %s651 = scalar_select %p650, %s649, 1
      %s652 = smul.addr %s651, 8
      %s653 = scalar_lea.vmem %s0, %s652
      %p654 = pneg %p63
      %p655 = pneg %p60
      %p656 = pneg %p84
      %p657 = pneg %p81
      %s658 = smul.u32 2, %s34
      %p659 = scmp.lt.s32.totalorder %s658, 1
      %s660 = scalar_select %p659, %s658, 1
      %s661 = smul.addr %s660, 8
      %s662 = scalar_lea.vmem %s2, %s661
      %p663 = pneg %p110
      %p664 = pneg %p107
      %p665 = pneg %p131
      %p666 = pneg %p128
      %p667 = pneg %p152
      %p668 = pneg %p149
      %p669 = scmp.lt.s32.totalorder %s35, 1
      %s670 = scalar_select %p669, %s35, 1
      %s671 = smul.addr %s670, 4
      %s672 = smul.addr %s671, 8
      %s673 = scalar_lea.vmem %s5, %s672
      %p674 = pneg %p178
      %p675 = pneg %p175
      %p676 = scmp.lt.s32.totalorder %s35, 1
      %s677 = scalar_select %p676, %s35, 1
      %s678 = scalar_lea.vmem %s6, %s677
      %p679 = pneg %p204
      %p680 = pneg %p201
      %p681 = scmp.lt.s32.totalorder %s35, 1
      %s682 = scalar_select %p681, %s35, 1
      %s683 = smul.addr %s682, 4
      %s684 = smul.addr %s683, 8
      %s685 = scalar_lea.vmem %s7, %s684
      %p686 = pneg %p230
      %p687 = pneg %p227
      %p688 = scmp.lt.s32.totalorder %s35, 1
      %s689 = scalar_select %p688, %s35, 1
      %s690 = scalar_lea.vmem %s8, %s689
      %p691 = pneg %p256
      %p692 = pneg %p253
      %p693 = scmp.lt.s32.totalorder %s35, 1
      %s694 = scalar_select %p693, %s35, 1
      %s695 = scalar_lea.vmem %s9, %s694
      %p696 = pneg %p282
      %p697 = pneg %p279
      %p698 = scmp.lt.s32.totalorder %s35, 1
      %s699 = scalar_select %p698, %s35, 1
      %s700 = scalar_lea.vmem %s10, %s699
      %p701 = pneg %p308
      %p702 = pneg %p305
      %p703 = scmp.lt.s32.totalorder %s35, 1
      %s704 = scalar_select %p703, %s35, 1
      %s705 = smul.addr %s704, 4
      %s706 = smul.addr %s705, 8
      %s707 = scalar_lea.vmem %s11, %s706
      %p708 = pneg %p334
      %p709 = pneg %p331
      %p710 = scmp.lt.s32.totalorder %s35, 1
      %s711 = scalar_select %p710, %s35, 1
      %s712 = scalar_lea.vmem %s12, %s711
      %p713 = pneg %p360
      %p714 = pneg %p357
      %p715 = scmp.lt.s32.totalorder %s35, 1
      %s716 = scalar_select %p715, %s35, 1
      %s717 = smul.addr %s716, 8
      %s718 = smul.addr %s717, 8
      %s719 = scalar_lea.vmem %s13, %s718
      %p720 = pneg %p386
      %p721 = pneg %p383
      %p722 = scmp.lt.s32.totalorder %s35, 1
      %s723 = scalar_select %p722, %s35, 1
      %s724 = scalar_lea.vmem %s14, %s723
      %p725 = pneg %p412
      %p726 = pneg %p409
      %p727 = scmp.lt.s32.totalorder %s35, 1
      %s728 = scalar_select %p727, %s35, 1
      %s729 = scalar_lea.vmem %s15, %s728
      %p730 = pneg %p438
      %p731 = pneg %p435
      %p732 = scmp.lt.s32.totalorder %s35, 1
      %s733 = scalar_select %p732, %s35, 1
      %s734 = scalar_lea.vmem %s16, %s733
      %p735 = pneg %p464
      %p736 = pneg %p461
      %p737 = pneg %p490
      %p738 = pneg %p487
      %s739 = smul.u32 2, %s34
      %p740 = scmp.lt.s32.totalorder %s739, 1
      %s741 = scalar_select %p740, %s739, 1
      %s742 = smul.addr %s741, 8
      %s743 = scalar_lea.vmem %s17, %s742
      %p744 = pneg %p516
      %p745 = pneg %p513
      %s746 = smul.u32 2, %s34
      %p747 = scmp.lt.s32.totalorder %s746, 1
      %s748 = scalar_select %p747, %s746, 1
      %s749 = scalar_lea.vmem %s18, %s748
      %s750 = smul.u32 2, %s34
      %p751 = scmp.lt.s32.totalorder %s750, 1
      %s752 = scalar_select %p751, %s750, 1
      %s753 = smul.addr %s752, 8
      %s754 = scalar_lea.vmem %s0, %s753
      %s755 = smul.u32 2, %s34
      %s756 = smul.u32 2, %s34
      %p757 = scmp.lt.s32.totalorder %s756, 1
      %s758 = scalar_select %p757, %s756, 1
      %s759 = smul.addr %s758, 8
      %s760 = scalar_lea.vmem %s2, %s759
      %s761 = smul.u32 2, %s34
      %p762 = scmp.lt.s32.totalorder %s35, 1
      %s763 = scalar_select %p762, %s35, 1
      %s764 = smul.addr %s763, 4
      %s765 = smul.addr %s764, 8
      %s766 = scalar_lea.vmem %s5, %s765
      %p767 = scmp.lt.s32.totalorder %s35, 1
      %s768 = scalar_select %p767, %s35, 1
      %s769 = scalar_lea.vmem %s6, %s768
      %p770 = scmp.lt.s32.totalorder %s35, 1
      %s771 = scalar_select %p770, %s35, 1
      %s772 = smul.addr %s771, 4
      %s773 = smul.addr %s772, 8
      %s774 = scalar_lea.vmem %s7, %s773
      %p775 = scmp.lt.s32.totalorder %s35, 1
      %s776 = scalar_select %p775, %s35, 1
      %s777 = scalar_lea.vmem %s8, %s776
      %p778 = scmp.lt.s32.totalorder %s35, 1
      %s779 = scalar_select %p778, %s35, 1
      %s780 = scalar_lea.vmem %s9, %s779
      %p781 = scmp.lt.s32.totalorder %s35, 1
      %s782 = scalar_select %p781, %s35, 1
      %s783 = scalar_lea.vmem %s10, %s782
      %p784 = scmp.lt.s32.totalorder %s35, 1
      %s785 = scalar_select %p784, %s35, 1
      %s786 = smul.addr %s785, 4
      %s787 = smul.addr %s786, 8
      %s788 = scalar_lea.vmem %s11, %s787
      %p789 = scmp.lt.s32.totalorder %s35, 1
      %s790 = scalar_select %p789, %s35, 1
      %s791 = scalar_lea.vmem %s12, %s790
      %p792 = scmp.lt.s32.totalorder %s35, 1
      %s793 = scalar_select %p792, %s35, 1
      %s794 = smul.addr %s793, 8
      %s795 = smul.addr %s794, 8
      %s796 = scalar_lea.vmem %s13, %s795
      %p797 = scmp.lt.s32.totalorder %s35, 1
      %s798 = scalar_select %p797, %s35, 1
      %s799 = scalar_lea.vmem %s14, %s798
      %p800 = scmp.lt.s32.totalorder %s35, 1
      %s801 = scalar_select %p800, %s35, 1
      %s802 = scalar_lea.vmem %s15, %s801
      %p803 = scmp.lt.s32.totalorder %s35, 1
      %s804 = scalar_select %p803, %s35, 1
      %s805 = scalar_lea.vmem %s16, %s804
      %s806 = smul.u32 2, %s34
      %p807 = scmp.lt.s32.totalorder %s806, 1
      %s808 = scalar_select %p807, %s806, 1
      %s809 = smul.addr %s808, 8
      %s810 = scalar_lea.vmem %s17, %s809
      %s811 = smul.u32 2, %s34
      %s812 = smul.u32 2, %s34
      %p813 = scmp.lt.s32.totalorder %s812, 1
      %s814 = scalar_select %p813, %s812, 1
      %s815 = scalar_lea.vmem %s18, %s814
      %s816 = smul.u32 2, %s34
      %p817 = scmp.eq.s32.totalorder %s35, 0
      // Predicated region
      $region89: #{continuous_transformer_forward.5} parent=87 // pred_check
        %p818 = pneg %p817
      $region90: #{continuous_transformer_forward.5} parent=87 // pred_check_branch
        %820 = sbr.rel (%p818) target = $region92
      $region91: #{continuous_transformer_forward.5} parent=87 // pred_region
        %v821 = vld [vmem:[%s754] sm:$0xff]
        %v822 = vld [vmem:[%s754 + $0x8] sm:$0xff]
        %v823 = vld [vmem:[%s1] sm:$0xff]
        %v824 = vld [vmem:[%s1 + $0x8] sm:$0xff]
        %v825 = vadd.f32 %v821, %v823
        %v826 = vadd.f32 %v822, %v824
        %vm827 = vcmask 261120
        %828 = vst.msk [vmem:[#allocation2] sm:$0xff] %vm827, %v825
        %829 = vst.msk [vmem:[#allocation2 + $0x8] sm:$0xff] %vm827, %v826
      $region92: #{continuous_transformer_forward.5} parent=87 // pred_fallthru
        _
      %v830 = vld [vmem:[#allocation2] sm:$0xff]
      %v831 = vld [vmem:[#allocation2 + $0x8] sm:$0xff]
      %v832 = vld [vmem:[%s766] sm:$0xff]
      %v833 = vld [vmem:[%s766 + $0x8] sm:$0xff]
      %v834 = vld [vmem:[%s766 + $0x10] sm:$0xff]
      %v835 = vld [vmem:[%s766 + $0x18] sm:$0xff]
      %v836 = vld [vmem:[%s769] sm:$0x1]
      %v837 = vld [vmem:[%s774] sm:$0xff]
      %v838 = vld [vmem:[%s774 + $0x8] sm:$0xff]
      %v839 = vld [vmem:[%s774 + $0x10] sm:$0xff]
      %v840 = vld [vmem:[%s774 + $0x18] sm:$0xff]
      %v841 = vld [vmem:[%s777] sm:$0x1]
      %v842 = vld [vmem:[%s780] sm:$0x1]
      %v843 = vld [vmem:[%s783] sm:$0x1]
      %v844 = vld [vmem:[%s788] sm:$0xff]
      %v845 = vld [vmem:[%s788 + $0x8] sm:$0xff]
      %v846 = vld [vmem:[%s788 + $0x10] sm:$0xff]
      %v847 = vld [vmem:[%s788 + $0x18] sm:$0xff]
      %v848 = vld [vmem:[%s791] sm:$0x1]
      %v849 = vld [vmem:[%s796] sm:$0xff]
      %v850 = vld [vmem:[%s796 + $0x8] sm:$0xff]
      %v851 = vld [vmem:[%s796 + $0x10] sm:$0xff]
      %v852 = vld [vmem:[%s796 + $0x18] sm:$0xff]
      %v853 = vld [vmem:[%s796 + $0x20] sm:$0xff]
      %v854 = vld [vmem:[%s796 + $0x28] sm:$0xff]
      %v855 = vld [vmem:[%s796 + $0x30] sm:$0xff]
      %v856 = vld [vmem:[%s796 + $0x38] sm:$0xff]
      %v857 = vld [vmem:[%s799] sm:$0x1]
      %v858 = vld [vmem:[%s802] sm:$0x1]
      %v859 = vld [vmem:[%s805] sm:$0x1]
      %v861 = vlaneseq
      %v862 = vshrl.u32 %v861, 7
      %v863 = vsub.s32 0, %v862
      %v864 = vrot.slane %v836, %v863
      %vm866 = vcmask 261120
      %v868 = vsel %vm866, %v830, 0
      %v871 = vsel %vm866, %v831, 0
      %873 = vmatprep.subr.mxu0 0.0
      %874 = vmatpush1.msra.mxu0 0.0
      %875 = vmatprep.subr.mxu0 0.0
      %876 = vmatpush1.msra.mxu0 0.0
      %877 = vmatprep.subr.mxu0 0.0
      %878 = vmatpush1.msra.mxu0 0.0
      %879 = vmatprep.subr.mxu0 0.0
      %880 = vmatpush1.msra.mxu0 0.0
      %881 = vmatprep.subr.mxu0 0.0
      %882 = vmatpush1.msra.mxu0 0.0
      %883 = vmatprep.subr.mxu0 0.0
      %884 = vmatpush1.msra.mxu0 0.0
      %885 = vmatprep.subr.mxu0 0.0
      %886 = vmatpush1.msra.mxu0 0.0
      %887 = vmatprep.subr.mxu0 0.0
      %888 = vmatpush1.msra.mxu0 0.0
      %889 = vmatprep.subr.mxu0 0.0
      %890 = vmatpush1.msra.mxu0 0.0
      %891 = vmatprep.subr.mxu0 0.0
      %892 = vmatpush1.msra.mxu0 0.0
      %893 = vmatprep.subr.mxu0 0.0
      %894 = vmatpush1.msra.mxu0 0.0
      %895 = vmatprep.subr.mxu0 0.0
      %896 = vmatpush1.msra.mxu0 0.0
      %897 = vmatprep.subr.mxu0 0.0
      %898 = vmatpush1.msra.mxu0 %v835
      %899 = vmatprep.subr.mxu0 0.0
      %900 = vmatpush1.msra.mxu0 %v834
      %901 = vmatprep.subr.mxu0 0.0
      %902 = vmatpush1.msra.mxu0 %v833
      %903 = vmatprep.subr.mxu0 0.0
      %904 = vmatpush1.msra.mxu0 %v832
      %905 = vmatprep.subr.mxu0 0.0
      %906 = vmatpush2.msra.mxu0 0.0
      %907 = vmatprep.subr.mxu0 0.0
      %908 = vmatpush2.msra.mxu0 0.0
      %909 = vmatprep.subr.mxu0 0.0
      %910 = vmatpush2.msra.mxu0 0.0
      %911 = vmatprep.subr.mxu0 0.0
      %912 = vmatpush2.msra.mxu0 0.0
      %913 = vmatprep.subr.mxu0 0.0
      %914 = vmatpush2.msra.mxu0 0.0
      %915 = vmatprep.subr.mxu0 0.0
      %916 = vmatpush2.msra.mxu0 0.0
      %917 = vmatprep.subr.mxu0 0.0
      %918 = vmatpush2.msra.mxu0 0.0
      %919 = vmatprep.subr.mxu0 0.0
      %920 = vmatpush2.msra.mxu0 0.0
      %921 = vmatprep.subr.mxu0 0.0
      %922 = vmatpush2.msra.mxu0 0.0
      %923 = vmatprep.subr.mxu0 0.0
      %924 = vmatpush2.msra.mxu0 0.0
      %925 = vmatprep.subr.mxu0 0.0
      %926 = vmatpush2.msra.mxu0 0.0
      %927 = vmatprep.subr.mxu0 0.0
      %928 = vmatpush2.msra.mxu0 0.0
      %929 = vmatprep.subr.mxu0 0.0
      %930 = vmatpush2.msra.mxu0 0.0
      %931 = vmatprep.subr.mxu0 0.0
      %932 = vmatpush2.msra.mxu0 0.0
      %933 = vmatprep.subr.mxu0 0.0
      %934 = vmatpush2.msra.mxu0 0.0
      %935 = vmatprep.subr.mxu0 0.0
      %936 = vmatpush2.msra.mxu0 0.0
      %937 = vmatprep.mubr.f32.mxu0 0.0
      %938 = vmatmul.mubr.f32.gmra.mxu0 %v868
      %v939 = vpop.f32.mrf.mxu0
      %v940 = vadd.f32 %v864, %v939
      %v941 = vpop.f32.mrf.mxu0
      %942 = vmatprep.mubr.f32.mxu0 0.0
      %943 = vmatmul.mubr.f32.gmra.mxu0 %v871
      %v944 = vpop.f32.mrf.mxu0
      %v945 = vadd.f32 %v864, %v944
      %v946 = vpop.f32.mrf.mxu0
      %947 = vdwg.mxu0
      %949 = vrot.lane.b32.xlu0 %v940, 96
      %v950 = vpop.permute.xlu0 %949
      %vm951 = vcmask 64512
      %v952 = vsel %vm951, %v940, 0
      %v954 = vsel %vm951, %v950, 0
      %956 = vmatprep.subr.mxu0 0.0
      %957 = vmatpush1.xpose.msra.mxu0 0.0
      %958 = vmatprep.subr.mxu0 0.0
      %959 = vmatpush1.xpose.msra.mxu0 0.0
      %960 = vmatprep.subr.mxu0 0.0
      %961 = vmatpush1.xpose.msra.mxu0 0.0
      %962 = vmatprep.subr.mxu0 0.0
      %963 = vmatpush1.xpose.msra.mxu0 0.0
      %964 = vmatprep.subr.mxu0 0.0
      %965 = vmatpush1.xpose.msra.mxu0 0.0
      %966 = vmatprep.subr.mxu0 0.0
      %967 = vmatpush1.xpose.msra.mxu0 0.0
      %968 = vmatprep.subr.mxu0 0.0
      %969 = vmatpush1.xpose.msra.mxu0 0.0
      %970 = vmatprep.subr.mxu0 0.0
      %971 = vmatpush1.xpose.msra.mxu0 0.0
      %972 = vmatprep.subr.mxu0 0.0
      %973 = vmatpush1.xpose.msra.mxu0 0.0
      %974 = vmatprep.subr.mxu0 0.0
      %975 = vmatpush1.xpose.msra.mxu0 0.0
      %976 = vmatprep.subr.mxu0 0.0
      %977 = vmatpush1.xpose.msra.mxu0 0.0
      %978 = vmatprep.subr.mxu0 0.0
      %979 = vmatpush1.xpose.msra.mxu0 0.0
      %980 = vmatprep.subr.mxu0 0.0
      %981 = vmatpush1.xpose.msra.mxu0 0.0
      %982 = vmatprep.subr.mxu0 0.0
      %983 = vmatpush1.xpose.msra.mxu0 0.0
      %984 = vmatprep.subr.mxu0 0.0
      %985 = vmatpush1.xpose.msra.mxu0 0.0
      %986 = vmatprep.subr.mxu0 0.0
      %987 = vmatpush1.xpose.msra.mxu0 %v954
      %988 = vmatprep.subr.mxu0 0.0
      %989 = vmatpush2.xpose.msra.mxu0 0.0
      %990 = vmatprep.subr.mxu0 0.0
      %991 = vmatpush2.xpose.msra.mxu0 0.0
      %992 = vmatprep.subr.mxu0 0.0
      %993 = vmatpush2.xpose.msra.mxu0 0.0
      %994 = vmatprep.subr.mxu0 0.0
      %995 = vmatpush2.xpose.msra.mxu0 0.0
      %996 = vmatprep.subr.mxu0 0.0
      %997 = vmatpush2.xpose.msra.mxu0 0.0
      %998 = vmatprep.subr.mxu0 0.0
      %999 = vmatpush2.xpose.msra.mxu0 0.0
      %1000 = vmatprep.subr.mxu0 0.0
      %1001 = vmatpush2.xpose.msra.mxu0 0.0
      %1002 = vmatprep.subr.mxu0 0.0
      %1003 = vmatpush2.xpose.msra.mxu0 0.0
      %1004 = vmatprep.subr.mxu0 0.0
      %1005 = vmatpush2.xpose.msra.mxu0 0.0
      %1006 = vmatprep.subr.mxu0 0.0
      %1007 = vmatpush2.xpose.msra.mxu0 0.0
      %1008 = vmatprep.subr.mxu0 0.0
      %1009 = vmatpush2.xpose.msra.mxu0 0.0
      %1010 = vmatprep.subr.mxu0 0.0
      %1011 = vmatpush2.xpose.msra.mxu0 0.0
      %1012 = vmatprep.subr.mxu0 0.0
      %1013 = vmatpush2.xpose.msra.mxu0 0.0
      %1014 = vmatprep.subr.mxu0 0.0
      %1015 = vmatpush2.xpose.msra.mxu0 0.0
      %1016 = vmatprep.subr.mxu0 0.0
      %1017 = vmatpush2.xpose.msra.mxu0 0.0
      %1018 = vmatprep.subr.mxu0 0.0
      %1019 = vmatpush2.xpose.msra.mxu0 0.0
      %1020 = vmatprep.mubr.f32.mxu0 0.0
      %1021 = vmatmul.mubr.f32.gmra.mxu0 %v952
      %v1022 = vpop.f32.mrf.mxu0
      %v1023 = vadd.f32 0.0, %v1022
      %v1024 = vpop.f32.mrf.mxu0
      %1025 = vdwg.mxu0
      %v1026 = vmul.f32 %v1023, 0.35355338
      %v1027 = vsel %vm951, %v1026, -inf
      %1028 = vmax.xlane.f32.xlu0 %v1027
      %v1029 = vpop.xlane.xlu0 %1028
      %v1030 = vsub.f32 %v1026, %v1029
      %v1031 = vmul.f32 %v1030, 1.442695
      %v1032 = vpow.pop %v1031
      %v1033 = vsel %vm951, %v1032, 0.0
      %1034 = vadd.xlane.f32.xlu0 %v1033
      %v1035 = vpop.xlane.xlu0 %1034
      %v1036 = vrcp.pop %v1035
      %v1037 = vmul.f32 %v1032, %v1036
      %1038 = vrot.lane.b32.xlu0 %v940, 64
      %v1039 = vpop.permute.xlu0 %1038
      %v1042 = vsel %vm951, %v1037, 0
      %1044 = vmatprep.subr.mxu0 0.0
      %1045 = vmatpush1.msra.mxu0 0.0
      %1046 = vmatprep.subr.mxu0 0.0
      %1047 = vmatpush1.msra.mxu0 0.0
      %1048 = vmatprep.subr.mxu0 0.0
      %1049 = vmatpush1.msra.mxu0 0.0
      %1050 = vmatprep.subr.mxu0 0.0
      %1051 = vmatpush1.msra.mxu0 0.0
      %1052 = vmatprep.subr.mxu0 0.0
      %1053 = vmatpush1.msra.mxu0 0.0
      %1054 = vmatprep.subr.mxu0 0.0
      %1055 = vmatpush1.msra.mxu0 0.0
      %1056 = vmatprep.subr.mxu0 0.0
      %1057 = vmatpush1.msra.mxu0 0.0
      %1058 = vmatprep.subr.mxu0 0.0
      %1059 = vmatpush1.msra.mxu0 0.0
      %1060 = vmatprep.subr.mxu0 0.0
      %1061 = vmatpush1.msra.mxu0 0.0
      %1062 = vmatprep.subr.mxu0 0.0
      %1063 = vmatpush1.msra.mxu0 0.0
      %1064 = vmatprep.subr.mxu0 0.0
      %1065 = vmatpush1.msra.mxu0 0.0
      %1066 = vmatprep.subr.mxu0 0.0
      %1067 = vmatpush1.msra.mxu0 0.0
      %1068 = vmatprep.subr.mxu0 0.0
      %1069 = vmatpush1.msra.mxu0 0.0
      %1070 = vmatprep.subr.mxu0 0.0
      %1071 = vmatpush1.msra.mxu0 0.0
      %1072 = vmatprep.subr.mxu0 0.0
      %1073 = vmatpush1.msra.mxu0 0.0
      %1074 = vmatprep.subr.mxu0 0.0
      %1075 = vmatpush1.msra.mxu0 %v1039
      %1076 = vmatprep.subr.mxu0 0.0
      %1077 = vmatpush2.msra.mxu0 0.0
      %1078 = vmatprep.subr.mxu0 0.0
      %1079 = vmatpush2.msra.mxu0 0.0
      %1080 = vmatprep.subr.mxu0 0.0
      %1081 = vmatpush2.msra.mxu0 0.0
      %1082 = vmatprep.subr.mxu0 0.0
      %1083 = vmatpush2.msra.mxu0 0.0
      %1084 = vmatprep.subr.mxu0 0.0
      %1085 = vmatpush2.msra.mxu0 0.0
      %1086 = vmatprep.subr.mxu0 0.0
      %1087 = vmatpush2.msra.mxu0 0.0
      %1088 = vmatprep.subr.mxu0 0.0
      %1089 = vmatpush2.msra.mxu0 0.0
      %1090 = vmatprep.subr.mxu0 0.0
      %1091 = vmatpush2.msra.mxu0 0.0
      %1092 = vmatprep.subr.mxu0 0.0
      %1093 = vmatpush2.msra.mxu0 0.0
      %1094 = vmatprep.subr.mxu0 0.0
      %1095 = vmatpush2.msra.mxu0 0.0
      %1096 = vmatprep.subr.mxu0 0.0
      %1097 = vmatpush2.msra.mxu0 0.0
      %1098 = vmatprep.subr.mxu0 0.0
      %1099 = vmatpush2.msra.mxu0 0.0
      %1100 = vmatprep.subr.mxu0 0.0
      %1101 = vmatpush2.msra.mxu0 0.0
      %1102 = vmatprep.subr.mxu0 0.0
      %1103 = vmatpush2.msra.mxu0 0.0
      %1104 = vmatprep.subr.mxu0 0.0
      %1105 = vmatpush2.msra.mxu0 0.0
      %1106 = vmatprep.subr.mxu0 0.0
      %1107 = vmatpush2.msra.mxu0 0.0
      %1108 = vmatprep.mubr.f32.mxu0 0.0
      %1109 = vmatmul.mubr.f32.gmra.mxu0 %v1042
      %v1110 = vpop.f32.mrf.mxu0
      %v1111 = vadd.f32 0.0, %v1110
      %v1112 = vpop.f32.mrf.mxu0
      %1113 = vdwg.mxu0
      %1114 = vst.msk [vmem:[#allocation3] sm:$0xff] %vm951, %v1111
      %1115 = vrot.lane.b32.xlu0 %v940, 120
      %v1116 = vpop.permute.xlu0 %1115
      %1117 = vrot.lane.b32.xlu0 %v940, 88
      %v1118 = vpop.permute.xlu0 %1117
      %v1119 = vsel %vm951, %v1116, 0
      %v1121 = vsel %vm951, %v1118, 0
      %1123 = vmatprep.subr.mxu0 0.0
      %1124 = vmatpush1.xpose.msra.mxu0 0.0
      %1125 = vmatprep.subr.mxu0 0.0
      %1126 = vmatpush1.xpose.msra.mxu0 0.0
      %1127 = vmatprep.subr.mxu0 0.0
      %1128 = vmatpush1.xpose.msra.mxu0 0.0
      %1129 = vmatprep.subr.mxu0 0.0
      %1130 = vmatpush1.xpose.msra.mxu0 0.0
      %1131 = vmatprep.subr.mxu0 0.0
      %1132 = vmatpush1.xpose.msra.mxu0 0.0
      %1133 = vmatprep.subr.mxu0 0.0
      %1134 = vmatpush1.xpose.msra.mxu0 0.0
      %1135 = vmatprep.subr.mxu0 0.0
      %1136 = vmatpush1.xpose.msra.mxu0 0.0
      %1137 = vmatprep.subr.mxu0 0.0
      %1138 = vmatpush1.xpose.msra.mxu0 0.0
      %1139 = vmatprep.subr.mxu0 0.0
      %1140 = vmatpush1.xpose.msra.mxu0 0.0
      %1141 = vmatprep.subr.mxu0 0.0
      %1142 = vmatpush1.xpose.msra.mxu0 0.0
      %1143 = vmatprep.subr.mxu0 0.0
      %1144 = vmatpush1.xpose.msra.mxu0 0.0
      %1145 = vmatprep.subr.mxu0 0.0
      %1146 = vmatpush1.xpose.msra.mxu0 0.0
      %1147 = vmatprep.subr.mxu0 0.0
      %1148 = vmatpush1.xpose.msra.mxu0 0.0
      %1149 = vmatprep.subr.mxu0 0.0
      %1150 = vmatpush1.xpose.msra.mxu0 0.0
      %1151 = vmatprep.subr.mxu0 0.0
      %1152 = vmatpush1.xpose.msra.mxu0 0.0
      %1153 = vmatprep.subr.mxu0 0.0
      %1154 = vmatpush1.xpose.msra.mxu0 %v1121
      %1155 = vmatprep.subr.mxu0 0.0
      %1156 = vmatpush2.xpose.msra.mxu0 0.0
      %1157 = vmatprep.subr.mxu0 0.0
      %1158 = vmatpush2.xpose.msra.mxu0 0.0
      %1159 = vmatprep.subr.mxu0 0.0
      %1160 = vmatpush2.xpose.msra.mxu0 0.0
      %1161 = vmatprep.subr.mxu0 0.0
      %1162 = vmatpush2.xpose.msra.mxu0 0.0
      %1163 = vmatprep.subr.mxu0 0.0
      %1164 = vmatpush2.xpose.msra.mxu0 0.0
      %1165 = vmatprep.subr.mxu0 0.0
      %1166 = vmatpush2.xpose.msra.mxu0 0.0
      %1167 = vmatprep.subr.mxu0 0.0
      %1168 = vmatpush2.xpose.msra.mxu0 0.0
      %1169 = vmatprep.subr.mxu0 0.0
      %1170 = vmatpush2.xpose.msra.mxu0 0.0
      %1171 = vmatprep.subr.mxu0 0.0
      %1172 = vmatpush2.xpose.msra.mxu0 0.0
      %1173 = vmatprep.subr.mxu0 0.0
      %1174 = vmatpush2.xpose.msra.mxu0 0.0
      %1175 = vmatprep.subr.mxu0 0.0
      %1176 = vmatpush2.xpose.msra.mxu0 0.0
      %1177 = vmatprep.subr.mxu0 0.0
      %1178 = vmatpush2.xpose.msra.mxu0 0.0
      %1179 = vmatprep.subr.mxu0 0.0
      %1180 = vmatpush2.xpose.msra.mxu0 0.0
      %1181 = vmatprep.subr.mxu0 0.0
      %1182 = vmatpush2.xpose.msra.mxu0 0.0
      %1183 = vmatprep.subr.mxu0 0.0
      %1184 = vmatpush2.xpose.msra.mxu0 0.0
      %1185 = vmatprep.subr.mxu0 0.0
      %1186 = vmatpush2.xpose.msra.mxu0 0.0
      %1187 = vmatprep.mubr.f32.mxu0 0.0
      %1188 = vmatmul.mubr.f32.gmra.mxu0 %v1119
      %v1189 = vpop.f32.mrf.mxu0
      %v1190 = vadd.f32 0.0, %v1189
      %v1191 = vpop.f32.mrf.mxu0
      %1192 = vdwg.mxu0
      %v1193 = vmul.f32 %v1190, 0.35355338
      %v1194 = vsel %vm951, %v1193, -inf
      %1195 = vmax.xlane.f32.xlu0 %v1194
      %v1196 = vpop.xlane.xlu0 %1195
      %v1197 = vsub.f32 %v1193, %v1196
      %v1198 = vmul.f32 %v1197, 1.442695
      %v1199 = vpow.pop %v1198
      %v1200 = vsel %vm951, %v1199, 0.0
      %1201 = vadd.xlane.f32.xlu0 %v1200
      %v1202 = vpop.xlane.xlu0 %1201
      %v1203 = vrcp.pop %v1202
      %v1204 = vmul.f32 %v1199, %v1203
      %1205 = vrot.lane.b32.xlu0 %v940, 56
      %v1206 = vpop.permute.xlu0 %1205
      %v1209 = vsel %vm951, %v1204, 0
      %1211 = vmatprep.subr.mxu0 0.0
      %1212 = vmatpush1.msra.mxu0 0.0
      %1213 = vmatprep.subr.mxu0 0.0
      %1214 = vmatpush1.msra.mxu0 0.0
      %1215 = vmatprep.subr.mxu0 0.0
      %1216 = vmatpush1.msra.mxu0 0.0
      %1217 = vmatprep.subr.mxu0 0.0
      %1218 = vmatpush1.msra.mxu0 0.0
      %1219 = vmatprep.subr.mxu0 0.0
      %1220 = vmatpush1.msra.mxu0 0.0
      %1221 = vmatprep.subr.mxu0 0.0
      %1222 = vmatpush1.msra.mxu0 0.0
      %1223 = vmatprep.subr.mxu0 0.0
      %1224 = vmatpush1.msra.mxu0 0.0
      %1225 = vmatprep.subr.mxu0 0.0
      %1226 = vmatpush1.msra.mxu0 0.0
      %1227 = vmatprep.subr.mxu0 0.0
      %1228 = vmatpush1.msra.mxu0 0.0
      %1229 = vmatprep.subr.mxu0 0.0
      %1230 = vmatpush1.msra.mxu0 0.0
      %1231 = vmatprep.subr.mxu0 0.0
      %1232 = vmatpush1.msra.mxu0 0.0
      %1233 = vmatprep.subr.mxu0 0.0
      %1234 = vmatpush1.msra.mxu0 0.0
      %1235 = vmatprep.subr.mxu0 0.0
      %1236 = vmatpush1.msra.mxu0 0.0
      %1237 = vmatprep.subr.mxu0 0.0
      %1238 = vmatpush1.msra.mxu0 0.0
      %1239 = vmatprep.subr.mxu0 0.0
      %1240 = vmatpush1.msra.mxu0 0.0
      %1241 = vmatprep.subr.mxu0 0.0
      %1242 = vmatpush1.msra.mxu0 %v1206
      %1243 = vmatprep.subr.mxu0 0.0
      %1244 = vmatpush2.msra.mxu0 0.0
      %1245 = vmatprep.subr.mxu0 0.0
      %1246 = vmatpush2.msra.mxu0 0.0
      %1247 = vmatprep.subr.mxu0 0.0
      %1248 = vmatpush2.msra.mxu0 0.0
      %1249 = vmatprep.subr.mxu0 0.0
      %1250 = vmatpush2.msra.mxu0 0.0
      %1251 = vmatprep.subr.mxu0 0.0
      %1252 = vmatpush2.msra.mxu0 0.0
      %1253 = vmatprep.subr.mxu0 0.0
      %1254 = vmatpush2.msra.mxu0 0.0
      %1255 = vmatprep.subr.mxu0 0.0
      %1256 = vmatpush2.msra.mxu0 0.0
      %1257 = vmatprep.subr.mxu0 0.0
      %1258 = vmatpush2.msra.mxu0 0.0
      %1259 = vmatprep.subr.mxu0 0.0
      %1260 = vmatpush2.msra.mxu0 0.0
      %1261 = vmatprep.subr.mxu0 0.0
      %1262 = vmatpush2.msra.mxu0 0.0
      %1263 = vmatprep.subr.mxu0 0.0
      %1264 = vmatpush2.msra.mxu0 0.0
      %1265 = vmatprep.subr.mxu0 0.0
      %1266 = vmatpush2.msra.mxu0 0.0
      %1267 = vmatprep.subr.mxu0 0.0
      %1268 = vmatpush2.msra.mxu0 0.0
      %1269 = vmatprep.subr.mxu0 0.0
      %1270 = vmatpush2.msra.mxu0 0.0
      %1271 = vmatprep.subr.mxu0 0.0
      %1272 = vmatpush2.msra.mxu0 0.0
      %1273 = vmatprep.subr.mxu0 0.0
      %1274 = vmatpush2.msra.mxu0 0.0
      %1275 = vmatprep.mubr.f32.mxu0 0.0
      %1276 = vmatmul.mubr.f32.gmra.mxu0 %v1209
      %v1277 = vpop.f32.mrf.mxu0
      %v1278 = vadd.f32 0.0, %v1277
      %v1279 = vpop.f32.mrf.mxu0
      %1280 = vdwg.mxu0
      %1282 = vrot.lane.b32.xlu0 %v1278, 8
      %v1283 = vpop.permute.xlu0 %1282
      %vm1285 = vcmask 130112
      %1286 = vst.msk [vmem:[#allocation3] sm:$0xff] %vm1285, %v1283
      %1287 = vrot.lane.b32.xlu0 %v940, 112
      %v1288 = vpop.permute.xlu0 %1287
      %1289 = vrot.lane.b32.xlu0 %v940, 80
      %v1290 = vpop.permute.xlu0 %1289
      %v1291 = vsel %vm951, %v1288, 0
      %v1293 = vsel %vm951, %v1290, 0
      %1295 = vmatprep.subr.mxu0 0.0
      %1296 = vmatpush1.xpose.msra.mxu0 0.0
      %1297 = vmatprep.subr.mxu0 0.0
      %1298 = vmatpush1.xpose.msra.mxu0 0.0
      %1299 = vmatprep.subr.mxu0 0.0
      %1300 = vmatpush1.xpose.msra.mxu0 0.0
      %1301 = vmatprep.subr.mxu0 0.0
      %1302 = vmatpush1.xpose.msra.mxu0 0.0
      %1303 = vmatprep.subr.mxu0 0.0
      %1304 = vmatpush1.xpose.msra.mxu0 0.0
      %1305 = vmatprep.subr.mxu0 0.0
      %1306 = vmatpush1.xpose.msra.mxu0 0.0
      %1307 = vmatprep.subr.mxu0 0.0
      %1308 = vmatpush1.xpose.msra.mxu0 0.0
      %1309 = vmatprep.subr.mxu0 0.0
      %1310 = vmatpush1.xpose.msra.mxu0 0.0
      %1311 = vmatprep.subr.mxu0 0.0
      %1312 = vmatpush1.xpose.msra.mxu0 0.0
      %1313 = vmatprep.subr.mxu0 0.0
      %1314 = vmatpush1.xpose.msra.mxu0 0.0
      %1315 = vmatprep.subr.mxu0 0.0
      %1316 = vmatpush1.xpose.msra.mxu0 0.0
      %1317 = vmatprep.subr.mxu0 0.0
      %1318 = vmatpush1.xpose.msra.mxu0 0.0
      %1319 = vmatprep.subr.mxu0 0.0
      %1320 = vmatpush1.xpose.msra.mxu0 0.0
      %1321 = vmatprep.subr.mxu0 0.0
      %1322 = vmatpush1.xpose.msra.mxu0 0.0
      %1323 = vmatprep.subr.mxu0 0.0
      %1324 = vmatpush1.xpose.msra.mxu0 0.0
      %1325 = vmatprep.subr.mxu0 0.0
      %1326 = vmatpush1.xpose.msra.mxu0 %v1293
      %1327 = vmatprep.subr.mxu0 0.0
      %1328 = vmatpush2.xpose.msra.mxu0 0.0
      %1329 = vmatprep.subr.mxu0 0.0
      %1330 = vmatpush2.xpose.msra.mxu0 0.0
      %1331 = vmatprep.subr.mxu0 0.0
      %1332 = vmatpush2.xpose.msra.mxu0 0.0
      %1333 = vmatprep.subr.mxu0 0.0
      %1334 = vmatpush2.xpose.msra.mxu0 0.0
      %1335 = vmatprep.subr.mxu0 0.0
      %1336 = vmatpush2.xpose.msra.mxu0 0.0
      %1337 = vmatprep.subr.mxu0 0.0
      %1338 = vmatpush2.xpose.msra.mxu0 0.0
      %1339 = vmatprep.subr.mxu0 0.0
      %1340 = vmatpush2.xpose.msra.mxu0 0.0
      %1341 = vmatprep.subr.mxu0 0.0
      %1342 = vmatpush2.xpose.msra.mxu0 0.0
      %1343 = vmatprep.subr.mxu0 0.0
      %1344 = vmatpush2.xpose.msra.mxu0 0.0
      %1345 = vmatprep.subr.mxu0 0.0
      %1346 = vmatpush2.xpose.msra.mxu0 0.0
      %1347 = vmatprep.subr.mxu0 0.0
      %1348 = vmatpush2.xpose.msra.mxu0 0.0
      %1349 = vmatprep.subr.mxu0 0.0
      %1350 = vmatpush2.xpose.msra.mxu0 0.0
      %1351 = vmatprep.subr.mxu0 0.0
      %1352 = vmatpush2.xpose.msra.mxu0 0.0
      %1353 = vmatprep.subr.mxu0 0.0
      %1354 = vmatpush2.xpose.msra.mxu0 0.0
      %1355 = vmatprep.subr.mxu0 0.0
      %1356 = vmatpush2.xpose.msra.mxu0 0.0
      %1357 = vmatprep.subr.mxu0 0.0
      %1358 = vmatpush2.xpose.msra.mxu0 0.0
      %1359 = vmatprep.mubr.f32.mxu0 0.0
      %1360 = vmatmul.mubr.f32.gmra.mxu0 %v1291
      %v1361 = vpop.f32.mrf.mxu0
      %v1362 = vadd.f32 0.0, %v1361
      %v1363 = vpop.f32.mrf.mxu0
      %1364 = vdwg.mxu0
      %v1365 = vmul.f32 %v1362, 0.35355338
      %v1366 = vsel %vm951, %v1365, -inf
      %1367 = vmax.xlane.f32.xlu0 %v1366
      %v1368 = vpop.xlane.xlu0 %1367
      %v1369 = vsub.f32 %v1365, %v1368
      %v1370 = vmul.f32 %v1369, 1.442695
      %v1371 = vpow.pop %v1370
      %v1372 = vsel %vm951, %v1371, 0.0
      %1373 = vadd.xlane.f32.xlu0 %v1372
      %v1374 = vpop.xlane.xlu0 %1373
      %v1375 = vrcp.pop %v1374
      %v1376 = vmul.f32 %v1371, %v1375
      %1377 = vrot.lane.b32.xlu0 %v940, 48
      %v1378 = vpop.permute.xlu0 %1377
      %v1381 = vsel %vm951, %v1376, 0
      %1383 = vmatprep.subr.mxu0 0.0
      %1384 = vmatpush1.msra.mxu0 0.0
      %1385 = vmatprep.subr.mxu0 0.0
      %1386 = vmatpush1.msra.mxu0 0.0
      %1387 = vmatprep.subr.mxu0 0.0
      %1388 = vmatpush1.msra.mxu0 0.0
      %1389 = vmatprep.subr.mxu0 0.0
      %1390 = vmatpush1.msra.mxu0 0.0
      %1391 = vmatprep.subr.mxu0 0.0
      %1392 = vmatpush1.msra.mxu0 0.0
      %1393 = vmatprep.subr.mxu0 0.0
      %1394 = vmatpush1.msra.mxu0 0.0
      %1395 = vmatprep.subr.mxu0 0.0
      %1396 = vmatpush1.msra.mxu0 0.0
      %1397 = vmatprep.subr.mxu0 0.0
      %1398 = vmatpush1.msra.mxu0 0.0
      %1399 = vmatprep.subr.mxu0 0.0
      %1400 = vmatpush1.msra.mxu0 0.0
      %1401 = vmatprep.subr.mxu0 0.0
      %1402 = vmatpush1.msra.mxu0 0.0
      %1403 = vmatprep.subr.mxu0 0.0
      %1404 = vmatpush1.msra.mxu0 0.0
      %1405 = vmatprep.subr.mxu0 0.0
      %1406 = vmatpush1.msra.mxu0 0.0
      %1407 = vmatprep.subr.mxu0 0.0
      %1408 = vmatpush1.msra.mxu0 0.0
      %1409 = vmatprep.subr.mxu0 0.0
      %1410 = vmatpush1.msra.mxu0 0.0
      %1411 = vmatprep.subr.mxu0 0.0
      %1412 = vmatpush1.msra.mxu0 0.0
      %1413 = vmatprep.subr.mxu0 0.0
      %1414 = vmatpush1.msra.mxu0 %v1378
      %1415 = vmatprep.subr.mxu0 0.0
      %1416 = vmatpush2.msra.mxu0 0.0
      %1417 = vmatprep.subr.mxu0 0.0
      %1418 = vmatpush2.msra.mxu0 0.0
      %1419 = vmatprep.subr.mxu0 0.0
      %1420 = vmatpush2.msra.mxu0 0.0
      %1421 = vmatprep.subr.mxu0 0.0
      %1422 = vmatpush2.msra.mxu0 0.0
      %1423 = vmatprep.subr.mxu0 0.0
      %1424 = vmatpush2.msra.mxu0 0.0
      %1425 = vmatprep.subr.mxu0 0.0
      %1426 = vmatpush2.msra.mxu0 0.0
      %1427 = vmatprep.subr.mxu0 0.0
      %1428 = vmatpush2.msra.mxu0 0.0
      %1429 = vmatprep.subr.mxu0 0.0
      %1430 = vmatpush2.msra.mxu0 0.0
      %1431 = vmatprep.subr.mxu0 0.0
      %1432 = vmatpush2.msra.mxu0 0.0
      %1433 = vmatprep.subr.mxu0 0.0
      %1434 = vmatpush2.msra.mxu0 0.0
      %1435 = vmatprep.subr.mxu0 0.0
      %1436 = vmatpush2.msra.mxu0 0.0
      %1437 = vmatprep.subr.mxu0 0.0
      %1438 = vmatpush2.msra.mxu0 0.0
      %1439 = vmatprep.subr.mxu0 0.0
      %1440 = vmatpush2.msra.mxu0 0.0
      %1441 = vmatprep.subr.mxu0 0.0
      %1442 = vmatpush2.msra.mxu0 0.0
      %1443 = vmatprep.subr.mxu0 0.0
      %1444 = vmatpush2.msra.mxu0 0.0
      %1445 = vmatprep.subr.mxu0 0.0
      %1446 = vmatpush2.msra.mxu0 0.0
      %1447 = vmatprep.mubr.f32.mxu0 0.0
      %1448 = vmatmul.mubr.f32.gmra.mxu0 %v1381
      %v1449 = vpop.f32.mrf.mxu0
      %v1450 = vadd.f32 0.0, %v1449
      %v1451 = vpop.f32.mrf.mxu0
      %1452 = vdwg.mxu0
      %1454 = vrot.lane.b32.xlu0 %v1450, 16
      %v1455 = vpop.permute.xlu0 %1454
      %vm1457 = vcmask 195712
      %1458 = vst.msk [vmem:[#allocation3] sm:$0xff] %vm1457, %v1455
      %1459 = vrot.lane.b32.xlu0 %v940, 104
      %v1460 = vpop.permute.xlu0 %1459
      %1461 = vrot.lane.b32.xlu0 %v940, 72
      %v1462 = vpop.permute.xlu0 %1461
      %v1463 = vsel %vm951, %v1460, 0
      %v1465 = vsel %vm951, %v1462, 0
      %1467 = vmatprep.subr.mxu0 0.0
      %1468 = vmatpush1.xpose.msra.mxu0 0.0
      %1469 = vmatprep.subr.mxu0 0.0
      %1470 = vmatpush1.xpose.msra.mxu0 0.0
      %1471 = vmatprep.subr.mxu0 0.0
      %1472 = vmatpush1.xpose.msra.mxu0 0.0
      %1473 = vmatprep.subr.mxu0 0.0
      %1474 = vmatpush1.xpose.msra.mxu0 0.0
      %1475 = vmatprep.subr.mxu0 0.0
      %1476 = vmatpush1.xpose.msra.mxu0 0.0
      %1477 = vmatprep.subr.mxu0 0.0
      %1478 = vmatpush1.xpose.msra.mxu0 0.0
      %1479 = vmatprep.subr.mxu0 0.0
      %1480 = vmatpush1.xpose.msra.mxu0 0.0
      %1481 = vmatprep.subr.mxu0 0.0
      %1482 = vmatpush1.xpose.msra.mxu0 0.0
      %1483 = vmatprep.subr.mxu0 0.0
      %1484 = vmatpush1.xpose.msra.mxu0 0.0
      %1485 = vmatprep.subr.mxu0 0.0
      %1486 = vmatpush1.xpose.msra.mxu0 0.0
      %1487 = vmatprep.subr.mxu0 0.0
      %1488 = vmatpush1.xpose.msra.mxu0 0.0
      %1489 = vmatprep.subr.mxu0 0.0
      %1490 = vmatpush1.xpose.msra.mxu0 0.0
      %1491 = vmatprep.subr.mxu0 0.0
      %1492 = vmatpush1.xpose.msra.mxu0 0.0
      %1493 = vmatprep.subr.mxu0 0.0
      %1494 = vmatpush1.xpose.msra.mxu0 0.0
      %1495 = vmatprep.subr.mxu0 0.0
      %1496 = vmatpush1.xpose.msra.mxu0 0.0
      %1497 = vmatprep.subr.mxu0 0.0
      %1498 = vmatpush1.xpose.msra.mxu0 %v1465
      %1499 = vmatprep.subr.mxu0 0.0
      %1500 = vmatpush2.xpose.msra.mxu0 0.0
      %1501 = vmatprep.subr.mxu0 0.0
      %1502 = vmatpush2.xpose.msra.mxu0 0.0
      %1503 = vmatprep.subr.mxu0 0.0
      %1504 = vmatpush2.xpose.msra.mxu0 0.0
      %1505 = vmatprep.subr.mxu0 0.0
      %1506 = vmatpush2.xpose.msra.mxu0 0.0
      %1507 = vmatprep.subr.mxu0 0.0
      %1508 = vmatpush2.xpose.msra.mxu0 0.0
      %1509 = vmatprep.subr.mxu0 0.0
      %1510 = vmatpush2.xpose.msra.mxu0 0.0
      %1511 = vmatprep.subr.mxu0 0.0
      %1512 = vmatpush2.xpose.msra.mxu0 0.0
      %1513 = vmatprep.subr.mxu0 0.0
      %1514 = vmatpush2.xpose.msra.mxu0 0.0
      %1515 = vmatprep.subr.mxu0 0.0
      %1516 = vmatpush2.xpose.msra.mxu0 0.0
      %1517 = vmatprep.subr.mxu0 0.0
      %1518 = vmatpush2.xpose.msra.mxu0 0.0
      %1519 = vmatprep.subr.mxu0 0.0
      %1520 = vmatpush2.xpose.msra.mxu0 0.0
      %1521 = vmatprep.subr.mxu0 0.0
      %1522 = vmatpush2.xpose.msra.mxu0 0.0
      %1523 = vmatprep.subr.mxu0 0.0
      %1524 = vmatpush2.xpose.msra.mxu0 0.0
      %1525 = vmatprep.subr.mxu0 0.0
      %1526 = vmatpush2.xpose.msra.mxu0 0.0
      %1527 = vmatprep.subr.mxu0 0.0
      %1528 = vmatpush2.xpose.msra.mxu0 0.0
      %1529 = vmatprep.subr.mxu0 0.0
      %1530 = vmatpush2.xpose.msra.mxu0 0.0
      %1531 = vmatprep.mubr.f32.mxu0 0.0
      %1532 = vmatmul.mubr.f32.gmra.mxu0 %v1463
      %v1533 = vpop.f32.mrf.mxu0
      %v1534 = vadd.f32 0.0, %v1533
      %v1535 = vpop.f32.mrf.mxu0
      %1536 = vdwg.mxu0
      %v1537 = vmul.f32 %v1534, 0.35355338
      %v1538 = vsel %vm951, %v1537, -inf
      %1539 = vmax.xlane.f32.xlu0 %v1538
      %v1540 = vpop.xlane.xlu0 %1539
      %v1541 = vsub.f32 %v1537, %v1540
      %v1542 = vmul.f32 %v1541, 1.442695
      %v1543 = vpow.pop %v1542
      %v1544 = vsel %vm951, %v1543, 0.0
      %1545 = vadd.xlane.f32.xlu0 %v1544
      %v1546 = vpop.xlane.xlu0 %1545
      %v1547 = vrcp.pop %v1546
      %v1548 = vmul.f32 %v1543, %v1547
      %1549 = vrot.lane.b32.xlu0 %v940, 40
      %v1550 = vpop.permute.xlu0 %1549
      %v1553 = vsel %vm951, %v1548, 0
      %1555 = vmatprep.subr.mxu0 0.0
      %1556 = vmatpush1.msra.mxu0 0.0
      %1557 = vmatprep.subr.mxu0 0.0
      %1558 = vmatpush1.msra.mxu0 0.0
      %1559 = vmatprep.subr.mxu0 0.0
      %1560 = vmatpush1.msra.mxu0 0.0
      %1561 = vmatprep.subr.mxu0 0.0
      %1562 = vmatpush1.msra.mxu0 0.0
      %1563 = vmatprep.subr.mxu0 0.0
      %1564 = vmatpush1.msra.mxu0 0.0
      %1565 = vmatprep.subr.mxu0 0.0
      %1566 = vmatpush1.msra.mxu0 0.0
      %1567 = vmatprep.subr.mxu0 0.0
      %1568 = vmatpush1.msra.mxu0 0.0
      %1569 = vmatprep.subr.mxu0 0.0
      %1570 = vmatpush1.msra.mxu0 0.0
      %1571 = vmatprep.subr.mxu0 0.0
      %1572 = vmatpush1.msra.mxu0 0.0
      %1573 = vmatprep.subr.mxu0 0.0
      %1574 = vmatpush1.msra.mxu0 0.0
      %1575 = vmatprep.subr.mxu0 0.0
      %1576 = vmatpush1.msra.mxu0 0.0
      %1577 = vmatprep.subr.mxu0 0.0
      %1578 = vmatpush1.msra.mxu0 0.0
      %1579 = vmatprep.subr.mxu0 0.0
      %1580 = vmatpush1.msra.mxu0 0.0
      %1581 = vmatprep.subr.mxu0 0.0
      %1582 = vmatpush1.msra.mxu0 0.0
      %1583 = vmatprep.subr.mxu0 0.0
      %1584 = vmatpush1.msra.mxu0 0.0
      %1585 = vmatprep.subr.mxu0 0.0
      %1586 = vmatpush1.msra.mxu0 %v1550
      %1587 = vmatprep.subr.mxu0 0.0
      %1588 = vmatpush2.msra.mxu0 0.0
      %1589 = vmatprep.subr.mxu0 0.0
      %1590 = vmatpush2.msra.mxu0 0.0
      %1591 = vmatprep.subr.mxu0 0.0
      %1592 = vmatpush2.msra.mxu0 0.0
      %1593 = vmatprep.subr.mxu0 0.0
      %1594 = vmatpush2.msra.mxu0 0.0
      %1595 = vmatprep.subr.mxu0 0.0
      %1596 = vmatpush2.msra.mxu0 0.0
      %1597 = vmatprep.subr.mxu0 0.0
      %1598 = vmatpush2.msra.mxu0 0.0
      %1599 = vmatprep.subr.mxu0 0.0
      %1600 = vmatpush2.msra.mxu0 0.0
      %1601 = vmatprep.subr.mxu0 0.0
      %1602 = vmatpush2.msra.mxu0 0.0
      %1603 = vmatprep.subr.mxu0 0.0
      %1604 = vmatpush2.msra.mxu0 0.0
      %1605 = vmatprep.subr.mxu0 0.0
      %1606 = vmatpush2.msra.mxu0 0.0
      %1607 = vmatprep.subr.mxu0 0.0
      %1608 = vmatpush2.msra.mxu0 0.0
      %1609 = vmatprep.subr.mxu0 0.0
      %1610 = vmatpush2.msra.mxu0 0.0
      %1611 = vmatprep.subr.mxu0 0.0
      %1612 = vmatpush2.msra.mxu0 0.0
      %1613 = vmatprep.subr.mxu0 0.0
      %1614 = vmatpush2.msra.mxu0 0.0
      %1615 = vmatprep.subr.mxu0 0.0
      %1616 = vmatpush2.msra.mxu0 0.0
      %1617 = vmatprep.subr.mxu0 0.0
      %1618 = vmatpush2.msra.mxu0 0.0
      %1619 = vmatprep.mubr.f32.mxu0 0.0
      %1620 = vmatmul.mubr.f32.gmra.mxu0 %v1553
      %v1621 = vpop.f32.mrf.mxu0
      %v1622 = vadd.f32 0.0, %v1621
      %v1623 = vpop.f32.mrf.mxu0
      %1624 = vdwg.mxu0
      %1626 = vrot.lane.b32.xlu0 %v1622, 24
      %v1627 = vpop.permute.xlu0 %1626
      %vm1629 = vcmask 261312
      %1630 = vst.msk [vmem:[#allocation3] sm:$0xff] %vm1629, %v1627
      %1632 = vrot.lane.b32.xlu0 %v945, 96
      %v1633 = vpop.permute.xlu0 %1632
      %v1634 = vsel %vm951, %v945, 0
      %v1636 = vsel %vm951, %v1633, 0
      %1638 = vmatprep.subr.mxu0 0.0
      %1639 = vmatpush1.xpose.msra.mxu0 0.0
      %1640 = vmatprep.subr.mxu0 0.0
      %1641 = vmatpush1.xpose.msra.mxu0 0.0
      %1642 = vmatprep.subr.mxu0 0.0
      %1643 = vmatpush1.xpose.msra.mxu0 0.0
      %1644 = vmatprep.subr.mxu0 0.0
      %1645 = vmatpush1.xpose.msra.mxu0 0.0
      %1646 = vmatprep.subr.mxu0 0.0
      %1647 = vmatpush1.xpose.msra.mxu0 0.0
      %1648 = vmatprep.subr.mxu0 0.0
      %1649 = vmatpush1.xpose.msra.mxu0 0.0
      %1650 = vmatprep.subr.mxu0 0.0
      %1651 = vmatpush1.xpose.msra.mxu0 0.0
      %1652 = vmatprep.subr.mxu0 0.0
      %1653 = vmatpush1.xpose.msra.mxu0 0.0
      %1654 = vmatprep.subr.mxu0 0.0
      %1655 = vmatpush1.xpose.msra.mxu0 0.0
      %1656 = vmatprep.subr.mxu0 0.0
      %1657 = vmatpush1.xpose.msra.mxu0 0.0
      %1658 = vmatprep.subr.mxu0 0.0
      %1659 = vmatpush1.xpose.msra.mxu0 0.0
      %1660 = vmatprep.subr.mxu0 0.0
      %1661 = vmatpush1.xpose.msra.mxu0 0.0
      %1662 = vmatprep.subr.mxu0 0.0
      %1663 = vmatpush1.xpose.msra.mxu0 0.0
      %1664 = vmatprep.subr.mxu0 0.0
      %1665 = vmatpush1.xpose.msra.mxu0 0.0
      %1666 = vmatprep.subr.mxu0 0.0
      %1667 = vmatpush1.xpose.msra.mxu0 0.0
      %1668 = vmatprep.subr.mxu0 0.0
      %1669 = vmatpush1.xpose.msra.mxu0 %v1636
      %1670 = vmatprep.subr.mxu0 0.0
      %1671 = vmatpush2.xpose.msra.mxu0 0.0
      %1672 = vmatprep.subr.mxu0 0.0
      %1673 = vmatpush2.xpose.msra.mxu0 0.0
      %1674 = vmatprep.subr.mxu0 0.0
      %1675 = vmatpush2.xpose.msra.mxu0 0.0
      %1676 = vmatprep.subr.mxu0 0.0
      %1677 = vmatpush2.xpose.msra.mxu0 0.0
      %1678 = vmatprep.subr.mxu0 0.0
      %1679 = vmatpush2.xpose.msra.mxu0 0.0
      %1680 = vmatprep.subr.mxu0 0.0
      %1681 = vmatpush2.xpose.msra.mxu0 0.0
      %1682 = vmatprep.subr.mxu0 0.0
      %1683 = vmatpush2.xpose.msra.mxu0 0.0
      %1684 = vmatprep.subr.mxu0 0.0
      %1685 = vmatpush2.xpose.msra.mxu0 0.0
      %1686 = vmatprep.subr.mxu0 0.0
      %1687 = vmatpush2.xpose.msra.mxu0 0.0
      %1688 = vmatprep.subr.mxu0 0.0
      %1689 = vmatpush2.xpose.msra.mxu0 0.0
      %1690 = vmatprep.subr.mxu0 0.0
      %1691 = vmatpush2.xpose.msra.mxu0 0.0
      %1692 = vmatprep.subr.mxu0 0.0
      %1693 = vmatpush2.xpose.msra.mxu0 0.0
      %1694 = vmatprep.subr.mxu0 0.0
      %1695 = vmatpush2.xpose.msra.mxu0 0.0
      %1696 = vmatprep.subr.mxu0 0.0
      %1697 = vmatpush2.xpose.msra.mxu0 0.0
      %1698 = vmatprep.subr.mxu0 0.0
      %1699 = vmatpush2.xpose.msra.mxu0 0.0
      %1700 = vmatprep.subr.mxu0 0.0
      %1701 = vmatpush2.xpose.msra.mxu0 0.0
      %1702 = vmatprep.mubr.f32.mxu0 0.0
      %1703 = vmatmul.mubr.f32.gmra.mxu0 %v1634
      %v1704 = vpop.f32.mrf.mxu0
      %v1705 = vadd.f32 0.0, %v1704
      %v1706 = vpop.f32.mrf.mxu0
      %1707 = vdwg.mxu0
      %v1708 = vmul.f32 %v1705, 0.35355338
      %v1709 = vsel %vm951, %v1708, -inf
      %1710 = vmax.xlane.f32.xlu0 %v1709
      %v1711 = vpop.xlane.xlu0 %1710
      %v1712 = vsub.f32 %v1708, %v1711
      %v1713 = vmul.f32 %v1712, 1.442695
      %v1714 = vpow.pop %v1713
      %v1715 = vsel %vm951, %v1714, 0.0
      %1716 = vadd.xlane.f32.xlu0 %v1715
      %v1717 = vpop.xlane.xlu0 %1716
      %v1718 = vrcp.pop %v1717
      %v1719 = vmul.f32 %v1714, %v1718
      %1720 = vrot.lane.b32.xlu0 %v945, 64
      %v1721 = vpop.permute.xlu0 %1720
      %v1724 = vsel %vm951, %v1719, 0
      %1726 = vmatprep.subr.mxu0 0.0
      %1727 = vmatpush1.msra.mxu0 0.0
      %1728 = vmatprep.subr.mxu0 0.0
      %1729 = vmatpush1.msra.mxu0 0.0
      %1730 = vmatprep.subr.mxu0 0.0
      %1731 = vmatpush1.msra.mxu0 0.0
      %1732 = vmatprep.subr.mxu0 0.0
      %1733 = vmatpush1.msra.mxu0 0.0
      %1734 = vmatprep.subr.mxu0 0.0
      %1735 = vmatpush1.msra.mxu0 0.0
      %1736 = vmatprep.subr.mxu0 0.0
      %1737 = vmatpush1.msra.mxu0 0.0
      %1738 = vmatprep.subr.mxu0 0.0
      %1739 = vmatpush1.msra.mxu0 0.0
      %1740 = vmatprep.subr.mxu0 0.0
      %1741 = vmatpush1.msra.mxu0 0.0
      %1742 = vmatprep.subr.mxu0 0.0
      %1743 = vmatpush1.msra.mxu0 0.0
      %1744 = vmatprep.subr.mxu0 0.0
      %1745 = vmatpush1.msra.mxu0 0.0
      %1746 = vmatprep.subr.mxu0 0.0
      %1747 = vmatpush1.msra.mxu0 0.0
      %1748 = vmatprep.subr.mxu0 0.0
      %1749 = vmatpush1.msra.mxu0 0.0
      %1750 = vmatprep.subr.mxu0 0.0
      %1751 = vmatpush1.msra.mxu0 0.0
      %1752 = vmatprep.subr.mxu0 0.0
      %1753 = vmatpush1.msra.mxu0 0.0
      %1754 = vmatprep.subr.mxu0 0.0
      %1755 = vmatpush1.msra.mxu0 0.0
      %1756 = vmatprep.subr.mxu0 0.0
      %1757 = vmatpush1.msra.mxu0 %v1721
      %1758 = vmatprep.subr.mxu0 0.0
      %1759 = vmatpush2.msra.mxu0 0.0
      %1760 = vmatprep.subr.mxu0 0.0
      %1761 = vmatpush2.msra.mxu0 0.0
      %1762 = vmatprep.subr.mxu0 0.0
      %1763 = vmatpush2.msra.mxu0 0.0
      %1764 = vmatprep.subr.mxu0 0.0
      %1765 = vmatpush2.msra.mxu0 0.0
      %1766 = vmatprep.subr.mxu0 0.0
      %1767 = vmatpush2.msra.mxu0 0.0
      %1768 = vmatprep.subr.mxu0 0.0
      %1769 = vmatpush2.msra.mxu0 0.0
      %1770 = vmatprep.subr.mxu0 0.0
      %1771 = vmatpush2.msra.mxu0 0.0
      %1772 = vmatprep.subr.mxu0 0.0
      %1773 = vmatpush2.msra.mxu0 0.0
      %1774 = vmatprep.subr.mxu0 0.0
      %1775 = vmatpush2.msra.mxu0 0.0
      %1776 = vmatprep.subr.mxu0 0.0
      %1777 = vmatpush2.msra.mxu0 0.0
      %1778 = vmatprep.subr.mxu0 0.0
      %1779 = vmatpush2.msra.mxu0 0.0
      %1780 = vmatprep.subr.mxu0 0.0
      %1781 = vmatpush2.msra.mxu0 0.0
      %1782 = vmatprep.subr.mxu0 0.0
      %1783 = vmatpush2.msra.mxu0 0.0
      %1784 = vmatprep.subr.mxu0 0.0
      %1785 = vmatpush2.msra.mxu0 0.0
      %1786 = vmatprep.subr.mxu0 0.0
      %1787 = vmatpush2.msra.mxu0 0.0
      %1788 = vmatprep.subr.mxu0 0.0
      %1789 = vmatpush2.msra.mxu0 0.0
      %1790 = vmatprep.mubr.f32.mxu0 0.0
      %1791 = vmatmul.mubr.f32.gmra.mxu0 %v1724
      %v1792 = vpop.f32.mrf.mxu0
      %v1793 = vadd.f32 0.0, %v1792
      %v1794 = vpop.f32.mrf.mxu0
      %1795 = vdwg.mxu0
      %1796 = vst.msk [vmem:[#allocation3 + $0x8] sm:$0xff] %vm951, %v1793
      %1797 = vrot.lane.b32.xlu0 %v945, 120
      %v1798 = vpop.permute.xlu0 %1797
      %1799 = vrot.lane.b32.xlu0 %v945, 88
      %v1800 = vpop.permute.xlu0 %1799
      %v1801 = vsel %vm951, %v1798, 0
      %v1803 = vsel %vm951, %v1800, 0
      %1805 = vmatprep.subr.mxu0 0.0
      %1806 = vmatpush1.xpose.msra.mxu0 0.0
      %1807 = vmatprep.subr.mxu0 0.0
      %1808 = vmatpush1.xpose.msra.mxu0 0.0
      %1809 = vmatprep.subr.mxu0 0.0
      %1810 = vmatpush1.xpose.msra.mxu0 0.0
      %1811 = vmatprep.subr.mxu0 0.0
      %1812 = vmatpush1.xpose.msra.mxu0 0.0
      %1813 = vmatprep.subr.mxu0 0.0
      %1814 = vmatpush1.xpose.msra.mxu0 0.0
      %1815 = vmatprep.subr.mxu0 0.0
      %1816 = vmatpush1.xpose.msra.mxu0 0.0
      %1817 = vmatprep.subr.mxu0 0.0
      %1818 = vmatpush1.xpose.msra.mxu0 0.0
      %1819 = vmatprep.subr.mxu0 0.0
      %1820 = vmatpush1.xpose.msra.mxu0 0.0
      %1821 = vmatprep.subr.mxu0 0.0
      %1822 = vmatpush1.xpose.msra.mxu0 0.0
      %1823 = vmatprep.subr.mxu0 0.0
      %1824 = vmatpush1.xpose.msra.mxu0 0.0
      %1825 = vmatprep.subr.mxu0 0.0
      %1826 = vmatpush1.xpose.msra.mxu0 0.0
      %1827 = vmatprep.subr.mxu0 0.0
      %1828 = vmatpush1.xpose.msra.mxu0 0.0
      %1829 = vmatprep.subr.mxu0 0.0
      %1830 = vmatpush1.xpose.msra.mxu0 0.0
      %1831 = vmatprep.subr.mxu0 0.0
      %1832 = vmatpush1.xpose.msra.mxu0 0.0
      %1833 = vmatprep.subr.mxu0 0.0
      %1834 = vmatpush1.xpose.msra.mxu0 0.0
      %1835 = vmatprep.subr.mxu0 0.0
      %1836 = vmatpush1.xpose.msra.mxu0 %v1803
      %1837 = vmatprep.subr.mxu0 0.0
      %1838 = vmatpush2.xpose.msra.mxu0 0.0
      %1839 = vmatprep.subr.mxu0 0.0
      %1840 = vmatpush2.xpose.msra.mxu0 0.0
      %1841 = vmatprep.subr.mxu0 0.0
      %1842 = vmatpush2.xpose.msra.mxu0 0.0
      %1843 = vmatprep.subr.mxu0 0.0
      %1844 = vmatpush2.xpose.msra.mxu0 0.0
      %1845 = vmatprep.subr.mxu0 0.0
      %1846 = vmatpush2.xpose.msra.mxu0 0.0
      %1847 = vmatprep.subr.mxu0 0.0
      %1848 = vmatpush2.xpose.msra.mxu0 0.0
      %1849 = vmatprep.subr.mxu0 0.0
      %1850 = vmatpush2.xpose.msra.mxu0 0.0
      %1851 = vmatprep.subr.mxu0 0.0
      %1852 = vmatpush2.xpose.msra.mxu0 0.0
      %1853 = vmatprep.subr.mxu0 0.0
      %1854 = vmatpush2.xpose.msra.mxu0 0.0
      %1855 = vmatprep.subr.mxu0 0.0
      %1856 = vmatpush2.xpose.msra.mxu0 0.0
      %1857 = vmatprep.subr.mxu0 0.0
      %1858 = vmatpush2.xpose.msra.mxu0 0.0
      %1859 = vmatprep.subr.mxu0 0.0
      %1860 = vmatpush2.xpose.msra.mxu0 0.0
      %1861 = vmatprep.subr.mxu0 0.0
      %1862 = vmatpush2.xpose.msra.mxu0 0.0
      %1863 = vmatprep.subr.mxu0 0.0
      %1864 = vmatpush2.xpose.msra.mxu0 0.0
      %1865 = vmatprep.subr.mxu0 0.0
      %1866 = vmatpush2.xpose.msra.mxu0 0.0
      %1867 = vmatprep.subr.mxu0 0.0
      %1868 = vmatpush2.xpose.msra.mxu0 0.0
      %1869 = vmatprep.mubr.f32.mxu0 0.0
      %1870 = vmatmul.mubr.f32.gmra.mxu0 %v1801
      %v1871 = vpop.f32.mrf.mxu0
      %v1872 = vadd.f32 0.0, %v1871
      %v1873 = vpop.f32.mrf.mxu0
      %1874 = vdwg.mxu0
      %v1875 = vmul.f32 %v1872, 0.35355338
      %v1876 = vsel %vm951, %v1875, -inf
      %1877 = vmax.xlane.f32.xlu0 %v1876
      %v1878 = vpop.xlane.xlu0 %1877
      %v1879 = vsub.f32 %v1875, %v1878
      %v1880 = vmul.f32 %v1879, 1.442695
      %v1881 = vpow.pop %v1880
      %v1882 = vsel %vm951, %v1881, 0.0
      %1883 = vadd.xlane.f32.xlu0 %v1882
      %v1884 = vpop.xlane.xlu0 %1883
      %v1885 = vrcp.pop %v1884
      %v1886 = vmul.f32 %v1881, %v1885
      %1887 = vrot.lane.b32.xlu0 %v945, 56
      %v1888 = vpop.permute.xlu0 %1887
      %v1891 = vsel %vm951, %v1886, 0
      %1893 = vmatprep.subr.mxu0 0.0
      %1894 = vmatpush1.msra.mxu0 0.0
      %1895 = vmatprep.subr.mxu0 0.0
      %1896 = vmatpush1.msra.mxu0 0.0
      %1897 = vmatprep.subr.mxu0 0.0
      %1898 = vmatpush1.msra.mxu0 0.0
      %1899 = vmatprep.subr.mxu0 0.0
      %1900 = vmatpush1.msra.mxu0 0.0
      %1901 = vmatprep.subr.mxu0 0.0
      %1902 = vmatpush1.msra.mxu0 0.0
      %1903 = vmatprep.subr.mxu0 0.0
      %1904 = vmatpush1.msra.mxu0 0.0
      %1905 = vmatprep.subr.mxu0 0.0
      %1906 = vmatpush1.msra.mxu0 0.0
      %1907 = vmatprep.subr.mxu0 0.0
      %1908 = vmatpush1.msra.mxu0 0.0
      %1909 = vmatprep.subr.mxu0 0.0
      %1910 = vmatpush1.msra.mxu0 0.0
      %1911 = vmatprep.subr.mxu0 0.0
      %1912 = vmatpush1.msra.mxu0 0.0
      %1913 = vmatprep.subr.mxu0 0.0
      %1914 = vmatpush1.msra.mxu0 0.0
      %1915 = vmatprep.subr.mxu0 0.0
      %1916 = vmatpush1.msra.mxu0 0.0
      %1917 = vmatprep.subr.mxu0 0.0
      %1918 = vmatpush1.msra.mxu0 0.0
      %1919 = vmatprep.subr.mxu0 0.0
      %1920 = vmatpush1.msra.mxu0 0.0
      %1921 = vmatprep.subr.mxu0 0.0
      %1922 = vmatpush1.msra.mxu0 0.0
      %1923 = vmatprep.subr.mxu0 0.0
      %1924 = vmatpush1.msra.mxu0 %v1888
      %1925 = vmatprep.subr.mxu0 0.0
      %1926 = vmatpush2.msra.mxu0 0.0
      %1927 = vmatprep.subr.mxu0 0.0
      %1928 = vmatpush2.msra.mxu0 0.0
      %1929 = vmatprep.subr.mxu0 0.0
      %1930 = vmatpush2.msra.mxu0 0.0
      %1931 = vmatprep.subr.mxu0 0.0
      %1932 = vmatpush2.msra.mxu0 0.0
      %1933 = vmatprep.subr.mxu0 0.0
      %1934 = vmatpush2.msra.mxu0 0.0
      %1935 = vmatprep.subr.mxu0 0.0
      %1936 = vmatpush2.msra.mxu0 0.0
      %1937 = vmatprep.subr.mxu0 0.0
      %1938 = vmatpush2.msra.mxu0 0.0
      %1939 = vmatprep.subr.mxu0 0.0
      %1940 = vmatpush2.msra.mxu0 0.0
      %1941 = vmatprep.subr.mxu0 0.0
      %1942 = vmatpush2.msra.mxu0 0.0
      %1943 = vmatprep.subr.mxu0 0.0
      %1944 = vmatpush2.msra.mxu0 0.0
      %1945 = vmatprep.subr.mxu0 0.0
      %1946 = vmatpush2.msra.mxu0 0.0
      %1947 = vmatprep.subr.mxu0 0.0
      %1948 = vmatpush2.msra.mxu0 0.0
      %1949 = vmatprep.subr.mxu0 0.0
      %1950 = vmatpush2.msra.mxu0 0.0
      %1951 = vmatprep.subr.mxu0 0.0
      %1952 = vmatpush2.msra.mxu0 0.0
      %1953 = vmatprep.subr.mxu0 0.0
      %1954 = vmatpush2.msra.mxu0 0.0
      %1955 = vmatprep.subr.mxu0 0.0
      %1956 = vmatpush2.msra.mxu0 0.0
      %1957 = vmatprep.mubr.f32.mxu0 0.0
      %1958 = vmatmul.mubr.f32.gmra.mxu0 %v1891
      %v1959 = vpop.f32.mrf.mxu0
      %v1960 = vadd.f32 0.0, %v1959
      %v1961 = vpop.f32.mrf.mxu0
      %1962 = vdwg.mxu0
      %1964 = vrot.lane.b32.xlu0 %v1960, 8
      %v1965 = vpop.permute.xlu0 %1964
      %1967 = vst.msk [vmem:[#allocation3 + $0x8] sm:$0xff] %vm1285, %v1965
      %1968 = vrot.lane.b32.xlu0 %v945, 112
      %v1969 = vpop.permute.xlu0 %1968
      %1970 = vrot.lane.b32.xlu0 %v945, 80
      %v1971 = vpop.permute.xlu0 %1970
      %v1972 = vsel %vm951, %v1969, 0
      %v1974 = vsel %vm951, %v1971, 0
      %1976 = vmatprep.subr.mxu0 0.0
      %1977 = vmatpush1.xpose.msra.mxu0 0.0
      %1978 = vmatprep.subr.mxu0 0.0
      %1979 = vmatpush1.xpose.msra.mxu0 0.0
      %1980 = vmatprep.subr.mxu0 0.0
      %1981 = vmatpush1.xpose.msra.mxu0 0.0
      %1982 = vmatprep.subr.mxu0 0.0
      %1983 = vmatpush1.xpose.msra.mxu0 0.0
      %1984 = vmatprep.subr.mxu0 0.0
      %1985 = vmatpush1.xpose.msra.mxu0 0.0
      %1986 = vmatprep.subr.mxu0 0.0
      %1987 = vmatpush1.xpose.msra.mxu0 0.0
      %1988 = vmatprep.subr.mxu0 0.0
      %1989 = vmatpush1.xpose.msra.mxu0 0.0
      %1990 = vmatprep.subr.mxu0 0.0
      %1991 = vmatpush1.xpose.msra.mxu0 0.0
      %1992 = vmatprep.subr.mxu0 0.0
      %1993 = vmatpush1.xpose.msra.mxu0 0.0
      %1994 = vmatprep.subr.mxu0 0.0
      %1995 = vmatpush1.xpose.msra.mxu0 0.0
      %1996 = vmatprep.subr.mxu0 0.0
      %1997 = vmatpush1.xpose.msra.mxu0 0.0
      %1998 = vmatprep.subr.mxu0 0.0
      %1999 = vmatpush1.xpose.msra.mxu0 0.0
      %2000 = vmatprep.subr.mxu0 0.0
      %2001 = vmatpush1.xpose.msra.mxu0 0.0
      %2002 = vmatprep.subr.mxu0 0.0
      %2003 = vmatpush1.xpose.msra.mxu0 0.0
      %2004 = vmatprep.subr.mxu0 0.0
      %2005 = vmatpush1.xpose.msra.mxu0 0.0
      %2006 = vmatprep.subr.mxu0 0.0
      %2007 = vmatpush1.xpose.msra.mxu0 %v1974
      %2008 = vmatprep.subr.mxu0 0.0
      %2009 = vmatpush2.xpose.msra.mxu0 0.0
      %2010 = vmatprep.subr.mxu0 0.0
      %2011 = vmatpush2.xpose.msra.mxu0 0.0
      %2012 = vmatprep.subr.mxu0 0.0
      %2013 = vmatpush2.xpose.msra.mxu0 0.0
      %2014 = vmatprep.subr.mxu0 0.0
      %2015 = vmatpush2.xpose.msra.mxu0 0.0
      %2016 = vmatprep.subr.mxu0 0.0
      %2017 = vmatpush2.xpose.msra.mxu0 0.0
      %2018 = vmatprep.subr.mxu0 0.0
      %2019 = vmatpush2.xpose.msra.mxu0 0.0
      %2020 = vmatprep.subr.mxu0 0.0
      %2021 = vmatpush2.xpose.msra.mxu0 0.0
      %2022 = vmatprep.subr.mxu0 0.0
      %2023 = vmatpush2.xpose.msra.mxu0 0.0
      %2024 = vmatprep.subr.mxu0 0.0
      %2025 = vmatpush2.xpose.msra.mxu0 0.0
      %2026 = vmatprep.subr.mxu0 0.0
      %2027 = vmatpush2.xpose.msra.mxu0 0.0
      %2028 = vmatprep.subr.mxu0 0.0
      %2029 = vmatpush2.xpose.msra.mxu0 0.0
      %2030 = vmatprep.subr.mxu0 0.0
      %2031 = vmatpush2.xpose.msra.mxu0 0.0
      %2032 = vmatprep.subr.mxu0 0.0
      %2033 = vmatpush2.xpose.msra.mxu0 0.0
      %2034 = vmatprep.subr.mxu0 0.0
      %2035 = vmatpush2.xpose.msra.mxu0 0.0
      %2036 = vmatprep.subr.mxu0 0.0
      %2037 = vmatpush2.xpose.msra.mxu0 0.0
      %2038 = vmatprep.subr.mxu0 0.0
      %2039 = vmatpush2.xpose.msra.mxu0 0.0
      %2040 = vmatprep.mubr.f32.mxu0 0.0
      %2041 = vmatmul.mubr.f32.gmra.mxu0 %v1972
      %v2042 = vpop.f32.mrf.mxu0
      %v2043 = vadd.f32 0.0, %v2042
      %v2044 = vpop.f32.mrf.mxu0
      %2045 = vdwg.mxu0
      %v2046 = vmul.f32 %v2043, 0.35355338
      %v2047 = vsel %vm951, %v2046, -inf
      %2048 = vmax.xlane.f32.xlu0 %v2047
      %v2049 = vpop.xlane.xlu0 %2048
      %v2050 = vsub.f32 %v2046, %v2049
      %v2051 = vmul.f32 %v2050, 1.442695
      %v2052 = vpow.pop %v2051
      %v2053 = vsel %vm951, %v2052, 0.0
      %2054 = vadd.xlane.f32.xlu0 %v2053
      %v2055 = vpop.xlane.xlu0 %2054
      %v2056 = vrcp.pop %v2055
      %v2057 = vmul.f32 %v2052, %v2056
      %2058 = vrot.lane.b32.xlu0 %v945, 48
      %v2059 = vpop.permute.xlu0 %2058
      %v2062 = vsel %vm951, %v2057, 0
      %2064 = vmatprep.subr.mxu0 0.0
      %2065 = vmatpush1.msra.mxu0 0.0
      %2066 = vmatprep.subr.mxu0 0.0
      %2067 = vmatpush1.msra.mxu0 0.0
      %2068 = vmatprep.subr.mxu0 0.0
      %2069 = vmatpush1.msra.mxu0 0.0
      %2070 = vmatprep.subr.mxu0 0.0
      %2071 = vmatpush1.msra.mxu0 0.0
      %2072 = vmatprep.subr.mxu0 0.0
      %2073 = vmatpush1.msra.mxu0 0.0
      %2074 = vmatprep.subr.mxu0 0.0
      %2075 = vmatpush1.msra.mxu0 0.0
      %2076 = vmatprep.subr.mxu0 0.0
      %2077 = vmatpush1.msra.mxu0 0.0
      %2078 = vmatprep.subr.mxu0 0.0
      %2079 = vmatpush1.msra.mxu0 0.0
      %2080 = vmatprep.subr.mxu0 0.0
      %2081 = vmatpush1.msra.mxu0 0.0
      %2082 = vmatprep.subr.mxu0 0.0
      %2083 = vmatpush1.msra.mxu0 0.0
      %2084 = vmatprep.subr.mxu0 0.0
      %2085 = vmatpush1.msra.mxu0 0.0
      %2086 = vmatprep.subr.mxu0 0.0
      %2087 = vmatpush1.msra.mxu0 0.0
      %2088 = vmatprep.subr.mxu0 0.0
      %2089 = vmatpush1.msra.mxu0 0.0
      %2090 = vmatprep.subr.mxu0 0.0
      %2091 = vmatpush1.msra.mxu0 0.0
      %2092 = vmatprep.subr.mxu0 0.0
      %2093 = vmatpush1.msra.mxu0 0.0
      %2094 = vmatprep.subr.mxu0 0.0
      %2095 = vmatpush1.msra.mxu0 %v2059
      %2096 = vmatprep.subr.mxu0 0.0
      %2097 = vmatpush2.msra.mxu0 0.0
      %2098 = vmatprep.subr.mxu0 0.0
      %2099 = vmatpush2.msra.mxu0 0.0
      %2100 = vmatprep.subr.mxu0 0.0
      %2101 = vmatpush2.msra.mxu0 0.0
      %2102 = vmatprep.subr.mxu0 0.0
      %2103 = vmatpush2.msra.mxu0 0.0
      %2104 = vmatprep.subr.mxu0 0.0
      %2105 = vmatpush2.msra.mxu0 0.0
      %2106 = vmatprep.subr.mxu0 0.0
      %2107 = vmatpush2.msra.mxu0 0.0
      %2108 = vmatprep.subr.mxu0 0.0
      %2109 = vmatpush2.msra.mxu0 0.0
      %2110 = vmatprep.subr.mxu0 0.0
      %2111 = vmatpush2.msra.mxu0 0.0
      %2112 = vmatprep.subr.mxu0 0.0
      %2113 = vmatpush2.msra.mxu0 0.0
      %2114 = vmatprep.subr.mxu0 0.0
      %2115 = vmatpush2.msra.mxu0 0.0
      %2116 = vmatprep.subr.mxu0 0.0
      %2117 = vmatpush2.msra.mxu0 0.0
      %2118 = vmatprep.subr.mxu0 0.0
      %2119 = vmatpush2.msra.mxu0 0.0
      %2120 = vmatprep.subr.mxu0 0.0
      %2121 = vmatpush2.msra.mxu0 0.0
      %2122 = vmatprep.subr.mxu0 0.0
      %2123 = vmatpush2.msra.mxu0 0.0
      %2124 = vmatprep.subr.mxu0 0.0
      %2125 = vmatpush2.msra.mxu0 0.0
      %2126 = vmatprep.subr.mxu0 0.0
      %2127 = vmatpush2.msra.mxu0 0.0
      %2128 = vmatprep.mubr.f32.mxu0 0.0
      %2129 = vmatmul.mubr.f32.gmra.mxu0 %v2062
      %v2130 = vpop.f32.mrf.mxu0
      %v2131 = vadd.f32 0.0, %v2130
      %v2132 = vpop.f32.mrf.mxu0
      %2133 = vdwg.mxu0
      %2135 = vrot.lane.b32.xlu0 %v2131, 16
      %v2136 = vpop.permute.xlu0 %2135
      %2138 = vst.msk [vmem:[#allocation3 + $0x8] sm:$0xff] %vm1457, %v2136
      %2139 = vrot.lane.b32.xlu0 %v945, 104
      %v2140 = vpop.permute.xlu0 %2139
      %2141 = vrot.lane.b32.xlu0 %v945, 72
      %v2142 = vpop.permute.xlu0 %2141
      %v2143 = vsel %vm951, %v2140, 0
      %v2145 = vsel %vm951, %v2142, 0
      %2147 = vmatprep.subr.mxu0 0.0
      %2148 = vmatpush1.xpose.msra.mxu0 0.0
      %2149 = vmatprep.subr.mxu0 0.0
      %2150 = vmatpush1.xpose.msra.mxu0 0.0
      %2151 = vmatprep.subr.mxu0 0.0
      %2152 = vmatpush1.xpose.msra.mxu0 0.0
      %2153 = vmatprep.subr.mxu0 0.0
      %2154 = vmatpush1.xpose.msra.mxu0 0.0
      %2155 = vmatprep.subr.mxu0 0.0
      %2156 = vmatpush1.xpose.msra.mxu0 0.0
      %2157 = vmatprep.subr.mxu0 0.0
      %2158 = vmatpush1.xpose.msra.mxu0 0.0
      %2159 = vmatprep.subr.mxu0 0.0
      %2160 = vmatpush1.xpose.msra.mxu0 0.0
      %2161 = vmatprep.subr.mxu0 0.0
      %2162 = vmatpush1.xpose.msra.mxu0 0.0
      %2163 = vmatprep.subr.mxu0 0.0
      %2164 = vmatpush1.xpose.msra.mxu0 0.0
      %2165 = vmatprep.subr.mxu0 0.0
      %2166 = vmatpush1.xpose.msra.mxu0 0.0
      %2167 = vmatprep.subr.mxu0 0.0
      %2168 = vmatpush1.xpose.msra.mxu0 0.0
      %2169 = vmatprep.subr.mxu0 0.0
      %2170 = vmatpush1.xpose.msra.mxu0 0.0
      %2171 = vmatprep.subr.mxu0 0.0
      %2172 = vmatpush1.xpose.msra.mxu0 0.0
      %2173 = vmatprep.subr.mxu0 0.0
      %2174 = vmatpush1.xpose.msra.mxu0 0.0
      %2175 = vmatprep.subr.mxu0 0.0
      %2176 = vmatpush1.xpose.msra.mxu0 0.0
      %2177 = vmatprep.subr.mxu0 0.0
      %2178 = vmatpush1.xpose.msra.mxu0 %v2145
      %2179 = vmatprep.subr.mxu0 0.0
      %2180 = vmatpush2.xpose.msra.mxu0 0.0
      %2181 = vmatprep.subr.mxu0 0.0
      %2182 = vmatpush2.xpose.msra.mxu0 0.0
      %2183 = vmatprep.subr.mxu0 0.0
      %2184 = vmatpush2.xpose.msra.mxu0 0.0
      %2185 = vmatprep.subr.mxu0 0.0
      %2186 = vmatpush2.xpose.msra.mxu0 0.0
      %2187 = vmatprep.subr.mxu0 0.0
      %2188 = vmatpush2.xpose.msra.mxu0 0.0
      %2189 = vmatprep.subr.mxu0 0.0
      %2190 = vmatpush2.xpose.msra.mxu0 0.0
      %2191 = vmatprep.subr.mxu0 0.0
      %2192 = vmatpush2.xpose.msra.mxu0 0.0
      %2193 = vmatprep.subr.mxu0 0.0
      %2194 = vmatpush2.xpose.msra.mxu0 0.0
      %2195 = vmatprep.subr.mxu0 0.0
      %2196 = vmatpush2.xpose.msra.mxu0 0.0
      %2197 = vmatprep.subr.mxu0 0.0
      %2198 = vmatpush2.xpose.msra.mxu0 0.0
      %2199 = vmatprep.subr.mxu0 0.0
      %2200 = vmatpush2.xpose.msra.mxu0 0.0
      %2201 = vmatprep.subr.mxu0 0.0
      %2202 = vmatpush2.xpose.msra.mxu0 0.0
      %2203 = vmatprep.subr.mxu0 0.0
      %2204 = vmatpush2.xpose.msra.mxu0 0.0
      %2205 = vmatprep.subr.mxu0 0.0
      %2206 = vmatpush2.xpose.msra.mxu0 0.0
      %2207 = vmatprep.subr.mxu0 0.0
      %2208 = vmatpush2.xpose.msra.mxu0 0.0
      %2209 = vmatprep.subr.mxu0 0.0
      %2210 = vmatpush2.xpose.msra.mxu0 0.0
      %2211 = vmatprep.mubr.f32.mxu0 0.0
      %2212 = vmatmul.mubr.f32.gmra.mxu0 %v2143
      %v2213 = vpop.f32.mrf.mxu0
      %v2214 = vadd.f32 0.0, %v2213
      %v2215 = vpop.f32.mrf.mxu0
      %2216 = vdwg.mxu0
      %v2217 = vmul.f32 %v2214, 0.35355338
      %v2218 = vsel %vm951, %v2217, -inf
      %2219 = vmax.xlane.f32.xlu0 %v2218
      %v2220 = vpop.xlane.xlu0 %2219
      %v2221 = vsub.f32 %v2217, %v2220
      %v2222 = vmul.f32 %v2221, 1.442695
      %v2223 = vpow.pop %v2222
      %v2224 = vsel %vm951, %v2223, 0.0
      %2225 = vadd.xlane.f32.xlu0 %v2224
      %v2226 = vpop.xlane.xlu0 %2225
      %v2227 = vrcp.pop %v2226
      %v2228 = vmul.f32 %v2223, %v2227
      %2229 = vrot.lane.b32.xlu0 %v945, 40
      %v2230 = vpop.permute.xlu0 %2229
      %v2233 = vsel %vm951, %v2228, 0
      %2235 = vmatprep.subr.mxu0 0.0
      %2236 = vmatpush1.msra.mxu0 0.0
      %2237 = vmatprep.subr.mxu0 0.0
      %2238 = vmatpush1.msra.mxu0 0.0
      %2239 = vmatprep.subr.mxu0 0.0
      %2240 = vmatpush1.msra.mxu0 0.0
      %2241 = vmatprep.subr.mxu0 0.0
      %2242 = vmatpush1.msra.mxu0 0.0
      %2243 = vmatprep.subr.mxu0 0.0
      %2244 = vmatpush1.msra.mxu0 0.0
      %2245 = vmatprep.subr.mxu0 0.0
      %2246 = vmatpush1.msra.mxu0 0.0
      %2247 = vmatprep.subr.mxu0 0.0
      %2248 = vmatpush1.msra.mxu0 0.0
      %2249 = vmatprep.subr.mxu0 0.0
      %2250 = vmatpush1.msra.mxu0 0.0
      %2251 = vmatprep.subr.mxu0 0.0
      %2252 = vmatpush1.msra.mxu0 0.0
      %2253 = vmatprep.subr.mxu0 0.0
      %2254 = vmatpush1.msra.mxu0 0.0
      %2255 = vmatprep.subr.mxu0 0.0
      %2256 = vmatpush1.msra.mxu0 0.0
      %2257 = vmatprep.subr.mxu0 0.0
      %2258 = vmatpush1.msra.mxu0 0.0
      %2259 = vmatprep.subr.mxu0 0.0
      %2260 = vmatpush1.msra.mxu0 0.0
      %2261 = vmatprep.subr.mxu0 0.0
      %2262 = vmatpush1.msra.mxu0 0.0
      %2263 = vmatprep.subr.mxu0 0.0
      %2264 = vmatpush1.msra.mxu0 0.0
      %2265 = vmatprep.subr.mxu0 0.0
      %2266 = vmatpush1.msra.mxu0 %v2230
      %2267 = vmatprep.subr.mxu0 0.0
      %2268 = vmatpush2.msra.mxu0 0.0
      %2269 = vmatprep.subr.mxu0 0.0
      %2270 = vmatpush2.msra.mxu0 0.0
      %2271 = vmatprep.subr.mxu0 0.0
      %2272 = vmatpush2.msra.mxu0 0.0
      %2273 = vmatprep.subr.mxu0 0.0
      %2274 = vmatpush2.msra.mxu0 0.0
      %2275 = vmatprep.subr.mxu0 0.0
      %2276 = vmatpush2.msra.mxu0 0.0
      %2277 = vmatprep.subr.mxu0 0.0
      %2278 = vmatpush2.msra.mxu0 0.0
      %2279 = vmatprep.subr.mxu0 0.0
      %2280 = vmatpush2.msra.mxu0 0.0
      %2281 = vmatprep.subr.mxu0 0.0
      %2282 = vmatpush2.msra.mxu0 0.0
      %2283 = vmatprep.subr.mxu0 0.0
      %2284 = vmatpush2.msra.mxu0 0.0
      %2285 = vmatprep.subr.mxu0 0.0
      %2286 = vmatpush2.msra.mxu0 0.0
      %2287 = vmatprep.subr.mxu0 0.0
      %2288 = vmatpush2.msra.mxu0 0.0
      %2289 = vmatprep.subr.mxu0 0.0
      %2290 = vmatpush2.msra.mxu0 0.0
      %2291 = vmatprep.subr.mxu0 0.0
      %2292 = vmatpush2.msra.mxu0 0.0
      %2293 = vmatprep.subr.mxu0 0.0
      %2294 = vmatpush2.msra.mxu0 0.0
      %2295 = vmatprep.subr.mxu0 0.0
      %2296 = vmatpush2.msra.mxu0 0.0
      %2297 = vmatprep.subr.mxu0 0.0
      %2298 = vmatpush2.msra.mxu0 0.0
      %2299 = vmatprep.mubr.f32.mxu0 0.0
      %2300 = vmatmul.mubr.f32.gmra.mxu0 %v2233
      %v2301 = vpop.f32.mrf.mxu0
      %v2302 = vadd.f32 0.0, %v2301
      %v2303 = vpop.f32.mrf.mxu0
      %2304 = vdwg.mxu0
      %2306 = vrot.lane.b32.xlu0 %v2302, 24
      %v2307 = vpop.permute.xlu0 %2306
      %2309 = vst.msk [vmem:[#allocation3 + $0x8] sm:$0xff] %vm1629, %v2307
      %v2310 = vld [vmem:[#allocation3] sm:$0xff]
      %v2311 = vld [vmem:[#allocation3 + $0x8] sm:$0xff]
      %v2313 = vlaneseq
      %v2314 = vshrl.u32 %v2313, 7
      %v2315 = vsub.s32 0, %v2314
      %v2316 = vrot.slane %v841, %v2315
      %v2319 = vsel %vm866, %v2310, 0
      %v2322 = vsel %vm866, %v2311, 0
      %2324 = vmatprep.subr.mxu0 0.0
      %2325 = vmatpush1.msra.mxu0 0.0
      %2326 = vmatprep.subr.mxu0 0.0
      %2327 = vmatpush1.msra.mxu0 0.0
      %2328 = vmatprep.subr.mxu0 0.0
      %2329 = vmatpush1.msra.mxu0 0.0
      %2330 = vmatprep.subr.mxu0 0.0
      %2331 = vmatpush1.msra.mxu0 0.0
      %2332 = vmatprep.subr.mxu0 0.0
      %2333 = vmatpush1.msra.mxu0 0.0
      %2334 = vmatprep.subr.mxu0 0.0
      %2335 = vmatpush1.msra.mxu0 0.0
      %2336 = vmatprep.subr.mxu0 0.0
      %2337 = vmatpush1.msra.mxu0 0.0
      %2338 = vmatprep.subr.mxu0 0.0
      %2339 = vmatpush1.msra.mxu0 0.0
      %2340 = vmatprep.subr.mxu0 0.0
      %2341 = vmatpush1.msra.mxu0 0.0
      %2342 = vmatprep.subr.mxu0 0.0
      %2343 = vmatpush1.msra.mxu0 0.0
      %2344 = vmatprep.subr.mxu0 0.0
      %2345 = vmatpush1.msra.mxu0 0.0
      %2346 = vmatprep.subr.mxu0 0.0
      %2347 = vmatpush1.msra.mxu0 0.0
      %2348 = vmatprep.subr.mxu0 0.0
      %2349 = vmatpush1.msra.mxu0 %v840
      %2350 = vmatprep.subr.mxu0 0.0
      %2351 = vmatpush1.msra.mxu0 %v839
      %2352 = vmatprep.subr.mxu0 0.0
      %2353 = vmatpush1.msra.mxu0 %v838
      %2354 = vmatprep.subr.mxu0 0.0
      %2355 = vmatpush1.msra.mxu0 %v837
      %2356 = vmatprep.subr.mxu0 0.0
      %2357 = vmatpush2.msra.mxu0 0.0
      %2358 = vmatprep.subr.mxu0 0.0
      %2359 = vmatpush2.msra.mxu0 0.0
      %2360 = vmatprep.subr.mxu0 0.0
      %2361 = vmatpush2.msra.mxu0 0.0
      %2362 = vmatprep.subr.mxu0 0.0
      %2363 = vmatpush2.msra.mxu0 0.0
      %2364 = vmatprep.subr.mxu0 0.0
      %2365 = vmatpush2.msra.mxu0 0.0
      %2366 = vmatprep.subr.mxu0 0.0
      %2367 = vmatpush2.msra.mxu0 0.0
      %2368 = vmatprep.subr.mxu0 0.0
      %2369 = vmatpush2.msra.mxu0 0.0
      %2370 = vmatprep.subr.mxu0 0.0
      %2371 = vmatpush2.msra.mxu0 0.0
      %2372 = vmatprep.subr.mxu0 0.0
      %2373 = vmatpush2.msra.mxu0 0.0
      %2374 = vmatprep.subr.mxu0 0.0
      %2375 = vmatpush2.msra.mxu0 0.0
      %2376 = vmatprep.subr.mxu0 0.0
      %2377 = vmatpush2.msra.mxu0 0.0
      %2378 = vmatprep.subr.mxu0 0.0
      %2379 = vmatpush2.msra.mxu0 0.0
      %2380 = vmatprep.subr.mxu0 0.0
      %2381 = vmatpush2.msra.mxu0 0.0
      %2382 = vmatprep.subr.mxu0 0.0
      %2383 = vmatpush2.msra.mxu0 0.0
      %2384 = vmatprep.subr.mxu0 0.0
      %2385 = vmatpush2.msra.mxu0 0.0
      %2386 = vmatprep.subr.mxu0 0.0
      %2387 = vmatpush2.msra.mxu0 0.0
      %2388 = vmatprep.mubr.f32.mxu0 0.0
      %2389 = vmatmul.mubr.f32.gmra.mxu0 %v2319
      %v2390 = vpop.f32.mrf.mxu0
      %v2391 = vadd.f32 %v2316, %v2390
      %v2392 = vpop.f32.mrf.mxu0
      %2393 = vmatprep.mubr.f32.mxu0 0.0
      %2394 = vmatmul.mubr.f32.gmra.mxu0 %v2322
      %v2395 = vpop.f32.mrf.mxu0
      %v2396 = vadd.f32 %v2316, %v2395
      %v2397 = vpop.f32.mrf.mxu0
      %2398 = vdwg.mxu0
      %v2399 = vadd.f32 %v830, %v2391
      %v2400 = vadd.f32 %v831, %v2396
      %v2401 = vsel %vm866, %v2399, 0.0
      %2402 = vadd.xlane.f32.xlu0 %v2401
      %v2403 = vpop.xlane.xlu0 %2402
      %v2404 = vsel %vm866, %v2400, 0.0
      %2405 = vadd.xlane.f32.xlu0 %v2404
      %v2406 = vpop.xlane.xlu0 %2405
      %v2407 = vrcp.pop 32.0
      %v2408 = vmul.f32 %v2403, %v2407
      %v2409 = vmul.f32 %v2406, %v2407
      %v2410 = vsub.f32 %v2399, %v2408
      %v2411 = vsub.f32 %v2400, %v2409
      %v2412 = vmul.f32 %v2410, %v2410
      %v2413 = vmul.f32 %v2411, %v2411
      %v2414 = vsel %vm866, %v2412, 0.0
      %2415 = vadd.xlane.f32.xlu0 %v2414
      %v2416 = vpop.xlane.xlu0 %2415
      %v2417 = vsel %vm866, %v2413, 0.0
      %2418 = vadd.xlane.f32.xlu0 %v2417
      %v2419 = vpop.xlane.xlu0 %2418
      %v2420 = vmul.f32 %v2416, %v2407
      %v2421 = vmul.f32 %v2419, %v2407
      %v2422 = vadd.f32 %v2420, 1e-06
      %v2423 = vadd.f32 %v2421, 1e-06
      %v2424 = vrsqrt.pop %v2422
      %v2425 = vrsqrt.pop %v2423
      %v2426 = vmul.f32 %v2410, %v2424
      %v2427 = vmul.f32 %v2411, %v2425
      %v2429 = vlaneseq
      %v2430 = vshrl.u32 %v2429, 7
      %v2431 = vsub.s32 0, %v2430
      %v2432 = vrot.slane %v842, %v2431
      %v2434 = vmul.f32 %v2426, %v2432
      %v2435 = vmul.f32 %v2427, %v2432
      %v2437 = vlaneseq
      %v2438 = vshrl.u32 %v2437, 7
      %v2439 = vsub.s32 0, %v2438
      %v2440 = vrot.slane %v843, %v2439
      %v2442 = vadd.f32 %v2434, %v2440
      %v2443 = vadd.f32 %v2435, %v2440
      %v2445 = vlaneseq
      %v2446 = vshrl.u32 %v2445, 7
      %v2447 = vsub.s32 0, %v2446
      %v2448 = vrot.slane %v848, %v2447
      %v2451 = vsel %vm866, %v2442, 0
      %v2454 = vsel %vm866, %v2443, 0
      %2456 = vmatprep.subr.mxu0 0.0
      %2457 = vmatpush1.msra.mxu0 0.0
      %2458 = vmatprep.subr.mxu0 0.0
      %2459 = vmatpush1.msra.mxu0 0.0
      %2460 = vmatprep.subr.mxu0 0.0
      %2461 = vmatpush1.msra.mxu0 0.0
      %2462 = vmatprep.subr.mxu0 0.0
      %2463 = vmatpush1.msra.mxu0 0.0
      %2464 = vmatprep.subr.mxu0 0.0
      %2465 = vmatpush1.msra.mxu0 0.0
      %2466 = vmatprep.subr.mxu0 0.0
      %2467 = vmatpush1.msra.mxu0 0.0
      %2468 = vmatprep.subr.mxu0 0.0
      %2469 = vmatpush1.msra.mxu0 0.0
      %2470 = vmatprep.subr.mxu0 0.0
      %2471 = vmatpush1.msra.mxu0 0.0
      %2472 = vmatprep.subr.mxu0 0.0
      %2473 = vmatpush1.msra.mxu0 0.0
      %2474 = vmatprep.subr.mxu0 0.0
      %2475 = vmatpush1.msra.mxu0 0.0
      %2476 = vmatprep.subr.mxu0 0.0
      %2477 = vmatpush1.msra.mxu0 0.0
      %2478 = vmatprep.subr.mxu0 0.0
      %2479 = vmatpush1.msra.mxu0 0.0
      %2480 = vmatprep.subr.mxu0 0.0
      %2481 = vmatpush1.msra.mxu0 %v847
      %2482 = vmatprep.subr.mxu0 0.0
      %2483 = vmatpush1.msra.mxu0 %v846
      %2484 = vmatprep.subr.mxu0 0.0
      %2485 = vmatpush1.msra.mxu0 %v845
      %2486 = vmatprep.subr.mxu0 0.0
      %2487 = vmatpush1.msra.mxu0 %v844
      %2488 = vmatprep.subr.mxu0 0.0
      %2489 = vmatpush2.msra.mxu0 0.0
      %2490 = vmatprep.subr.mxu0 0.0
      %2491 = vmatpush2.msra.mxu0 0.0
      %2492 = vmatprep.subr.mxu0 0.0
      %2493 = vmatpush2.msra.mxu0 0.0
      %2494 = vmatprep.subr.mxu0 0.0
      %2495 = vmatpush2.msra.mxu0 0.0
      %2496 = vmatprep.subr.mxu0 0.0
      %2497 = vmatpush2.msra.mxu0 0.0
      %2498 = vmatprep.subr.mxu0 0.0
      %2499 = vmatpush2.msra.mxu0 0.0
      %2500 = vmatprep.subr.mxu0 0.0
      %2501 = vmatpush2.msra.mxu0 0.0
      %2502 = vmatprep.subr.mxu0 0.0
      %2503 = vmatpush2.msra.mxu0 0.0
      %2504 = vmatprep.subr.mxu0 0.0
      %2505 = vmatpush2.msra.mxu0 0.0
      %2506 = vmatprep.subr.mxu0 0.0
      %2507 = vmatpush2.msra.mxu0 0.0
      %2508 = vmatprep.subr.mxu0 0.0
      %2509 = vmatpush2.msra.mxu0 0.0
      %2510 = vmatprep.subr.mxu0 0.0
      %2511 = vmatpush2.msra.mxu0 0.0
      %2512 = vmatprep.subr.mxu0 0.0
      %2513 = vmatpush2.msra.mxu0 0.0
      %2514 = vmatprep.subr.mxu0 0.0
      %2515 = vmatpush2.msra.mxu0 0.0
      %2516 = vmatprep.subr.mxu0 0.0
      %2517 = vmatpush2.msra.mxu0 0.0
      %2518 = vmatprep.subr.mxu0 0.0
      %2519 = vmatpush2.msra.mxu0 0.0
      %2520 = vmatprep.mubr.f32.mxu0 0.0
      %2521 = vmatmul.mubr.f32.gmra.mxu0 %v2451
      %v2522 = vpop.f32.mrf.mxu0
      %v2523 = vadd.f32 %v2448, %v2522
      %v2524 = vpop.f32.mrf.mxu0
      %2525 = vmatprep.mubr.f32.mxu0 0.0
      %2526 = vmatmul.mubr.f32.gmra.mxu0 %v2454
      %v2527 = vpop.f32.mrf.mxu0
      %v2528 = vadd.f32 %v2448, %v2527
      %v2529 = vpop.f32.mrf.mxu0
      %2530 = vdwg.mxu0
      %v2531 = vmax.f32 %v2523, 0.0
      %v2532 = vmax.f32 %v2528, 0.0
      %v2534 = vlaneseq
      %v2535 = vshrl.u32 %v2534, 7
      %v2536 = vsub.s32 0, %v2535
      %v2537 = vrot.slane %v857, %v2536
      %vm2539 = vcmask 523264
      %v2541 = vsel %vm2539, %v2531, 0
      %v2544 = vsel %vm2539, %v2532, 0
      %2546 = vmatprep.subr.mxu0 0.0
      %2547 = vmatpush1.msra.mxu0 0.0
      %2548 = vmatprep.subr.mxu0 0.0
      %2549 = vmatpush1.msra.mxu0 0.0
      %2550 = vmatprep.subr.mxu0 0.0
      %2551 = vmatpush1.msra.mxu0 0.0
      %2552 = vmatprep.subr.mxu0 0.0
      %2553 = vmatpush1.msra.mxu0 0.0
      %2554 = vmatprep.subr.mxu0 0.0
      %2555 = vmatpush1.msra.mxu0 0.0
      %2556 = vmatprep.subr.mxu0 0.0
      %2557 = vmatpush1.msra.mxu0 0.0
      %2558 = vmatprep.subr.mxu0 0.0
      %2559 = vmatpush1.msra.mxu0 0.0
      %2560 = vmatprep.subr.mxu0 0.0
      %2561 = vmatpush1.msra.mxu0 0.0
      %2562 = vmatprep.subr.mxu0 0.0
      %2563 = vmatpush1.msra.mxu0 %v856
      %2564 = vmatprep.subr.mxu0 0.0
      %2565 = vmatpush1.msra.mxu0 %v855
      %2566 = vmatprep.subr.mxu0 0.0
      %2567 = vmatpush1.msra.mxu0 %v854
      %2568 = vmatprep.subr.mxu0 0.0
      %2569 = vmatpush1.msra.mxu0 %v853
      %2570 = vmatprep.subr.mxu0 0.0
      %2571 = vmatpush1.msra.mxu0 %v852
      %2572 = vmatprep.subr.mxu0 0.0
      %2573 = vmatpush1.msra.mxu0 %v851
      %2574 = vmatprep.subr.mxu0 0.0
      %2575 = vmatpush1.msra.mxu0 %v850
      %2576 = vmatprep.subr.mxu0 0.0
      %2577 = vmatpush1.msra.mxu0 %v849
      %2578 = vmatprep.subr.mxu0 0.0
      %2579 = vmatpush2.msra.mxu0 0.0
      %2580 = vmatprep.subr.mxu0 0.0
      %2581 = vmatpush2.msra.mxu0 0.0
      %2582 = vmatprep.subr.mxu0 0.0
      %2583 = vmatpush2.msra.mxu0 0.0
      %2584 = vmatprep.subr.mxu0 0.0
      %2585 = vmatpush2.msra.mxu0 0.0
      %2586 = vmatprep.subr.mxu0 0.0
      %2587 = vmatpush2.msra.mxu0 0.0
      %2588 = vmatprep.subr.mxu0 0.0
      %2589 = vmatpush2.msra.mxu0 0.0
      %2590 = vmatprep.subr.mxu0 0.0
      %2591 = vmatpush2.msra.mxu0 0.0
      %2592 = vmatprep.subr.mxu0 0.0
      %2593 = vmatpush2.msra.mxu0 0.0
      %2594 = vmatprep.subr.mxu0 0.0
      %2595 = vmatpush2.msra.mxu0 0.0
      %2596 = vmatprep.subr.mxu0 0.0
      %2597 = vmatpush2.msra.mxu0 0.0
      %2598 = vmatprep.subr.mxu0 0.0
      %2599 = vmatpush2.msra.mxu0 0.0
      %2600 = vmatprep.subr.mxu0 0.0
      %2601 = vmatpush2.msra.mxu0 0.0
      %2602 = vmatprep.subr.mxu0 0.0
      %2603 = vmatpush2.msra.mxu0 0.0
      %2604 = vmatprep.subr.mxu0 0.0
      %2605 = vmatpush2.msra.mxu0 0.0
      %2606 = vmatprep.subr.mxu0 0.0
      %2607 = vmatpush2.msra.mxu0 0.0
      %2608 = vmatprep.subr.mxu0 0.0
      %2609 = vmatpush2.msra.mxu0 0.0
      %2610 = vmatprep.mubr.f32.mxu0 0.0
      %2611 = vmatmul.mubr.f32.gmra.mxu0 %v2541
      %v2612 = vpop.f32.mrf.mxu0
      %v2613 = vadd.f32 %v2537, %v2612
      %v2614 = vpop.f32.mrf.mxu0
      %2615 = vmatprep.mubr.f32.mxu0 0.0
      %2616 = vmatmul.mubr.f32.gmra.mxu0 %v2544
      %v2617 = vpop.f32.mrf.mxu0
      %v2618 = vadd.f32 %v2537, %v2617
      %v2619 = vpop.f32.mrf.mxu0
      %2620 = vdwg.mxu0
      %v2621 = vadd.f32 %v2442, %v2613
      %v2622 = vadd.f32 %v2443, %v2618
      %v2623 = vsel %vm866, %v2621, 0.0
      %2624 = vadd.xlane.f32.xlu0 %v2623
      %v2625 = vpop.xlane.xlu0 %2624
      %v2626 = vsel %vm866, %v2622, 0.0
      %2627 = vadd.xlane.f32.xlu0 %v2626
      %v2628 = vpop.xlane.xlu0 %2627
      %v2629 = vmul.f32 %v2625, %v2407
      %v2630 = vmul.f32 %v2628, %v2407
      %v2631 = vsub.f32 %v2621, %v2629
      %v2632 = vsub.f32 %v2622, %v2630
      %v2633 = vmul.f32 %v2631, %v2631
      %v2634 = vmul.f32 %v2632, %v2632
      %v2635 = vsel %vm866, %v2633, 0.0
      %2636 = vadd.xlane.f32.xlu0 %v2635
      %v2637 = vpop.xlane.xlu0 %2636
      %v2638 = vsel %vm866, %v2634, 0.0
      %2639 = vadd.xlane.f32.xlu0 %v2638
      %v2640 = vpop.xlane.xlu0 %2639
      %v2641 = vmul.f32 %v2637, %v2407
      %v2642 = vmul.f32 %v2640, %v2407
      %v2643 = vadd.f32 %v2641, 1e-06
      %v2644 = vadd.f32 %v2642, 1e-06
      %v2645 = vrsqrt.pop %v2643
      %v2646 = vrsqrt.pop %v2644
      %v2647 = vmul.f32 %v2631, %v2645
      %v2648 = vmul.f32 %v2632, %v2646
      %v2650 = vlaneseq
      %v2651 = vshrl.u32 %v2650, 7
      %v2652 = vsub.s32 0, %v2651
      %v2653 = vrot.slane %v858, %v2652
      %v2655 = vmul.f32 %v2647, %v2653
      %v2656 = vmul.f32 %v2648, %v2653
      %v2658 = vlaneseq
      %v2659 = vshrl.u32 %v2658, 7
      %v2660 = vsub.s32 0, %v2659
      %v2661 = vrot.slane %v859, %v2660
      %v2663 = vadd.f32 %v2655, %v2661
      %v2664 = vadd.f32 %v2656, %v2661
      %2665 = vst.msk [vmem:[#allocation2] sm:$0xff] %vm866, %v2663
      %2666 = vst.msk [vmem:[#allocation2 + $0x8] sm:$0xff] %vm866, %v2664
      %p2667 = scmp.eq.s32.totalorder %s35, 1
      // Predicated region
      $region93: #{continuous_transformer_forward.5} parent=87 // pred_check
        %p2668 = pneg %p2667
      $region94: #{continuous_transformer_forward.5} parent=87 // pred_check_branch
        %2670 = sbr.rel (%p2668) target = $region96
      $region95: #{continuous_transformer_forward.5} parent=87 // pred_region
        %v2671 = vld [vmem:[%s3] sm:$0xff]
        %v2672 = vld [vmem:[%s3 + $0x8] sm:$0xff]
        %v2673 = vld [vmem:[%s3 + $0x10] sm:$0xff]
        %v2674 = vld [vmem:[%s3 + $0x18] sm:$0xff]
        %v2675 = vld [vmem:[%s4] sm:$0x1]
        %v2677 = vlaneseq
        %v2678 = vshrl.u32 %v2677, 7
        %v2679 = vsub.s32 0, %v2678
        %v2680 = vrot.slane %v2675, %v2679
        %v2683 = vsel %vm866, %v2663, 0
        %v2686 = vsel %vm866, %v2664, 0
        %2688 = vmatprep.subr.mxu0 0.0
        %2689 = vmatpush1.msra.mxu0 0.0
        %2690 = vmatprep.subr.mxu0 0.0
        %2691 = vmatpush1.msra.mxu0 0.0
        %2692 = vmatprep.subr.mxu0 0.0
        %2693 = vmatpush1.msra.mxu0 0.0
        %2694 = vmatprep.subr.mxu0 0.0
        %2695 = vmatpush1.msra.mxu0 0.0
        %2696 = vmatprep.subr.mxu0 0.0
        %2697 = vmatpush1.msra.mxu0 0.0
        %2698 = vmatprep.subr.mxu0 0.0
        %2699 = vmatpush1.msra.mxu0 0.0
        %2700 = vmatprep.subr.mxu0 0.0
        %2701 = vmatpush1.msra.mxu0 0.0
        %2702 = vmatprep.subr.mxu0 0.0
        %2703 = vmatpush1.msra.mxu0 0.0
        %2704 = vmatprep.subr.mxu0 0.0
        %2705 = vmatpush1.msra.mxu0 0.0
        %2706 = vmatprep.subr.mxu0 0.0
        %2707 = vmatpush1.msra.mxu0 0.0
        %2708 = vmatprep.subr.mxu0 0.0
        %2709 = vmatpush1.msra.mxu0 0.0
        %2710 = vmatprep.subr.mxu0 0.0
        %2711 = vmatpush1.msra.mxu0 0.0
        %2712 = vmatprep.subr.mxu0 0.0
        %2713 = vmatpush1.msra.mxu0 %v2674
        %2714 = vmatprep.subr.mxu0 0.0
        %2715 = vmatpush1.msra.mxu0 %v2673
        %2716 = vmatprep.subr.mxu0 0.0
        %2717 = vmatpush1.msra.mxu0 %v2672
        %2718 = vmatprep.subr.mxu0 0.0
        %2719 = vmatpush1.msra.mxu0 %v2671
        %2720 = vmatprep.subr.mxu0 0.0
        %2721 = vmatpush2.msra.mxu0 0.0
        %2722 = vmatprep.subr.mxu0 0.0
        %2723 = vmatpush2.msra.mxu0 0.0
        %2724 = vmatprep.subr.mxu0 0.0
        %2725 = vmatpush2.msra.mxu0 0.0
        %2726 = vmatprep.subr.mxu0 0.0
        %2727 = vmatpush2.msra.mxu0 0.0
        %2728 = vmatprep.subr.mxu0 0.0
        %2729 = vmatpush2.msra.mxu0 0.0
        %2730 = vmatprep.subr.mxu0 0.0
        %2731 = vmatpush2.msra.mxu0 0.0
        %2732 = vmatprep.subr.mxu0 0.0
        %2733 = vmatpush2.msra.mxu0 0.0
        %2734 = vmatprep.subr.mxu0 0.0
        %2735 = vmatpush2.msra.mxu0 0.0
        %2736 = vmatprep.subr.mxu0 0.0
        %2737 = vmatpush2.msra.mxu0 0.0
        %2738 = vmatprep.subr.mxu0 0.0
        %2739 = vmatpush2.msra.mxu0 0.0
        %2740 = vmatprep.subr.mxu0 0.0
        %2741 = vmatpush2.msra.mxu0 0.0
        %2742 = vmatprep.subr.mxu0 0.0
        %2743 = vmatpush2.msra.mxu0 0.0
        %2744 = vmatprep.subr.mxu0 0.0
        %2745 = vmatpush2.msra.mxu0 0.0
        %2746 = vmatprep.subr.mxu0 0.0
        %2747 = vmatpush2.msra.mxu0 0.0
        %2748 = vmatprep.subr.mxu0 0.0
        %2749 = vmatpush2.msra.mxu0 0.0
        %2750 = vmatprep.subr.mxu0 0.0
        %2751 = vmatpush2.msra.mxu0 0.0
        %2752 = vmatprep.mubr.f32.mxu0 0.0
        %2753 = vmatmul.mubr.f32.gmra.mxu0 %v2683
        %v2754 = vpop.f32.mrf.mxu0
        %v2755 = vadd.f32 %v2680, %v2754
        %v2756 = vpop.f32.mrf.mxu0
        %2757 = vmatprep.mubr.f32.mxu0 0.0
        %2758 = vmatmul.mubr.f32.gmra.mxu0 %v2686
        %v2759 = vpop.f32.mrf.mxu0
        %v2760 = vadd.f32 %v2680, %v2759
        %v2761 = vpop.f32.mrf.mxu0
        %2762 = vdwg.mxu0
        %v2763 = vsub.f32 0.0, %v2755
        %v2764 = vsub.f32 0.0, %v2760
        %v2765 = vmul.f32 %v2763, 1.442695
        %v2766 = vpow.pop %v2765
        %v2767 = vmul.f32 %v2764, 1.442695
        %v2768 = vpow.pop %v2767
        %v2769 = vadd.f32 %v2766, 1.0
        %v2770 = vadd.f32 %v2768, 1.0
        %v2771 = vrcp.pop %v2769
        %v2772 = vmul.f32 1.0, %v2771
        %v2773 = vrcp.pop %v2770
        %v2774 = vmul.f32 1.0, %v2773
        %vm2775 = vcmask 48128
        %2776 = vst.msk [vmem:[%s810] sm:$0xff] %vm2775, %v2772
        %2777 = vst.msk [vmem:[%s810 + $0x8] sm:$0xff] %vm2775, %v2774
        %v2778 = vld [vmem:[%s760] sm:$0xff]
        %v2779 = vld [vmem:[%s760 + $0x8] sm:$0xff]
        %v2780 = vsub.f32 %v2772, %v2778
        %v2781 = vsub.f32 %v2774, %v2779
        %v2782 = vmul.f32 %v2780, %v2780
        %v2783 = vmul.f32 %v2781, %v2781
        %v2784 = vsel %vm2775, %v2782, 0.0
        %2785 = vadd.xlane.f32.xlu0 %v2784
        %v2786 = vpop.xlane.xlu0 %2785
        %v2787 = vsel %vm2775, %v2783, 0.0
        %2788 = vadd.xlane.f32.xlu0 %v2787
        %v2789 = vpop.xlane.xlu0 %2788
        %v2790 = vrot.slane %v2786, 4
        %v2791 = vadd.f32 %v2786, %v2790
        %v2792 = vrot.slane %v2791, 2
        %v2793 = vadd.f32 %v2791, %v2792
        %v2794 = vrot.slane %v2793, 1
        %v2795 = vadd.f32 %v2793, %v2794
        %v2796 = vrot.slane %v2789, 4
        %v2797 = vadd.f32 %v2789, %v2796
        %v2798 = vrot.slane %v2797, 2
        %v2799 = vadd.f32 %v2797, %v2798
        %v2800 = vrot.slane %v2799, 1
        %v2801 = vadd.f32 %v2799, %v2800
        %vm2802 = vcmask 0
        %2803 = vst.msk [vmem:[%s815] sm:$0x1] %vm2802, %v2795
        %2804 = vst.msk [vmem:[%s815 + $0x1] sm:$0x1] %vm2802, %v2801
      $region96: #{continuous_transformer_forward.5} parent=87 // pred_fallthru
        _
      %s2805 = smul.u32 2, %s34
      %p2806 = scmp.lt.s32.totalorder %s2805, 1
      %s2807 = scalar_select %p2806, %s2805, 1
      %s2808 = smul.addr %s2807, 8
      %s2809 = scalar_lea.vmem %s17, %s2808
      %s2810 = smul.u32 2, %s34
      %p2811 = scmp.lt.s32.totalorder %s2810, 1
      %s2812 = scalar_select %p2811, %s2810, 1
      %s2813 = scalar_lea.vmem %s18, %s2812
      // Predicated region
      $region97: #{continuous_transformer_forward.5} parent=87 // pred_check
        %p2814 = pneg %p487
      $region98: #{continuous_transformer_forward.5} parent=87 // pred_check_branch
        %2816 = sbr.rel (%p2814) target = $region100
      $region99: #{continuous_transformer_forward.5} parent=87 // pred_region
        %s2817 = smul.u32 2, %s34
      $region100: #{continuous_transformer_forward.5} parent=87 // pred_fallthru
        _
      // Predicated region
      $region101: #{continuous_transformer_forward.5} parent=87 // pred_check
        %p2818 = pneg %p513
      $region102: #{continuous_transformer_forward.5} parent=87 // pred_check_branch
        %2820 = sbr.rel (%p2818) target = $region104
      $region103: #{continuous_transformer_forward.5} parent=87 // pred_region
        %s2821 = smul.u32 2, %s34
      $region104: #{continuous_transformer_forward.5} parent=87 // pred_fallthru
        _
      // Predicated region
      $region105: #{continuous_transformer_forward.5} parent=87 // pred_check
        %p2822 = pneg %p487
      $region106: #{continuous_transformer_forward.5} parent=87 // pred_check_branch
        %2824 = sbr.rel (%p2822) target = $region108
      $region107: #{continuous_transformer_forward.5} parent=87 // pred_region
        %s2825 = smul.u32 2, %s34
        %p2826 = scmp.lt.s32.totalorder %s2825, 1
        %s2827 = scalar_select %p2826, %s2825, 1
        %s2828 = smul.addr %s2827, 8
        %s2829 = scalar_lea.vmem %s17, %s2828
      $region108: #{continuous_transformer_forward.5} parent=87 // pred_fallthru
        _
      // Predicated region
      $region109: #{continuous_transformer_forward.5} parent=87 // pred_check
        %p2830 = pneg %p513
      $region110: #{continuous_transformer_forward.5} parent=87 // pred_check_branch
        %2832 = sbr.rel (%p2830) target = $region112
      $region111: #{continuous_transformer_forward.5} parent=87 // pred_region
        %s2833 = smul.u32 2, %s34
        %p2834 = scmp.lt.s32.totalorder %s2833, 1
        %s2835 = scalar_select %p2834, %s2833, 1
        %s2836 = scalar_lea.vmem %s18, %s2835
      $region112: #{continuous_transformer_forward.5} parent=87 // pred_fallthru
        _
    $region88: #{continuous_transformer_forward.5} parent=5 // pred_fallthru
      _
    %p2837 = scmp.le.s32.totalorder 2, %s25
    // Predicated region
    $region113: #{continuous_transformer_forward.5} parent=5 // pred_check
      %p2838 = pneg %p2837
    $region114: #{continuous_transformer_forward.5} parent=5 // pred_check_branch
      %2840 = sbr.rel (%p2838) target = $region116
    $region115: #{continuous_transformer_forward.5} parent=5 // pred_region
      %s2841 = ssub.s32 %s25, 2
    $region116: #{continuous_transformer_forward.5} parent=5 // pred_fallthru
      _
  $region6: #{continuous_transformer_forward.5} parent=0 // loop_footer
    %s29 = sadd.s32 1, %s25
  $region7: #{continuous_transformer_forward.5} parent=0 // loop_footer_branch
    %24 = sbr.rel target = $region3
  $region8: #{continuous_transformer_forward.5} parent=0 // loop_exit
    _

</llo_original>
